<compile_context>
chip_gen: v5e
topology: v5e:2x2
jax: 0.10.0
libtpu: 0.0.40
codegen_flags: <defaults>
</compile_context>

<pallas_src>
import functools

import jax
import jax.numpy as jnp
from jax.experimental import pallas as pl
from jax.experimental.pallas import tpu as pltpu

# ---------------- cfg.* equivalents (small, deterministic) ----------------
DF_DIM = 16            # cfg.GAN.DF_DIM (ndf)
GF_DIM = 16            # cfg.GAN.GF_DIM      -> ngf = GF_DIM // 4 = 4
GLOVE_DIM = 16         # cfg.TEXT.GLOVE_EMBEDDING_DIM (only feeds the unused D_GET_LOGITS heads)
NUM_CLASSES = 4        # ncf (shape-map channels)
ROI_BASE_SIZE = 4      # cfg.ROI.ROI_BASE_SIZE
BOXES_NUM = 3          # cfg.ROI.BOXES_NUM
BATCH = 2
IN_SIZE = 32           # raw input spatial size (forward resizes to IMG_SIZE)
IMG_SIZE = 64          # small stand-in for the reference default img_size=512
LEAK = 0.2


# ============================ Pallas kernels ============================

def _mm_epilogue_kernel(a_ref, b_ref, bias_ref, o_ref, *, act):
    """bf16 x bf16 -> f32 matmul tile with fused bias + activation epilogue."""
    y = jnp.dot(a_ref[...], b_ref[...], preferred_element_type=jnp.float32)
    y = y + bias_ref[...]
    if act == "leaky":
        y = jnp.where(y >= 0, y, LEAK * y)
    o_ref[...] = y


def matmul_fused(a, w, bias=None, act="none"):
    """(M,K)@(K,N) on the MXU: bf16 operands, f32 accumulate, fused bias/act.

    N is zero-padded to a multiple of 128 (lane-dense output stores); M is
    tiled (TM <= 512) with a parallel grid so v7x can split across cores.
    """
    a = a.astype(jnp.float32)
    M, K = a.shape
    N = w.shape[1]
    Np = ((N + 127) // 128) * 128
    if bias is None:
        bias = jnp.zeros((N,), jnp.float32)
    w_p = jnp.pad(w.astype(jnp.float32), ((0, 0), (0, Np - N))).astype(jnp.bfloat16)
    bias_p = jnp.pad(bias.astype(jnp.float32), (0, Np - N)).reshape(1, Np)
    a_bf = a.astype(jnp.bfloat16)
    if M > 512:
        TM = 512
        Mp = ((M + TM - 1) // TM) * TM
        if Mp != M:
            a_bf = jnp.pad(a_bf, ((0, Mp - M), (0, 0)))
    else:
        TM, Mp = M, M

    kernel = functools.partial(_mm_epilogue_kernel, act=act)
    out = pl.pallas_call(
        kernel,
        out_shape=jax.ShapeDtypeStruct((Mp, Np), jnp.float32),
        grid=(Mp // TM, Np // 128),
        in_specs=[pl.BlockSpec((TM, K), lambda i, j: (i, 0)),
                  pl.BlockSpec((K, 128), lambda i, j: (0, j)),
                  pl.BlockSpec((1, 128), lambda i, j: (0, j))],
        out_specs=pl.BlockSpec((TM, 128), lambda i, j: (i, j)),
        compiler_params=pltpu.CompilerParams(
            dimension_semantics=("parallel", "parallel")),
    )(a_bf, w_p, bias_p)
    return out[:M, :N]


def _bn_leaky_kernel(x_ref, g_ref, b_ref, o_ref):
    # train-mode BatchNorm2d (batch statistics) fused with LeakyReLU(0.2)
    x = x_ref[...]                                          # (B*H*W, C)
    mean = jnp.mean(x, axis=0, keepdims=True)
    var = jnp.mean(jnp.square(x - mean), axis=0, keepdims=True)
    y = (x - mean) * jax.lax.rsqrt(var + 1e-5) * g_ref[...] + b_ref[...]
    o_ref[...] = jnp.where(y >= 0, y, LEAK * y)


def batchnorm_leaky(x_nhwc, gamma, beta):
    B, H, W, C = x_nhwc.shape
    flat = x_nhwc.reshape(B * H * W, C)
    fs = flat.shape                     # largest instance here: (512, 32) — tiny
    out = pl.pallas_call(
        _bn_leaky_kernel,
        out_shape=jax.ShapeDtypeStruct(fs, jnp.float32),
        grid=(1,),
        in_specs=[pl.BlockSpec(fs, lambda i: (0, 0)),
                  pl.BlockSpec((1, C), lambda i: (0, 0)),
                  pl.BlockSpec((1, C), lambda i: (0, 0))],
        out_specs=pl.BlockSpec(fs, lambda i: (0, 0)),
    )(flat, gamma.reshape(1, C), beta.reshape(1, C))
    return out.reshape(B, H, W, C)


def _in_leaky_kernel(x_ref, o_ref):
    # InstanceNorm2d (affine=False) fused with LeakyReLU(0.2); lane-dense:
    # per-(b,c) reduction over the H*W lane axis.
    x = x_ref[...]                                          # (B*C, H*W)
    mean = jnp.mean(x, axis=1, keepdims=True)
    var = jnp.mean(jnp.square(x - mean), axis=1, keepdims=True)
    y = (x - mean) * jax.lax.rsqrt(var + 1e-5)
    o_ref[...] = jnp.where(y >= 0, y, LEAK * y)


def instnorm_leaky(x_nhwc):
    B, H, W, C = x_nhwc.shape
    xr = jnp.transpose(x_nhwc, (0, 3, 1, 2)).reshape(B * C, H * W)
    out = pl.pallas_call(
        _in_leaky_kernel,
        out_shape=jax.ShapeDtypeStruct((B * C, H * W), jnp.float32),
        grid=(1,),
        in_specs=[pl.BlockSpec((B * C, H * W), lambda i: (0, 0))],
        out_specs=pl.BlockSpec((B * C, H * W), lambda i: (0, 0)),
    )(xr)
    return jnp.transpose(out.reshape(B, C, H, W), (0, 2, 3, 1))


# ============================ conv / resize helpers ============================

def conv2d(x_nhwc, w_torch, bias=None, *, ksize, stride, pad,
           pad_mode="constant", act="none"):
    """KxK conv (NHWC) via direct (strided) patch extraction + fused Pallas matmul.

    w_torch has the PyTorch layout (Cout, Cin, KH, KW). Bias add and LeakyReLU
    are fused into the matmul epilogue.
    """
    B, H, W, Cin = x_nhwc.shape
    Cout = w_torch.shape[0]
    xp = jnp.pad(x_nhwc, ((0, 0), (pad, pad), (pad, pad), (0, 0)), mode=pad_mode) \
        if pad > 0 else x_nhwc
    Ho = (H + 2 * pad - ksize) // stride + 1
    Wo = (W + 2 * pad - ksize) // stride + 1
    # strided tap extraction (no full-res im2col that gets subsampled afterwards)
    taps = [xp[:, kh:kh + stride * Ho:stride, kw:kw + stride * Wo:stride, :]
            for kh in range(ksize) for kw in range(ksize)]
    cols = jnp.concatenate(taps, axis=-1).reshape(B * Ho * Wo, ksize * ksize * Cin)
    wm = jnp.transpose(w_torch, (2, 3, 1, 0)).reshape(ksize * ksize * Cin, Cout)
    y = matmul_fused(cols, wm, bias=bias, act=act)
    return y.reshape(B, Ho, Wo, Cout)


def _interp_matrix(in_size, out_size):
    """Dense 1-D bilinear interpolation matrix, align_corners=True."""
    pos = jnp.arange(out_size, dtype=jnp.float32) * (in_size - 1) / max(out_size - 1, 1)
    lo = jnp.clip(jnp.floor(pos).astype(jnp.int32), 0, max(in_size - 2, 0))
    frac = pos - lo.astype(jnp.float32)
    rows = jnp.arange(out_size)
    W = jnp.zeros((out_size, in_size), jnp.float32)
    W = W.at[rows, lo].set(1.0 - frac)
    W = W.at[rows, jnp.minimum(lo + 1, in_size - 1)].add(frac)
    return W


def resize_bilinear_nchw_to_nhwc(x_nchw, out_size):
    """F.interpolate(..., mode='bilinear', align_corners=True) as two MXU matmuls."""
    B, C, Hin, Win = x_nchw.shape
    Wmat_w = _interp_matrix(Win, out_size)                      # (out, Win)
    Wmat_h = _interp_matrix(Hin, out_size)                      # (out, Hin)
    y = matmul_fused(x_nchw.reshape(B * C * Hin, Win), Wmat_w.T)
    y = y.reshape(B, C, Hin, out_size).transpose(0, 1, 3, 2)    # (B,C,Wout,Hin)
    z = matmul_fused(y.reshape(B * C * out_size, Hin), Wmat_h.T)
    z = z.reshape(B, C, out_size, out_size)                     # (B,C,Wout,Hout)
    return jnp.transpose(z, (0, 3, 2, 1))                       # NHWC


# ============================ ROI handling ============================

def build_rois(fm_rois):
    """[x1,y1,w,h,...] -> [level, x1,y1,x2,y2]; im_scales are all 1 so the
    _get_rois_blob level column is all zeros (as in the reference code)."""
    x1 = fm_rois[..., 0]
    y1 = fm_rois[..., 1]
    x2 = x1 + fm_rois[..., 2]
    y2 = y1 + fm_rois[..., 3]
    boxes = jnp.stack([x1, y1, x2, y2], axis=-1).reshape(-1, 4)
    levels = jnp.zeros((boxes.shape[0], 1), jnp.float32)
    return jnp.concatenate([levels, boxes], axis=-1)            # (B*R, 5)


def roi_align_avg(feat_nhwc, rois, out_size, spatial_scale):
    # TODO(synk): the external RoIAlignAvg CUDA extension is not in the spec; this is
    # the standard variant ((out+1)^2 bilinear samples then 2x2 stride-1 avg pool),
    # kept as JAX glue because it is a tiny data-dependent gather.
    Hf, Wf = feat_nhwc.shape[1], feat_nhwc.shape[2]
    bidx = rois[:, 0].astype(jnp.int32)
    x1 = rois[:, 1] * spatial_scale
    y1 = rois[:, 2] * spatial_scale
    x2 = rois[:, 3] * spatial_scale
    y2 = rois[:, 4] * spatial_scale
    bin_w = jnp.maximum(x2 - x1, 0.0) / out_size
    bin_h = jnp.maximum(y2 - y1, 0.0) / out_size
    g = jnp.arange(out_size + 1, dtype=jnp.float32)
    ys = y1[:, None] + g[None, :] * bin_h[:, None]              # (R, n)
    xs = x1[:, None] + g[None, :] * bin_w[:, None]              # (R, n)
    valid = ((ys >= 0) & (ys < Hf))[:, :, None] & ((xs >= 0) & (xs < Wf))[:, None, :]
    y0 = jnp.clip(jnp.floor(ys), 0, Hf - 1).astype(jnp.int32)
    x0 = jnp.clip(jnp.floor(xs), 0, Wf - 1).astype(jnp.int32)
    y1i = jnp.minimum(y0 + 1, Hf - 1)
    x1i = jnp.minimum(x0 + 1, Wf - 1)
    wy = (ys - jnp.floor(ys))[:, :, None, None]
    wx = (xs - jnp.floor(xs))[:, None, :, None]

    def gather(yi, xi):
        return feat_nhwc[bidx[:, None, None], yi[:, :, None], xi[:, None, :], :]

    samp = (gather(y0, x0) * (1 - wy) * (1 - wx) + gather(y0, x1i) * (1 - wy) * wx +
            gather(y1i, x0) * wy * (1 - wx) + gather(y1i, x1i) * wy * wx)
    samp = samp * valid[..., None].astype(samp.dtype)           # (R, n, n, C)
    pooled = 0.25 * (samp[:, :-1, :-1] + samp[:, 1:, :-1] +
                     samp[:, :-1, 1:] + samp[:, 1:, 1:])
    return pooled                                               # (R, out, out, C)


# ============================ parameters ============================

def init_params(key):
    ndf, ngf, ncf = DF_DIM, GF_DIM // 4, NUM_CLASSES

    def nrm(k, shape, scale=0.05):
        return scale * jax.random.normal(k, shape, jnp.float32)

    ks = iter(jax.random.split(key, 16))
    p = {}
    # shp_code: ReflectionPad(1) + Conv2d(ncf->ngf, 3, bias) + InstanceNorm + LeakyReLU
    p["shp_w"] = nrm(next(ks), (ngf, ncf, 3, 3))
    p["shp_b"] = nrm(next(ks), (ngf,))
    # img_code = encode_image_by_ntimes(ngf, ndf, 4): 4x [Conv 4x4 s2 p1 (no bias)]
    p["img_w1"] = nrm(next(ks), (ndf, 3 + ngf, 4, 4))
    p["img_w2"] = nrm(next(ks), (ndf * 2, ndf, 4, 4))
    p["img_w3"] = nrm(next(ks), (ndf * 4, ndf * 2, 4, 4))
    p["img_w4"] = nrm(next(ks), (ndf * 8, ndf * 4, 4, 4))
    for i, c in ((2, ndf * 2), (3, ndf * 4), (4, ndf * 8)):
        p[f"img_bn{i}_g"] = jnp.ones((c,), jnp.float32)
        p[f"img_bn{i}_b"] = jnp.zeros((c,), jnp.float32)
    # roi_code: Conv2d(ndf*8 -> ndf*4, 4, s1, p1, bias) + LeakyReLU
    p["roi_w"] = nrm(next(ks), (ndf * 4, ndf * 8, 4, 4))
    p["roi_b"] = nrm(next(ks), (ndf * 4,))
    # TODO(synk): D_GET_LOGITS heads (UNCOND_DNET / COND_DNET) are constructed in the
    # reference __init__ but never called by this forward, so they are not implemented.
    return p


# ============================ forward ============================

@functools.partial(jax.jit, static_argnames=("img_size",))
def obj_ls_d_net_forward(params, x_var, s_var, fm_rois, num_rois, img_size=IMG_SIZE):
    # num_rois only feeds an unused np.amax() in the reference forward.
    del num_rois
    # F.interpolate(bilinear, align_corners=True) on image + shape maps
    x = resize_bilinear_nchw_to_nhwc(x_var, img_size)               # (B,S,S,3)
    s = resize_bilinear_nchw_to_nhwc(s_var, img_size)               # (B,S,S,ncf)
    # shp_code
    ns = conv2d(s, params["shp_w"], params["shp_b"], ksize=3, stride=1, pad=1,
                pad_mode="reflect", act="none")
    ns = instnorm_leaky(ns)                                         # (B,S,S,ngf)
    # concat + img_code (4x stride-2 4x4 convs; BN in train mode)
    h = jnp.concatenate([x, ns], axis=-1)                           # (B,S,S,3+ngf)
    h = conv2d(h, params["img_w1"], ksize=4, stride=2, pad=1, act="leaky")
    h = conv2d(h, params["img_w2"], ksize=4, stride=2, pad=1, act="none")
    h = batchnorm_leaky(h, params["img_bn2_g"], params["img_bn2_b"])
    h = conv2d(h, params["img_w3"], ksize=4, stride=2, pad=1, act="none")
    h = batchnorm_leaky(h, params["img_bn3_g"], params["img_bn3_b"])
    h = conv2d(h, params["img_w4"], ksize=4, stride=2, pad=1, act="none")
    x_code32 = batchnorm_leaky(h, params["img_bn4_g"], params["img_bn4_b"])
    # ROI path: rois blob -> RoIAlignAvg -> roi_code (conv + fused LeakyReLU)
    rois = build_rois(fm_rois)
    pooled = roi_align_avg(x_code32, rois, ROI_BASE_SIZE, 1.0 / 16.0)
    pf = conv2d(pooled, params["roi_w"], params["roi_b"], ksize=4, stride=1, pad=1,
                act="leaky")                                        # (B*R, 3, 3, ndf*4)
    R, Ho, Wo, C = pf.shape
    B = fm_rois.shape[0]
    return jnp.transpose(pf, (0, 3, 1, 2)).reshape(B, BOXES_NUM, C, Ho, Wo)


# ============================ driver ============================

if __name__ == "__main__":
    key = jax.random.PRNGKey(0)
    kp, kx, ks, kr1, kr2 = jax.random.split(key, 5)
    params = init_params(kp)

    B = BATCH
    x_var = jax.random.normal(kx, (B, 3, IN_SIZE, IN_SIZE), jnp.float32)
    s_var = jax.random.normal(ks, (B, NUM_CLASSES, IN_SIZE, IN_SIZE), jnp.float32)
    xy = jax.random.uniform(kr1, (B, BOXES_NUM, 2), jnp.float32, 0.0, IMG_SIZE / 2)
    wh = jax.random.uniform(kr2, (B, BOXES_NUM, 2), jnp.float32, 8.0, IMG_SIZE / 2)
    cls = jnp.zeros((B, BOXES_NUM, 1), jnp.float32)
    fm_rois = jnp.concatenate([xy, wh, cls], axis=-1)               # (B, R, 5): x,y,w,h,cls
    num_rois = jnp.full((B,), BOXES_NUM, jnp.int32)

    pooled_feat = obj_ls_d_net_forward(params, x_var, s_var, fm_rois, num_rois,
                                       img_size=IMG_SIZE)
    jax.block_until_ready(pooled_feat)

    assert pooled_feat.shape == (B, BOXES_NUM, DF_DIM * 4,
                                 ROI_BASE_SIZE - 1, ROI_BASE_SIZE - 1), pooled_feat.shape
    assert bool(jnp.all(jnp.isfinite(pooled_feat)))
    print("KERNEL_OK")
</pallas_src>

<mosaic_0001>
module attributes {stable_mosaic.version = 11 : i64} {
  func.func @_mm_epilogue_kernel(%arg0: i32, %arg1: i32, %arg2: memref<256x32xbf16, #tpu.memory_space<vmem>>, %arg3: memref<32x128xbf16, #tpu.memory_space<vmem>>, %arg4: memref<1x128xf32, #tpu.memory_space<vmem>>, %arg5: memref<256x128xf32, #tpu.memory_space<vmem>>) attributes {dimension_semantics = [#tpu.dimension_semantics<parallel>, #tpu.dimension_semantics<parallel>], iteration_bounds = array<i64: 1, 1>, scalar_prefetch = 0 : i64, scratch_operands = 0 : i64, tpu.core_type = #tpu.core_type<tc>, window_params = [{transform_indices = @transform_0, window_bounds = array<i64: 256, 32>}, {transform_indices = @transform_1, window_bounds = array<i64: 32, 128>}, {transform_indices = @transform_2, window_bounds = array<i64: 1, 128>}, {transform_indices = @transform_3, window_bounds = array<i64: 256, 128>}]} {
    %c0 = arith.constant 0 : index
    %c0_0 = arith.constant 0 : index
    %0 = vector.load %arg2[%c0, %c0_0] : memref<256x32xbf16, #tpu.memory_space<vmem>>, vector<256x32xbf16>
    %c0_1 = arith.constant 0 : index
    %c0_2 = arith.constant 0 : index
    %1 = vector.load %arg3[%c0_1, %c0_2] : memref<32x128xbf16, #tpu.memory_space<vmem>>, vector<32x128xbf16>
    %cst = arith.constant dense<0.000000e+00> : vector<256x128xf32>
    %2 = tpu.matmul %0, %1, %cst {dimension_numbers = #tpu.dot_dimension_numbers<[1], [0], [0], [1], [0, 0, 1, 1], [], []>} : vector<256x32xbf16>, vector<32x128xbf16>, vector<256x128xf32> -> vector<256x128xf32>
    %c0_3 = arith.constant 0 : index
    %c0_4 = arith.constant 0 : index
    %3 = vector.load %arg4[%c0_3, %c0_4] : memref<1x128xf32, #tpu.memory_space<vmem>>, vector<1x128xf32>
    %4 = vector.broadcast %3 : vector<1x128xf32> to vector<256x128xf32>
    %5 = arith.addf %2, %4 : vector<256x128xf32>
    %c0_5 = arith.constant 0 : index
    %c0_6 = arith.constant 0 : index
    %6 = vector.load %arg5[%c0_5, %c0_6] : memref<256x128xf32, #tpu.memory_space<vmem>>, vector<256x128xf32>
    tpu.vector_store %arg5[%c0_5, %c0_6], %5 {strides = array<i32>} : memref<256x128xf32, #tpu.memory_space<vmem>>, vector<256x128xf32>,
    return
  }
  func.func @transform_0(%arg0: i32, %arg1: i32) -> (i32, i32) {
    %c0_i32 = arith.constant 0 : i32
    %c0_i32_0 = arith.constant 0 : i32
    return %arg0, %c0_i32 : i32, i32
  }
  func.func @transform_1(%arg0: i32, %arg1: i32) -> (i32, i32) {
    %c0_i32 = arith.constant 0 : i32
    %c0_i32_0 = arith.constant 0 : i32
    return %c0_i32, %arg1 : i32, i32
  }
  func.func @transform_2(%arg0: i32, %arg1: i32) -> (i32, i32) {
    %c0_i32 = arith.constant 0 : i32
    %c0_i32_0 = arith.constant 0 : i32
    return %c0_i32, %arg1 : i32, i32
  }
  func.func @transform_3(%arg0: i32, %arg1: i32) -> (i32, i32) {
    %c0_i32 = arith.constant 0 : i32
    return %arg0, %arg1 : i32, i32
  }
}

module attributes {stable_mosaic.version = 11 : i64} {
  func.func @_mm_epilogue_kernel(%arg0: i32, %arg1: i32, %arg2: memref<512x32xbf16, #tpu.memory_space<vmem>>, %arg3: memref<32x128xbf16, #tpu.memory_space<vmem>>, %arg4: memref<1x128xf32, #tpu.memory_space<vmem>>, %arg5: memref<512x128xf32, #tpu.memory_space<vmem>>) attributes {dimension_semantics = [#tpu.dimension_semantics<parallel>, #tpu.dimension_semantics<parallel>], iteration_bounds = array<i64: 1, 1>, scalar_prefetch = 0 : i64, scratch_operands = 0 : i64, tpu.core_type = #tpu.core_type<tc>, window_params = [{transform_indices = @transform_0, window_bounds = array<i64: 512, 32>}, {transform_indices = @transform_1, window_bounds = array<i64: 32, 128>}, {transform_indices = @transform_2, window_bounds = array<i64: 1, 128>}, {transform_indices = @transform_3, window_bounds = array<i64: 512, 128>}]} {
    %c0 = arith.constant 0 : index
    %c0_0 = arith.constant 0 : index
    %0 = vector.load %arg2[%c0, %c0_0] : memref<512x32xbf16, #tpu.memory_space<vmem>>, vector<512x32xbf16>
    %c0_1 = arith.constant 0 : index
    %c0_2 = arith.constant 0 : index
    %1 = vector.load %arg3[%c0_1, %c0_2] : memref<32x128xbf16, #tpu.memory_space<vmem>>, vector<32x128xbf16>
    %cst = arith.constant dense<0.000000e+00> : vector<512x128xf32>
    %2 = tpu.matmul %0, %1, %cst {dimension_numbers = #tpu.dot_dimension_numbers<[1], [0], [0], [1], [0, 0, 1, 1], [], []>} : vector<512x32xbf16>, vector<32x128xbf16>, vector<512x128xf32> -> vector<512x128xf32>
    %c0_3 = arith.constant 0 : index
    %c0_4 = arith.constant 0 : index
    %3 = vector.load %arg4[%c0_3, %c0_4] : memref<1x128xf32, #tpu.memory_space<vmem>>, vector<1x128xf32>
    %4 = vector.broadcast %3 : vector<1x128xf32> to vector<512x128xf32>
    %5 = arith.addf %2, %4 : vector<512x128xf32>
    %c0_5 = arith.constant 0 : index
    %c0_6 = arith.constant 0 : index
    %6 = vector.load %arg5[%c0_5, %c0_6] : memref<512x128xf32, #tpu.memory_space<vmem>>, vector<512x128xf32>
    tpu.vector_store %arg5[%c0_5, %c0_6], %5 {strides = array<i32>} : memref<512x128xf32, #tpu.memory_space<vmem>>, vector<512x128xf32>,
    return
  }
  func.func @transform_0(%arg0: i32, %arg1: i32) -> (i32, i32) {
    %c0_i32 = arith.constant 0 : i32
    %c0_i32_0 = arith.constant 0 : i32
    return %arg0, %c0_i32 : i32, i32
  }
  func.func @transform_1(%arg0: i32, %arg1: i32) -> (i32, i32) {
    %c0_i32 = arith.constant 0 : i32
    %c0_i32_0 = arith.constant 0 : i32
    return %c0_i32, %arg1 : i32, i32
  }
  func.func @transform_2(%arg0: i32, %arg1: i32) -> (i32, i32) {
    %c0_i32 = arith.constant 0 : i32
    %c0_i32_0 = arith.constant 0 : i32
    return %c0_i32, %arg1 : i32, i32
  }
  func.func @transform_3(%arg0: i32, %arg1: i32) -> (i32, i32) {
    %c0_i32 = arith.constant 0 : i32
    return %arg0, %arg1 : i32, i32
  }
}

module attributes {stable_mosaic.version = 11 : i64} {
  func.func @_mm_epilogue_kernel(%arg0: i32, %arg1: i32, %arg2: memref<512x36xbf16, #tpu.memory_space<vmem>>, %arg3: memref<36x128xbf16, #tpu.memory_space<vmem>>, %arg4: memref<1x128xf32, #tpu.memory_space<vmem>>, %arg5: memref<512x128xf32, #tpu.memory_space<vmem>>) attributes {dimension_semantics = [#tpu.dimension_semantics<parallel>, #tpu.dimension_semantics<parallel>], iteration_bounds = array<i64: 16, 1>, scalar_prefetch = 0 : i64, scratch_operands = 0 : i64, tpu.core_type = #tpu.core_type<tc>, window_params = [{transform_indices = @transform_0, window_bounds = array<i64: 512, 36>}, {transform_indices = @transform_1, window_bounds = array<i64: 36, 128>}, {transform_indices = @transform_2, window_bounds = array<i64: 1, 128>}, {transform_indices = @transform_3, window_bounds = array<i64: 512, 128>}]} {
    %c0 = arith.constant 0 : index
    %c0_0 = arith.constant 0 : index
    %0 = vector.load %arg2[%c0, %c0_0] : memref<512x36xbf16, #tpu.memory_space<vmem>>, vector<512x36xbf16>
    %c0_1 = arith.constant 0 : index
    %c0_2 = arith.constant 0 : index
    %1 = vector.load %arg3[%c0_1, %c0_2] : memref<36x128xbf16, #tpu.memory_space<vmem>>, vector<36x128xbf16>
    %cst = arith.constant dense<0.000000e+00> : vector<512x128xf32>
    %2 = tpu.matmul %0, %1, %cst {dimension_numbers = #tpu.dot_dimension_numbers<[1], [0], [0], [1], [0, 0, 1, 1], [], []>} : vector<512x36xbf16>, vector<36x128xbf16>, vector<512x128xf32> -> vector<512x128xf32>
    %c0_3 = arith.constant 0 : index
    %c0_4 = arith.constant 0 : index
    %3 = vector.load %arg4[%c0_3, %c0_4] : memref<1x128xf32, #tpu.memory_space<vmem>>, vector<1x128xf32>
    %4 = vector.broadcast %3 : vector<1x128xf32> to vector<512x128xf32>
    %5 = arith.addf %2, %4 : vector<512x128xf32>
    %c0_5 = arith.constant 0 : index
    %c0_6 = arith.constant 0 : index
    %6 = vector.load %arg5[%c0_5, %c0_6] : memref<512x128xf32, #tpu.memory_space<vmem>>, vector<512x128xf32>
    tpu.vector_store %arg5[%c0_5, %c0_6], %5 {strides = array<i32>} : memref<512x128xf32, #tpu.memory_space<vmem>>, vector<512x128xf32>,
    return
  }
  func.func @transform_0(%arg0: i32, %arg1: i32) -> (i32, i32) {
    %c0_i32 = arith.constant 0 : i32
    %c0_i32_0 = arith.constant 0 : i32
    return %arg0, %c0_i32 : i32, i32
  }
  func.func @transform_1(%arg0: i32, %arg1: i32) -> (i32, i32) {
    %c0_i32 = arith.constant 0 : i32
    %c0_i32_0 = arith.constant 0 : i32
    return %c0_i32, %arg1 : i32, i32
  }
  func.func @transform_2(%arg0: i32, %arg1: i32) -> (i32, i32) {
    %c0_i32 = arith.constant 0 : i32
    %c0_i32_0 = arith.constant 0 : i32
    return %c0_i32, %arg1 : i32, i32
  }
  func.func @transform_3(%arg0: i32, %arg1: i32) -> (i32, i32) {
    %c0_i32 = arith.constant 0 : i32
    return %arg0, %arg1 : i32, i32
  }
}

module attributes {stable_mosaic.version = 11 : i64} {
  func.func @_in_leaky_kernel(%arg0: i32, %arg1: memref<8x4096xf32, #tpu.memory_space<vmem>>, %arg2: memref<8x4096xf32, #tpu.memory_space<vmem>>) attributes {dimension_semantics = [#tpu.dimension_semantics<arbitrary>], iteration_bounds = array<i64: 1>, scalar_prefetch = 0 : i64, scratch_operands = 0 : i64, tpu.core_type = #tpu.core_type<tc>, window_params = [{pipeline_mode = #tpu.pipeline_mode<synchronous>, transform_indices = @transform_0, window_bounds = array<i64: 8, 4096>}, {pipeline_mode = #tpu.pipeline_mode<synchronous>, transform_indices = @transform_1, window_bounds = array<i64: 8, 4096>}]} {
    %c0 = arith.constant 0 : index
    %c0_0 = arith.constant 0 : index
    %0 = vector.load %arg1[%c0, %c0_0] : memref<8x4096xf32, #tpu.memory_space<vmem>>, vector<8x4096xf32>
    %cst = arith.constant dense<0.000000e+00> : vector<8xf32>
    %1 = vector.multi_reduction <add>, %0, %cst [1] : vector<8x4096xf32> to vector<8xf32>
    %2 = vector.shape_cast %1 : vector<8xf32> to vector<8x1xf32>
    %cst_1 = arith.constant 4.096000e+03 : f32
    %3 = vector.broadcast %cst_1 : f32 to vector<8x1xf32>
    %4 = arith.divf %2, %3 : vector<8x1xf32>
    %5 = vector.broadcast %4 : vector<8x1xf32> to vector<8x4096xf32>
    %6 = arith.subf %0, %5 : vector<8x4096xf32>
    %7 = arith.mulf %6, %6 : vector<8x4096xf32>
    %cst_2 = arith.constant dense<0.000000e+00> : vector<8xf32>
    %8 = vector.multi_reduction <add>, %7, %cst_2 [1] : vector<8x4096xf32> to vector<8xf32>
    %9 = vector.shape_cast %8 : vector<8xf32> to vector<8x1xf32>
    %cst_3 = arith.constant 4.096000e+03 : f32
    %10 = vector.broadcast %cst_3 : f32 to vector<8x1xf32>
    %11 = arith.divf %9, %10 : vector<8x1xf32>
    %12 = vector.broadcast %4 : vector<8x1xf32> to vector<8x4096xf32>
    %13 = arith.subf %0, %12 : vector<8x4096xf32>
    %cst_4 = arith.constant 9.99999974E-6 : f32
    %14 = vector.broadcast %cst_4 : f32 to vector<8x1xf32>
    %15 = arith.addf %11, %14 : vector<8x1xf32>
    %16 = math.rsqrt %15 : vector<8x1xf32>
    %17 = vector.broadcast %16 : vector<8x1xf32> to vector<8x4096xf32>
    %18 = arith.mulf %13, %17 : vector<8x4096xf32>
    %cst_5 = arith.constant 0.000000e+00 : f32
    %19 = vector.broadcast %cst_5 : f32 to vector<8x4096xf32>
    %20 = arith.cmpf oge, %18, %19 : vector<8x4096xf32>
    %cst_6 = arith.constant 2.000000e-01 : f32
    %21 = vector.broadcast %cst_6 : f32 to vector<8x4096xf32>
    %22 = arith.mulf %21, %18 : vector<8x4096xf32>
    %23 = arith.select %20, %18, %22 : vector<8x4096xi1>, vector<8x4096xf32>
    %c0_7 = arith.constant 0 : index
    %c0_8 = arith.constant 0 : index
    %24 = vector.load %arg2[%c0_7, %c0_8] : memref<8x4096xf32, #tpu.memory_space<vmem>>, vector<8x4096xf32>
    tpu.vector_store %arg2[%c0_7, %c0_8], %23 {strides = array<i32>} : memref<8x4096xf32, #tpu.memory_space<vmem>>, vector<8x4096xf32>,
    return
  }
  func.func @transform_0(%arg0: i32) -> (i32, i32) {
    %c0_i32 = arith.constant 0 : i32
    %c0_i32_0 = arith.constant 0 : i32
    %c0_i32_1 = arith.constant 0 : i32
    return %c0_i32, %c0_i32_0 : i32, i32
  }
  func.func @transform_1(%arg0: i32) -> (i32, i32) {
    %c0_i32 = arith.constant 0 : i32
    %c0_i32_0 = arith.constant 0 : i32
    %c0_i32_1 = arith.constant 0 : i32
    return %c0_i32, %c0_i32_0 : i32, i32
  }
}

module attributes {stable_mosaic.version = 11 : i64} {
  func.func @_mm_epilogue_kernel(%arg0: i32, %arg1: i32, %arg2: memref<192x32xbf16, #tpu.memory_space<vmem>>, %arg3: memref<32x128xbf16, #tpu.memory_space<vmem>>, %arg4: memref<1x128xf32, #tpu.memory_space<vmem>>, %arg5: memref<192x128xf32, #tpu.memory_space<vmem>>) attributes {dimension_semantics = [#tpu.dimension_semantics<parallel>, #tpu.dimension_semantics<parallel>], iteration_bounds = array<i64: 1, 1>, scalar_prefetch = 0 : i64, scratch_operands = 0 : i64, tpu.core_type = #tpu.core_type<tc>, window_params = [{transform_indices = @transform_0, window_bounds = array<i64: 192, 32>}, {transform_indices = @transform_1, window_bounds = array<i64: 32, 128>}, {transform_indices = @transform_2, window_bounds = array<i64: 1, 128>}, {transform_indices = @transform_3, window_bounds = array<i64: 192, 128>}]} {
    %c0 = arith.constant 0 : index
    %c0_0 = arith.constant 0 : index
    %0 = vector.load %arg2[%c0, %c0_0] : memref<192x32xbf16, #tpu.memory_space<vmem>>, vector<192x32xbf16>
    %c0_1 = arith.constant 0 : index
    %c0_2 = arith.constant 0 : index
    %1 = vector.load %arg3[%c0_1, %c0_2] : memref<32x128xbf16, #tpu.memory_space<vmem>>, vector<32x128xbf16>
    %cst = arith.constant dense<0.000000e+00> : vector<192x128xf32>
    %2 = tpu.matmul %0, %1, %cst {dimension_numbers = #tpu.dot_dimension_numbers<[1], [0], [0], [1], [0, 0, 1, 1], [], []>} : vector<192x32xbf16>, vector<32x128xbf16>, vector<192x128xf32> -> vector<192x128xf32>
    %c0_3 = arith.constant 0 : index
    %c0_4 = arith.constant 0 : index
    %3 = vector.load %arg4[%c0_3, %c0_4] : memref<1x128xf32, #tpu.memory_space<vmem>>, vector<1x128xf32>
    %4 = vector.broadcast %3 : vector<1x128xf32> to vector<192x128xf32>
    %5 = arith.addf %2, %4 : vector<192x128xf32>
    %c0_5 = arith.constant 0 : index
    %c0_6 = arith.constant 0 : index
    %6 = vector.load %arg5[%c0_5, %c0_6] : memref<192x128xf32, #tpu.memory_space<vmem>>, vector<192x128xf32>
    tpu.vector_store %arg5[%c0_5, %c0_6], %5 {strides = array<i32>} : memref<192x128xf32, #tpu.memory_space<vmem>>, vector<192x128xf32>,
    return
  }
  func.func @transform_0(%arg0: i32, %arg1: i32) -> (i32, i32) {
    %c0_i32 = arith.constant 0 : i32
    %c0_i32_0 = arith.constant 0 : i32
    return %arg0, %c0_i32 : i32, i32
  }
  func.func @transform_1(%arg0: i32, %arg1: i32) -> (i32, i32) {
    %c0_i32 = arith.constant 0 : i32
    %c0_i32_0 = arith.constant 0 : i32
    return %c0_i32, %arg1 : i32, i32
  }
  func.func @transform_2(%arg0: i32, %arg1: i32) -> (i32, i32) {
    %c0_i32 = arith.constant 0 : i32
    %c0_i32_0 = arith.constant 0 : i32
    return %c0_i32, %arg1 : i32, i32
  }
  func.func @transform_3(%arg0: i32, %arg1: i32) -> (i32, i32) {
    %c0_i32 = arith.constant 0 : i32
    return %arg0, %arg1 : i32, i32
  }
}

module attributes {stable_mosaic.version = 11 : i64} {
  func.func @_mm_epilogue_kernel(%arg0: i32, %arg1: i32, %arg2: memref<384x32xbf16, #tpu.memory_space<vmem>>, %arg3: memref<32x128xbf16, #tpu.memory_space<vmem>>, %arg4: memref<1x128xf32, #tpu.memory_space<vmem>>, %arg5: memref<384x128xf32, #tpu.memory_space<vmem>>) attributes {dimension_semantics = [#tpu.dimension_semantics<parallel>, #tpu.dimension_semantics<parallel>], iteration_bounds = array<i64: 1, 1>, scalar_prefetch = 0 : i64, scratch_operands = 0 : i64, tpu.core_type = #tpu.core_type<tc>, window_params = [{transform_indices = @transform_0, window_bounds = array<i64: 384, 32>}, {transform_indices = @transform_1, window_bounds = array<i64: 32, 128>}, {transform_indices = @transform_2, window_bounds = array<i64: 1, 128>}, {transform_indices = @transform_3, window_bounds = array<i64: 384, 128>}]} {
    %c0 = arith.constant 0 : index
    %c0_0 = arith.constant 0 : index
    %0 = vector.load %arg2[%c0, %c0_0] : memref<384x32xbf16, #tpu.memory_space<vmem>>, vector<384x32xbf16>
    %c0_1 = arith.constant 0 : index
    %c0_2 = arith.constant 0 : index
    %1 = vector.load %arg3[%c0_1, %c0_2] : memref<32x128xbf16, #tpu.memory_space<vmem>>, vector<32x128xbf16>
    %cst = arith.constant dense<0.000000e+00> : vector<384x128xf32>
    %2 = tpu.matmul %0, %1, %cst {dimension_numbers = #tpu.dot_dimension_numbers<[1], [0], [0], [1], [0, 0, 1, 1], [], []>} : vector<384x32xbf16>, vector<32x128xbf16>, vector<384x128xf32> -> vector<384x128xf32>
    %c0_3 = arith.constant 0 : index
    %c0_4 = arith.constant 0 : index
    %3 = vector.load %arg4[%c0_3, %c0_4] : memref<1x128xf32, #tpu.memory_space<vmem>>, vector<1x128xf32>
    %4 = vector.broadcast %3 : vector<1x128xf32> to vector<384x128xf32>
    %5 = arith.addf %2, %4 : vector<384x128xf32>
    %c0_5 = arith.constant 0 : index
    %c0_6 = arith.constant 0 : index
    %6 = vector.load %arg5[%c0_5, %c0_6] : memref<384x128xf32, #tpu.memory_space<vmem>>, vector<384x128xf32>
    tpu.vector_store %arg5[%c0_5, %c0_6], %5 {strides = array<i32>} : memref<384x128xf32, #tpu.memory_space<vmem>>, vector<384x128xf32>,
    return
  }
  func.func @transform_0(%arg0: i32, %arg1: i32) -> (i32, i32) {
    %c0_i32 = arith.constant 0 : i32
    %c0_i32_0 = arith.constant 0 : i32
    return %arg0, %c0_i32 : i32, i32
  }
  func.func @transform_1(%arg0: i32, %arg1: i32) -> (i32, i32) {
    %c0_i32 = arith.constant 0 : i32
    %c0_i32_0 = arith.constant 0 : i32
    return %c0_i32, %arg1 : i32, i32
  }
  func.func @transform_2(%arg0: i32, %arg1: i32) -> (i32, i32) {
    %c0_i32 = arith.constant 0 : i32
    %c0_i32_0 = arith.constant 0 : i32
    return %c0_i32, %arg1 : i32, i32
  }
  func.func @transform_3(%arg0: i32, %arg1: i32) -> (i32, i32) {
    %c0_i32 = arith.constant 0 : i32
    return %arg0, %arg1 : i32, i32
  }
}

module attributes {stable_mosaic.version = 11 : i64} {
  func.func @_mm_epilogue_kernel(%arg0: i32, %arg1: i32, %arg2: memref<512x112xbf16, #tpu.memory_space<vmem>>, %arg3: memref<112x128xbf16, #tpu.memory_space<vmem>>, %arg4: memref<1x128xf32, #tpu.memory_space<vmem>>, %arg5: memref<512x128xf32, #tpu.memory_space<vmem>>) attributes {dimension_semantics = [#tpu.dimension_semantics<parallel>, #tpu.dimension_semantics<parallel>], iteration_bounds = array<i64: 4, 1>, scalar_prefetch = 0 : i64, scratch_operands = 0 : i64, tpu.core_type = #tpu.core_type<tc>, window_params = [{transform_indices = @transform_0, window_bounds = array<i64: 512, 112>}, {transform_indices = @transform_1, window_bounds = array<i64: 112, 128>}, {transform_indices = @transform_2, window_bounds = array<i64: 1, 128>}, {transform_indices = @transform_3, window_bounds = array<i64: 512, 128>}]} {
    %c0 = arith.constant 0 : index
    %c0_0 = arith.constant 0 : index
    %0 = vector.load %arg2[%c0, %c0_0] : memref<512x112xbf16, #tpu.memory_space<vmem>>, vector<512x112xbf16>
    %c0_1 = arith.constant 0 : index
    %c0_2 = arith.constant 0 : index
    %1 = vector.load %arg3[%c0_1, %c0_2] : memref<112x128xbf16, #tpu.memory_space<vmem>>, vector<112x128xbf16>
    %cst = arith.constant dense<0.000000e+00> : vector<512x128xf32>
    %2 = tpu.matmul %0, %1, %cst {dimension_numbers = #tpu.dot_dimension_numbers<[1], [0], [0], [1], [0, 0, 1, 1], [], []>} : vector<512x112xbf16>, vector<112x128xbf16>, vector<512x128xf32> -> vector<512x128xf32>
    %c0_3 = arith.constant 0 : index
    %c0_4 = arith.constant 0 : index
    %3 = vector.load %arg4[%c0_3, %c0_4] : memref<1x128xf32, #tpu.memory_space<vmem>>, vector<1x128xf32>
    %4 = vector.broadcast %3 : vector<1x128xf32> to vector<512x128xf32>
    %5 = arith.addf %2, %4 : vector<512x128xf32>
    %cst_5 = arith.constant 0.000000e+00 : f32
    %6 = vector.broadcast %cst_5 : f32 to vector<512x128xf32>
    %7 = arith.cmpf oge, %5, %6 : vector<512x128xf32>
    %cst_6 = arith.constant 2.000000e-01 : f32
    %8 = vector.broadcast %cst_6 : f32 to vector<512x128xf32>
    %9 = arith.mulf %8, %5 : vector<512x128xf32>
    %10 = arith.select %7, %5, %9 : vector<512x128xi1>, vector<512x128xf32>
    %c0_7 = arith.constant 0 : index
    %c0_8 = arith.constant 0 : index
    %11 = vector.load %arg5[%c0_7, %c0_8] : memref<512x128xf32, #tpu.memory_space<vmem>>, vector<512x128xf32>
    tpu.vector_store %arg5[%c0_7, %c0_8], %10 {strides = array<i32>} : memref<512x128xf32, #tpu.memory_space<vmem>>, vector<512x128xf32>,
    return
  }
  func.func @transform_0(%arg0: i32, %arg1: i32) -> (i32, i32) {
    %c0_i32 = arith.constant 0 : i32
    %c0_i32_0 = arith.constant 0 : i32
    return %arg0, %c0_i32 : i32, i32
  }
  func.func @transform_1(%arg0: i32, %arg1: i32) -> (i32, i32) {
    %c0_i32 = arith.constant 0 : i32
    %c0_i32_0 = arith.constant 0 : i32
    return %c0_i32, %arg1 : i32, i32
  }
  func.func @transform_2(%arg0: i32, %arg1: i32) -> (i32, i32) {
    %c0_i32 = arith.constant 0 : i32
    %c0_i32_0 = arith.constant 0 : i32
    return %c0_i32, %arg1 : i32, i32
  }
  func.func @transform_3(%arg0: i32, %arg1: i32) -> (i32, i32) {
    %c0_i32 = arith.constant 0 : i32
    return %arg0, %arg1 : i32, i32
  }
}

module attributes {stable_mosaic.version = 11 : i64} {
  func.func @_bn_leaky_kernel(%arg0: i32, %arg1: memref<512x32xf32, #tpu.memory_space<vmem>>, %arg2: memref<1x32xf32, #tpu.memory_space<vmem>>, %arg3: memref<1x32xf32, #tpu.memory_space<vmem>>, %arg4: memref<512x32xf32, #tpu.memory_space<vmem>>) attributes {dimension_semantics = [#tpu.dimension_semantics<arbitrary>], iteration_bounds = array<i64: 1>, scalar_prefetch = 0 : i64, scratch_operands = 0 : i64, tpu.core_type = #tpu.core_type<tc>, window_params = [{pipeline_mode = #tpu.pipeline_mode<synchronous>, transform_indices = @transform_0, window_bounds = array<i64: 512, 32>}, {pipeline_mode = #tpu.pipeline_mode<synchronous>, transform_indices = @transform_1, window_bounds = array<i64: 1, 32>}, {pipeline_mode = #tpu.pipeline_mode<synchronous>, transform_indices = @transform_2, window_bounds = array<i64: 1, 32>}, {pipeline_mode = #tpu.pipeline_mode<synchronous>, transform_indices = @transform_3, window_bounds = array<i64: 512, 32>}]} {
    %c0 = arith.constant 0 : index
    %c0_0 = arith.constant 0 : index
    %0 = vector.load %arg1[%c0, %c0_0] : memref<512x32xf32, #tpu.memory_space<vmem>>, vector<512x32xf32>
    %cst = arith.constant dense<0.000000e+00> : vector<32xf32>
    %1 = vector.multi_reduction <add>, %0, %cst [0] : vector<512x32xf32> to vector<32xf32>
    %2 = vector.shape_cast %1 : vector<32xf32> to vector<1x32xf32>
    %cst_1 = arith.constant 5.120000e+02 : f32
    %3 = vector.broadcast %cst_1 : f32 to vector<1x32xf32>
    %4 = arith.divf %2, %3 : vector<1x32xf32>
    %5 = vector.broadcast %4 : vector<1x32xf32> to vector<512x32xf32>
    %6 = arith.subf %0, %5 : vector<512x32xf32>
    %7 = arith.mulf %6, %6 : vector<512x32xf32>
    %cst_2 = arith.constant dense<0.000000e+00> : vector<32xf32>
    %8 = vector.multi_reduction <add>, %7, %cst_2 [0] : vector<512x32xf32> to vector<32xf32>
    %9 = vector.shape_cast %8 : vector<32xf32> to vector<1x32xf32>
    %cst_3 = arith.constant 5.120000e+02 : f32
    %10 = vector.broadcast %cst_3 : f32 to vector<1x32xf32>
    %11 = arith.divf %9, %10 : vector<1x32xf32>
    %12 = vector.broadcast %4 : vector<1x32xf32> to vector<512x32xf32>
    %13 = arith.subf %0, %12 : vector<512x32xf32>
    %cst_4 = arith.constant 9.99999974E-6 : f32
    %14 = vector.broadcast %cst_4 : f32 to vector<1x32xf32>
    %15 = arith.addf %11, %14 : vector<1x32xf32>
    %16 = math.rsqrt %15 : vector<1x32xf32>
    %17 = vector.broadcast %16 : vector<1x32xf32> to vector<512x32xf32>
    %18 = arith.mulf %13, %17 : vector<512x32xf32>
    %c0_5 = arith.constant 0 : index
    %c0_6 = arith.constant 0 : index
    %19 = vector.load %arg2[%c0_5, %c0_6] : memref<1x32xf32, #tpu.memory_space<vmem>>, vector<1x32xf32>
    %20 = vector.broadcast %19 : vector<1x32xf32> to vector<512x32xf32>
    %21 = arith.mulf %18, %20 : vector<512x32xf32>
    %c0_7 = arith.constant 0 : index
    %c0_8 = arith.constant 0 : index
    %22 = vector.load %arg3[%c0_7, %c0_8] : memref<1x32xf32, #tpu.memory_space<vmem>>, vector<1x32xf32>
    %23 = vector.broadcast %22 : vector<1x32xf32> to vector<512x32xf32>
    %24 = arith.addf %21, %23 : vector<512x32xf32>
    %cst_9 = arith.constant 0.000000e+00 : f32
    %25 = vector.broadcast %cst_9 : f32 to vector<512x32xf32>
    %26 = arith.cmpf oge, %24, %25 : vector<512x32xf32>
    %cst_10 = arith.constant 2.000000e-01 : f32
    %27 = vector.broadcast %cst_10 : f32 to vector<512x32xf32>
    %28 = arith.mulf %27, %24 : vector<512x32xf32>
    %29 = arith.select %26, %24, %28 : vector<512x32xi1>, vector<512x32xf32>
    %c0_11 = arith.constant 0 : index
    %c0_12 = arith.constant 0 : index
    %30 = vector.load %arg4[%c0_11, %c0_12] : memref<512x32xf32, #tpu.memory_space<vmem>>, vector<512x32xf32>
    tpu.vector_store %arg4[%c0_11, %c0_12], %29 {strides = array<i32>} : memref<512x32xf32, #tpu.memory_space<vmem>>, vector<512x32xf32>,
    return
  }
  func.func @transform_0(%arg0: i32) -> (i32, i32) {
    %c0_i32 = arith.constant 0 : i32
    %c0_i32_0 = arith.constant 0 : i32
    %c0_i32_1 = arith.constant 0 : i32
    return %c0_i32, %c0_i32_0 : i32, i32
  }
  func.func @transform_1(%arg0: i32) -> (i32, i32) {
    %c0_i32 = arith.constant 0 : i32
    %c0_i32_0 = arith.constant 0 : i32
    %c0_i32_1 = arith.constant 0 : i32
    return %c0_i32, %c0_i32_0 : i32, i32
  }
  func.func @transform_2(%arg0: i32) -> (i32, i32) {
    %c0_i32 = arith.constant 0 : i32
    %c0_i32_0 = arith.constant 0 : i32
    %c0_i32_1 = arith.constant 0 : i32
    return %c0_i32, %c0_i32_0 : i32, i32
  }
  func.func @transform_3(%arg0: i32) -> (i32, i32) {
    %c0_i32 = arith.constant 0 : i32
    %c0_i32_0 = arith.constant 0 : i32
    %c0_i32_1 = arith.constant 0 : i32
    return %c0_i32, %c0_i32_0 : i32, i32
  }
}

module attributes {stable_mosaic.version = 11 : i64} {
  func.func @_mm_epilogue_kernel(%arg0: i32, %arg1: i32, %arg2: memref<512x256xbf16, #tpu.memory_space<vmem>>, %arg3: memref<256x128xbf16, #tpu.memory_space<vmem>>, %arg4: memref<1x128xf32, #tpu.memory_space<vmem>>, %arg5: memref<512x128xf32, #tpu.memory_space<vmem>>) attributes {dimension_semantics = [#tpu.dimension_semantics<parallel>, #tpu.dimension_semantics<parallel>], iteration_bounds = array<i64: 1, 1>, scalar_prefetch = 0 : i64, scratch_operands = 0 : i64, tpu.core_type = #tpu.core_type<tc>, window_params = [{transform_indices = @transform_0, window_bounds = array<i64: 512, 256>}, {transform_indices = @transform_1, window_bounds = array<i64: 256, 128>}, {transform_indices = @transform_2, window_bounds = array<i64: 1, 128>}, {transform_indices = @transform_3, window_bounds = array<i64: 512, 128>}]} {
    %c0 = arith.constant 0 : index
    %c0_0 = arith.constant 0 : index
    %0 = vector.load %arg2[%c0, %c0_0] : memref<512x256xbf16, #tpu.memory_space<vmem>>, vector<512x256xbf16>
    %c0_1 = arith.constant 0 : index
    %c0_2 = arith.constant 0 : index
    %1 = vector.load %arg3[%c0_1, %c0_2] : memref<256x128xbf16, #tpu.memory_space<vmem>>, vector<256x128xbf16>
    %cst = arith.constant dense<0.000000e+00> : vector<512x128xf32>
    %2 = tpu.matmul %0, %1, %cst {dimension_numbers = #tpu.dot_dimension_numbers<[1], [0], [0], [1], [0, 0, 1, 1], [], []>} : vector<512x256xbf16>, vector<256x128xbf16>, vector<512x128xf32> -> vector<512x128xf32>
    %c0_3 = arith.constant 0 : index
    %c0_4 = arith.constant 0 : index
    %3 = vector.load %arg4[%c0_3, %c0_4] : memref<1x128xf32, #tpu.memory_space<vmem>>, vector<1x128xf32>
    %4 = vector.broadcast %3 : vector<1x128xf32> to vector<512x128xf32>
    %5 = arith.addf %2, %4 : vector<512x128xf32>
    %c0_5 = arith.constant 0 : index
    %c0_6 = arith.constant 0 : index
    %6 = vector.load %arg5[%c0_5, %c0_6] : memref<512x128xf32, #tpu.memory_space<vmem>>, vector<512x128xf32>
    tpu.vector_store %arg5[%c0_5, %c0_6], %5 {strides = array<i32>} : memref<512x128xf32, #tpu.memory_space<vmem>>, vector<512x128xf32>,
    return
  }
  func.func @transform_0(%arg0: i32, %arg1: i32) -> (i32, i32) {
    %c0_i32 = arith.constant 0 : i32
    %c0_i32_0 = arith.constant 0 : i32
    return %arg0, %c0_i32 : i32, i32
  }
  func.func @transform_1(%arg0: i32, %arg1: i32) -> (i32, i32) {
    %c0_i32 = arith.constant 0 : i32
    %c0_i32_0 = arith.constant 0 : i32
    return %c0_i32, %arg1 : i32, i32
  }
  func.func @transform_2(%arg0: i32, %arg1: i32) -> (i32, i32) {
    %c0_i32 = arith.constant 0 : i32
    %c0_i32_0 = arith.constant 0 : i32
    return %c0_i32, %arg1 : i32, i32
  }
  func.func @transform_3(%arg0: i32, %arg1: i32) -> (i32, i32) {
    %c0_i32 = arith.constant 0 : i32
    return %arg0, %arg1 : i32, i32
  }
}

module attributes {stable_mosaic.version = 11 : i64} {
  func.func @_mm_epilogue_kernel(%arg0: i32, %arg1: i32, %arg2: memref<128x512xbf16, #tpu.memory_space<vmem>>, %arg3: memref<512x128xbf16, #tpu.memory_space<vmem>>, %arg4: memref<1x128xf32, #tpu.memory_space<vmem>>, %arg5: memref<128x128xf32, #tpu.memory_space<vmem>>) attributes {dimension_semantics = [#tpu.dimension_semantics<parallel>, #tpu.dimension_semantics<parallel>], iteration_bounds = array<i64: 1, 1>, scalar_prefetch = 0 : i64, scratch_operands = 0 : i64, tpu.core_type = #tpu.core_type<tc>, window_params = [{transform_indices = @transform_0, window_bounds = array<i64: 128, 512>}, {transform_indices = @transform_1, window_bounds = array<i64: 512, 128>}, {transform_indices = @transform_2, window_bounds = array<i64: 1, 128>}, {transform_indices = @transform_3, window_bounds = array<i64: 128, 128>}]} {
    %c0 = arith.constant 0 : index
    %c0_0 = arith.constant 0 : index
    %0 = vector.load %arg2[%c0, %c0_0] : memref<128x512xbf16, #tpu.memory_space<vmem>>, vector<128x512xbf16>
    %c0_1 = arith.constant 0 : index
    %c0_2 = arith.constant 0 : index
    %1 = vector.load %arg3[%c0_1, %c0_2] : memref<512x128xbf16, #tpu.memory_space<vmem>>, vector<512x128xbf16>
    %cst = arith.constant dense<0.000000e+00> : vector<128x128xf32>
    %2 = tpu.matmul %0, %1, %cst {dimension_numbers = #tpu.dot_dimension_numbers<[1], [0], [0], [1], [0, 0, 1, 1], [], []>} : vector<128x512xbf16>, vector<512x128xbf16>, vector<128x128xf32> -> vector<128x128xf32>
    %c0_3 = arith.constant 0 : index
    %c0_4 = arith.constant 0 : index
    %3 = vector.load %arg4[%c0_3, %c0_4] : memref<1x128xf32, #tpu.memory_space<vmem>>, vector<1x128xf32>
    %4 = vector.broadcast %3 : vector<1x128xf32> to vector<128x128xf32>
    %5 = arith.addf %2, %4 : vector<128x128xf32>
    %c0_5 = arith.constant 0 : index
    %c0_6 = arith.constant 0 : index
    %6 = vector.load %arg5[%c0_5, %c0_6] : memref<128x128xf32, #tpu.memory_space<vmem>>, vector<128x128xf32>
    tpu.vector_store %arg5[%c0_5, %c0_6], %5 {strides = array<i32>} : memref<128x128xf32, #tpu.memory_space<vmem>>, vector<128x128xf32>,
    return
  }
  func.func @transform_0(%arg0: i32, %arg1: i32) -> (i32, i32) {
    %c0_i32 = arith.constant 0 : i32
    %c0_i32_0 = arith.constant 0 : i32
    return %arg0, %c0_i32 : i32, i32
  }
  func.func @transform_1(%arg0: i32, %arg1: i32) -> (i32, i32) {
    %c0_i32 = arith.constant 0 : i32
    %c0_i32_0 = arith.constant 0 : i32
    return %c0_i32, %arg1 : i32, i32
  }
  func.func @transform_2(%arg0: i32, %arg1: i32) -> (i32, i32) {
    %c0_i32 = arith.constant 0 : i32
    %c0_i32_0 = arith.constant 0 : i32
    return %c0_i32, %arg1 : i32, i32
  }
  func.func @transform_3(%arg0: i32, %arg1: i32) -> (i32, i32) {
    %c0_i32 = arith.constant 0 : i32
    return %arg0, %arg1 : i32, i32
  }
}

module attributes {stable_mosaic.version = 11 : i64} {
  func.func @_bn_leaky_kernel(%arg0: i32, %arg1: memref<128x64xf32, #tpu.memory_space<vmem>>, %arg2: memref<1x64xf32, #tpu.memory_space<vmem>>, %arg3: memref<1x64xf32, #tpu.memory_space<vmem>>, %arg4: memref<128x64xf32, #tpu.memory_space<vmem>>) attributes {dimension_semantics = [#tpu.dimension_semantics<arbitrary>], iteration_bounds = array<i64: 1>, scalar_prefetch = 0 : i64, scratch_operands = 0 : i64, tpu.core_type = #tpu.core_type<tc>, window_params = [{pipeline_mode = #tpu.pipeline_mode<synchronous>, transform_indices = @transform_0, window_bounds = array<i64: 128, 64>}, {pipeline_mode = #tpu.pipeline_mode<synchronous>, transform_indices = @transform_1, window_bounds = array<i64: 1, 64>}, {pipeline_mode = #tpu.pipeline_mode<synchronous>, transform_indices = @transform_2, window_bounds = array<i64: 1, 64>}, {pipeline_mode = #tpu.pipeline_mode<synchronous>, transform_indices = @transform_3, window_bounds = array<i64: 128, 64>}]} {
    %c0 = arith.constant 0 : index
    %c0_0 = arith.constant 0 : index
    %0 = vector.load %arg1[%c0, %c0_0] : memref<128x64xf32, #tpu.memory_space<vmem>>, vector<128x64xf32>
    %cst = arith.constant dense<0.000000e+00> : vector<64xf32>
    %1 = vector.multi_reduction <add>, %0, %cst [0] : vector<128x64xf32> to vector<64xf32>
    %2 = vector.shape_cast %1 : vector<64xf32> to vector<1x64xf32>
    %cst_1 = arith.constant 1.280000e+02 : f32
    %3 = vector.broadcast %cst_1 : f32 to vector<1x64xf32>
    %4 = arith.divf %2, %3 : vector<1x64xf32>
    %5 = vector.broadcast %4 : vector<1x64xf32> to vector<128x64xf32>
    %6 = arith.subf %0, %5 : vector<128x64xf32>
    %7 = arith.mulf %6, %6 : vector<128x64xf32>
    %cst_2 = arith.constant dense<0.000000e+00> : vector<64xf32>
    %8 = vector.multi_reduction <add>, %7, %cst_2 [0] : vector<128x64xf32> to vector<64xf32>
    %9 = vector.shape_cast %8 : vector<64xf32> to vector<1x64xf32>
    %cst_3 = arith.constant 1.280000e+02 : f32
    %10 = vector.broadcast %cst_3 : f32 to vector<1x64xf32>
    %11 = arith.divf %9, %10 : vector<1x64xf32>
    %12 = vector.broadcast %4 : vector<1x64xf32> to vector<128x64xf32>
    %13 = arith.subf %0, %12 : vector<128x64xf32>
    %cst_4 = arith.constant 9.99999974E-6 : f32
    %14 = vector.broadcast %cst_4 : f32 to vector<1x64xf32>
    %15 = arith.addf %11, %14 : vector<1x64xf32>
    %16 = math.rsqrt %15 : vector<1x64xf32>
    %17 = vector.broadcast %16 : vector<1x64xf32> to vector<128x64xf32>
    %18 = arith.mulf %13, %17 : vector<128x64xf32>
    %c0_5 = arith.constant 0 : index
    %c0_6 = arith.constant 0 : index
    %19 = vector.load %arg2[%c0_5, %c0_6] : memref<1x64xf32, #tpu.memory_space<vmem>>, vector<1x64xf32>
    %20 = vector.broadcast %19 : vector<1x64xf32> to vector<128x64xf32>
    %21 = arith.mulf %18, %20 : vector<128x64xf32>
    %c0_7 = arith.constant 0 : index
    %c0_8 = arith.constant 0 : index
    %22 = vector.load %arg3[%c0_7, %c0_8] : memref<1x64xf32, #tpu.memory_space<vmem>>, vector<1x64xf32>
    %23 = vector.broadcast %22 : vector<1x64xf32> to vector<128x64xf32>
    %24 = arith.addf %21, %23 : vector<128x64xf32>
    %cst_9 = arith.constant 0.000000e+00 : f32
    %25 = vector.broadcast %cst_9 : f32 to vector<128x64xf32>
    %26 = arith.cmpf oge, %24, %25 : vector<128x64xf32>
    %cst_10 = arith.constant 2.000000e-01 : f32
    %27 = vector.broadcast %cst_10 : f32 to vector<128x64xf32>
    %28 = arith.mulf %27, %24 : vector<128x64xf32>
    %29 = arith.select %26, %24, %28 : vector<128x64xi1>, vector<128x64xf32>
    %c0_11 = arith.constant 0 : index
    %c0_12 = arith.constant 0 : index
    %30 = vector.load %arg4[%c0_11, %c0_12] : memref<128x64xf32, #tpu.memory_space<vmem>>, vector<128x64xf32>
    tpu.vector_store %arg4[%c0_11, %c0_12], %29 {strides = array<i32>} : memref<128x64xf32, #tpu.memory_space<vmem>>, vector<128x64xf32>,
    return
  }
  func.func @transform_0(%arg0: i32) -> (i32, i32) {
    %c0_i32 = arith.constant 0 : i32
    %c0_i32_0 = arith.constant 0 : i32
    %c0_i32_1 = arith.constant 0 : i32
    return %c0_i32, %c0_i32_0 : i32, i32
  }
  func.func @transform_1(%arg0: i32) -> (i32, i32) {
    %c0_i32 = arith.constant 0 : i32
    %c0_i32_0 = arith.constant 0 : i32
    %c0_i32_1 = arith.constant 0 : i32
    return %c0_i32, %c0_i32_0 : i32, i32
  }
  func.func @transform_2(%arg0: i32) -> (i32, i32) {
    %c0_i32 = arith.constant 0 : i32
    %c0_i32_0 = arith.constant 0 : i32
    %c0_i32_1 = arith.constant 0 : i32
    return %c0_i32, %c0_i32_0 : i32, i32
  }
  func.func @transform_3(%arg0: i32) -> (i32, i32) {
    %c0_i32 = arith.constant 0 : i32
    %c0_i32_0 = arith.constant 0 : i32
    %c0_i32_1 = arith.constant 0 : i32
    return %c0_i32, %c0_i32_0 : i32, i32
  }
}

module attributes {stable_mosaic.version = 11 : i64} {
  func.func @_mm_epilogue_kernel(%arg0: i32, %arg1: i32, %arg2: memref<32x1024xbf16, #tpu.memory_space<vmem>>, %arg3: memref<1024x128xbf16, #tpu.memory_space<vmem>>, %arg4: memref<1x128xf32, #tpu.memory_space<vmem>>, %arg5: memref<32x128xf32, #tpu.memory_space<vmem>>) attributes {dimension_semantics = [#tpu.dimension_semantics<parallel>, #tpu.dimension_semantics<parallel>], iteration_bounds = array<i64: 1, 1>, scalar_prefetch = 0 : i64, scratch_operands = 0 : i64, tpu.core_type = #tpu.core_type<tc>, window_params = [{transform_indices = @transform_0, window_bounds = array<i64: 32, 1024>}, {transform_indices = @transform_1, window_bounds = array<i64: 1024, 128>}, {transform_indices = @transform_2, window_bounds = array<i64: 1, 128>}, {transform_indices = @transform_3, window_bounds = array<i64: 32, 128>}]} {
    %c0 = arith.constant 0 : index
    %c0_0 = arith.constant 0 : index
    %0 = vector.load %arg2[%c0, %c0_0] : memref<32x1024xbf16, #tpu.memory_space<vmem>>, vector<32x1024xbf16>
    %c0_1 = arith.constant 0 : index
    %c0_2 = arith.constant 0 : index
    %1 = vector.load %arg3[%c0_1, %c0_2] : memref<1024x128xbf16, #tpu.memory_space<vmem>>, vector<1024x128xbf16>
    %cst = arith.constant dense<0.000000e+00> : vector<32x128xf32>
    %2 = tpu.matmul %0, %1, %cst {dimension_numbers = #tpu.dot_dimension_numbers<[1], [0], [0], [1], [0, 0, 1, 1], [], []>} : vector<32x1024xbf16>, vector<1024x128xbf16>, vector<32x128xf32> -> vector<32x128xf32>
    %c0_3 = arith.constant 0 : index
    %c0_4 = arith.constant 0 : index
    %3 = vector.load %arg4[%c0_3, %c0_4] : memref<1x128xf32, #tpu.memory_space<vmem>>, vector<1x128xf32>
    %4 = vector.broadcast %3 : vector<1x128xf32> to vector<32x128xf32>
    %5 = arith.addf %2, %4 : vector<32x128xf32>
    %c0_5 = arith.constant 0 : index
    %c0_6 = arith.constant 0 : index
    %6 = vector.load %arg5[%c0_5, %c0_6] : memref<32x128xf32, #tpu.memory_space<vmem>>, vector<32x128xf32>
    tpu.vector_store %arg5[%c0_5, %c0_6], %5 {strides = array<i32>} : memref<32x128xf32, #tpu.memory_space<vmem>>, vector<32x128xf32>,
    return
  }
  func.func @transform_0(%arg0: i32, %arg1: i32) -> (i32, i32) {
    %c0_i32 = arith.constant 0 : i32
    %c0_i32_0 = arith.constant 0 : i32
    return %arg0, %c0_i32 : i32, i32
  }
  func.func @transform_1(%arg0: i32, %arg1: i32) -> (i32, i32) {
    %c0_i32 = arith.constant 0 : i32
    %c0_i32_0 = arith.constant 0 : i32
    return %c0_i32, %arg1 : i32, i32
  }
  func.func @transform_2(%arg0: i32, %arg1: i32) -> (i32, i32) {
    %c0_i32 = arith.constant 0 : i32
    %c0_i32_0 = arith.constant 0 : i32
    return %c0_i32, %arg1 : i32, i32
  }
  func.func @transform_3(%arg0: i32, %arg1: i32) -> (i32, i32) {
    %c0_i32 = arith.constant 0 : i32
    return %arg0, %arg1 : i32, i32
  }
}

module attributes {stable_mosaic.version = 11 : i64} {
  func.func @_bn_leaky_kernel(%arg0: i32, %arg1: memref<32x128xf32, #tpu.memory_space<vmem>>, %arg2: memref<1x128xf32, #tpu.memory_space<vmem>>, %arg3: memref<1x128xf32, #tpu.memory_space<vmem>>, %arg4: memref<32x128xf32, #tpu.memory_space<vmem>>) attributes {dimension_semantics = [#tpu.dimension_semantics<arbitrary>], iteration_bounds = array<i64: 1>, scalar_prefetch = 0 : i64, scratch_operands = 0 : i64, tpu.core_type = #tpu.core_type<tc>, window_params = [{pipeline_mode = #tpu.pipeline_mode<synchronous>, transform_indices = @transform_0, window_bounds = array<i64: 32, 128>}, {pipeline_mode = #tpu.pipeline_mode<synchronous>, transform_indices = @transform_1, window_bounds = array<i64: 1, 128>}, {pipeline_mode = #tpu.pipeline_mode<synchronous>, transform_indices = @transform_2, window_bounds = array<i64: 1, 128>}, {pipeline_mode = #tpu.pipeline_mode<synchronous>, transform_indices = @transform_3, window_bounds = array<i64: 32, 128>}]} {
    %c0 = arith.constant 0 : index
    %c0_0 = arith.constant 0 : index
    %0 = vector.load %arg1[%c0, %c0_0] : memref<32x128xf32, #tpu.memory_space<vmem>>, vector<32x128xf32>
    %cst = arith.constant dense<0.000000e+00> : vector<128xf32>
    %1 = vector.multi_reduction <add>, %0, %cst [0] : vector<32x128xf32> to vector<128xf32>
    %2 = vector.shape_cast %1 : vector<128xf32> to vector<1x128xf32>
    %cst_1 = arith.constant 3.200000e+01 : f32
    %3 = vector.broadcast %cst_1 : f32 to vector<1x128xf32>
    %4 = arith.divf %2, %3 : vector<1x128xf32>
    %5 = vector.broadcast %4 : vector<1x128xf32> to vector<32x128xf32>
    %6 = arith.subf %0, %5 : vector<32x128xf32>
    %7 = arith.mulf %6, %6 : vector<32x128xf32>
    %cst_2 = arith.constant dense<0.000000e+00> : vector<128xf32>
    %8 = vector.multi_reduction <add>, %7, %cst_2 [0] : vector<32x128xf32> to vector<128xf32>
    %9 = vector.shape_cast %8 : vector<128xf32> to vector<1x128xf32>
    %cst_3 = arith.constant 3.200000e+01 : f32
    %10 = vector.broadcast %cst_3 : f32 to vector<1x128xf32>
    %11 = arith.divf %9, %10 : vector<1x128xf32>
    %12 = vector.broadcast %4 : vector<1x128xf32> to vector<32x128xf32>
    %13 = arith.subf %0, %12 : vector<32x128xf32>
    %cst_4 = arith.constant 9.99999974E-6 : f32
    %14 = vector.broadcast %cst_4 : f32 to vector<1x128xf32>
    %15 = arith.addf %11, %14 : vector<1x128xf32>
    %16 = math.rsqrt %15 : vector<1x128xf32>
    %17 = vector.broadcast %16 : vector<1x128xf32> to vector<32x128xf32>
    %18 = arith.mulf %13, %17 : vector<32x128xf32>
    %c0_5 = arith.constant 0 : index
    %c0_6 = arith.constant 0 : index
    %19 = vector.load %arg2[%c0_5, %c0_6] : memref<1x128xf32, #tpu.memory_space<vmem>>, vector<1x128xf32>
    %20 = vector.broadcast %19 : vector<1x128xf32> to vector<32x128xf32>
    %21 = arith.mulf %18, %20 : vector<32x128xf32>
    %c0_7 = arith.constant 0 : index
    %c0_8 = arith.constant 0 : index
    %22 = vector.load %arg3[%c0_7, %c0_8] : memref<1x128xf32, #tpu.memory_space<vmem>>, vector<1x128xf32>
    %23 = vector.broadcast %22 : vector<1x128xf32> to vector<32x128xf32>
    %24 = arith.addf %21, %23 : vector<32x128xf32>
    %cst_9 = arith.constant 0.000000e+00 : f32
    %25 = vector.broadcast %cst_9 : f32 to vector<32x128xf32>
    %26 = arith.cmpf oge, %24, %25 : vector<32x128xf32>
    %cst_10 = arith.constant 2.000000e-01 : f32
    %27 = vector.broadcast %cst_10 : f32 to vector<32x128xf32>
    %28 = arith.mulf %27, %24 : vector<32x128xf32>
    %29 = arith.select %26, %24, %28 : vector<32x128xi1>, vector<32x128xf32>
    %c0_11 = arith.constant 0 : index
    %c0_12 = arith.constant 0 : index
    %30 = vector.load %arg4[%c0_11, %c0_12] : memref<32x128xf32, #tpu.memory_space<vmem>>, vector<32x128xf32>
    tpu.vector_store %arg4[%c0_11, %c0_12], %29 {strides = array<i32>} : memref<32x128xf32, #tpu.memory_space<vmem>>, vector<32x128xf32>,
    return
  }
  func.func @transform_0(%arg0: i32) -> (i32, i32) {
    %c0_i32 = arith.constant 0 : i32
    %c0_i32_0 = arith.constant 0 : i32
    %c0_i32_1 = arith.constant 0 : i32
    return %c0_i32, %c0_i32_0 : i32, i32
  }
  func.func @transform_1(%arg0: i32) -> (i32, i32) {
    %c0_i32 = arith.constant 0 : i32
    %c0_i32_0 = arith.constant 0 : i32
    %c0_i32_1 = arith.constant 0 : i32
    return %c0_i32, %c0_i32_0 : i32, i32
  }
  func.func @transform_2(%arg0: i32) -> (i32, i32) {
    %c0_i32 = arith.constant 0 : i32
    %c0_i32_0 = arith.constant 0 : i32
    %c0_i32_1 = arith.constant 0 : i32
    return %c0_i32, %c0_i32_0 : i32, i32
  }
  func.func @transform_3(%arg0: i32) -> (i32, i32) {
    %c0_i32 = arith.constant 0 : i32
    %c0_i32_0 = arith.constant 0 : i32
    %c0_i32_1 = arith.constant 0 : i32
    return %c0_i32, %c0_i32_0 : i32, i32
  }
}

module attributes {stable_mosaic.version = 11 : i64} {
  func.func @_mm_epilogue_kernel(%arg0: i32, %arg1: i32, %arg2: memref<54x2048xbf16, #tpu.memory_space<vmem>>, %arg3: memref<2048x128xbf16, #tpu.memory_space<vmem>>, %arg4: memref<1x128xf32, #tpu.memory_space<vmem>>, %arg5: memref<54x128xf32, #tpu.memory_space<vmem>>) attributes {dimension_semantics = [#tpu.dimension_semantics<parallel>, #tpu.dimension_semantics<parallel>], iteration_bounds = array<i64: 1, 1>, scalar_prefetch = 0 : i64, scratch_operands = 0 : i64, tpu.core_type = #tpu.core_type<tc>, window_params = [{transform_indices = @transform_0, window_bounds = array<i64: 54, 2048>}, {transform_indices = @transform_1, window_bounds = array<i64: 2048, 128>}, {transform_indices = @transform_2, window_bounds = array<i64: 1, 128>}, {transform_indices = @transform_3, window_bounds = array<i64: 54, 128>}]} {
    %c0 = arith.constant 0 : index
    %c0_0 = arith.constant 0 : index
    %0 = vector.load %arg2[%c0, %c0_0] : memref<54x2048xbf16, #tpu.memory_space<vmem>>, vector<54x2048xbf16>
    %c0_1 = arith.constant 0 : index
    %c0_2 = arith.constant 0 : index
    %1 = vector.load %arg3[%c0_1, %c0_2] : memref<2048x128xbf16, #tpu.memory_space<vmem>>, vector<2048x128xbf16>
    %cst = arith.constant dense<0.000000e+00> : vector<54x128xf32>
    %2 = tpu.matmul %0, %1, %cst {dimension_numbers = #tpu.dot_dimension_numbers<[1], [0], [0], [1], [0, 0, 1, 1], [], []>} : vector<54x2048xbf16>, vector<2048x128xbf16>, vector<54x128xf32> -> vector<54x128xf32>
    %c0_3 = arith.constant 0 : index
    %c0_4 = arith.constant 0 : index
    %3 = vector.load %arg4[%c0_3, %c0_4] : memref<1x128xf32, #tpu.memory_space<vmem>>, vector<1x128xf32>
    %4 = vector.broadcast %3 : vector<1x128xf32> to vector<54x128xf32>
    %5 = arith.addf %2, %4 : vector<54x128xf32>
    %cst_5 = arith.constant 0.000000e+00 : f32
    %6 = vector.broadcast %cst_5 : f32 to vector<54x128xf32>
    %7 = arith.cmpf oge, %5, %6 : vector<54x128xf32>
    %cst_6 = arith.constant 2.000000e-01 : f32
    %8 = vector.broadcast %cst_6 : f32 to vector<54x128xf32>
    %9 = arith.mulf %8, %5 : vector<54x128xf32>
    %10 = arith.select %7, %5, %9 : vector<54x128xi1>, vector<54x128xf32>
    %c0_7 = arith.constant 0 : index
    %c0_8 = arith.constant 0 : index
    %11 = vector.load %arg5[%c0_7, %c0_8] : memref<54x128xf32, #tpu.memory_space<vmem>>, vector<54x128xf32>
    tpu.vector_store %arg5[%c0_7, %c0_8], %10 {strides = array<i32>} : memref<54x128xf32, #tpu.memory_space<vmem>>, vector<54x128xf32>,
    return
  }
  func.func @transform_0(%arg0: i32, %arg1: i32) -> (i32, i32) {
    %c0_i32 = arith.constant 0 : i32
    %c0_i32_0 = arith.constant 0 : i32
    return %arg0, %c0_i32 : i32, i32
  }
  func.func @transform_1(%arg0: i32, %arg1: i32) -> (i32, i32) {
    %c0_i32 = arith.constant 0 : i32
    %c0_i32_0 = arith.constant 0 : i32
    return %c0_i32, %arg1 : i32, i32
  }
  func.func @transform_2(%arg0: i32, %arg1: i32) -> (i32, i32) {
    %c0_i32 = arith.constant 0 : i32
    %c0_i32_0 = arith.constant 0 : i32
    return %c0_i32, %arg1 : i32, i32
  }
  func.func @transform_3(%arg0: i32, %arg1: i32) -> (i32, i32) {
    %c0_i32 = arith.constant 0 : i32
    return %arg0, %arg1 : i32, i32
  }
}

</mosaic_0001>

<llo_original>
// kernel: obj_ls_d_net_forward.16
$region0: #{obj_ls_d_net_forward.16}
  #allocation0 [shape = 'u32[]', space=smem, size = 0x4, offset = 0x4, fixed_abs, tag = 'smem constant byte address 0x4 - core index']
  #allocation1 [shape = 'u32[72,128]{1,0:T(1,128)}', space=vmem, size = 0x9000, scoped, tag = 'internal scratch']
  %s0 = inlined_call_operand.vmem [shape: bf16[256,32], index: 0, kind: input, shape index: {}]
  %s1 = inlined_call_operand.vmem [shape: bf16[32,128], index: 1, kind: input, shape index: {}]
  %s2 = inlined_call_operand.vmem [shape: f32[1,128], index: 2, kind: input, shape index: {}]
  %s3 = inlined_call_operand.vmem [shape: f32[256,128], index: 3, kind: output, shape index: {}]
  %s4 = sld [smem:[#allocation0]]
  $region22: #{obj_ls_d_net_forward.16} parent=0
    _
  %s6 = ssub.s32 1, %s4
  %s7 = scalar_select 0, %s6, %s4
  // Predicated region
  $region2: #{obj_ls_d_net_forward.16} parent=0 // pred_check
    _
  $region3: #{obj_ls_d_net_forward.16} parent=0 // pred_check_branch
    %9 = sbr.rel (0) target = $region5
  $region4: #{obj_ls_d_net_forward.16} parent=0 // pred_region
    _
  $region5: #{obj_ls_d_net_forward.16} parent=0 // pred_fallthru
    _
  // Predicated region
  $region6: #{obj_ls_d_net_forward.16} parent=0 // pred_check
    _
  $region7: #{obj_ls_d_net_forward.16} parent=0 // pred_check_branch
    %11 = sbr.rel (0) target = $region9
  $region8: #{obj_ls_d_net_forward.16} parent=0 // pred_region
    _
  $region9: #{obj_ls_d_net_forward.16} parent=0 // pred_fallthru
    _
  // Predicated region
  $region10: #{obj_ls_d_net_forward.16} parent=0 // pred_check
    _
  $region11: #{obj_ls_d_net_forward.16} parent=0 // pred_check_branch
    %13 = sbr.rel (0) target = $region13
  $region12: #{obj_ls_d_net_forward.16} parent=0 // pred_region
    _
  $region13: #{obj_ls_d_net_forward.16} parent=0 // pred_fallthru
    _
  %v15 = vld [vmem:[%s0] sm:$0xf]
  %v16 = vld [vmem:[%s0 + $0x4] sm:$0xf]
  %v17 = vld [vmem:[%s0 + $0x8] sm:$0xf]
  %v18 = vld [vmem:[%s0 + $0xc] sm:$0xf]
  %v19 = vld [vmem:[%s0 + $0x10] sm:$0xf]
  %v20 = vld [vmem:[%s0 + $0x14] sm:$0xf]
  %v21 = vld [vmem:[%s0 + $0x18] sm:$0xf]
  %v22 = vld [vmem:[%s0 + $0x1c] sm:$0xf]
  %v23 = vld [vmem:[%s0 + $0x20] sm:$0xf]
  %v24 = vld [vmem:[%s0 + $0x24] sm:$0xf]
  %v25 = vld [vmem:[%s0 + $0x28] sm:$0xf]
  %v26 = vld [vmem:[%s0 + $0x2c] sm:$0xf]
  %v27 = vld [vmem:[%s0 + $0x30] sm:$0xf]
  %v28 = vld [vmem:[%s0 + $0x34] sm:$0xf]
  %v29 = vld [vmem:[%s0 + $0x38] sm:$0xf]
  %v30 = vld [vmem:[%s0 + $0x3c] sm:$0xf]
  %v31 = vld [vmem:[%s0 + $0x40] sm:$0xf]
  %v32 = vld [vmem:[%s0 + $0x44] sm:$0xf]
  %v33 = vld [vmem:[%s0 + $0x48] sm:$0xf]
  %v34 = vld [vmem:[%s0 + $0x4c] sm:$0xf]
  %v35 = vld [vmem:[%s0 + $0x50] sm:$0xf]
  %v36 = vld [vmem:[%s0 + $0x54] sm:$0xf]
  %v37 = vld [vmem:[%s0 + $0x58] sm:$0xf]
  %v38 = vld [vmem:[%s0 + $0x5c] sm:$0xf]
  %v39 = vld [vmem:[%s0 + $0x60] sm:$0xf]
  %v40 = vld [vmem:[%s0 + $0x64] sm:$0xf]
  %v41 = vld [vmem:[%s0 + $0x68] sm:$0xf]
  %v42 = vld [vmem:[%s0 + $0x6c] sm:$0xf]
  %v43 = vld [vmem:[%s0 + $0x70] sm:$0xf]
  %v44 = vld [vmem:[%s0 + $0x74] sm:$0xf]
  %v45 = vld [vmem:[%s0 + $0x78] sm:$0xf]
  %v46 = vld [vmem:[%s0 + $0x7c] sm:$0xf]
  %v47 = vld [vmem:[%s1] sm:$0xf]
  %v48 = vld [vmem:[%s1 + $0x4] sm:$0xf]
  %v49 = vld [vmem:[%s1 + $0x8] sm:$0xf]
  %v50 = vld [vmem:[%s1 + $0xc] sm:$0xf]
  %v51 = vld [vmem:[%s2] sm:$0x1]
  %v53 = vperm.slane %v51, 0
  %v87 = vunpack.c.l.b16 %v15
  %v88 = vunpack.c.l.b16 %v16
  %v89 = vunpack.c.l.b16 %v17
  %v90 = vunpack.c.l.b16 %v18
  %v91 = vunpack.c.l.b16 %v19
  %v92 = vunpack.c.l.b16 %v20
  %v93 = vunpack.c.l.b16 %v21
  %v94 = vunpack.c.l.b16 %v22
  %v95 = vunpack.c.l.b16 %v23
  %v96 = vunpack.c.l.b16 %v24
  %v97 = vunpack.c.l.b16 %v25
  %v98 = vunpack.c.l.b16 %v26
  %v99 = vunpack.c.l.b16 %v27
  %v100 = vunpack.c.l.b16 %v28
  %v101 = vunpack.c.l.b16 %v29
  %v102 = vunpack.c.l.b16 %v30
  %v103 = vunpack.c.l.b16 %v31
  %v104 = vunpack.c.l.b16 %v32
  %v105 = vunpack.c.l.b16 %v33
  %v106 = vunpack.c.l.b16 %v34
  %v107 = vunpack.c.l.b16 %v35
  %v108 = vunpack.c.l.b16 %v36
  %v109 = vunpack.c.l.b16 %v37
  %v110 = vunpack.c.l.b16 %v38
  %v111 = vunpack.c.l.b16 %v39
  %v112 = vunpack.c.l.b16 %v40
  %v113 = vunpack.c.l.b16 %v41
  %v114 = vunpack.c.l.b16 %v42
  %v115 = vunpack.c.l.b16 %v43
  %v116 = vunpack.c.l.b16 %v44
  %v117 = vunpack.c.l.b16 %v45
  %v118 = vunpack.c.l.b16 %v46
  %v119 = vpack.c.b16 %v88, %v87
  %v120 = vpack.c.b16 %v90, %v89
  %v121 = vpack.c.b16 %v92, %v91
  %v122 = vpack.c.b16 %v94, %v93
  %v123 = vpack.c.b16 %v96, %v95
  %v124 = vpack.c.b16 %v98, %v97
  %v125 = vpack.c.b16 %v100, %v99
  %v126 = vpack.c.b16 %v102, %v101
  %v127 = vpack.c.b16 %v104, %v103
  %v128 = vpack.c.b16 %v106, %v105
  %v129 = vpack.c.b16 %v108, %v107
  %v130 = vpack.c.b16 %v110, %v109
  %v131 = vpack.c.b16 %v112, %v111
  %v132 = vpack.c.b16 %v114, %v113
  %v133 = vpack.c.b16 %v116, %v115
  %v134 = vpack.c.b16 %v118, %v117
  %v139 = vunpack.c.l.b16 %v47
  %v140 = vunpack.c.l.b16 %v48
  %v141 = vunpack.c.l.b16 %v49
  %v142 = vunpack.c.l.b16 %v50
  %v143 = vpack.c.b16 %v140, %v139
  %v144 = vpack.c.b16 %v142, %v141
  %vm147 = vcmask 261120
  %v149 = vsel %vm147, %v119, 0
  %v152 = vsel %vm147, %v120, 0
  %v155 = vsel %vm147, %v121, 0
  %v158 = vsel %vm147, %v122, 0
  %v161 = vsel %vm147, %v123, 0
  %v164 = vsel %vm147, %v124, 0
  %v167 = vsel %vm147, %v125, 0
  %v170 = vsel %vm147, %v126, 0
  %v173 = vsel %vm147, %v127, 0
  %v176 = vsel %vm147, %v128, 0
  %v179 = vsel %vm147, %v129, 0
  %v182 = vsel %vm147, %v130, 0
  %v185 = vsel %vm147, %v131, 0
  %v188 = vsel %vm147, %v132, 0
  %v191 = vsel %vm147, %v133, 0
  %v194 = vsel %vm147, %v134, 0
  %196 = vmatpush.bf16.msra.mxu0 0
  %197 = vmatpush.bf16.msra.mxu0 0
  %198 = vmatpush.bf16.msra.mxu0 0
  %199 = vmatpush.bf16.msra.mxu0 0
  %200 = vmatpush.bf16.msra.mxu0 0
  %201 = vmatpush.bf16.msra.mxu0 0
  %202 = vmatpush.bf16.msra.mxu0 %v144
  %203 = vmatpush.bf16.msra.mxu0 %v143
  %204 = vmatmul.bf16.gmra.mxu0 %v149
  %v205 = vpop.f32.mrf.mxu0
  %v206 = vadd.f32 %v53, %v205
  %v207 = vpop.f32.mrf.mxu0
  %v208 = vadd.f32 %v53, %v207
  %209 = vmatmul.bf16.gmra.mxu0 %v152
  %v210 = vpop.f32.mrf.mxu0
  %v211 = vadd.f32 %v53, %v210
  %v212 = vpop.f32.mrf.mxu0
  %v213 = vadd.f32 %v53, %v212
  %214 = vmatmul.bf16.gmra.mxu0 %v155
  %v215 = vpop.f32.mrf.mxu0
  %v216 = vadd.f32 %v53, %v215
  %v217 = vpop.f32.mrf.mxu0
  %v218 = vadd.f32 %v53, %v217
  %219 = vmatmul.bf16.gmra.mxu0 %v158
  %v220 = vpop.f32.mrf.mxu0
  %v221 = vadd.f32 %v53, %v220
  %v222 = vpop.f32.mrf.mxu0
  %v223 = vadd.f32 %v53, %v222
  %224 = vmatmul.bf16.gmra.mxu0 %v161
  %v225 = vpop.f32.mrf.mxu0
  %v226 = vadd.f32 %v53, %v225
  %v227 = vpop.f32.mrf.mxu0
  %v228 = vadd.f32 %v53, %v227
  %229 = vmatmul.bf16.gmra.mxu0 %v164
  %v230 = vpop.f32.mrf.mxu0
  %v231 = vadd.f32 %v53, %v230
  %v232 = vpop.f32.mrf.mxu0
  %v233 = vadd.f32 %v53, %v232
  %234 = vmatmul.bf16.gmra.mxu0 %v167
  %v235 = vpop.f32.mrf.mxu0
  %v236 = vadd.f32 %v53, %v235
  %v237 = vpop.f32.mrf.mxu0
  %v238 = vadd.f32 %v53, %v237
  %239 = vmatmul.bf16.gmra.mxu0 %v170
  %v240 = vpop.f32.mrf.mxu0
  %v241 = vadd.f32 %v53, %v240
  %v242 = vpop.f32.mrf.mxu0
  %v243 = vadd.f32 %v53, %v242
  %244 = vmatmul.bf16.gmra.mxu0 %v173
  %v245 = vpop.f32.mrf.mxu0
  %v246 = vadd.f32 %v53, %v245
  %v247 = vpop.f32.mrf.mxu0
  %v248 = vadd.f32 %v53, %v247
  %249 = vmatmul.bf16.gmra.mxu0 %v176
  %v250 = vpop.f32.mrf.mxu0
  %v251 = vadd.f32 %v53, %v250
  %v252 = vpop.f32.mrf.mxu0
  %v253 = vadd.f32 %v53, %v252
  %254 = vmatmul.bf16.gmra.mxu0 %v179
  %v255 = vpop.f32.mrf.mxu0
  %v256 = vadd.f32 %v53, %v255
  %v257 = vpop.f32.mrf.mxu0
  %v258 = vadd.f32 %v53, %v257
  %259 = vmatmul.bf16.gmra.mxu0 %v182
  %v260 = vpop.f32.mrf.mxu0
  %v261 = vadd.f32 %v53, %v260
  %v262 = vpop.f32.mrf.mxu0
  %v263 = vadd.f32 %v53, %v262
  %264 = vmatmul.bf16.gmra.mxu0 %v185
  %v265 = vpop.f32.mrf.mxu0
  %v266 = vadd.f32 %v53, %v265
  %v267 = vpop.f32.mrf.mxu0
  %v268 = vadd.f32 %v53, %v267
  %269 = vmatmul.bf16.gmra.mxu0 %v188
  %v270 = vpop.f32.mrf.mxu0
  %v271 = vadd.f32 %v53, %v270
  %v272 = vpop.f32.mrf.mxu0
  %v273 = vadd.f32 %v53, %v272
  %274 = vmatmul.bf16.gmra.mxu0 %v191
  %v275 = vpop.f32.mrf.mxu0
  %v276 = vadd.f32 %v53, %v275
  %v277 = vpop.f32.mrf.mxu0
  %v278 = vadd.f32 %v53, %v277
  %279 = vmatmul.bf16.gmra.mxu0 %v194
  %v280 = vpop.f32.mrf.mxu0
  %v281 = vadd.f32 %v53, %v280
  %v282 = vpop.f32.mrf.mxu0
  %v283 = vadd.f32 %v53, %v282
  %284 = vdwg.mxu0
  %285 = vst [vmem:[%s3] sm:$0xff] %v206
  %286 = vst [vmem:[%s3 + $0x8] sm:$0xff] %v208
  %287 = vst [vmem:[%s3 + $0x10] sm:$0xff] %v211
  %288 = vst [vmem:[%s3 + $0x18] sm:$0xff] %v213
  %289 = vst [vmem:[%s3 + $0x20] sm:$0xff] %v216
  %290 = vst [vmem:[%s3 + $0x28] sm:$0xff] %v218
  %291 = vst [vmem:[%s3 + $0x30] sm:$0xff] %v221
  %292 = vst [vmem:[%s3 + $0x38] sm:$0xff] %v223
  %293 = vst [vmem:[%s3 + $0x40] sm:$0xff] %v226
  %294 = vst [vmem:[%s3 + $0x48] sm:$0xff] %v228
  %295 = vst [vmem:[%s3 + $0x50] sm:$0xff] %v231
  %296 = vst [vmem:[%s3 + $0x58] sm:$0xff] %v233
  %297 = vst [vmem:[%s3 + $0x60] sm:$0xff] %v236
  %298 = vst [vmem:[%s3 + $0x68] sm:$0xff] %v238
  %299 = vst [vmem:[%s3 + $0x70] sm:$0xff] %v241
  %300 = vst [vmem:[%s3 + $0x78] sm:$0xff] %v243
  %301 = vst [vmem:[%s3 + $0x80] sm:$0xff] %v246
  %302 = vst [vmem:[%s3 + $0x88] sm:$0xff] %v248
  %303 = vst [vmem:[%s3 + $0x90] sm:$0xff] %v251
  %304 = vst [vmem:[%s3 + $0x98] sm:$0xff] %v253
  %305 = vst [vmem:[%s3 + $0xa0] sm:$0xff] %v256
  %306 = vst [vmem:[%s3 + $0xa8] sm:$0xff] %v258
  %307 = vst [vmem:[%s3 + $0xb0] sm:$0xff] %v261
  %308 = vst [vmem:[%s3 + $0xb8] sm:$0xff] %v263
  %309 = vst [vmem:[%s3 + $0xc0] sm:$0xff] %v266
  %310 = vst [vmem:[%s3 + $0xc8] sm:$0xff] %v268
  %311 = vst [vmem:[%s3 + $0xd0] sm:$0xff] %v271
  %312 = vst [vmem:[%s3 + $0xd8] sm:$0xff] %v273
  %313 = vst [vmem:[%s3 + $0xe0] sm:$0xff] %v276
  %314 = vst [vmem:[%s3 + $0xe8] sm:$0xff] %v278
  %315 = vst [vmem:[%s3 + $0xf0] sm:$0xff] %v281
  %316 = vst [vmem:[%s3 + $0xf8] sm:$0xff] %v283
  // Predicated region
  $region14: #{obj_ls_d_net_forward.16} parent=0 // pred_check
    _
  $region15: #{obj_ls_d_net_forward.16} parent=0 // pred_check_branch
    %318 = sbr.rel (0) target = $region17
  $region16: #{obj_ls_d_net_forward.16} parent=0 // pred_region
    _
  $region17: #{obj_ls_d_net_forward.16} parent=0 // pred_fallthru
    _
  // Predicated region
  $region18: #{obj_ls_d_net_forward.16} parent=0 // pred_check
    _
  $region19: #{obj_ls_d_net_forward.16} parent=0 // pred_check_branch
    %320 = sbr.rel (0) target = $region21
  $region20: #{obj_ls_d_net_forward.16} parent=0 // pred_region
    _
  $region21: #{obj_ls_d_net_forward.16} parent=0 // pred_fallthru
    _

// kernel: obj_ls_d_net_forward.17
$region0: #{obj_ls_d_net_forward.17}
  #allocation0 [shape = 'u32[]', space=smem, size = 0x4, offset = 0x4, fixed_abs, tag = 'smem constant byte address 0x4 - core index']
  #allocation1 [shape = 'u32[72,128]{1,0:T(1,128)}', space=vmem, size = 0x9000, scoped, tag = 'internal scratch']
  %s0 = inlined_call_operand.vmem [shape: bf16[512,32], index: 0, kind: input, shape index: {}]
  %s1 = inlined_call_operand.vmem [shape: bf16[32,128], index: 1, kind: input, shape index: {}]
  %s2 = inlined_call_operand.vmem [shape: f32[1,128], index: 2, kind: input, shape index: {}]
  %s3 = inlined_call_operand.vmem [shape: f32[512,128], index: 3, kind: output, shape index: {}]
  %s4 = sld [smem:[#allocation0]]
  $region22: #{obj_ls_d_net_forward.17} parent=0
    _
  %s6 = ssub.s32 1, %s4
  %s7 = scalar_select 0, %s6, %s4
  // Predicated region
  $region2: #{obj_ls_d_net_forward.17} parent=0 // pred_check
    _
  $region3: #{obj_ls_d_net_forward.17} parent=0 // pred_check_branch
    %9 = sbr.rel (0) target = $region5
  $region4: #{obj_ls_d_net_forward.17} parent=0 // pred_region
    _
  $region5: #{obj_ls_d_net_forward.17} parent=0 // pred_fallthru
    _
  // Predicated region
  $region6: #{obj_ls_d_net_forward.17} parent=0 // pred_check
    _
  $region7: #{obj_ls_d_net_forward.17} parent=0 // pred_check_branch
    %11 = sbr.rel (0) target = $region9
  $region8: #{obj_ls_d_net_forward.17} parent=0 // pred_region
    _
  $region9: #{obj_ls_d_net_forward.17} parent=0 // pred_fallthru
    _
  // Predicated region
  $region10: #{obj_ls_d_net_forward.17} parent=0 // pred_check
    _
  $region11: #{obj_ls_d_net_forward.17} parent=0 // pred_check_branch
    %13 = sbr.rel (0) target = $region13
  $region12: #{obj_ls_d_net_forward.17} parent=0 // pred_region
    _
  $region13: #{obj_ls_d_net_forward.17} parent=0 // pred_fallthru
    _
  %v15 = vld [vmem:[%s0] sm:$0xf]
  %v16 = vld [vmem:[%s0 + $0x4] sm:$0xf]
  %v17 = vld [vmem:[%s0 + $0x8] sm:$0xf]
  %v18 = vld [vmem:[%s0 + $0xc] sm:$0xf]
  %v19 = vld [vmem:[%s0 + $0x10] sm:$0xf]
  %v20 = vld [vmem:[%s0 + $0x14] sm:$0xf]
  %v21 = vld [vmem:[%s0 + $0x18] sm:$0xf]
  %v22 = vld [vmem:[%s0 + $0x1c] sm:$0xf]
  %v23 = vld [vmem:[%s0 + $0x20] sm:$0xf]
  %v24 = vld [vmem:[%s0 + $0x24] sm:$0xf]
  %v25 = vld [vmem:[%s0 + $0x28] sm:$0xf]
  %v26 = vld [vmem:[%s0 + $0x2c] sm:$0xf]
  %v27 = vld [vmem:[%s0 + $0x30] sm:$0xf]
  %v28 = vld [vmem:[%s0 + $0x34] sm:$0xf]
  %v29 = vld [vmem:[%s0 + $0x38] sm:$0xf]
  %v30 = vld [vmem:[%s0 + $0x3c] sm:$0xf]
  %v31 = vld [vmem:[%s0 + $0x40] sm:$0xf]
  %v32 = vld [vmem:[%s0 + $0x44] sm:$0xf]
  %v33 = vld [vmem:[%s0 + $0x48] sm:$0xf]
  %v34 = vld [vmem:[%s0 + $0x4c] sm:$0xf]
  %v35 = vld [vmem:[%s0 + $0x50] sm:$0xf]
  %v36 = vld [vmem:[%s0 + $0x54] sm:$0xf]
  %v37 = vld [vmem:[%s0 + $0x58] sm:$0xf]
  %v38 = vld [vmem:[%s0 + $0x5c] sm:$0xf]
  %v39 = vld [vmem:[%s0 + $0x60] sm:$0xf]
  %v40 = vld [vmem:[%s0 + $0x64] sm:$0xf]
  %v41 = vld [vmem:[%s0 + $0x68] sm:$0xf]
  %v42 = vld [vmem:[%s0 + $0x6c] sm:$0xf]
  %v43 = vld [vmem:[%s0 + $0x70] sm:$0xf]
  %v44 = vld [vmem:[%s0 + $0x74] sm:$0xf]
  %v45 = vld [vmem:[%s0 + $0x78] sm:$0xf]
  %v46 = vld [vmem:[%s0 + $0x7c] sm:$0xf]
  %v47 = vld [vmem:[%s0 + $0x80] sm:$0xf]
  %v48 = vld [vmem:[%s0 + $0x84] sm:$0xf]
  %v49 = vld [vmem:[%s0 + $0x88] sm:$0xf]
  %v50 = vld [vmem:[%s0 + $0x8c] sm:$0xf]
  %v51 = vld [vmem:[%s0 + $0x90] sm:$0xf]
  %v52 = vld [vmem:[%s0 + $0x94] sm:$0xf]
  %v53 = vld [vmem:[%s0 + $0x98] sm:$0xf]
  %v54 = vld [vmem:[%s0 + $0x9c] sm:$0xf]
  %v55 = vld [vmem:[%s0 + $0xa0] sm:$0xf]
  %v56 = vld [vmem:[%s0 + $0xa4] sm:$0xf]
  %v57 = vld [vmem:[%s0 + $0xa8] sm:$0xf]
  %v58 = vld [vmem:[%s0 + $0xac] sm:$0xf]
  %v59 = vld [vmem:[%s0 + $0xb0] sm:$0xf]
  %v60 = vld [vmem:[%s0 + $0xb4] sm:$0xf]
  %v61 = vld [vmem:[%s0 + $0xb8] sm:$0xf]
  %v62 = vld [vmem:[%s0 + $0xbc] sm:$0xf]
  %v63 = vld [vmem:[%s0 + $0xc0] sm:$0xf]
  %v64 = vld [vmem:[%s0 + $0xc4] sm:$0xf]
  %v65 = vld [vmem:[%s0 + $0xc8] sm:$0xf]
  %v66 = vld [vmem:[%s0 + $0xcc] sm:$0xf]
  %v67 = vld [vmem:[%s0 + $0xd0] sm:$0xf]
  %v68 = vld [vmem:[%s0 + $0xd4] sm:$0xf]
  %v69 = vld [vmem:[%s0 + $0xd8] sm:$0xf]
  %v70 = vld [vmem:[%s0 + $0xdc] sm:$0xf]
  %v71 = vld [vmem:[%s0 + $0xe0] sm:$0xf]
  %v72 = vld [vmem:[%s0 + $0xe4] sm:$0xf]
  %v73 = vld [vmem:[%s0 + $0xe8] sm:$0xf]
  %v74 = vld [vmem:[%s0 + $0xec] sm:$0xf]
  %v75 = vld [vmem:[%s0 + $0xf0] sm:$0xf]
  %v76 = vld [vmem:[%s0 + $0xf4] sm:$0xf]
  %v77 = vld [vmem:[%s0 + $0xf8] sm:$0xf]
  %v78 = vld [vmem:[%s0 + $0xfc] sm:$0xf]
  %v79 = vld [vmem:[%s1] sm:$0xf]
  %v80 = vld [vmem:[%s1 + $0x4] sm:$0xf]
  %v81 = vld [vmem:[%s1 + $0x8] sm:$0xf]
  %v82 = vld [vmem:[%s1 + $0xc] sm:$0xf]
  %v83 = vld [vmem:[%s2] sm:$0x1]
  %v85 = vperm.slane %v83, 0
  %v151 = vunpack.c.l.b16 %v15
  %v152 = vunpack.c.l.b16 %v16
  %v153 = vunpack.c.l.b16 %v17
  %v154 = vunpack.c.l.b16 %v18
  %v155 = vunpack.c.l.b16 %v19
  %v156 = vunpack.c.l.b16 %v20
  %v157 = vunpack.c.l.b16 %v21
  %v158 = vunpack.c.l.b16 %v22
  %v159 = vunpack.c.l.b16 %v23
  %v160 = vunpack.c.l.b16 %v24
  %v161 = vunpack.c.l.b16 %v25
  %v162 = vunpack.c.l.b16 %v26
  %v163 = vunpack.c.l.b16 %v27
  %v164 = vunpack.c.l.b16 %v28
  %v165 = vunpack.c.l.b16 %v29
  %v166 = vunpack.c.l.b16 %v30
  %v167 = vunpack.c.l.b16 %v31
  %v168 = vunpack.c.l.b16 %v32
  %v169 = vunpack.c.l.b16 %v33
  %v170 = vunpack.c.l.b16 %v34
  %v171 = vunpack.c.l.b16 %v35
  %v172 = vunpack.c.l.b16 %v36
  %v173 = vunpack.c.l.b16 %v37
  %v174 = vunpack.c.l.b16 %v38
  %v175 = vunpack.c.l.b16 %v39
  %v176 = vunpack.c.l.b16 %v40
  %v177 = vunpack.c.l.b16 %v41
  %v178 = vunpack.c.l.b16 %v42
  %v179 = vunpack.c.l.b16 %v43
  %v180 = vunpack.c.l.b16 %v44
  %v181 = vunpack.c.l.b16 %v45
  %v182 = vunpack.c.l.b16 %v46
  %v183 = vunpack.c.l.b16 %v47
  %v184 = vunpack.c.l.b16 %v48
  %v185 = vunpack.c.l.b16 %v49
  %v186 = vunpack.c.l.b16 %v50
  %v187 = vunpack.c.l.b16 %v51
  %v188 = vunpack.c.l.b16 %v52
  %v189 = vunpack.c.l.b16 %v53
  %v190 = vunpack.c.l.b16 %v54
  %v191 = vunpack.c.l.b16 %v55
  %v192 = vunpack.c.l.b16 %v56
  %v193 = vunpack.c.l.b16 %v57
  %v194 = vunpack.c.l.b16 %v58
  %v195 = vunpack.c.l.b16 %v59
  %v196 = vunpack.c.l.b16 %v60
  %v197 = vunpack.c.l.b16 %v61
  %v198 = vunpack.c.l.b16 %v62
  %v199 = vunpack.c.l.b16 %v63
  %v200 = vunpack.c.l.b16 %v64
  %v201 = vunpack.c.l.b16 %v65
  %v202 = vunpack.c.l.b16 %v66
  %v203 = vunpack.c.l.b16 %v67
  %v204 = vunpack.c.l.b16 %v68
  %v205 = vunpack.c.l.b16 %v69
  %v206 = vunpack.c.l.b16 %v70
  %v207 = vunpack.c.l.b16 %v71
  %v208 = vunpack.c.l.b16 %v72
  %v209 = vunpack.c.l.b16 %v73
  %v210 = vunpack.c.l.b16 %v74
  %v211 = vunpack.c.l.b16 %v75
  %v212 = vunpack.c.l.b16 %v76
  %v213 = vunpack.c.l.b16 %v77
  %v214 = vunpack.c.l.b16 %v78
  %v215 = vpack.c.b16 %v152, %v151
  %v216 = vpack.c.b16 %v154, %v153
  %v217 = vpack.c.b16 %v156, %v155
  %v218 = vpack.c.b16 %v158, %v157
  %v219 = vpack.c.b16 %v160, %v159
  %v220 = vpack.c.b16 %v162, %v161
  %v221 = vpack.c.b16 %v164, %v163
  %v222 = vpack.c.b16 %v166, %v165
  %v223 = vpack.c.b16 %v168, %v167
  %v224 = vpack.c.b16 %v170, %v169
  %v225 = vpack.c.b16 %v172, %v171
  %v226 = vpack.c.b16 %v174, %v173
  %v227 = vpack.c.b16 %v176, %v175
  %v228 = vpack.c.b16 %v178, %v177
  %v229 = vpack.c.b16 %v180, %v179
  %v230 = vpack.c.b16 %v182, %v181
  %v231 = vpack.c.b16 %v184, %v183
  %v232 = vpack.c.b16 %v186, %v185
  %v233 = vpack.c.b16 %v188, %v187
  %v234 = vpack.c.b16 %v190, %v189
  %v235 = vpack.c.b16 %v192, %v191
  %v236 = vpack.c.b16 %v194, %v193
  %v237 = vpack.c.b16 %v196, %v195
  %v238 = vpack.c.b16 %v198, %v197
  %v239 = vpack.c.b16 %v200, %v199
  %v240 = vpack.c.b16 %v202, %v201
  %v241 = vpack.c.b16 %v204, %v203
  %v242 = vpack.c.b16 %v206, %v205
  %v243 = vpack.c.b16 %v208, %v207
  %v244 = vpack.c.b16 %v210, %v209
  %v245 = vpack.c.b16 %v212, %v211
  %v246 = vpack.c.b16 %v214, %v213
  %v251 = vunpack.c.l.b16 %v79
  %v252 = vunpack.c.l.b16 %v80
  %v253 = vunpack.c.l.b16 %v81
  %v254 = vunpack.c.l.b16 %v82
  %v255 = vpack.c.b16 %v252, %v251
  %v256 = vpack.c.b16 %v254, %v253
  %vm259 = vcmask 261120
  %v261 = vsel %vm259, %v215, 0
  %v264 = vsel %vm259, %v216, 0
  %v267 = vsel %vm259, %v217, 0
  %v270 = vsel %vm259, %v218, 0
  %v273 = vsel %vm259, %v219, 0
  %v276 = vsel %vm259, %v220, 0
  %v279 = vsel %vm259, %v221, 0
  %v282 = vsel %vm259, %v222, 0
  %v285 = vsel %vm259, %v223, 0
  %v288 = vsel %vm259, %v224, 0
  %v291 = vsel %vm259, %v225, 0
  %v294 = vsel %vm259, %v226, 0
  %v297 = vsel %vm259, %v227, 0
  %v300 = vsel %vm259, %v228, 0
  %v303 = vsel %vm259, %v229, 0
  %v306 = vsel %vm259, %v230, 0
  %v309 = vsel %vm259, %v231, 0
  %v312 = vsel %vm259, %v232, 0
  %v315 = vsel %vm259, %v233, 0
  %v318 = vsel %vm259, %v234, 0
  %v321 = vsel %vm259, %v235, 0
  %v324 = vsel %vm259, %v236, 0
  %v327 = vsel %vm259, %v237, 0
  %v330 = vsel %vm259, %v238, 0
  %v333 = vsel %vm259, %v239, 0
  %v336 = vsel %vm259, %v240, 0
  %v339 = vsel %vm259, %v241, 0
  %v342 = vsel %vm259, %v242, 0
  %v345 = vsel %vm259, %v243, 0
  %v348 = vsel %vm259, %v244, 0
  %v351 = vsel %vm259, %v245, 0
  %v354 = vsel %vm259, %v246, 0
  %356 = vmatpush.bf16.msra.mxu0 0
  %357 = vmatpush.bf16.msra.mxu0 0
  %358 = vmatpush.bf16.msra.mxu0 0
  %359 = vmatpush.bf16.msra.mxu0 0
  %360 = vmatpush.bf16.msra.mxu0 0
  %361 = vmatpush.bf16.msra.mxu0 0
  %362 = vmatpush.bf16.msra.mxu0 %v256
  %363 = vmatpush.bf16.msra.mxu0 %v255
  %364 = vmatmul.bf16.gmra.mxu0 %v261
  %v365 = vpop.f32.mrf.mxu0
  %v366 = vadd.f32 %v85, %v365
  %v367 = vpop.f32.mrf.mxu0
  %v368 = vadd.f32 %v85, %v367
  %369 = vmatmul.bf16.gmra.mxu0 %v264
  %v370 = vpop.f32.mrf.mxu0
  %v371 = vadd.f32 %v85, %v370
  %v372 = vpop.f32.mrf.mxu0
  %v373 = vadd.f32 %v85, %v372
  %374 = vmatmul.bf16.gmra.mxu0 %v267
  %v375 = vpop.f32.mrf.mxu0
  %v376 = vadd.f32 %v85, %v375
  %v377 = vpop.f32.mrf.mxu0
  %v378 = vadd.f32 %v85, %v377
  %379 = vmatmul.bf16.gmra.mxu0 %v270
  %v380 = vpop.f32.mrf.mxu0
  %v381 = vadd.f32 %v85, %v380
  %v382 = vpop.f32.mrf.mxu0
  %v383 = vadd.f32 %v85, %v382
  %384 = vmatmul.bf16.gmra.mxu0 %v273
  %v385 = vpop.f32.mrf.mxu0
  %v386 = vadd.f32 %v85, %v385
  %v387 = vpop.f32.mrf.mxu0
  %v388 = vadd.f32 %v85, %v387
  %389 = vmatmul.bf16.gmra.mxu0 %v276
  %v390 = vpop.f32.mrf.mxu0
  %v391 = vadd.f32 %v85, %v390
  %v392 = vpop.f32.mrf.mxu0
  %v393 = vadd.f32 %v85, %v392
  %394 = vmatmul.bf16.gmra.mxu0 %v279
  %v395 = vpop.f32.mrf.mxu0
  %v396 = vadd.f32 %v85, %v395
  %v397 = vpop.f32.mrf.mxu0
  %v398 = vadd.f32 %v85, %v397
  %399 = vmatmul.bf16.gmra.mxu0 %v282
  %v400 = vpop.f32.mrf.mxu0
  %v401 = vadd.f32 %v85, %v400
  %v402 = vpop.f32.mrf.mxu0
  %v403 = vadd.f32 %v85, %v402
  %404 = vmatmul.bf16.gmra.mxu0 %v285
  %v405 = vpop.f32.mrf.mxu0
  %v406 = vadd.f32 %v85, %v405
  %v407 = vpop.f32.mrf.mxu0
  %v408 = vadd.f32 %v85, %v407
  %409 = vmatmul.bf16.gmra.mxu0 %v288
  %v410 = vpop.f32.mrf.mxu0
  %v411 = vadd.f32 %v85, %v410
  %v412 = vpop.f32.mrf.mxu0
  %v413 = vadd.f32 %v85, %v412
  %414 = vmatmul.bf16.gmra.mxu0 %v291
  %v415 = vpop.f32.mrf.mxu0
  %v416 = vadd.f32 %v85, %v415
  %v417 = vpop.f32.mrf.mxu0
  %v418 = vadd.f32 %v85, %v417
  %419 = vmatmul.bf16.gmra.mxu0 %v294
  %v420 = vpop.f32.mrf.mxu0
  %v421 = vadd.f32 %v85, %v420
  %v422 = vpop.f32.mrf.mxu0
  %v423 = vadd.f32 %v85, %v422
  %424 = vmatmul.bf16.gmra.mxu0 %v297
  %v425 = vpop.f32.mrf.mxu0
  %v426 = vadd.f32 %v85, %v425
  %v427 = vpop.f32.mrf.mxu0
  %v428 = vadd.f32 %v85, %v427
  %429 = vmatmul.bf16.gmra.mxu0 %v300
  %v430 = vpop.f32.mrf.mxu0
  %v431 = vadd.f32 %v85, %v430
  %v432 = vpop.f32.mrf.mxu0
  %v433 = vadd.f32 %v85, %v432
  %434 = vmatmul.bf16.gmra.mxu0 %v303
  %v435 = vpop.f32.mrf.mxu0
  %v436 = vadd.f32 %v85, %v435
  %v437 = vpop.f32.mrf.mxu0
  %v438 = vadd.f32 %v85, %v437
  %439 = vmatmul.bf16.gmra.mxu0 %v306
  %v440 = vpop.f32.mrf.mxu0
  %v441 = vadd.f32 %v85, %v440
  %v442 = vpop.f32.mrf.mxu0
  %v443 = vadd.f32 %v85, %v442
  %444 = vmatmul.bf16.gmra.mxu0 %v309
  %v445 = vpop.f32.mrf.mxu0
  %v446 = vadd.f32 %v85, %v445
  %v447 = vpop.f32.mrf.mxu0
  %v448 = vadd.f32 %v85, %v447
  %449 = vmatmul.bf16.gmra.mxu0 %v312
  %v450 = vpop.f32.mrf.mxu0
  %v451 = vadd.f32 %v85, %v450
  %v452 = vpop.f32.mrf.mxu0
  %v453 = vadd.f32 %v85, %v452
  %454 = vmatmul.bf16.gmra.mxu0 %v315
  %v455 = vpop.f32.mrf.mxu0
  %v456 = vadd.f32 %v85, %v455
  %v457 = vpop.f32.mrf.mxu0
  %v458 = vadd.f32 %v85, %v457
  %459 = vmatmul.bf16.gmra.mxu0 %v318
  %v460 = vpop.f32.mrf.mxu0
  %v461 = vadd.f32 %v85, %v460
  %v462 = vpop.f32.mrf.mxu0
  %v463 = vadd.f32 %v85, %v462
  %464 = vmatmul.bf16.gmra.mxu0 %v321
  %v465 = vpop.f32.mrf.mxu0
  %v466 = vadd.f32 %v85, %v465
  %v467 = vpop.f32.mrf.mxu0
  %v468 = vadd.f32 %v85, %v467
  %469 = vmatmul.bf16.gmra.mxu0 %v324
  %v470 = vpop.f32.mrf.mxu0
  %v471 = vadd.f32 %v85, %v470
  %v472 = vpop.f32.mrf.mxu0
  %v473 = vadd.f32 %v85, %v472
  %474 = vmatmul.bf16.gmra.mxu0 %v327
  %v475 = vpop.f32.mrf.mxu0
  %v476 = vadd.f32 %v85, %v475
  %v477 = vpop.f32.mrf.mxu0
  %v478 = vadd.f32 %v85, %v477
  %479 = vmatmul.bf16.gmra.mxu0 %v330
  %v480 = vpop.f32.mrf.mxu0
  %v481 = vadd.f32 %v85, %v480
  %v482 = vpop.f32.mrf.mxu0
  %v483 = vadd.f32 %v85, %v482
  %484 = vmatmul.bf16.gmra.mxu0 %v333
  %v485 = vpop.f32.mrf.mxu0
  %v486 = vadd.f32 %v85, %v485
  %v487 = vpop.f32.mrf.mxu0
  %v488 = vadd.f32 %v85, %v487
  %489 = vmatmul.bf16.gmra.mxu0 %v336
  %v490 = vpop.f32.mrf.mxu0
  %v491 = vadd.f32 %v85, %v490
  %v492 = vpop.f32.mrf.mxu0
  %v493 = vadd.f32 %v85, %v492
  %494 = vmatmul.bf16.gmra.mxu0 %v339
  %v495 = vpop.f32.mrf.mxu0
  %v496 = vadd.f32 %v85, %v495
  %v497 = vpop.f32.mrf.mxu0
  %v498 = vadd.f32 %v85, %v497
  %499 = vmatmul.bf16.gmra.mxu0 %v342
  %v500 = vpop.f32.mrf.mxu0
  %v501 = vadd.f32 %v85, %v500
  %v502 = vpop.f32.mrf.mxu0
  %v503 = vadd.f32 %v85, %v502
  %504 = vmatmul.bf16.gmra.mxu0 %v345
  %v505 = vpop.f32.mrf.mxu0
  %v506 = vadd.f32 %v85, %v505
  %v507 = vpop.f32.mrf.mxu0
  %v508 = vadd.f32 %v85, %v507
  %509 = vmatmul.bf16.gmra.mxu0 %v348
  %v510 = vpop.f32.mrf.mxu0
  %v511 = vadd.f32 %v85, %v510
  %v512 = vpop.f32.mrf.mxu0
  %v513 = vadd.f32 %v85, %v512
  %514 = vmatmul.bf16.gmra.mxu0 %v351
  %v515 = vpop.f32.mrf.mxu0
  %v516 = vadd.f32 %v85, %v515
  %v517 = vpop.f32.mrf.mxu0
  %v518 = vadd.f32 %v85, %v517
  %519 = vmatmul.bf16.gmra.mxu0 %v354
  %v520 = vpop.f32.mrf.mxu0
  %v521 = vadd.f32 %v85, %v520
  %v522 = vpop.f32.mrf.mxu0
  %v523 = vadd.f32 %v85, %v522
  %524 = vdwg.mxu0
  %525 = vst [vmem:[%s3] sm:$0xff] %v366
  %526 = vst [vmem:[%s3 + $0x8] sm:$0xff] %v368
  %527 = vst [vmem:[%s3 + $0x10] sm:$0xff] %v371
  %528 = vst [vmem:[%s3 + $0x18] sm:$0xff] %v373
  %529 = vst [vmem:[%s3 + $0x20] sm:$0xff] %v376
  %530 = vst [vmem:[%s3 + $0x28] sm:$0xff] %v378
  %531 = vst [vmem:[%s3 + $0x30] sm:$0xff] %v381
  %532 = vst [vmem:[%s3 + $0x38] sm:$0xff] %v383
  %533 = vst [vmem:[%s3 + $0x40] sm:$0xff] %v386
  %534 = vst [vmem:[%s3 + $0x48] sm:$0xff] %v388
  %535 = vst [vmem:[%s3 + $0x50] sm:$0xff] %v391
  %536 = vst [vmem:[%s3 + $0x58] sm:$0xff] %v393
  %537 = vst [vmem:[%s3 + $0x60] sm:$0xff] %v396
  %538 = vst [vmem:[%s3 + $0x68] sm:$0xff] %v398
  %539 = vst [vmem:[%s3 + $0x70] sm:$0xff] %v401
  %540 = vst [vmem:[%s3 + $0x78] sm:$0xff] %v403
  %541 = vst [vmem:[%s3 + $0x80] sm:$0xff] %v406
  %542 = vst [vmem:[%s3 + $0x88] sm:$0xff] %v408
  %543 = vst [vmem:[%s3 + $0x90] sm:$0xff] %v411
  %544 = vst [vmem:[%s3 + $0x98] sm:$0xff] %v413
  %545 = vst [vmem:[%s3 + $0xa0] sm:$0xff] %v416
  %546 = vst [vmem:[%s3 + $0xa8] sm:$0xff] %v418
  %547 = vst [vmem:[%s3 + $0xb0] sm:$0xff] %v421
  %548 = vst [vmem:[%s3 + $0xb8] sm:$0xff] %v423
  %549 = vst [vmem:[%s3 + $0xc0] sm:$0xff] %v426
  %550 = vst [vmem:[%s3 + $0xc8] sm:$0xff] %v428
  %551 = vst [vmem:[%s3 + $0xd0] sm:$0xff] %v431
  %552 = vst [vmem:[%s3 + $0xd8] sm:$0xff] %v433
  %553 = vst [vmem:[%s3 + $0xe0] sm:$0xff] %v436
  %554 = vst [vmem:[%s3 + $0xe8] sm:$0xff] %v438
  %555 = vst [vmem:[%s3 + $0xf0] sm:$0xff] %v441
  %556 = vst [vmem:[%s3 + $0xf8] sm:$0xff] %v443
  %557 = vst [vmem:[%s3 + $0x100] sm:$0xff] %v446
  %558 = vst [vmem:[%s3 + $0x108] sm:$0xff] %v448
  %559 = vst [vmem:[%s3 + $0x110] sm:$0xff] %v451
  %560 = vst [vmem:[%s3 + $0x118] sm:$0xff] %v453
  %561 = vst [vmem:[%s3 + $0x120] sm:$0xff] %v456
  %562 = vst [vmem:[%s3 + $0x128] sm:$0xff] %v458
  %563 = vst [vmem:[%s3 + $0x130] sm:$0xff] %v461
  %564 = vst [vmem:[%s3 + $0x138] sm:$0xff] %v463
  %565 = vst [vmem:[%s3 + $0x140] sm:$0xff] %v466
  %566 = vst [vmem:[%s3 + $0x148] sm:$0xff] %v468
  %567 = vst [vmem:[%s3 + $0x150] sm:$0xff] %v471
  %568 = vst [vmem:[%s3 + $0x158] sm:$0xff] %v473
  %569 = vst [vmem:[%s3 + $0x160] sm:$0xff] %v476
  %570 = vst [vmem:[%s3 + $0x168] sm:$0xff] %v478
  %571 = vst [vmem:[%s3 + $0x170] sm:$0xff] %v481
  %572 = vst [vmem:[%s3 + $0x178] sm:$0xff] %v483
  %573 = vst [vmem:[%s3 + $0x180] sm:$0xff] %v486
  %574 = vst [vmem:[%s3 + $0x188] sm:$0xff] %v488
  %575 = vst [vmem:[%s3 + $0x190] sm:$0xff] %v491
  %576 = vst [vmem:[%s3 + $0x198] sm:$0xff] %v493
  %577 = vst [vmem:[%s3 + $0x1a0] sm:$0xff] %v496
  %578 = vst [vmem:[%s3 + $0x1a8] sm:$0xff] %v498
  %579 = vst [vmem:[%s3 + $0x1b0] sm:$0xff] %v501
  %580 = vst [vmem:[%s3 + $0x1b8] sm:$0xff] %v503
  %581 = vst [vmem:[%s3 + $0x1c0] sm:$0xff] %v506
  %582 = vst [vmem:[%s3 + $0x1c8] sm:$0xff] %v508
  %583 = vst [vmem:[%s3 + $0x1d0] sm:$0xff] %v511
  %584 = vst [vmem:[%s3 + $0x1d8] sm:$0xff] %v513
  %585 = vst [vmem:[%s3 + $0x1e0] sm:$0xff] %v516
  %586 = vst [vmem:[%s3 + $0x1e8] sm:$0xff] %v518
  %587 = vst [vmem:[%s3 + $0x1f0] sm:$0xff] %v521
  %588 = vst [vmem:[%s3 + $0x1f8] sm:$0xff] %v523
  // Predicated region
  $region14: #{obj_ls_d_net_forward.17} parent=0 // pred_check
    _
  $region15: #{obj_ls_d_net_forward.17} parent=0 // pred_check_branch
    %590 = sbr.rel (0) target = $region17
  $region16: #{obj_ls_d_net_forward.17} parent=0 // pred_region
    _
  $region17: #{obj_ls_d_net_forward.17} parent=0 // pred_fallthru
    _
  // Predicated region
  $region18: #{obj_ls_d_net_forward.17} parent=0 // pred_check
    _
  $region19: #{obj_ls_d_net_forward.17} parent=0 // pred_check_branch
    %592 = sbr.rel (0) target = $region21
  $region20: #{obj_ls_d_net_forward.17} parent=0 // pred_region
    _
  $region21: #{obj_ls_d_net_forward.17} parent=0 // pred_fallthru
    _

// kernel: obj_ls_d_net_forward.18
$region0: #{obj_ls_d_net_forward.18}
  #allocation0 [shape = 'u32[]', space=smem, size = 0x4, offset = 0x4, fixed_abs, tag = 'smem constant byte address 0x4 - core index']
  #allocation1 [shape = 'u32[72,128]{1,0:T(1,128)}', space=vmem, size = 0x9000, scoped, tag = 'internal scratch']
  %s0 = inlined_call_operand.vmem [shape: bf16[8192,36], index: 0, kind: input, shape index: {}]
  %s1 = inlined_call_operand.vmem [shape: bf16[36,128], index: 1, kind: input, shape index: {}]
  %s2 = inlined_call_operand.vmem [shape: f32[1,128], index: 2, kind: input, shape index: {}]
  %s3 = inlined_call_operand.vmem [shape: f32[8192,128], index: 3, kind: output, shape index: {}]
  %s4 = sld [smem:[#allocation0]]
  $region45: #{obj_ls_d_net_forward.18} parent=0
    _
  %s6 = ssub.s32 1, %s4
  %s7 = scalar_select 0, %s6, %s4
  loop: start=0, step=1, limit=18
  $region2: #{obj_ls_d_net_forward.18} parent=0 // loop_pre_header
    _
  $region3: #{obj_ls_d_net_forward.18} parent=0 // loop_header
    %s9 = sphi 0, %s13
    %p10 = scmp.ge.s32.totalorder %s9, 18
    %s16 = sphi 0, %s28
    %s17 = sphi 0, %s24
    %s18 = sphi 0, %s16
    %s19 = sphi 0, %s17
    %s20 = sphi 0, %s18
    %s21 = sphi 0, %s19
    %s31 = sphi 0, %s33
    %s34 = sphi 0, %s31
    %s35 = sphi 0, %s34
    %s51 = sphi 0, %s35
    %s57 = sphi 0, %s59
    %s60 = sphi 0, %s57
    %s61 = sphi 0, %s60
    %s77 = sphi 0, %s61
    %s83 = sphi 0, %s85
    %s86 = sphi 0, %s83
    %s87 = sphi 0, %s86
    %s103 = sphi 0, %s87
    %s111 = sphi 0, %s113
    %s114 = sphi 0, %s111
    %s115 = sphi 0, %s114
    %s131 = sphi 0, %s115
  $region4: #{obj_ls_d_net_forward.18} parent=0 // loop_header_branch
    %12 = sbr.rel (%p10) target = $region8
  $region5: #{obj_ls_d_net_forward.18} parent=0 // loop_body
    %s14 = ssub.s32 %s9, 1
    %s15 = ssub.s32 %s9, 2
    %s22 = sadd.s32 1, %s17
    %p23 = scmp.ge.s32.totalorder %s22, 1
    %s24 = scalar_select %p23, 0, %s22
    %s25 = sadd.s32 1, %s16
    %s26 = scalar_select %p23, %s25, %s16
    %p27 = scmp.ge.s32.totalorder %s26, 16
    %s28 = scalar_select %p27, 0, %s26
    %s29 = ssub.s32 %s16, %s28
    %p30 = scmp.eq.s32.totalorder %s29, 0
    %s32 = sadd.s32 %s31, 1
    %s33 = scalar_select %p30, %s31, %s32
    %p36 = pneg %p30
    %p37 = scmp.eq.s32.totalorder %s9, 15
    %p38 = por %p36, %p37
    %p39 = scmp.ne.s32.totalorder %s31, %s34
    %p40 = scmp.eq.s32.totalorder %s9, 0
    %p41 = por %p39, %p40
    %p42 = scmp.ne.s32.totalorder %s31, %s34
    %p43 = scmp.eq.s32.totalorder %s14, 15
    %p44 = por %p42, %p43
    %p45 = scmp.ne.s32.totalorder %s34, %s35
    %p46 = scmp.eq.s32.totalorder %s14, 0
    %p47 = por %p45, %p46
    %p48 = scmp.ne.s32.totalorder %s34, %s35
    %p49 = scmp.eq.s32.totalorder %s15, 15
    %p50 = por %p48, %p49
    %p52 = scmp.ne.s32.totalorder %s35, %s51
    %p53 = scmp.eq.s32.totalorder %s15, 0
    %p54 = por %p52, %p53
    %s55 = ssub.s32 %s17, %s24
    %p56 = scmp.eq.s32.totalorder %s55, 0
    %s58 = sadd.s32 %s57, 1
    %s59 = scalar_select %p56, %s57, %s58
    %p62 = pneg %p56
    %p63 = scmp.eq.s32.totalorder %s9, 15
    %p64 = por %p62, %p63
    %p65 = scmp.ne.s32.totalorder %s57, %s60
    %p66 = scmp.eq.s32.totalorder %s9, 0
    %p67 = por %p65, %p66
    %p68 = scmp.ne.s32.totalorder %s57, %s60
    %p69 = scmp.eq.s32.totalorder %s14, 15
    %p70 = por %p68, %p69
    %p71 = scmp.ne.s32.totalorder %s60, %s61
    %p72 = scmp.eq.s32.totalorder %s14, 0
    %p73 = por %p71, %p72
    %p74 = scmp.ne.s32.totalorder %s60, %s61
    %p75 = scmp.eq.s32.totalorder %s15, 15
    %p76 = por %p74, %p75
    %p78 = scmp.ne.s32.totalorder %s61, %s77
    %p79 = scmp.eq.s32.totalorder %s15, 0
    %p80 = por %p78, %p79
    %s81 = ssub.s32 %s17, %s24
    %p82 = scmp.eq.s32.totalorder %s81, 0
    %s84 = sadd.s32 %s83, 1
    %s85 = scalar_select %p82, %s83, %s84
    %p88 = pneg %p82
    %p89 = scmp.eq.s32.totalorder %s9, 15
    %p90 = por %p88, %p89
    %p91 = scmp.ne.s32.totalorder %s83, %s86
    %p92 = scmp.eq.s32.totalorder %s9, 0
    %p93 = por %p91, %p92
    %p94 = scmp.ne.s32.totalorder %s83, %s86
    %p95 = scmp.eq.s32.totalorder %s14, 15
    %p96 = por %p94, %p95
    %p97 = scmp.ne.s32.totalorder %s86, %s87
    %p98 = scmp.eq.s32.totalorder %s14, 0
    %p99 = por %p97, %p98
    %p100 = scmp.ne.s32.totalorder %s86, %s87
    %p101 = scmp.eq.s32.totalorder %s15, 15
    %p102 = por %p100, %p101
    %p104 = scmp.ne.s32.totalorder %s87, %s103
    %p105 = scmp.eq.s32.totalorder %s15, 0
    %p106 = por %p104, %p105
    %s107 = ssub.s32 %s16, %s28
    %s108 = ssub.s32 %s17, %s24
    %s109 = sor.u32 %s107, %s108
    %p110 = scmp.eq.s32.totalorder %s109, 0
    %s112 = sadd.s32 %s111, 1
    %s113 = scalar_select %p110, %s111, %s112
    %p116 = pneg %p110
    %p117 = scmp.eq.s32.totalorder %s9, 15
    %p118 = por %p116, %p117
    %p119 = scmp.ne.s32.totalorder %s111, %s114
    %p120 = scmp.eq.s32.totalorder %s9, 0
    %p121 = por %p119, %p120
    %p122 = scmp.ne.s32.totalorder %s111, %s114
    %p123 = scmp.eq.s32.totalorder %s14, 15
    %p124 = por %p122, %p123
    %p125 = scmp.ne.s32.totalorder %s114, %s115
    %p126 = scmp.eq.s32.totalorder %s14, 0
    %p127 = por %p125, %p126
    %p128 = scmp.ne.s32.totalorder %s114, %s115
    %p129 = scmp.eq.s32.totalorder %s15, 15
    %p130 = por %p128, %p129
    %p132 = scmp.ne.s32.totalorder %s115, %s131
    %p133 = scmp.eq.s32.totalorder %s15, 0
    %p134 = por %p132, %p133
    %p135 = scmp.le.s32.totalorder 1, %s9
    %p136 = scmp.lt.s32.totalorder %s9, 17
    %p137 = pnand %p135, %p136
    %p138 = pneg %p137
    // Predicated region
    $region9: #{obj_ls_d_net_forward.18} parent=5 // pred_check
      _
    $region10: #{obj_ls_d_net_forward.18} parent=5 // pred_check_branch
      %140 = sbr.rel (%p137) target = $region12
    $region11: #{obj_ls_d_net_forward.18} parent=5 // pred_region
      %s141 = ssub.s32 %s9, 1
      // Predicated region
      $region13: #{obj_ls_d_net_forward.18} parent=11 // pred_check
        %p142 = pneg %p73
      $region14: #{obj_ls_d_net_forward.18} parent=11 // pred_check_branch
        %144 = sbr.rel (%p142) target = $region16
      $region15: #{obj_ls_d_net_forward.18} parent=11 // pred_region
        %p145 = scmp.lt.s32.totalorder %s19, 0
        %s146 = scalar_select %p145, %s19, 0
        %s147 = smul.addr %s146, 4
        %s148 = scalar_lea.vmem %s1, %s147
      $region16: #{obj_ls_d_net_forward.18} parent=11 // pred_fallthru
        _
      // Predicated region
      $region17: #{obj_ls_d_net_forward.18} parent=11 // pred_check
        %p149 = pneg %p99
      $region18: #{obj_ls_d_net_forward.18} parent=11 // pred_check_branch
        %151 = sbr.rel (%p149) target = $region20
      $region19: #{obj_ls_d_net_forward.18} parent=11 // pred_region
        %p152 = scmp.lt.s32.totalorder %s19, 0
        %s153 = scalar_select %p152, %s19, 0
        %s154 = scalar_lea.vmem %s2, %s153
      $region20: #{obj_ls_d_net_forward.18} parent=11 // pred_fallthru
        _
    $region12: #{obj_ls_d_net_forward.18} parent=5 // pred_fallthru
      _
    %p155 = scmp.lt.s32.totalorder %s9, 16
    // Predicated region
    $region21: #{obj_ls_d_net_forward.18} parent=5 // pred_check
      %p156 = pneg %p155
    $region22: #{obj_ls_d_net_forward.18} parent=5 // pred_check_branch
      %158 = sbr.rel (%p156) target = $region24
    $region23: #{obj_ls_d_net_forward.18} parent=5 // pred_region
      // Predicated region
      $region25: #{obj_ls_d_net_forward.18} parent=23 // pred_check
        %p159 = pneg %p41
      $region26: #{obj_ls_d_net_forward.18} parent=23 // pred_check_branch
        %161 = sbr.rel (%p159) target = $region28
      $region27: #{obj_ls_d_net_forward.18} parent=23 // pred_region
        %s162 = smul.u32 64, %s16
        %p163 = scmp.lt.s32.totalorder %s162, 1023
        %s164 = scalar_select %p163, %s162, 1023
        %s165 = smul.addr %s164, 4
        %s166 = scalar_lea.vmem %s0, %s165
        %s167 = smul.u32 64, %s16
      $region28: #{obj_ls_d_net_forward.18} parent=23 // pred_fallthru
        _
    $region24: #{obj_ls_d_net_forward.18} parent=5 // pred_fallthru
      _
    %p168 = scmp.le.s32.totalorder 1, %s9
    %p169 = scmp.lt.s32.totalorder %s9, 17
    %p170 = pnand %p168, %p169
    %p171 = pneg %p170
    // Predicated region
    $region29: #{obj_ls_d_net_forward.18} parent=5 // pred_check
      _
    $region30: #{obj_ls_d_net_forward.18} parent=5 // pred_check_branch
      %173 = sbr.rel (%p170) target = $region32
    $region31: #{obj_ls_d_net_forward.18} parent=5 // pred_region
      %s174 = ssub.s32 %s9, 1
      %s175 = smul.u32 64, %s18
      %p176 = scmp.lt.s32.totalorder %s175, 1023
      %s177 = scalar_select %p176, %s175, 1023
      %s178 = smul.addr %s177, 4
      %s179 = scalar_lea.vmem %s0, %s178
      %p180 = pneg %p47
      %p181 = pneg %p44
      %p182 = scmp.lt.s32.totalorder %s19, 0
      %s183 = scalar_select %p182, %s19, 0
      %s184 = smul.addr %s183, 4
      %s185 = scalar_lea.vmem %s1, %s184
      %p186 = pneg %p73
      %p187 = pneg %p70
      %p188 = scmp.lt.s32.totalorder %s19, 0
      %s189 = scalar_select %p188, %s19, 0
      %s190 = scalar_lea.vmem %s2, %s189
      %p191 = pneg %p99
      %p192 = pneg %p96
      %p193 = pneg %p127
      %p194 = pneg %p124
      %s195 = smul.u32 64, %s18
      %p196 = scmp.lt.s32.totalorder %s195, 1023
      %s197 = scalar_select %p196, %s195, 1023
      %p198 = scmp.lt.s32.totalorder %s19, 0
      %s199 = scalar_select %p198, %s19, 0
      %s200 = sadd.s32 %s199, %s197
      %s201 = smul.addr %s200, 8
      %s202 = scalar_lea.vmem %s3, %s201
      %s203 = smul.u32 64, %s18
      %p204 = scmp.lt.s32.totalorder %s203, 1023
      %s205 = scalar_select %p204, %s203, 1023
      %s206 = smul.addr %s205, 4
      %s207 = scalar_lea.vmem %s0, %s206
      %s208 = smul.u32 64, %s18
      %p209 = scmp.lt.s32.totalorder %s19, 0
      %s210 = scalar_select %p209, %s19, 0
      %s211 = smul.addr %s210, 4
      %s212 = scalar_lea.vmem %s1, %s211
      %p213 = scmp.lt.s32.totalorder %s19, 0
      %s214 = scalar_select %p213, %s19, 0
      %s215 = scalar_lea.vmem %s2, %s214
      %s216 = smul.u32 64, %s18
      %p217 = scmp.lt.s32.totalorder %s216, 1023
      %s218 = scalar_select %p217, %s216, 1023
      %p219 = scmp.lt.s32.totalorder %s19, 0
      %s220 = scalar_select %p219, %s19, 0
      %s221 = sadd.s32 %s220, %s218
      %s222 = smul.addr %s221, 8
      %s223 = scalar_lea.vmem %s3, %s222
      %s224 = smul.u32 64, %s18
      %v226 = vld [vmem:[%s207] sm:$0xf]
      %v227 = vld [vmem:[%s207 + $0x4] sm:$0xf]
      %v228 = vld [vmem:[%s207 + $0x8] sm:$0xf]
      %v229 = vld [vmem:[%s207 + $0xc] sm:$0xf]
      %v230 = vld [vmem:[%s207 + $0x10] sm:$0xf]
      %v231 = vld [vmem:[%s207 + $0x14] sm:$0xf]
      %v232 = vld [vmem:[%s207 + $0x18] sm:$0xf]
      %v233 = vld [vmem:[%s207 + $0x1c] sm:$0xf]
      %v234 = vld [vmem:[%s207 + $0x20] sm:$0xf]
      %v235 = vld [vmem:[%s207 + $0x24] sm:$0xf]
      %v236 = vld [vmem:[%s207 + $0x28] sm:$0xf]
      %v237 = vld [vmem:[%s207 + $0x2c] sm:$0xf]
      %v238 = vld [vmem:[%s207 + $0x30] sm:$0xf]
      %v239 = vld [vmem:[%s207 + $0x34] sm:$0xf]
      %v240 = vld [vmem:[%s207 + $0x38] sm:$0xf]
      %v241 = vld [vmem:[%s207 + $0x3c] sm:$0xf]
      %v242 = vld [vmem:[%s207 + $0x40] sm:$0xf]
      %v243 = vld [vmem:[%s207 + $0x44] sm:$0xf]
      %v244 = vld [vmem:[%s207 + $0x48] sm:$0xf]
      %v245 = vld [vmem:[%s207 + $0x4c] sm:$0xf]
      %v246 = vld [vmem:[%s207 + $0x50] sm:$0xf]
      %v247 = vld [vmem:[%s207 + $0x54] sm:$0xf]
      %v248 = vld [vmem:[%s207 + $0x58] sm:$0xf]
      %v249 = vld [vmem:[%s207 + $0x5c] sm:$0xf]
      %v250 = vld [vmem:[%s207 + $0x60] sm:$0xf]
      %v251 = vld [vmem:[%s207 + $0x64] sm:$0xf]
      %v252 = vld [vmem:[%s207 + $0x68] sm:$0xf]
      %v253 = vld [vmem:[%s207 + $0x6c] sm:$0xf]
      %v254 = vld [vmem:[%s207 + $0x70] sm:$0xf]
      %v255 = vld [vmem:[%s207 + $0x74] sm:$0xf]
      %v256 = vld [vmem:[%s207 + $0x78] sm:$0xf]
      %v257 = vld [vmem:[%s207 + $0x7c] sm:$0xf]
      %v258 = vld [vmem:[%s207 + $0x80] sm:$0xf]
      %v259 = vld [vmem:[%s207 + $0x84] sm:$0xf]
      %v260 = vld [vmem:[%s207 + $0x88] sm:$0xf]
      %v261 = vld [vmem:[%s207 + $0x8c] sm:$0xf]
      %v262 = vld [vmem:[%s207 + $0x90] sm:$0xf]
      %v263 = vld [vmem:[%s207 + $0x94] sm:$0xf]
      %v264 = vld [vmem:[%s207 + $0x98] sm:$0xf]
      %v265 = vld [vmem:[%s207 + $0x9c] sm:$0xf]
      %v266 = vld [vmem:[%s207 + $0xa0] sm:$0xf]
      %v267 = vld [vmem:[%s207 + $0xa4] sm:$0xf]
      %v268 = vld [vmem:[%s207 + $0xa8] sm:$0xf]
      %v269 = vld [vmem:[%s207 + $0xac] sm:$0xf]
      %v270 = vld [vmem:[%s207 + $0xb0] sm:$0xf]
      %v271 = vld [vmem:[%s207 + $0xb4] sm:$0xf]
      %v272 = vld [vmem:[%s207 + $0xb8] sm:$0xf]
      %v273 = vld [vmem:[%s207 + $0xbc] sm:$0xf]
      %v274 = vld [vmem:[%s207 + $0xc0] sm:$0xf]
      %v275 = vld [vmem:[%s207 + $0xc4] sm:$0xf]
      %v276 = vld [vmem:[%s207 + $0xc8] sm:$0xf]
      %v277 = vld [vmem:[%s207 + $0xcc] sm:$0xf]
      %v278 = vld [vmem:[%s207 + $0xd0] sm:$0xf]
      %v279 = vld [vmem:[%s207 + $0xd4] sm:$0xf]
      %v280 = vld [vmem:[%s207 + $0xd8] sm:$0xf]
      %v281 = vld [vmem:[%s207 + $0xdc] sm:$0xf]
      %v282 = vld [vmem:[%s207 + $0xe0] sm:$0xf]
      %v283 = vld [vmem:[%s207 + $0xe4] sm:$0xf]
      %v284 = vld [vmem:[%s207 + $0xe8] sm:$0xf]
      %v285 = vld [vmem:[%s207 + $0xec] sm:$0xf]
      %v286 = vld [vmem:[%s207 + $0xf0] sm:$0xf]
      %v287 = vld [vmem:[%s207 + $0xf4] sm:$0xf]
      %v288 = vld [vmem:[%s207 + $0xf8] sm:$0xf]
      %v289 = vld [vmem:[%s207 + $0xfc] sm:$0xf]
      %v290 = vld [vmem:[%s212] sm:$0xf]
      %v291 = vld [vmem:[%s212 + $0x4] sm:$0xf]
      %v292 = vld [vmem:[%s212 + $0x8] sm:$0xf]
      %v293 = vld [vmem:[%s212 + $0xc] sm:$0xf]
      %v294 = vld [vmem:[%s212 + $0x10] sm:$0x3]
      %v295 = vld [vmem:[%s215] sm:$0x1]
      %v297 = vperm.slane %v295, 0
      %v363 = vunpack.c.l.b16 %v226
      %v364 = vunpack.c.l.b16 %v227
      %v365 = vunpack.c.l.b16 %v228
      %v366 = vunpack.c.l.b16 %v229
      %v367 = vunpack.c.l.b16 %v230
      %v368 = vunpack.c.l.b16 %v231
      %v369 = vunpack.c.l.b16 %v232
      %v370 = vunpack.c.l.b16 %v233
      %v371 = vunpack.c.l.b16 %v234
      %v372 = vunpack.c.l.b16 %v235
      %v373 = vunpack.c.l.b16 %v236
      %v374 = vunpack.c.l.b16 %v237
      %v375 = vunpack.c.l.b16 %v238
      %v376 = vunpack.c.l.b16 %v239
      %v377 = vunpack.c.l.b16 %v240
      %v378 = vunpack.c.l.b16 %v241
      %v379 = vunpack.c.l.b16 %v242
      %v380 = vunpack.c.l.b16 %v243
      %v381 = vunpack.c.l.b16 %v244
      %v382 = vunpack.c.l.b16 %v245
      %v383 = vunpack.c.l.b16 %v246
      %v384 = vunpack.c.l.b16 %v247
      %v385 = vunpack.c.l.b16 %v248
      %v386 = vunpack.c.l.b16 %v249
      %v387 = vunpack.c.l.b16 %v250
      %v388 = vunpack.c.l.b16 %v251
      %v389 = vunpack.c.l.b16 %v252
      %v390 = vunpack.c.l.b16 %v253
      %v391 = vunpack.c.l.b16 %v254
      %v392 = vunpack.c.l.b16 %v255
      %v393 = vunpack.c.l.b16 %v256
      %v394 = vunpack.c.l.b16 %v257
      %v395 = vunpack.c.l.b16 %v258
      %v396 = vunpack.c.l.b16 %v259
      %v397 = vunpack.c.l.b16 %v260
      %v398 = vunpack.c.l.b16 %v261
      %v399 = vunpack.c.l.b16 %v262
      %v400 = vunpack.c.l.b16 %v263
      %v401 = vunpack.c.l.b16 %v264
      %v402 = vunpack.c.l.b16 %v265
      %v403 = vunpack.c.l.b16 %v266
      %v404 = vunpack.c.l.b16 %v267
      %v405 = vunpack.c.l.b16 %v268
      %v406 = vunpack.c.l.b16 %v269
      %v407 = vunpack.c.l.b16 %v270
      %v408 = vunpack.c.l.b16 %v271
      %v409 = vunpack.c.l.b16 %v272
      %v410 = vunpack.c.l.b16 %v273
      %v411 = vunpack.c.l.b16 %v274
      %v412 = vunpack.c.l.b16 %v275
      %v413 = vunpack.c.l.b16 %v276
      %v414 = vunpack.c.l.b16 %v277
      %v415 = vunpack.c.l.b16 %v278
      %v416 = vunpack.c.l.b16 %v279
      %v417 = vunpack.c.l.b16 %v280
      %v418 = vunpack.c.l.b16 %v281
      %v419 = vunpack.c.l.b16 %v282
      %v420 = vunpack.c.l.b16 %v283
      %v421 = vunpack.c.l.b16 %v284
      %v422 = vunpack.c.l.b16 %v285
      %v423 = vunpack.c.l.b16 %v286
      %v424 = vunpack.c.l.b16 %v287
      %v425 = vunpack.c.l.b16 %v288
      %v426 = vunpack.c.l.b16 %v289
      %v427 = vpack.c.b16 %v364, %v363
      %v428 = vpack.c.b16 %v366, %v365
      %v429 = vpack.c.b16 %v368, %v367
      %v430 = vpack.c.b16 %v370, %v369
      %v431 = vpack.c.b16 %v372, %v371
      %v432 = vpack.c.b16 %v374, %v373
      %v433 = vpack.c.b16 %v376, %v375
      %v434 = vpack.c.b16 %v378, %v377
      %v435 = vpack.c.b16 %v380, %v379
      %v436 = vpack.c.b16 %v382, %v381
      %v437 = vpack.c.b16 %v384, %v383
      %v438 = vpack.c.b16 %v386, %v385
      %v439 = vpack.c.b16 %v388, %v387
      %v440 = vpack.c.b16 %v390, %v389
      %v441 = vpack.c.b16 %v392, %v391
      %v442 = vpack.c.b16 %v394, %v393
      %v443 = vpack.c.b16 %v396, %v395
      %v444 = vpack.c.b16 %v398, %v397
      %v445 = vpack.c.b16 %v400, %v399
      %v446 = vpack.c.b16 %v402, %v401
      %v447 = vpack.c.b16 %v404, %v403
      %v448 = vpack.c.b16 %v406, %v405
      %v449 = vpack.c.b16 %v408, %v407
      %v450 = vpack.c.b16 %v410, %v409
      %v451 = vpack.c.b16 %v412, %v411
      %v452 = vpack.c.b16 %v414, %v413
      %v453 = vpack.c.b16 %v416, %v415
      %v454 = vpack.c.b16 %v418, %v417
      %v455 = vpack.c.b16 %v420, %v419
      %v456 = vpack.c.b16 %v422, %v421
      %v457 = vpack.c.b16 %v424, %v423
      %v458 = vpack.c.b16 %v426, %v425
      %v464 = vunpack.c.l.b16 %v290
      %v465 = vunpack.c.l.b16 %v291
      %v466 = vunpack.c.l.b16 %v292
      %v467 = vunpack.c.l.b16 %v293
      %v468 = vunpack.c.l.b16 %v294
      %v469 = vpack.c.b16 %v465, %v464
      %v470 = vpack.c.b16 %v467, %v466
      %v471 = vpack.c.b16 %v468, %v468
      %vm474 = vcmask 293888
      %v476 = vsel %vm474, %v427, 0
      %v479 = vsel %vm474, %v428, 0
      %v482 = vsel %vm474, %v429, 0
      %v485 = vsel %vm474, %v430, 0
      %v488 = vsel %vm474, %v431, 0
      %v491 = vsel %vm474, %v432, 0
      %v494 = vsel %vm474, %v433, 0
      %v497 = vsel %vm474, %v434, 0
      %v500 = vsel %vm474, %v435, 0
      %v503 = vsel %vm474, %v436, 0
      %v506 = vsel %vm474, %v437, 0
      %v509 = vsel %vm474, %v438, 0
      %v512 = vsel %vm474, %v439, 0
      %v515 = vsel %vm474, %v440, 0
      %v518 = vsel %vm474, %v441, 0
      %v521 = vsel %vm474, %v442, 0
      %v524 = vsel %vm474, %v443, 0
      %v527 = vsel %vm474, %v444, 0
      %v530 = vsel %vm474, %v445, 0
      %v533 = vsel %vm474, %v446, 0
      %v536 = vsel %vm474, %v447, 0
      %v539 = vsel %vm474, %v448, 0
      %v542 = vsel %vm474, %v449, 0
      %v545 = vsel %vm474, %v450, 0
      %v548 = vsel %vm474, %v451, 0
      %v551 = vsel %vm474, %v452, 0
      %v554 = vsel %vm474, %v453, 0
      %v557 = vsel %vm474, %v454, 0
      %v560 = vsel %vm474, %v455, 0
      %v563 = vsel %vm474, %v456, 0
      %v566 = vsel %vm474, %v457, 0
      %v569 = vsel %vm474, %v458, 0
      %vm571 = vcmask 1041408
      %v573 = vsel %vm571, %v471, 0
      %575 = vmatpush.bf16.msra.mxu0 0
      %576 = vmatpush.bf16.msra.mxu0 0
      %577 = vmatpush.bf16.msra.mxu0 0
      %578 = vmatpush.bf16.msra.mxu0 0
      %579 = vmatpush.bf16.msra.mxu0 0
      %580 = vmatpush.bf16.msra.mxu0 %v573
      %581 = vmatpush.bf16.msra.mxu0 %v470
      %582 = vmatpush.bf16.msra.mxu0 %v469
      %583 = vmatmul.bf16.gmra.mxu0 %v476
      %v584 = vpop.f32.mrf.mxu0
      %v585 = vadd.f32 %v297, %v584
      %v586 = vpop.f32.mrf.mxu0
      %v587 = vadd.f32 %v297, %v586
      %588 = vmatmul.bf16.gmra.mxu0 %v479
      %v589 = vpop.f32.mrf.mxu0
      %v590 = vadd.f32 %v297, %v589
      %v591 = vpop.f32.mrf.mxu0
      %v592 = vadd.f32 %v297, %v591
      %593 = vmatmul.bf16.gmra.mxu0 %v482
      %v594 = vpop.f32.mrf.mxu0
      %v595 = vadd.f32 %v297, %v594
      %v596 = vpop.f32.mrf.mxu0
      %v597 = vadd.f32 %v297, %v596
      %598 = vmatmul.bf16.gmra.mxu0 %v485
      %v599 = vpop.f32.mrf.mxu0
      %v600 = vadd.f32 %v297, %v599
      %v601 = vpop.f32.mrf.mxu0
      %v602 = vadd.f32 %v297, %v601
      %603 = vmatmul.bf16.gmra.mxu0 %v488
      %v604 = vpop.f32.mrf.mxu0
      %v605 = vadd.f32 %v297, %v604
      %v606 = vpop.f32.mrf.mxu0
      %v607 = vadd.f32 %v297, %v606
      %608 = vmatmul.bf16.gmra.mxu0 %v491
      %v609 = vpop.f32.mrf.mxu0
      %v610 = vadd.f32 %v297, %v609
      %v611 = vpop.f32.mrf.mxu0
      %v612 = vadd.f32 %v297, %v611
      %613 = vmatmul.bf16.gmra.mxu0 %v494
      %v614 = vpop.f32.mrf.mxu0
      %v615 = vadd.f32 %v297, %v614
      %v616 = vpop.f32.mrf.mxu0
      %v617 = vadd.f32 %v297, %v616
      %618 = vmatmul.bf16.gmra.mxu0 %v497
      %v619 = vpop.f32.mrf.mxu0
      %v620 = vadd.f32 %v297, %v619
      %v621 = vpop.f32.mrf.mxu0
      %v622 = vadd.f32 %v297, %v621
      %623 = vmatmul.bf16.gmra.mxu0 %v500
      %v624 = vpop.f32.mrf.mxu0
      %v625 = vadd.f32 %v297, %v624
      %v626 = vpop.f32.mrf.mxu0
      %v627 = vadd.f32 %v297, %v626
      %628 = vmatmul.bf16.gmra.mxu0 %v503
      %v629 = vpop.f32.mrf.mxu0
      %v630 = vadd.f32 %v297, %v629
      %v631 = vpop.f32.mrf.mxu0
      %v632 = vadd.f32 %v297, %v631
      %633 = vmatmul.bf16.gmra.mxu0 %v506
      %v634 = vpop.f32.mrf.mxu0
      %v635 = vadd.f32 %v297, %v634
      %v636 = vpop.f32.mrf.mxu0
      %v637 = vadd.f32 %v297, %v636
      %638 = vmatmul.bf16.gmra.mxu0 %v509
      %v639 = vpop.f32.mrf.mxu0
      %v640 = vadd.f32 %v297, %v639
      %v641 = vpop.f32.mrf.mxu0
      %v642 = vadd.f32 %v297, %v641
      %643 = vmatmul.bf16.gmra.mxu0 %v512
      %v644 = vpop.f32.mrf.mxu0
      %v645 = vadd.f32 %v297, %v644
      %v646 = vpop.f32.mrf.mxu0
      %v647 = vadd.f32 %v297, %v646
      %648 = vmatmul.bf16.gmra.mxu0 %v515
      %v649 = vpop.f32.mrf.mxu0
      %v650 = vadd.f32 %v297, %v649
      %v651 = vpop.f32.mrf.mxu0
      %v652 = vadd.f32 %v297, %v651
      %653 = vmatmul.bf16.gmra.mxu0 %v518
      %v654 = vpop.f32.mrf.mxu0
      %v655 = vadd.f32 %v297, %v654
      %v656 = vpop.f32.mrf.mxu0
      %v657 = vadd.f32 %v297, %v656
      %658 = vmatmul.bf16.gmra.mxu0 %v521
      %v659 = vpop.f32.mrf.mxu0
      %v660 = vadd.f32 %v297, %v659
      %v661 = vpop.f32.mrf.mxu0
      %v662 = vadd.f32 %v297, %v661
      %663 = vmatmul.bf16.gmra.mxu0 %v524
      %v664 = vpop.f32.mrf.mxu0
      %v665 = vadd.f32 %v297, %v664
      %v666 = vpop.f32.mrf.mxu0
      %v667 = vadd.f32 %v297, %v666
      %668 = vmatmul.bf16.gmra.mxu0 %v527
      %v669 = vpop.f32.mrf.mxu0
      %v670 = vadd.f32 %v297, %v669
      %v671 = vpop.f32.mrf.mxu0
      %v672 = vadd.f32 %v297, %v671
      %673 = vmatmul.bf16.gmra.mxu0 %v530
      %v674 = vpop.f32.mrf.mxu0
      %v675 = vadd.f32 %v297, %v674
      %v676 = vpop.f32.mrf.mxu0
      %v677 = vadd.f32 %v297, %v676
      %678 = vmatmul.bf16.gmra.mxu0 %v533
      %v679 = vpop.f32.mrf.mxu0
      %v680 = vadd.f32 %v297, %v679
      %v681 = vpop.f32.mrf.mxu0
      %v682 = vadd.f32 %v297, %v681
      %683 = vmatmul.bf16.gmra.mxu0 %v536
      %v684 = vpop.f32.mrf.mxu0
      %v685 = vadd.f32 %v297, %v684
      %v686 = vpop.f32.mrf.mxu0
      %v687 = vadd.f32 %v297, %v686
      %688 = vmatmul.bf16.gmra.mxu0 %v539
      %v689 = vpop.f32.mrf.mxu0
      %v690 = vadd.f32 %v297, %v689
      %v691 = vpop.f32.mrf.mxu0
      %v692 = vadd.f32 %v297, %v691
      %693 = vmatmul.bf16.gmra.mxu0 %v542
      %v694 = vpop.f32.mrf.mxu0
      %v695 = vadd.f32 %v297, %v694
      %v696 = vpop.f32.mrf.mxu0
      %v697 = vadd.f32 %v297, %v696
      %698 = vmatmul.bf16.gmra.mxu0 %v545
      %v699 = vpop.f32.mrf.mxu0
      %v700 = vadd.f32 %v297, %v699
      %v701 = vpop.f32.mrf.mxu0
      %v702 = vadd.f32 %v297, %v701
      %703 = vmatmul.bf16.gmra.mxu0 %v548
      %v704 = vpop.f32.mrf.mxu0
      %v705 = vadd.f32 %v297, %v704
      %v706 = vpop.f32.mrf.mxu0
      %v707 = vadd.f32 %v297, %v706
      %708 = vmatmul.bf16.gmra.mxu0 %v551
      %v709 = vpop.f32.mrf.mxu0
      %v710 = vadd.f32 %v297, %v709
      %v711 = vpop.f32.mrf.mxu0
      %v712 = vadd.f32 %v297, %v711
      %713 = vmatmul.bf16.gmra.mxu0 %v554
      %v714 = vpop.f32.mrf.mxu0
      %v715 = vadd.f32 %v297, %v714
      %v716 = vpop.f32.mrf.mxu0
      %v717 = vadd.f32 %v297, %v716
      %718 = vmatmul.bf16.gmra.mxu0 %v557
      %v719 = vpop.f32.mrf.mxu0
      %v720 = vadd.f32 %v297, %v719
      %v721 = vpop.f32.mrf.mxu0
      %v722 = vadd.f32 %v297, %v721
      %723 = vmatmul.bf16.gmra.mxu0 %v560
      %v724 = vpop.f32.mrf.mxu0
      %v725 = vadd.f32 %v297, %v724
      %v726 = vpop.f32.mrf.mxu0
      %v727 = vadd.f32 %v297, %v726
      %728 = vmatmul.bf16.gmra.mxu0 %v563
      %v729 = vpop.f32.mrf.mxu0
      %v730 = vadd.f32 %v297, %v729
      %v731 = vpop.f32.mrf.mxu0
      %v732 = vadd.f32 %v297, %v731
      %733 = vmatmul.bf16.gmra.mxu0 %v566
      %v734 = vpop.f32.mrf.mxu0
      %v735 = vadd.f32 %v297, %v734
      %v736 = vpop.f32.mrf.mxu0
      %v737 = vadd.f32 %v297, %v736
      %738 = vmatmul.bf16.gmra.mxu0 %v569
      %v739 = vpop.f32.mrf.mxu0
      %v740 = vadd.f32 %v297, %v739
      %v741 = vpop.f32.mrf.mxu0
      %v742 = vadd.f32 %v297, %v741
      %743 = vdwg.mxu0
      %744 = vst [vmem:[%s223] sm:$0xff] %v585
      %745 = vst [vmem:[%s223 + $0x8] sm:$0xff] %v587
      %746 = vst [vmem:[%s223 + $0x10] sm:$0xff] %v590
      %747 = vst [vmem:[%s223 + $0x18] sm:$0xff] %v592
      %748 = vst [vmem:[%s223 + $0x20] sm:$0xff] %v595
      %749 = vst [vmem:[%s223 + $0x28] sm:$0xff] %v597
      %750 = vst [vmem:[%s223 + $0x30] sm:$0xff] %v600
      %751 = vst [vmem:[%s223 + $0x38] sm:$0xff] %v602
      %752 = vst [vmem:[%s223 + $0x40] sm:$0xff] %v605
      %753 = vst [vmem:[%s223 + $0x48] sm:$0xff] %v607
      %754 = vst [vmem:[%s223 + $0x50] sm:$0xff] %v610
      %755 = vst [vmem:[%s223 + $0x58] sm:$0xff] %v612
      %756 = vst [vmem:[%s223 + $0x60] sm:$0xff] %v615
      %757 = vst [vmem:[%s223 + $0x68] sm:$0xff] %v617
      %758 = vst [vmem:[%s223 + $0x70] sm:$0xff] %v620
      %759 = vst [vmem:[%s223 + $0x78] sm:$0xff] %v622
      %760 = vst [vmem:[%s223 + $0x80] sm:$0xff] %v625
      %761 = vst [vmem:[%s223 + $0x88] sm:$0xff] %v627
      %762 = vst [vmem:[%s223 + $0x90] sm:$0xff] %v630
      %763 = vst [vmem:[%s223 + $0x98] sm:$0xff] %v632
      %764 = vst [vmem:[%s223 + $0xa0] sm:$0xff] %v635
      %765 = vst [vmem:[%s223 + $0xa8] sm:$0xff] %v637
      %766 = vst [vmem:[%s223 + $0xb0] sm:$0xff] %v640
      %767 = vst [vmem:[%s223 + $0xb8] sm:$0xff] %v642
      %768 = vst [vmem:[%s223 + $0xc0] sm:$0xff] %v645
      %769 = vst [vmem:[%s223 + $0xc8] sm:$0xff] %v647
      %770 = vst [vmem:[%s223 + $0xd0] sm:$0xff] %v650
      %771 = vst [vmem:[%s223 + $0xd8] sm:$0xff] %v652
      %772 = vst [vmem:[%s223 + $0xe0] sm:$0xff] %v655
      %773 = vst [vmem:[%s223 + $0xe8] sm:$0xff] %v657
      %774 = vst [vmem:[%s223 + $0xf0] sm:$0xff] %v660
      %775 = vst [vmem:[%s223 + $0xf8] sm:$0xff] %v662
      %776 = vst [vmem:[%s223 + $0x100] sm:$0xff] %v665
      %777 = vst [vmem:[%s223 + $0x108] sm:$0xff] %v667
      %778 = vst [vmem:[%s223 + $0x110] sm:$0xff] %v670
      %779 = vst [vmem:[%s223 + $0x118] sm:$0xff] %v672
      %780 = vst [vmem:[%s223 + $0x120] sm:$0xff] %v675
      %781 = vst [vmem:[%s223 + $0x128] sm:$0xff] %v677
      %782 = vst [vmem:[%s223 + $0x130] sm:$0xff] %v680
      %783 = vst [vmem:[%s223 + $0x138] sm:$0xff] %v682
      %784 = vst [vmem:[%s223 + $0x140] sm:$0xff] %v685
      %785 = vst [vmem:[%s223 + $0x148] sm:$0xff] %v687
      %786 = vst [vmem:[%s223 + $0x150] sm:$0xff] %v690
      %787 = vst [vmem:[%s223 + $0x158] sm:$0xff] %v692
      %788 = vst [vmem:[%s223 + $0x160] sm:$0xff] %v695
      %789 = vst [vmem:[%s223 + $0x168] sm:$0xff] %v697
      %790 = vst [vmem:[%s223 + $0x170] sm:$0xff] %v700
      %791 = vst [vmem:[%s223 + $0x178] sm:$0xff] %v702
      %792 = vst [vmem:[%s223 + $0x180] sm:$0xff] %v705
      %793 = vst [vmem:[%s223 + $0x188] sm:$0xff] %v707
      %794 = vst [vmem:[%s223 + $0x190] sm:$0xff] %v710
      %795 = vst [vmem:[%s223 + $0x198] sm:$0xff] %v712
      %796 = vst [vmem:[%s223 + $0x1a0] sm:$0xff] %v715
      %797 = vst [vmem:[%s223 + $0x1a8] sm:$0xff] %v717
      %798 = vst [vmem:[%s223 + $0x1b0] sm:$0xff] %v720
      %799 = vst [vmem:[%s223 + $0x1b8] sm:$0xff] %v722
      %800 = vst [vmem:[%s223 + $0x1c0] sm:$0xff] %v725
      %801 = vst [vmem:[%s223 + $0x1c8] sm:$0xff] %v727
      %802 = vst [vmem:[%s223 + $0x1d0] sm:$0xff] %v730
      %803 = vst [vmem:[%s223 + $0x1d8] sm:$0xff] %v732
      %804 = vst [vmem:[%s223 + $0x1e0] sm:$0xff] %v735
      %805 = vst [vmem:[%s223 + $0x1e8] sm:$0xff] %v737
      %806 = vst [vmem:[%s223 + $0x1f0] sm:$0xff] %v740
      %807 = vst [vmem:[%s223 + $0x1f8] sm:$0xff] %v742
      %s808 = smul.u32 64, %s18
      %p809 = scmp.lt.s32.totalorder %s808, 1023
      %s810 = scalar_select %p809, %s808, 1023
      %p811 = scmp.lt.s32.totalorder %s19, 0
      %s812 = scalar_select %p811, %s19, 0
      %s813 = sadd.s32 %s812, %s810
      %s814 = smul.addr %s813, 8
      %s815 = scalar_lea.vmem %s3, %s814
      // Predicated region
      $region33: #{obj_ls_d_net_forward.18} parent=31 // pred_check
        %p816 = pneg %p124
      $region34: #{obj_ls_d_net_forward.18} parent=31 // pred_check_branch
        %818 = sbr.rel (%p816) target = $region36
      $region35: #{obj_ls_d_net_forward.18} parent=31 // pred_region
        %s819 = smul.u32 64, %s18
      $region36: #{obj_ls_d_net_forward.18} parent=31 // pred_fallthru
        _
    $region32: #{obj_ls_d_net_forward.18} parent=5 // pred_fallthru
      _
    %p820 = scmp.le.s32.totalorder 2, %s9
    // Predicated region
    $region37: #{obj_ls_d_net_forward.18} parent=5 // pred_check
      %p821 = pneg %p820
    $region38: #{obj_ls_d_net_forward.18} parent=5 // pred_check_branch
      %823 = sbr.rel (%p821) target = $region40
    $region39: #{obj_ls_d_net_forward.18} parent=5 // pred_region
      %s824 = ssub.s32 %s9, 2
      // Predicated region
      $region41: #{obj_ls_d_net_forward.18} parent=39 // pred_check
        %p825 = pneg %p130
      $region42: #{obj_ls_d_net_forward.18} parent=39 // pred_check_branch
        %827 = sbr.rel (%p825) target = $region44
      $region43: #{obj_ls_d_net_forward.18} parent=39 // pred_region
        %s828 = smul.u32 64, %s20
        %p829 = scmp.lt.s32.totalorder %s828, 1023
        %s830 = scalar_select %p829, %s828, 1023
        %p831 = scmp.lt.s32.totalorder %s21, 0
        %s832 = scalar_select %p831, %s21, 0
        %s833 = sadd.s32 %s832, %s830
        %s834 = smul.addr %s833, 8
        %s835 = scalar_lea.vmem %s3, %s834
      $region44: #{obj_ls_d_net_forward.18} parent=39 // pred_fallthru
        _
    $region40: #{obj_ls_d_net_forward.18} parent=5 // pred_fallthru
      _
  $region6: #{obj_ls_d_net_forward.18} parent=0 // loop_footer
    %s13 = sadd.s32 1, %s9
  $region7: #{obj_ls_d_net_forward.18} parent=0 // loop_footer_branch
    %8 = sbr.rel target = $region3
  $region8: #{obj_ls_d_net_forward.18} parent=0 // loop_exit
    _

// kernel: obj_ls_d_net_forward.19
$region0: #{obj_ls_d_net_forward.19}
  #allocation0 [shape = 'u32[]', space=smem, size = 0x4, offset = 0x4, fixed_abs, tag = 'smem constant byte address 0x4 - core index']
  #allocation1 [shape = 'u32[72,128]{1,0:T(1,128)}', space=vmem, size = 0x9000, scoped, tag = 'internal scratch']
  %s0 = inlined_call_operand.vmem [shape: f32[8,4096], index: 0, kind: input, shape index: {}]
  %s1 = inlined_call_operand.vmem [shape: f32[8,4096], index: 1, kind: output, shape index: {}]
  %s2 = sld [smem:[#allocation0]]
  $region14: #{obj_ls_d_net_forward.19} parent=0
    _
  %s4 = ssub.s32 1, %s2
  %s5 = scalar_select 0, %s4, %s2
  // Predicated region
  $region2: #{obj_ls_d_net_forward.19} parent=0 // pred_check
    _
  $region3: #{obj_ls_d_net_forward.19} parent=0 // pred_check_branch
    %7 = sbr.rel (0) target = $region5
  $region4: #{obj_ls_d_net_forward.19} parent=0 // pred_region
    _
  $region5: #{obj_ls_d_net_forward.19} parent=0 // pred_fallthru
    _
  %v8 = vld [vmem:[%s0] sm:$0xff]
  %v9 = vld [vmem:[%s0 + $0x8] sm:$0xff]
  %v10 = vld [vmem:[%s0 + $0x10] sm:$0xff]
  %v11 = vld [vmem:[%s0 + $0x18] sm:$0xff]
  %v12 = vld [vmem:[%s0 + $0x20] sm:$0xff]
  %v13 = vld [vmem:[%s0 + $0x28] sm:$0xff]
  %v14 = vld [vmem:[%s0 + $0x30] sm:$0xff]
  %v15 = vld [vmem:[%s0 + $0x38] sm:$0xff]
  %v16 = vld [vmem:[%s0 + $0x40] sm:$0xff]
  %v17 = vld [vmem:[%s0 + $0x48] sm:$0xff]
  %v18 = vld [vmem:[%s0 + $0x50] sm:$0xff]
  %v19 = vld [vmem:[%s0 + $0x58] sm:$0xff]
  %v20 = vld [vmem:[%s0 + $0x60] sm:$0xff]
  %v21 = vld [vmem:[%s0 + $0x68] sm:$0xff]
  %v22 = vld [vmem:[%s0 + $0x70] sm:$0xff]
  %v23 = vld [vmem:[%s0 + $0x78] sm:$0xff]
  %v24 = vld [vmem:[%s0 + $0x80] sm:$0xff]
  %v25 = vld [vmem:[%s0 + $0x88] sm:$0xff]
  %v26 = vld [vmem:[%s0 + $0x90] sm:$0xff]
  %v27 = vld [vmem:[%s0 + $0x98] sm:$0xff]
  %v28 = vld [vmem:[%s0 + $0xa0] sm:$0xff]
  %v29 = vld [vmem:[%s0 + $0xa8] sm:$0xff]
  %v30 = vld [vmem:[%s0 + $0xb0] sm:$0xff]
  %v31 = vld [vmem:[%s0 + $0xb8] sm:$0xff]
  %v32 = vld [vmem:[%s0 + $0xc0] sm:$0xff]
  %v33 = vld [vmem:[%s0 + $0xc8] sm:$0xff]
  %v34 = vld [vmem:[%s0 + $0xd0] sm:$0xff]
  %v35 = vld [vmem:[%s0 + $0xd8] sm:$0xff]
  %v36 = vld [vmem:[%s0 + $0xe0] sm:$0xff]
  %v37 = vld [vmem:[%s0 + $0xe8] sm:$0xff]
  %v38 = vld [vmem:[%s0 + $0xf0] sm:$0xff]
  %v39 = vld [vmem:[%s0 + $0xf8] sm:$0xff]
  %v40 = vadd.f32 %v8, %v9
  %v41 = vadd.f32 %v40, %v10
  %v42 = vadd.f32 %v41, %v11
  %v43 = vadd.f32 %v42, %v12
  %v44 = vadd.f32 %v43, %v13
  %v45 = vadd.f32 %v44, %v14
  %v46 = vadd.f32 %v45, %v15
  %v47 = vadd.f32 %v46, %v16
  %v48 = vadd.f32 %v47, %v17
  %v49 = vadd.f32 %v48, %v18
  %v50 = vadd.f32 %v49, %v19
  %v51 = vadd.f32 %v50, %v20
  %v52 = vadd.f32 %v51, %v21
  %v53 = vadd.f32 %v52, %v22
  %v54 = vadd.f32 %v53, %v23
  %v55 = vadd.f32 %v54, %v24
  %v56 = vadd.f32 %v55, %v25
  %v57 = vadd.f32 %v56, %v26
  %v58 = vadd.f32 %v57, %v27
  %v59 = vadd.f32 %v58, %v28
  %v60 = vadd.f32 %v59, %v29
  %v61 = vadd.f32 %v60, %v30
  %v62 = vadd.f32 %v61, %v31
  %v63 = vadd.f32 %v62, %v32
  %v64 = vadd.f32 %v63, %v33
  %v65 = vadd.f32 %v64, %v34
  %v66 = vadd.f32 %v65, %v35
  %v67 = vadd.f32 %v66, %v36
  %v68 = vadd.f32 %v67, %v37
  %v69 = vadd.f32 %v68, %v38
  %v70 = vadd.f32 %v69, %v39
  %71 = vadd.xlane.f32.xlu0 %v70
  %v72 = vpop.xlane.xlu0 %71
  %v73 = vrcp.pop 4096.0
  %v74 = vmul.f32 4096.0, %v73
  %v75 = vsub.f32 1.0, %v74
  %v76 = vmul.f32 %v73, %v75
  %v77 = vadd.f32 %v73, %v76
  %vm78 = vweird.f32 %v73
  %v79 = vsel %vm78, %v73, %v77
  %v80 = vmul.f32 %v72, %v79
  %v81 = vsub.f32 %v8, %v80
  %v82 = vsub.f32 %v9, %v80
  %v83 = vsub.f32 %v10, %v80
  %v84 = vsub.f32 %v11, %v80
  %v85 = vsub.f32 %v12, %v80
  %v86 = vsub.f32 %v13, %v80
  %v87 = vsub.f32 %v14, %v80
  %v88 = vsub.f32 %v15, %v80
  %v89 = vsub.f32 %v16, %v80
  %v90 = vsub.f32 %v17, %v80
  %v91 = vsub.f32 %v18, %v80
  %v92 = vsub.f32 %v19, %v80
  %v93 = vsub.f32 %v20, %v80
  %v94 = vsub.f32 %v21, %v80
  %v95 = vsub.f32 %v22, %v80
  %v96 = vsub.f32 %v23, %v80
  %v97 = vsub.f32 %v24, %v80
  %v98 = vsub.f32 %v25, %v80
  %v99 = vsub.f32 %v26, %v80
  %v100 = vsub.f32 %v27, %v80
  %v101 = vsub.f32 %v28, %v80
  %v102 = vsub.f32 %v29, %v80
  %v103 = vsub.f32 %v30, %v80
  %v104 = vsub.f32 %v31, %v80
  %v105 = vsub.f32 %v32, %v80
  %v106 = vsub.f32 %v33, %v80
  %v107 = vsub.f32 %v34, %v80
  %v108 = vsub.f32 %v35, %v80
  %v109 = vsub.f32 %v36, %v80
  %v110 = vsub.f32 %v37, %v80
  %v111 = vsub.f32 %v38, %v80
  %v112 = vsub.f32 %v39, %v80
  %v113 = vmul.f32 %v81, %v81
  %v114 = vmul.f32 %v82, %v82
  %v115 = vmul.f32 %v83, %v83
  %v116 = vmul.f32 %v84, %v84
  %v117 = vmul.f32 %v85, %v85
  %v118 = vmul.f32 %v86, %v86
  %v119 = vmul.f32 %v87, %v87
  %v120 = vmul.f32 %v88, %v88
  %v121 = vmul.f32 %v89, %v89
  %v122 = vmul.f32 %v90, %v90
  %v123 = vmul.f32 %v91, %v91
  %v124 = vmul.f32 %v92, %v92
  %v125 = vmul.f32 %v93, %v93
  %v126 = vmul.f32 %v94, %v94
  %v127 = vmul.f32 %v95, %v95
  %v128 = vmul.f32 %v96, %v96
  %v129 = vmul.f32 %v97, %v97
  %v130 = vmul.f32 %v98, %v98
  %v131 = vmul.f32 %v99, %v99
  %v132 = vmul.f32 %v100, %v100
  %v133 = vmul.f32 %v101, %v101
  %v134 = vmul.f32 %v102, %v102
  %v135 = vmul.f32 %v103, %v103
  %v136 = vmul.f32 %v104, %v104
  %v137 = vmul.f32 %v105, %v105
  %v138 = vmul.f32 %v106, %v106
  %v139 = vmul.f32 %v107, %v107
  %v140 = vmul.f32 %v108, %v108
  %v141 = vmul.f32 %v109, %v109
  %v142 = vmul.f32 %v110, %v110
  %v143 = vmul.f32 %v111, %v111
  %v144 = vmul.f32 %v112, %v112
  %v145 = vadd.f32 %v113, %v114
  %v146 = vadd.f32 %v145, %v115
  %v147 = vadd.f32 %v146, %v116
  %v148 = vadd.f32 %v147, %v117
  %v149 = vadd.f32 %v148, %v118
  %v150 = vadd.f32 %v149, %v119
  %v151 = vadd.f32 %v150, %v120
  %v152 = vadd.f32 %v151, %v121
  %v153 = vadd.f32 %v152, %v122
  %v154 = vadd.f32 %v153, %v123
  %v155 = vadd.f32 %v154, %v124
  %v156 = vadd.f32 %v155, %v125
  %v157 = vadd.f32 %v156, %v126
  %v158 = vadd.f32 %v157, %v127
  %v159 = vadd.f32 %v158, %v128
  %v160 = vadd.f32 %v159, %v129
  %v161 = vadd.f32 %v160, %v130
  %v162 = vadd.f32 %v161, %v131
  %v163 = vadd.f32 %v162, %v132
  %v164 = vadd.f32 %v163, %v133
  %v165 = vadd.f32 %v164, %v134
  %v166 = vadd.f32 %v165, %v135
  %v167 = vadd.f32 %v166, %v136
  %v168 = vadd.f32 %v167, %v137
  %v169 = vadd.f32 %v168, %v138
  %v170 = vadd.f32 %v169, %v139
  %v171 = vadd.f32 %v170, %v140
  %v172 = vadd.f32 %v171, %v141
  %v173 = vadd.f32 %v172, %v142
  %v174 = vadd.f32 %v173, %v143
  %v175 = vadd.f32 %v174, %v144
  %176 = vadd.xlane.f32.xlu0 %v175
  %v177 = vpop.xlane.xlu0 %176
  %v178 = vmul.f32 %v177, %v79
  %v179 = vadd.f32 %v178, 1e-05
  %v180 = vrsqrt.pop %v179
  %v181 = vmul.f32 %v180, %v179
  %v182 = vmul.f32 %v181, %v180
  %v183 = vmul.f32 0.5, %v182
  %v184 = vsub.f32 1.5, %v183
  %v185 = vmul.f32 %v180, %v184
  %vm186 = vweird.f32 %v179
  %vm187 = vweird.f32 %v180
  %vm188 = vmor %vm186, %vm187
  %v189 = vsel %vm188, %v180, %v185
  %v190 = vmul.f32 %v81, %v189
  %v191 = vmul.f32 %v82, %v189
  %v192 = vmul.f32 %v83, %v189
  %v193 = vmul.f32 %v84, %v189
  %v194 = vmul.f32 %v85, %v189
  %v195 = vmul.f32 %v86, %v189
  %v196 = vmul.f32 %v87, %v189
  %v197 = vmul.f32 %v88, %v189
  %v198 = vmul.f32 %v89, %v189
  %v199 = vmul.f32 %v90, %v189
  %v200 = vmul.f32 %v91, %v189
  %v201 = vmul.f32 %v92, %v189
  %v202 = vmul.f32 %v93, %v189
  %v203 = vmul.f32 %v94, %v189
  %v204 = vmul.f32 %v95, %v189
  %v205 = vmul.f32 %v96, %v189
  %v206 = vmul.f32 %v97, %v189
  %v207 = vmul.f32 %v98, %v189
  %v208 = vmul.f32 %v99, %v189
  %v209 = vmul.f32 %v100, %v189
  %v210 = vmul.f32 %v101, %v189
  %v211 = vmul.f32 %v102, %v189
  %v212 = vmul.f32 %v103, %v189
  %v213 = vmul.f32 %v104, %v189
  %v214 = vmul.f32 %v105, %v189
  %v215 = vmul.f32 %v106, %v189
  %v216 = vmul.f32 %v107, %v189
  %v217 = vmul.f32 %v108, %v189
  %v218 = vmul.f32 %v109, %v189
  %v219 = vmul.f32 %v110, %v189
  %v220 = vmul.f32 %v111, %v189
  %v221 = vmul.f32 %v112, %v189
  %vm222 = vcmp.ge.f32.partialorder %v190, 0.0
  %vm223 = vcmp.ge.f32.partialorder %v191, 0.0
  %vm224 = vcmp.ge.f32.partialorder %v192, 0.0
  %vm225 = vcmp.ge.f32.partialorder %v193, 0.0
  %vm226 = vcmp.ge.f32.partialorder %v194, 0.0
  %vm227 = vcmp.ge.f32.partialorder %v195, 0.0
  %vm228 = vcmp.ge.f32.partialorder %v196, 0.0
  %vm229 = vcmp.ge.f32.partialorder %v197, 0.0
  %vm230 = vcmp.ge.f32.partialorder %v198, 0.0
  %vm231 = vcmp.ge.f32.partialorder %v199, 0.0
  %vm232 = vcmp.ge.f32.partialorder %v200, 0.0
  %vm233 = vcmp.ge.f32.partialorder %v201, 0.0
  %vm234 = vcmp.ge.f32.partialorder %v202, 0.0
  %vm235 = vcmp.ge.f32.partialorder %v203, 0.0
  %vm236 = vcmp.ge.f32.partialorder %v204, 0.0
  %vm237 = vcmp.ge.f32.partialorder %v205, 0.0
  %vm238 = vcmp.ge.f32.partialorder %v206, 0.0
  %vm239 = vcmp.ge.f32.partialorder %v207, 0.0
  %vm240 = vcmp.ge.f32.partialorder %v208, 0.0
  %vm241 = vcmp.ge.f32.partialorder %v209, 0.0
  %vm242 = vcmp.ge.f32.partialorder %v210, 0.0
  %vm243 = vcmp.ge.f32.partialorder %v211, 0.0
  %vm244 = vcmp.ge.f32.partialorder %v212, 0.0
  %vm245 = vcmp.ge.f32.partialorder %v213, 0.0
  %vm246 = vcmp.ge.f32.partialorder %v214, 0.0
  %vm247 = vcmp.ge.f32.partialorder %v215, 0.0
  %vm248 = vcmp.ge.f32.partialorder %v216, 0.0
  %vm249 = vcmp.ge.f32.partialorder %v217, 0.0
  %vm250 = vcmp.ge.f32.partialorder %v218, 0.0
  %vm251 = vcmp.ge.f32.partialorder %v219, 0.0
  %vm252 = vcmp.ge.f32.partialorder %v220, 0.0
  %vm253 = vcmp.ge.f32.partialorder %v221, 0.0
  %v254 = vmul.f32 %v190, 0.2
  %v255 = vmul.f32 %v191, 0.2
  %v256 = vmul.f32 %v192, 0.2
  %v257 = vmul.f32 %v193, 0.2
  %v258 = vmul.f32 %v194, 0.2
  %v259 = vmul.f32 %v195, 0.2
  %v260 = vmul.f32 %v196, 0.2
  %v261 = vmul.f32 %v197, 0.2
  %v262 = vmul.f32 %v198, 0.2
  %v263 = vmul.f32 %v199, 0.2
  %v264 = vmul.f32 %v200, 0.2
  %v265 = vmul.f32 %v201, 0.2
  %v266 = vmul.f32 %v202, 0.2
  %v267 = vmul.f32 %v203, 0.2
  %v268 = vmul.f32 %v204, 0.2
  %v269 = vmul.f32 %v205, 0.2
  %v270 = vmul.f32 %v206, 0.2
  %v271 = vmul.f32 %v207, 0.2
  %v272 = vmul.f32 %v208, 0.2
  %v273 = vmul.f32 %v209, 0.2
  %v274 = vmul.f32 %v210, 0.2
  %v275 = vmul.f32 %v211, 0.2
  %v276 = vmul.f32 %v212, 0.2
  %v277 = vmul.f32 %v213, 0.2
  %v278 = vmul.f32 %v214, 0.2
  %v279 = vmul.f32 %v215, 0.2
  %v280 = vmul.f32 %v216, 0.2
  %v281 = vmul.f32 %v217, 0.2
  %v282 = vmul.f32 %v218, 0.2
  %v283 = vmul.f32 %v219, 0.2
  %v284 = vmul.f32 %v220, 0.2
  %v285 = vmul.f32 %v221, 0.2
  %v286 = vsel %vm222, %v190, %v254
  %v287 = vsel %vm223, %v191, %v255
  %v288 = vsel %vm224, %v192, %v256
  %v289 = vsel %vm225, %v193, %v257
  %v290 = vsel %vm226, %v194, %v258
  %v291 = vsel %vm227, %v195, %v259
  %v292 = vsel %vm228, %v196, %v260
  %v293 = vsel %vm229, %v197, %v261
  %v294 = vsel %vm230, %v198, %v262
  %v295 = vsel %vm231, %v199, %v263
  %v296 = vsel %vm232, %v200, %v264
  %v297 = vsel %vm233, %v201, %v265
  %v298 = vsel %vm234, %v202, %v266
  %v299 = vsel %vm235, %v203, %v267
  %v300 = vsel %vm236, %v204, %v268
  %v301 = vsel %vm237, %v205, %v269
  %v302 = vsel %vm238, %v206, %v270
  %v303 = vsel %vm239, %v207, %v271
  %v304 = vsel %vm240, %v208, %v272
  %v305 = vsel %vm241, %v209, %v273
  %v306 = vsel %vm242, %v210, %v274
  %v307 = vsel %vm243, %v211, %v275
  %v308 = vsel %vm244, %v212, %v276
  %v309 = vsel %vm245, %v213, %v277
  %v310 = vsel %vm246, %v214, %v278
  %v311 = vsel %vm247, %v215, %v279
  %v312 = vsel %vm248, %v216, %v280
  %v313 = vsel %vm249, %v217, %v281
  %v314 = vsel %vm250, %v218, %v282
  %v315 = vsel %vm251, %v219, %v283
  %v316 = vsel %vm252, %v220, %v284
  %v317 = vsel %vm253, %v221, %v285
  %318 = vst [vmem:[%s1] sm:$0xff] %v286
  %319 = vst [vmem:[%s1 + $0x8] sm:$0xff] %v287
  %320 = vst [vmem:[%s1 + $0x10] sm:$0xff] %v288
  %321 = vst [vmem:[%s1 + $0x18] sm:$0xff] %v289
  %322 = vst [vmem:[%s1 + $0x20] sm:$0xff] %v290
  %323 = vst [vmem:[%s1 + $0x28] sm:$0xff] %v291
  %324 = vst [vmem:[%s1 + $0x30] sm:$0xff] %v292
  %325 = vst [vmem:[%s1 + $0x38] sm:$0xff] %v293
  %326 = vst [vmem:[%s1 + $0x40] sm:$0xff] %v294
  %327 = vst [vmem:[%s1 + $0x48] sm:$0xff] %v295
  %328 = vst [vmem:[%s1 + $0x50] sm:$0xff] %v296
  %329 = vst [vmem:[%s1 + $0x58] sm:$0xff] %v297
  %330 = vst [vmem:[%s1 + $0x60] sm:$0xff] %v298
  %331 = vst [vmem:[%s1 + $0x68] sm:$0xff] %v299
  %332 = vst [vmem:[%s1 + $0x70] sm:$0xff] %v300
  %333 = vst [vmem:[%s1 + $0x78] sm:$0xff] %v301
  %334 = vst [vmem:[%s1 + $0x80] sm:$0xff] %v302
  %335 = vst [vmem:[%s1 + $0x88] sm:$0xff] %v303
  %336 = vst [vmem:[%s1 + $0x90] sm:$0xff] %v304
  %337 = vst [vmem:[%s1 + $0x98] sm:$0xff] %v305
  %338 = vst [vmem:[%s1 + $0xa0] sm:$0xff] %v306
  %339 = vst [vmem:[%s1 + $0xa8] sm:$0xff] %v307
  %340 = vst [vmem:[%s1 + $0xb0] sm:$0xff] %v308
  %341 = vst [vmem:[%s1 + $0xb8] sm:$0xff] %v309
  %342 = vst [vmem:[%s1 + $0xc0] sm:$0xff] %v310
  %343 = vst [vmem:[%s1 + $0xc8] sm:$0xff] %v311
  %344 = vst [vmem:[%s1 + $0xd0] sm:$0xff] %v312
  %345 = vst [vmem:[%s1 + $0xd8] sm:$0xff] %v313
  %346 = vst [vmem:[%s1 + $0xe0] sm:$0xff] %v314
  %347 = vst [vmem:[%s1 + $0xe8] sm:$0xff] %v315
  %348 = vst [vmem:[%s1 + $0xf0] sm:$0xff] %v316
  %349 = vst [vmem:[%s1 + $0xf8] sm:$0xff] %v317
  // Predicated region
  $region6: #{obj_ls_d_net_forward.19} parent=0 // pred_check
    _
  $region7: #{obj_ls_d_net_forward.19} parent=0 // pred_check_branch
    %351 = sbr.rel (0) target = $region9
  $region8: #{obj_ls_d_net_forward.19} parent=0 // pred_region
    _
  $region9: #{obj_ls_d_net_forward.19} parent=0 // pred_fallthru
    _
  // Predicated region
  $region10: #{obj_ls_d_net_forward.19} parent=0 // pred_check
    _
  $region11: #{obj_ls_d_net_forward.19} parent=0 // pred_check_branch
    %353 = sbr.rel (0) target = $region13
  $region12: #{obj_ls_d_net_forward.19} parent=0 // pred_region
    _
  $region13: #{obj_ls_d_net_forward.19} parent=0 // pred_fallthru
    _

// kernel: obj_ls_d_net_forward.14
$region0: #{obj_ls_d_net_forward.14}
  #allocation0 [shape = 'u32[]', space=smem, size = 0x4, offset = 0x4, fixed_abs, tag = 'smem constant byte address 0x4 - core index']
  #allocation1 [shape = 'u32[72,128]{1,0:T(1,128)}', space=vmem, size = 0x9000, scoped, tag = 'internal scratch']
  %s0 = inlined_call_operand.vmem [shape: bf16[192,32], index: 0, kind: input, shape index: {}]
  %s1 = inlined_call_operand.vmem [shape: bf16[32,128], index: 1, kind: input, shape index: {}]
  %s2 = inlined_call_operand.vmem [shape: f32[1,128], index: 2, kind: input, shape index: {}]
  %s3 = inlined_call_operand.vmem [shape: f32[192,128], index: 3, kind: output, shape index: {}]
  %s4 = sld [smem:[#allocation0]]
  $region22: #{obj_ls_d_net_forward.14} parent=0
    _
  %s6 = ssub.s32 1, %s4
  %s7 = scalar_select 0, %s6, %s4
  // Predicated region
  $region2: #{obj_ls_d_net_forward.14} parent=0 // pred_check
    _
  $region3: #{obj_ls_d_net_forward.14} parent=0 // pred_check_branch
    %9 = sbr.rel (0) target = $region5
  $region4: #{obj_ls_d_net_forward.14} parent=0 // pred_region
    _
  $region5: #{obj_ls_d_net_forward.14} parent=0 // pred_fallthru
    _
  // Predicated region
  $region6: #{obj_ls_d_net_forward.14} parent=0 // pred_check
    _
  $region7: #{obj_ls_d_net_forward.14} parent=0 // pred_check_branch
    %11 = sbr.rel (0) target = $region9
  $region8: #{obj_ls_d_net_forward.14} parent=0 // pred_region
    _
  $region9: #{obj_ls_d_net_forward.14} parent=0 // pred_fallthru
    _
  // Predicated region
  $region10: #{obj_ls_d_net_forward.14} parent=0 // pred_check
    _
  $region11: #{obj_ls_d_net_forward.14} parent=0 // pred_check_branch
    %13 = sbr.rel (0) target = $region13
  $region12: #{obj_ls_d_net_forward.14} parent=0 // pred_region
    _
  $region13: #{obj_ls_d_net_forward.14} parent=0 // pred_fallthru
    _
  %v15 = vld [vmem:[%s0] sm:$0xf]
  %v16 = vld [vmem:[%s0 + $0x4] sm:$0xf]
  %v17 = vld [vmem:[%s0 + $0x8] sm:$0xf]
  %v18 = vld [vmem:[%s0 + $0xc] sm:$0xf]
  %v19 = vld [vmem:[%s0 + $0x10] sm:$0xf]
  %v20 = vld [vmem:[%s0 + $0x14] sm:$0xf]
  %v21 = vld [vmem:[%s0 + $0x18] sm:$0xf]
  %v22 = vld [vmem:[%s0 + $0x1c] sm:$0xf]
  %v23 = vld [vmem:[%s0 + $0x20] sm:$0xf]
  %v24 = vld [vmem:[%s0 + $0x24] sm:$0xf]
  %v25 = vld [vmem:[%s0 + $0x28] sm:$0xf]
  %v26 = vld [vmem:[%s0 + $0x2c] sm:$0xf]
  %v27 = vld [vmem:[%s0 + $0x30] sm:$0xf]
  %v28 = vld [vmem:[%s0 + $0x34] sm:$0xf]
  %v29 = vld [vmem:[%s0 + $0x38] sm:$0xf]
  %v30 = vld [vmem:[%s0 + $0x3c] sm:$0xf]
  %v31 = vld [vmem:[%s0 + $0x40] sm:$0xf]
  %v32 = vld [vmem:[%s0 + $0x44] sm:$0xf]
  %v33 = vld [vmem:[%s0 + $0x48] sm:$0xf]
  %v34 = vld [vmem:[%s0 + $0x4c] sm:$0xf]
  %v35 = vld [vmem:[%s0 + $0x50] sm:$0xf]
  %v36 = vld [vmem:[%s0 + $0x54] sm:$0xf]
  %v37 = vld [vmem:[%s0 + $0x58] sm:$0xf]
  %v38 = vld [vmem:[%s0 + $0x5c] sm:$0xf]
  %v39 = vld [vmem:[%s1] sm:$0xf]
  %v40 = vld [vmem:[%s1 + $0x4] sm:$0xf]
  %v41 = vld [vmem:[%s1 + $0x8] sm:$0xf]
  %v42 = vld [vmem:[%s1 + $0xc] sm:$0xf]
  %v43 = vld [vmem:[%s2] sm:$0x1]
  %v45 = vperm.slane %v43, 0
  %v71 = vunpack.c.l.b16 %v15
  %v72 = vunpack.c.l.b16 %v16
  %v73 = vunpack.c.l.b16 %v17
  %v74 = vunpack.c.l.b16 %v18
  %v75 = vunpack.c.l.b16 %v19
  %v76 = vunpack.c.l.b16 %v20
  %v77 = vunpack.c.l.b16 %v21
  %v78 = vunpack.c.l.b16 %v22
  %v79 = vunpack.c.l.b16 %v23
  %v80 = vunpack.c.l.b16 %v24
  %v81 = vunpack.c.l.b16 %v25
  %v82 = vunpack.c.l.b16 %v26
  %v83 = vunpack.c.l.b16 %v27
  %v84 = vunpack.c.l.b16 %v28
  %v85 = vunpack.c.l.b16 %v29
  %v86 = vunpack.c.l.b16 %v30
  %v87 = vunpack.c.l.b16 %v31
  %v88 = vunpack.c.l.b16 %v32
  %v89 = vunpack.c.l.b16 %v33
  %v90 = vunpack.c.l.b16 %v34
  %v91 = vunpack.c.l.b16 %v35
  %v92 = vunpack.c.l.b16 %v36
  %v93 = vunpack.c.l.b16 %v37
  %v94 = vunpack.c.l.b16 %v38
  %v95 = vpack.c.b16 %v72, %v71
  %v96 = vpack.c.b16 %v74, %v73
  %v97 = vpack.c.b16 %v76, %v75
  %v98 = vpack.c.b16 %v78, %v77
  %v99 = vpack.c.b16 %v80, %v79
  %v100 = vpack.c.b16 %v82, %v81
  %v101 = vpack.c.b16 %v84, %v83
  %v102 = vpack.c.b16 %v86, %v85
  %v103 = vpack.c.b16 %v88, %v87
  %v104 = vpack.c.b16 %v90, %v89
  %v105 = vpack.c.b16 %v92, %v91
  %v106 = vpack.c.b16 %v94, %v93
  %v111 = vunpack.c.l.b16 %v39
  %v112 = vunpack.c.l.b16 %v40
  %v113 = vunpack.c.l.b16 %v41
  %v114 = vunpack.c.l.b16 %v42
  %v115 = vpack.c.b16 %v112, %v111
  %v116 = vpack.c.b16 %v114, %v113
  %vm119 = vcmask 261120
  %v121 = vsel %vm119, %v95, 0
  %v124 = vsel %vm119, %v96, 0
  %v127 = vsel %vm119, %v97, 0
  %v130 = vsel %vm119, %v98, 0
  %v133 = vsel %vm119, %v99, 0
  %v136 = vsel %vm119, %v100, 0
  %v139 = vsel %vm119, %v101, 0
  %v142 = vsel %vm119, %v102, 0
  %v145 = vsel %vm119, %v103, 0
  %v148 = vsel %vm119, %v104, 0
  %v151 = vsel %vm119, %v105, 0
  %v154 = vsel %vm119, %v106, 0
  %156 = vmatpush.bf16.msra.mxu0 0
  %157 = vmatpush.bf16.msra.mxu0 0
  %158 = vmatpush.bf16.msra.mxu0 0
  %159 = vmatpush.bf16.msra.mxu0 0
  %160 = vmatpush.bf16.msra.mxu0 0
  %161 = vmatpush.bf16.msra.mxu0 0
  %162 = vmatpush.bf16.msra.mxu0 %v116
  %163 = vmatpush.bf16.msra.mxu0 %v115
  %164 = vmatmul.bf16.gmra.mxu0 %v121
  %v165 = vpop.f32.mrf.mxu0
  %v166 = vadd.f32 %v45, %v165
  %v167 = vpop.f32.mrf.mxu0
  %v168 = vadd.f32 %v45, %v167
  %169 = vmatmul.bf16.gmra.mxu0 %v124
  %v170 = vpop.f32.mrf.mxu0
  %v171 = vadd.f32 %v45, %v170
  %v172 = vpop.f32.mrf.mxu0
  %v173 = vadd.f32 %v45, %v172
  %174 = vmatmul.bf16.gmra.mxu0 %v127
  %v175 = vpop.f32.mrf.mxu0
  %v176 = vadd.f32 %v45, %v175
  %v177 = vpop.f32.mrf.mxu0
  %v178 = vadd.f32 %v45, %v177
  %179 = vmatmul.bf16.gmra.mxu0 %v130
  %v180 = vpop.f32.mrf.mxu0
  %v181 = vadd.f32 %v45, %v180
  %v182 = vpop.f32.mrf.mxu0
  %v183 = vadd.f32 %v45, %v182
  %184 = vmatmul.bf16.gmra.mxu0 %v133
  %v185 = vpop.f32.mrf.mxu0
  %v186 = vadd.f32 %v45, %v185
  %v187 = vpop.f32.mrf.mxu0
  %v188 = vadd.f32 %v45, %v187
  %189 = vmatmul.bf16.gmra.mxu0 %v136
  %v190 = vpop.f32.mrf.mxu0
  %v191 = vadd.f32 %v45, %v190
  %v192 = vpop.f32.mrf.mxu0
  %v193 = vadd.f32 %v45, %v192
  %194 = vmatmul.bf16.gmra.mxu0 %v139
  %v195 = vpop.f32.mrf.mxu0
  %v196 = vadd.f32 %v45, %v195
  %v197 = vpop.f32.mrf.mxu0
  %v198 = vadd.f32 %v45, %v197
  %199 = vmatmul.bf16.gmra.mxu0 %v142
  %v200 = vpop.f32.mrf.mxu0
  %v201 = vadd.f32 %v45, %v200
  %v202 = vpop.f32.mrf.mxu0
  %v203 = vadd.f32 %v45, %v202
  %204 = vmatmul.bf16.gmra.mxu0 %v145
  %v205 = vpop.f32.mrf.mxu0
  %v206 = vadd.f32 %v45, %v205
  %v207 = vpop.f32.mrf.mxu0
  %v208 = vadd.f32 %v45, %v207
  %209 = vmatmul.bf16.gmra.mxu0 %v148
  %v210 = vpop.f32.mrf.mxu0
  %v211 = vadd.f32 %v45, %v210
  %v212 = vpop.f32.mrf.mxu0
  %v213 = vadd.f32 %v45, %v212
  %214 = vmatmul.bf16.gmra.mxu0 %v151
  %v215 = vpop.f32.mrf.mxu0
  %v216 = vadd.f32 %v45, %v215
  %v217 = vpop.f32.mrf.mxu0
  %v218 = vadd.f32 %v45, %v217
  %219 = vmatmul.bf16.gmra.mxu0 %v154
  %v220 = vpop.f32.mrf.mxu0
  %v221 = vadd.f32 %v45, %v220
  %v222 = vpop.f32.mrf.mxu0
  %v223 = vadd.f32 %v45, %v222
  %224 = vdwg.mxu0
  %225 = vst [vmem:[%s3] sm:$0xff] %v166
  %226 = vst [vmem:[%s3 + $0x8] sm:$0xff] %v168
  %227 = vst [vmem:[%s3 + $0x10] sm:$0xff] %v171
  %228 = vst [vmem:[%s3 + $0x18] sm:$0xff] %v173
  %229 = vst [vmem:[%s3 + $0x20] sm:$0xff] %v176
  %230 = vst [vmem:[%s3 + $0x28] sm:$0xff] %v178
  %231 = vst [vmem:[%s3 + $0x30] sm:$0xff] %v181
  %232 = vst [vmem:[%s3 + $0x38] sm:$0xff] %v183
  %233 = vst [vmem:[%s3 + $0x40] sm:$0xff] %v186
  %234 = vst [vmem:[%s3 + $0x48] sm:$0xff] %v188
  %235 = vst [vmem:[%s3 + $0x50] sm:$0xff] %v191
  %236 = vst [vmem:[%s3 + $0x58] sm:$0xff] %v193
  %237 = vst [vmem:[%s3 + $0x60] sm:$0xff] %v196
  %238 = vst [vmem:[%s3 + $0x68] sm:$0xff] %v198
  %239 = vst [vmem:[%s3 + $0x70] sm:$0xff] %v201
  %240 = vst [vmem:[%s3 + $0x78] sm:$0xff] %v203
  %241 = vst [vmem:[%s3 + $0x80] sm:$0xff] %v206
  %242 = vst [vmem:[%s3 + $0x88] sm:$0xff] %v208
  %243 = vst [vmem:[%s3 + $0x90] sm:$0xff] %v211
  %244 = vst [vmem:[%s3 + $0x98] sm:$0xff] %v213
  %245 = vst [vmem:[%s3 + $0xa0] sm:$0xff] %v216
  %246 = vst [vmem:[%s3 + $0xa8] sm:$0xff] %v218
  %247 = vst [vmem:[%s3 + $0xb0] sm:$0xff] %v221
  %248 = vst [vmem:[%s3 + $0xb8] sm:$0xff] %v223
  // Predicated region
  $region14: #{obj_ls_d_net_forward.14} parent=0 // pred_check
    _
  $region15: #{obj_ls_d_net_forward.14} parent=0 // pred_check_branch
    %250 = sbr.rel (0) target = $region17
  $region16: #{obj_ls_d_net_forward.14} parent=0 // pred_region
    _
  $region17: #{obj_ls_d_net_forward.14} parent=0 // pred_fallthru
    _
  // Predicated region
  $region18: #{obj_ls_d_net_forward.14} parent=0 // pred_check
    _
  $region19: #{obj_ls_d_net_forward.14} parent=0 // pred_check_branch
    %252 = sbr.rel (0) target = $region21
  $region20: #{obj_ls_d_net_forward.14} parent=0 // pred_region
    _
  $region21: #{obj_ls_d_net_forward.14} parent=0 // pred_fallthru
    _

// kernel: obj_ls_d_net_forward.15
$region0: #{obj_ls_d_net_forward.15}
  #allocation0 [shape = 'u32[]', space=smem, size = 0x4, offset = 0x4, fixed_abs, tag = 'smem constant byte address 0x4 - core index']
  #allocation1 [shape = 'u32[72,128]{1,0:T(1,128)}', space=vmem, size = 0x9000, scoped, tag = 'internal scratch']
  %s0 = inlined_call_operand.vmem [shape: bf16[384,32], index: 0, kind: input, shape index: {}]
  %s1 = inlined_call_operand.vmem [shape: bf16[32,128], index: 1, kind: input, shape index: {}]
  %s2 = inlined_call_operand.vmem [shape: f32[1,128], index: 2, kind: input, shape index: {}]
  %s3 = inlined_call_operand.vmem [shape: f32[384,128], index: 3, kind: output, shape index: {}]
  %s4 = sld [smem:[#allocation0]]
  $region22: #{obj_ls_d_net_forward.15} parent=0
    _
  %s6 = ssub.s32 1, %s4
  %s7 = scalar_select 0, %s6, %s4
  // Predicated region
  $region2: #{obj_ls_d_net_forward.15} parent=0 // pred_check
    _
  $region3: #{obj_ls_d_net_forward.15} parent=0 // pred_check_branch
    %9 = sbr.rel (0) target = $region5
  $region4: #{obj_ls_d_net_forward.15} parent=0 // pred_region
    _
  $region5: #{obj_ls_d_net_forward.15} parent=0 // pred_fallthru
    _
  // Predicated region
  $region6: #{obj_ls_d_net_forward.15} parent=0 // pred_check
    _
  $region7: #{obj_ls_d_net_forward.15} parent=0 // pred_check_branch
    %11 = sbr.rel (0) target = $region9
  $region8: #{obj_ls_d_net_forward.15} parent=0 // pred_region
    _
  $region9: #{obj_ls_d_net_forward.15} parent=0 // pred_fallthru
    _
  // Predicated region
  $region10: #{obj_ls_d_net_forward.15} parent=0 // pred_check
    _
  $region11: #{obj_ls_d_net_forward.15} parent=0 // pred_check_branch
    %13 = sbr.rel (0) target = $region13
  $region12: #{obj_ls_d_net_forward.15} parent=0 // pred_region
    _
  $region13: #{obj_ls_d_net_forward.15} parent=0 // pred_fallthru
    _
  %v15 = vld [vmem:[%s0] sm:$0xf]
  %v16 = vld [vmem:[%s0 + $0x4] sm:$0xf]
  %v17 = vld [vmem:[%s0 + $0x8] sm:$0xf]
  %v18 = vld [vmem:[%s0 + $0xc] sm:$0xf]
  %v19 = vld [vmem:[%s0 + $0x10] sm:$0xf]
  %v20 = vld [vmem:[%s0 + $0x14] sm:$0xf]
  %v21 = vld [vmem:[%s0 + $0x18] sm:$0xf]
  %v22 = vld [vmem:[%s0 + $0x1c] sm:$0xf]
  %v23 = vld [vmem:[%s0 + $0x20] sm:$0xf]
  %v24 = vld [vmem:[%s0 + $0x24] sm:$0xf]
  %v25 = vld [vmem:[%s0 + $0x28] sm:$0xf]
  %v26 = vld [vmem:[%s0 + $0x2c] sm:$0xf]
  %v27 = vld [vmem:[%s0 + $0x30] sm:$0xf]
  %v28 = vld [vmem:[%s0 + $0x34] sm:$0xf]
  %v29 = vld [vmem:[%s0 + $0x38] sm:$0xf]
  %v30 = vld [vmem:[%s0 + $0x3c] sm:$0xf]
  %v31 = vld [vmem:[%s0 + $0x40] sm:$0xf]
  %v32 = vld [vmem:[%s0 + $0x44] sm:$0xf]
  %v33 = vld [vmem:[%s0 + $0x48] sm:$0xf]
  %v34 = vld [vmem:[%s0 + $0x4c] sm:$0xf]
  %v35 = vld [vmem:[%s0 + $0x50] sm:$0xf]
  %v36 = vld [vmem:[%s0 + $0x54] sm:$0xf]
  %v37 = vld [vmem:[%s0 + $0x58] sm:$0xf]
  %v38 = vld [vmem:[%s0 + $0x5c] sm:$0xf]
  %v39 = vld [vmem:[%s0 + $0x60] sm:$0xf]
  %v40 = vld [vmem:[%s0 + $0x64] sm:$0xf]
  %v41 = vld [vmem:[%s0 + $0x68] sm:$0xf]
  %v42 = vld [vmem:[%s0 + $0x6c] sm:$0xf]
  %v43 = vld [vmem:[%s0 + $0x70] sm:$0xf]
  %v44 = vld [vmem:[%s0 + $0x74] sm:$0xf]
  %v45 = vld [vmem:[%s0 + $0x78] sm:$0xf]
  %v46 = vld [vmem:[%s0 + $0x7c] sm:$0xf]
  %v47 = vld [vmem:[%s0 + $0x80] sm:$0xf]
  %v48 = vld [vmem:[%s0 + $0x84] sm:$0xf]
  %v49 = vld [vmem:[%s0 + $0x88] sm:$0xf]
  %v50 = vld [vmem:[%s0 + $0x8c] sm:$0xf]
  %v51 = vld [vmem:[%s0 + $0x90] sm:$0xf]
  %v52 = vld [vmem:[%s0 + $0x94] sm:$0xf]
  %v53 = vld [vmem:[%s0 + $0x98] sm:$0xf]
  %v54 = vld [vmem:[%s0 + $0x9c] sm:$0xf]
  %v55 = vld [vmem:[%s0 + $0xa0] sm:$0xf]
  %v56 = vld [vmem:[%s0 + $0xa4] sm:$0xf]
  %v57 = vld [vmem:[%s0 + $0xa8] sm:$0xf]
  %v58 = vld [vmem:[%s0 + $0xac] sm:$0xf]
  %v59 = vld [vmem:[%s0 + $0xb0] sm:$0xf]
  %v60 = vld [vmem:[%s0 + $0xb4] sm:$0xf]
  %v61 = vld [vmem:[%s0 + $0xb8] sm:$0xf]
  %v62 = vld [vmem:[%s0 + $0xbc] sm:$0xf]
  %v63 = vld [vmem:[%s1] sm:$0xf]
  %v64 = vld [vmem:[%s1 + $0x4] sm:$0xf]
  %v65 = vld [vmem:[%s1 + $0x8] sm:$0xf]
  %v66 = vld [vmem:[%s1 + $0xc] sm:$0xf]
  %v67 = vld [vmem:[%s2] sm:$0x1]
  %v69 = vperm.slane %v67, 0
  %v119 = vunpack.c.l.b16 %v15
  %v120 = vunpack.c.l.b16 %v16
  %v121 = vunpack.c.l.b16 %v17
  %v122 = vunpack.c.l.b16 %v18
  %v123 = vunpack.c.l.b16 %v19
  %v124 = vunpack.c.l.b16 %v20
  %v125 = vunpack.c.l.b16 %v21
  %v126 = vunpack.c.l.b16 %v22
  %v127 = vunpack.c.l.b16 %v23
  %v128 = vunpack.c.l.b16 %v24
  %v129 = vunpack.c.l.b16 %v25
  %v130 = vunpack.c.l.b16 %v26
  %v131 = vunpack.c.l.b16 %v27
  %v132 = vunpack.c.l.b16 %v28
  %v133 = vunpack.c.l.b16 %v29
  %v134 = vunpack.c.l.b16 %v30
  %v135 = vunpack.c.l.b16 %v31
  %v136 = vunpack.c.l.b16 %v32
  %v137 = vunpack.c.l.b16 %v33
  %v138 = vunpack.c.l.b16 %v34
  %v139 = vunpack.c.l.b16 %v35
  %v140 = vunpack.c.l.b16 %v36
  %v141 = vunpack.c.l.b16 %v37
  %v142 = vunpack.c.l.b16 %v38
  %v143 = vunpack.c.l.b16 %v39
  %v144 = vunpack.c.l.b16 %v40
  %v145 = vunpack.c.l.b16 %v41
  %v146 = vunpack.c.l.b16 %v42
  %v147 = vunpack.c.l.b16 %v43
  %v148 = vunpack.c.l.b16 %v44
  %v149 = vunpack.c.l.b16 %v45
  %v150 = vunpack.c.l.b16 %v46
  %v151 = vunpack.c.l.b16 %v47
  %v152 = vunpack.c.l.b16 %v48
  %v153 = vunpack.c.l.b16 %v49
  %v154 = vunpack.c.l.b16 %v50
  %v155 = vunpack.c.l.b16 %v51
  %v156 = vunpack.c.l.b16 %v52
  %v157 = vunpack.c.l.b16 %v53
  %v158 = vunpack.c.l.b16 %v54
  %v159 = vunpack.c.l.b16 %v55
  %v160 = vunpack.c.l.b16 %v56
  %v161 = vunpack.c.l.b16 %v57
  %v162 = vunpack.c.l.b16 %v58
  %v163 = vunpack.c.l.b16 %v59
  %v164 = vunpack.c.l.b16 %v60
  %v165 = vunpack.c.l.b16 %v61
  %v166 = vunpack.c.l.b16 %v62
  %v167 = vpack.c.b16 %v120, %v119
  %v168 = vpack.c.b16 %v122, %v121
  %v169 = vpack.c.b16 %v124, %v123
  %v170 = vpack.c.b16 %v126, %v125
  %v171 = vpack.c.b16 %v128, %v127
  %v172 = vpack.c.b16 %v130, %v129
  %v173 = vpack.c.b16 %v132, %v131
  %v174 = vpack.c.b16 %v134, %v133
  %v175 = vpack.c.b16 %v136, %v135
  %v176 = vpack.c.b16 %v138, %v137
  %v177 = vpack.c.b16 %v140, %v139
  %v178 = vpack.c.b16 %v142, %v141
  %v179 = vpack.c.b16 %v144, %v143
  %v180 = vpack.c.b16 %v146, %v145
  %v181 = vpack.c.b16 %v148, %v147
  %v182 = vpack.c.b16 %v150, %v149
  %v183 = vpack.c.b16 %v152, %v151
  %v184 = vpack.c.b16 %v154, %v153
  %v185 = vpack.c.b16 %v156, %v155
  %v186 = vpack.c.b16 %v158, %v157
  %v187 = vpack.c.b16 %v160, %v159
  %v188 = vpack.c.b16 %v162, %v161
  %v189 = vpack.c.b16 %v164, %v163
  %v190 = vpack.c.b16 %v166, %v165
  %v195 = vunpack.c.l.b16 %v63
  %v196 = vunpack.c.l.b16 %v64
  %v197 = vunpack.c.l.b16 %v65
  %v198 = vunpack.c.l.b16 %v66
  %v199 = vpack.c.b16 %v196, %v195
  %v200 = vpack.c.b16 %v198, %v197
  %vm203 = vcmask 261120
  %v205 = vsel %vm203, %v167, 0
  %v208 = vsel %vm203, %v168, 0
  %v211 = vsel %vm203, %v169, 0
  %v214 = vsel %vm203, %v170, 0
  %v217 = vsel %vm203, %v171, 0
  %v220 = vsel %vm203, %v172, 0
  %v223 = vsel %vm203, %v173, 0
  %v226 = vsel %vm203, %v174, 0
  %v229 = vsel %vm203, %v175, 0
  %v232 = vsel %vm203, %v176, 0
  %v235 = vsel %vm203, %v177, 0
  %v238 = vsel %vm203, %v178, 0
  %v241 = vsel %vm203, %v179, 0
  %v244 = vsel %vm203, %v180, 0
  %v247 = vsel %vm203, %v181, 0
  %v250 = vsel %vm203, %v182, 0
  %v253 = vsel %vm203, %v183, 0
  %v256 = vsel %vm203, %v184, 0
  %v259 = vsel %vm203, %v185, 0
  %v262 = vsel %vm203, %v186, 0
  %v265 = vsel %vm203, %v187, 0
  %v268 = vsel %vm203, %v188, 0
  %v271 = vsel %vm203, %v189, 0
  %v274 = vsel %vm203, %v190, 0
  %276 = vmatpush.bf16.msra.mxu0 0
  %277 = vmatpush.bf16.msra.mxu0 0
  %278 = vmatpush.bf16.msra.mxu0 0
  %279 = vmatpush.bf16.msra.mxu0 0
  %280 = vmatpush.bf16.msra.mxu0 0
  %281 = vmatpush.bf16.msra.mxu0 0
  %282 = vmatpush.bf16.msra.mxu0 %v200
  %283 = vmatpush.bf16.msra.mxu0 %v199
  %284 = vmatmul.bf16.gmra.mxu0 %v205
  %v285 = vpop.f32.mrf.mxu0
  %v286 = vadd.f32 %v69, %v285
  %v287 = vpop.f32.mrf.mxu0
  %v288 = vadd.f32 %v69, %v287
  %289 = vmatmul.bf16.gmra.mxu0 %v208
  %v290 = vpop.f32.mrf.mxu0
  %v291 = vadd.f32 %v69, %v290
  %v292 = vpop.f32.mrf.mxu0
  %v293 = vadd.f32 %v69, %v292
  %294 = vmatmul.bf16.gmra.mxu0 %v211
  %v295 = vpop.f32.mrf.mxu0
  %v296 = vadd.f32 %v69, %v295
  %v297 = vpop.f32.mrf.mxu0
  %v298 = vadd.f32 %v69, %v297
  %299 = vmatmul.bf16.gmra.mxu0 %v214
  %v300 = vpop.f32.mrf.mxu0
  %v301 = vadd.f32 %v69, %v300
  %v302 = vpop.f32.mrf.mxu0
  %v303 = vadd.f32 %v69, %v302
  %304 = vmatmul.bf16.gmra.mxu0 %v217
  %v305 = vpop.f32.mrf.mxu0
  %v306 = vadd.f32 %v69, %v305
  %v307 = vpop.f32.mrf.mxu0
  %v308 = vadd.f32 %v69, %v307
  %309 = vmatmul.bf16.gmra.mxu0 %v220
  %v310 = vpop.f32.mrf.mxu0
  %v311 = vadd.f32 %v69, %v310
  %v312 = vpop.f32.mrf.mxu0
  %v313 = vadd.f32 %v69, %v312
  %314 = vmatmul.bf16.gmra.mxu0 %v223
  %v315 = vpop.f32.mrf.mxu0
  %v316 = vadd.f32 %v69, %v315
  %v317 = vpop.f32.mrf.mxu0
  %v318 = vadd.f32 %v69, %v317
  %319 = vmatmul.bf16.gmra.mxu0 %v226
  %v320 = vpop.f32.mrf.mxu0
  %v321 = vadd.f32 %v69, %v320
  %v322 = vpop.f32.mrf.mxu0
  %v323 = vadd.f32 %v69, %v322
  %324 = vmatmul.bf16.gmra.mxu0 %v229
  %v325 = vpop.f32.mrf.mxu0
  %v326 = vadd.f32 %v69, %v325
  %v327 = vpop.f32.mrf.mxu0
  %v328 = vadd.f32 %v69, %v327
  %329 = vmatmul.bf16.gmra.mxu0 %v232
  %v330 = vpop.f32.mrf.mxu0
  %v331 = vadd.f32 %v69, %v330
  %v332 = vpop.f32.mrf.mxu0
  %v333 = vadd.f32 %v69, %v332
  %334 = vmatmul.bf16.gmra.mxu0 %v235
  %v335 = vpop.f32.mrf.mxu0
  %v336 = vadd.f32 %v69, %v335
  %v337 = vpop.f32.mrf.mxu0
  %v338 = vadd.f32 %v69, %v337
  %339 = vmatmul.bf16.gmra.mxu0 %v238
  %v340 = vpop.f32.mrf.mxu0
  %v341 = vadd.f32 %v69, %v340
  %v342 = vpop.f32.mrf.mxu0
  %v343 = vadd.f32 %v69, %v342
  %344 = vmatmul.bf16.gmra.mxu0 %v241
  %v345 = vpop.f32.mrf.mxu0
  %v346 = vadd.f32 %v69, %v345
  %v347 = vpop.f32.mrf.mxu0
  %v348 = vadd.f32 %v69, %v347
  %349 = vmatmul.bf16.gmra.mxu0 %v244
  %v350 = vpop.f32.mrf.mxu0
  %v351 = vadd.f32 %v69, %v350
  %v352 = vpop.f32.mrf.mxu0
  %v353 = vadd.f32 %v69, %v352
  %354 = vmatmul.bf16.gmra.mxu0 %v247
  %v355 = vpop.f32.mrf.mxu0
  %v356 = vadd.f32 %v69, %v355
  %v357 = vpop.f32.mrf.mxu0
  %v358 = vadd.f32 %v69, %v357
  %359 = vmatmul.bf16.gmra.mxu0 %v250
  %v360 = vpop.f32.mrf.mxu0
  %v361 = vadd.f32 %v69, %v360
  %v362 = vpop.f32.mrf.mxu0
  %v363 = vadd.f32 %v69, %v362
  %364 = vmatmul.bf16.gmra.mxu0 %v253
  %v365 = vpop.f32.mrf.mxu0
  %v366 = vadd.f32 %v69, %v365
  %v367 = vpop.f32.mrf.mxu0
  %v368 = vadd.f32 %v69, %v367
  %369 = vmatmul.bf16.gmra.mxu0 %v256
  %v370 = vpop.f32.mrf.mxu0
  %v371 = vadd.f32 %v69, %v370
  %v372 = vpop.f32.mrf.mxu0
  %v373 = vadd.f32 %v69, %v372
  %374 = vmatmul.bf16.gmra.mxu0 %v259
  %v375 = vpop.f32.mrf.mxu0
  %v376 = vadd.f32 %v69, %v375
  %v377 = vpop.f32.mrf.mxu0
  %v378 = vadd.f32 %v69, %v377
  %379 = vmatmul.bf16.gmra.mxu0 %v262
  %v380 = vpop.f32.mrf.mxu0
  %v381 = vadd.f32 %v69, %v380
  %v382 = vpop.f32.mrf.mxu0
  %v383 = vadd.f32 %v69, %v382
  %384 = vmatmul.bf16.gmra.mxu0 %v265
  %v385 = vpop.f32.mrf.mxu0
  %v386 = vadd.f32 %v69, %v385
  %v387 = vpop.f32.mrf.mxu0
  %v388 = vadd.f32 %v69, %v387
  %389 = vmatmul.bf16.gmra.mxu0 %v268
  %v390 = vpop.f32.mrf.mxu0
  %v391 = vadd.f32 %v69, %v390
  %v392 = vpop.f32.mrf.mxu0
  %v393 = vadd.f32 %v69, %v392
  %394 = vmatmul.bf16.gmra.mxu0 %v271
  %v395 = vpop.f32.mrf.mxu0
  %v396 = vadd.f32 %v69, %v395
  %v397 = vpop.f32.mrf.mxu0
  %v398 = vadd.f32 %v69, %v397
  %399 = vmatmul.bf16.gmra.mxu0 %v274
  %v400 = vpop.f32.mrf.mxu0
  %v401 = vadd.f32 %v69, %v400
  %v402 = vpop.f32.mrf.mxu0
  %v403 = vadd.f32 %v69, %v402
  %404 = vdwg.mxu0
  %405 = vst [vmem:[%s3] sm:$0xff] %v286
  %406 = vst [vmem:[%s3 + $0x8] sm:$0xff] %v288
  %407 = vst [vmem:[%s3 + $0x10] sm:$0xff] %v291
  %408 = vst [vmem:[%s3 + $0x18] sm:$0xff] %v293
  %409 = vst [vmem:[%s3 + $0x20] sm:$0xff] %v296
  %410 = vst [vmem:[%s3 + $0x28] sm:$0xff] %v298
  %411 = vst [vmem:[%s3 + $0x30] sm:$0xff] %v301
  %412 = vst [vmem:[%s3 + $0x38] sm:$0xff] %v303
  %413 = vst [vmem:[%s3 + $0x40] sm:$0xff] %v306
  %414 = vst [vmem:[%s3 + $0x48] sm:$0xff] %v308
  %415 = vst [vmem:[%s3 + $0x50] sm:$0xff] %v311
  %416 = vst [vmem:[%s3 + $0x58] sm:$0xff] %v313
  %417 = vst [vmem:[%s3 + $0x60] sm:$0xff] %v316
  %418 = vst [vmem:[%s3 + $0x68] sm:$0xff] %v318
  %419 = vst [vmem:[%s3 + $0x70] sm:$0xff] %v321
  %420 = vst [vmem:[%s3 + $0x78] sm:$0xff] %v323
  %421 = vst [vmem:[%s3 + $0x80] sm:$0xff] %v326
  %422 = vst [vmem:[%s3 + $0x88] sm:$0xff] %v328
  %423 = vst [vmem:[%s3 + $0x90] sm:$0xff] %v331
  %424 = vst [vmem:[%s3 + $0x98] sm:$0xff] %v333
  %425 = vst [vmem:[%s3 + $0xa0] sm:$0xff] %v336
  %426 = vst [vmem:[%s3 + $0xa8] sm:$0xff] %v338
  %427 = vst [vmem:[%s3 + $0xb0] sm:$0xff] %v341
  %428 = vst [vmem:[%s3 + $0xb8] sm:$0xff] %v343
  %429 = vst [vmem:[%s3 + $0xc0] sm:$0xff] %v346
  %430 = vst [vmem:[%s3 + $0xc8] sm:$0xff] %v348
  %431 = vst [vmem:[%s3 + $0xd0] sm:$0xff] %v351
  %432 = vst [vmem:[%s3 + $0xd8] sm:$0xff] %v353
  %433 = vst [vmem:[%s3 + $0xe0] sm:$0xff] %v356
  %434 = vst [vmem:[%s3 + $0xe8] sm:$0xff] %v358
  %435 = vst [vmem:[%s3 + $0xf0] sm:$0xff] %v361
  %436 = vst [vmem:[%s3 + $0xf8] sm:$0xff] %v363
  %437 = vst [vmem:[%s3 + $0x100] sm:$0xff] %v366
  %438 = vst [vmem:[%s3 + $0x108] sm:$0xff] %v368
  %439 = vst [vmem:[%s3 + $0x110] sm:$0xff] %v371
  %440 = vst [vmem:[%s3 + $0x118] sm:$0xff] %v373
  %441 = vst [vmem:[%s3 + $0x120] sm:$0xff] %v376
  %442 = vst [vmem:[%s3 + $0x128] sm:$0xff] %v378
  %443 = vst [vmem:[%s3 + $0x130] sm:$0xff] %v381
  %444 = vst [vmem:[%s3 + $0x138] sm:$0xff] %v383
  %445 = vst [vmem:[%s3 + $0x140] sm:$0xff] %v386
  %446 = vst [vmem:[%s3 + $0x148] sm:$0xff] %v388
  %447 = vst [vmem:[%s3 + $0x150] sm:$0xff] %v391
  %448 = vst [vmem:[%s3 + $0x158] sm:$0xff] %v393
  %449 = vst [vmem:[%s3 + $0x160] sm:$0xff] %v396
  %450 = vst [vmem:[%s3 + $0x168] sm:$0xff] %v398
  %451 = vst [vmem:[%s3 + $0x170] sm:$0xff] %v401
  %452 = vst [vmem:[%s3 + $0x178] sm:$0xff] %v403
  // Predicated region
  $region14: #{obj_ls_d_net_forward.15} parent=0 // pred_check
    _
  $region15: #{obj_ls_d_net_forward.15} parent=0 // pred_check_branch
    %454 = sbr.rel (0) target = $region17
  $region16: #{obj_ls_d_net_forward.15} parent=0 // pred_region
    _
  $region17: #{obj_ls_d_net_forward.15} parent=0 // pred_fallthru
    _
  // Predicated region
  $region18: #{obj_ls_d_net_forward.15} parent=0 // pred_check
    _
  $region19: #{obj_ls_d_net_forward.15} parent=0 // pred_check_branch
    %456 = sbr.rel (0) target = $region21
  $region20: #{obj_ls_d_net_forward.15} parent=0 // pred_region
    _
  $region21: #{obj_ls_d_net_forward.15} parent=0 // pred_fallthru
    _

// kernel: obj_ls_d_net_forward.20
$region0: #{obj_ls_d_net_forward.20}
  #allocation0 [shape = 'u32[]', space=smem, size = 0x4, offset = 0x4, fixed_abs, tag = 'smem constant byte address 0x4 - core index']
  #allocation1 [shape = 'u32[72,128]{1,0:T(1,128)}', space=vmem, size = 0x9000, scoped, tag = 'internal scratch']
  %s0 = inlined_call_operand.vmem [shape: bf16[2048,112], index: 0, kind: input, shape index: {}]
  %s1 = inlined_call_operand.vmem [shape: bf16[112,128], index: 1, kind: input, shape index: {}]
  %s2 = inlined_call_operand.vmem [shape: f32[1,128], index: 2, kind: input, shape index: {}]
  %s3 = inlined_call_operand.vmem [shape: f32[2048,128], index: 3, kind: output, shape index: {}]
  %s4 = sld [smem:[#allocation0]]
  $region45: #{obj_ls_d_net_forward.20} parent=0
    _
  %s6 = ssub.s32 1, %s4
  %s7 = scalar_select 0, %s6, %s4
  loop: start=0, step=1, limit=6
  $region2: #{obj_ls_d_net_forward.20} parent=0 // loop_pre_header
    _
  $region3: #{obj_ls_d_net_forward.20} parent=0 // loop_header
    %s9 = sphi 0, %s13
    %p10 = scmp.ge.s32.totalorder %s9, 6
    %s16 = sphi 0, %s28
    %s17 = sphi 0, %s24
    %s18 = sphi 0, %s16
    %s19 = sphi 0, %s17
    %s20 = sphi 0, %s18
    %s21 = sphi 0, %s19
    %s31 = sphi 0, %s33
    %s34 = sphi 0, %s31
    %s35 = sphi 0, %s34
    %s51 = sphi 0, %s35
    %s57 = sphi 0, %s59
    %s60 = sphi 0, %s57
    %s61 = sphi 0, %s60
    %s77 = sphi 0, %s61
    %s83 = sphi 0, %s85
    %s86 = sphi 0, %s83
    %s87 = sphi 0, %s86
    %s103 = sphi 0, %s87
    %s111 = sphi 0, %s113
    %s114 = sphi 0, %s111
    %s115 = sphi 0, %s114
    %s131 = sphi 0, %s115
  $region4: #{obj_ls_d_net_forward.20} parent=0 // loop_header_branch
    %12 = sbr.rel (%p10) target = $region8
  $region5: #{obj_ls_d_net_forward.20} parent=0 // loop_body
    %s14 = ssub.s32 %s9, 1
    %s15 = ssub.s32 %s9, 2
    %s22 = sadd.s32 1, %s17
    %p23 = scmp.ge.s32.totalorder %s22, 1
    %s24 = scalar_select %p23, 0, %s22
    %s25 = sadd.s32 1, %s16
    %s26 = scalar_select %p23, %s25, %s16
    %p27 = scmp.ge.s32.totalorder %s26, 4
    %s28 = scalar_select %p27, 0, %s26
    %s29 = ssub.s32 %s16, %s28
    %p30 = scmp.eq.s32.totalorder %s29, 0
    %s32 = sadd.s32 %s31, 1
    %s33 = scalar_select %p30, %s31, %s32
    %p36 = pneg %p30
    %p37 = scmp.eq.s32.totalorder %s9, 3
    %p38 = por %p36, %p37
    %p39 = scmp.ne.s32.totalorder %s31, %s34
    %p40 = scmp.eq.s32.totalorder %s9, 0
    %p41 = por %p39, %p40
    %p42 = scmp.ne.s32.totalorder %s31, %s34
    %p43 = scmp.eq.s32.totalorder %s14, 3
    %p44 = por %p42, %p43
    %p45 = scmp.ne.s32.totalorder %s34, %s35
    %p46 = scmp.eq.s32.totalorder %s14, 0
    %p47 = por %p45, %p46
    %p48 = scmp.ne.s32.totalorder %s34, %s35
    %p49 = scmp.eq.s32.totalorder %s15, 3
    %p50 = por %p48, %p49
    %p52 = scmp.ne.s32.totalorder %s35, %s51
    %p53 = scmp.eq.s32.totalorder %s15, 0
    %p54 = por %p52, %p53
    %s55 = ssub.s32 %s17, %s24
    %p56 = scmp.eq.s32.totalorder %s55, 0
    %s58 = sadd.s32 %s57, 1
    %s59 = scalar_select %p56, %s57, %s58
    %p62 = pneg %p56
    %p63 = scmp.eq.s32.totalorder %s9, 3
    %p64 = por %p62, %p63
    %p65 = scmp.ne.s32.totalorder %s57, %s60
    %p66 = scmp.eq.s32.totalorder %s9, 0
    %p67 = por %p65, %p66
    %p68 = scmp.ne.s32.totalorder %s57, %s60
    %p69 = scmp.eq.s32.totalorder %s14, 3
    %p70 = por %p68, %p69
    %p71 = scmp.ne.s32.totalorder %s60, %s61
    %p72 = scmp.eq.s32.totalorder %s14, 0
    %p73 = por %p71, %p72
    %p74 = scmp.ne.s32.totalorder %s60, %s61
    %p75 = scmp.eq.s32.totalorder %s15, 3
    %p76 = por %p74, %p75
    %p78 = scmp.ne.s32.totalorder %s61, %s77
    %p79 = scmp.eq.s32.totalorder %s15, 0
    %p80 = por %p78, %p79
    %s81 = ssub.s32 %s17, %s24
    %p82 = scmp.eq.s32.totalorder %s81, 0
    %s84 = sadd.s32 %s83, 1
    %s85 = scalar_select %p82, %s83, %s84
    %p88 = pneg %p82
    %p89 = scmp.eq.s32.totalorder %s9, 3
    %p90 = por %p88, %p89
    %p91 = scmp.ne.s32.totalorder %s83, %s86
    %p92 = scmp.eq.s32.totalorder %s9, 0
    %p93 = por %p91, %p92
    %p94 = scmp.ne.s32.totalorder %s83, %s86
    %p95 = scmp.eq.s32.totalorder %s14, 3
    %p96 = por %p94, %p95
    %p97 = scmp.ne.s32.totalorder %s86, %s87
    %p98 = scmp.eq.s32.totalorder %s14, 0
    %p99 = por %p97, %p98
    %p100 = scmp.ne.s32.totalorder %s86, %s87
    %p101 = scmp.eq.s32.totalorder %s15, 3
    %p102 = por %p100, %p101
    %p104 = scmp.ne.s32.totalorder %s87, %s103
    %p105 = scmp.eq.s32.totalorder %s15, 0
    %p106 = por %p104, %p105
    %s107 = ssub.s32 %s16, %s28
    %s108 = ssub.s32 %s17, %s24
    %s109 = sor.u32 %s107, %s108
    %p110 = scmp.eq.s32.totalorder %s109, 0
    %s112 = sadd.s32 %s111, 1
    %s113 = scalar_select %p110, %s111, %s112
    %p116 = pneg %p110
    %p117 = scmp.eq.s32.totalorder %s9, 3
    %p118 = por %p116, %p117
    %p119 = scmp.ne.s32.totalorder %s111, %s114
    %p120 = scmp.eq.s32.totalorder %s9, 0
    %p121 = por %p119, %p120
    %p122 = scmp.ne.s32.totalorder %s111, %s114
    %p123 = scmp.eq.s32.totalorder %s14, 3
    %p124 = por %p122, %p123
    %p125 = scmp.ne.s32.totalorder %s114, %s115
    %p126 = scmp.eq.s32.totalorder %s14, 0
    %p127 = por %p125, %p126
    %p128 = scmp.ne.s32.totalorder %s114, %s115
    %p129 = scmp.eq.s32.totalorder %s15, 3
    %p130 = por %p128, %p129
    %p132 = scmp.ne.s32.totalorder %s115, %s131
    %p133 = scmp.eq.s32.totalorder %s15, 0
    %p134 = por %p132, %p133
    %p135 = scmp.le.s32.totalorder 1, %s9
    %p136 = scmp.lt.s32.totalorder %s9, 5
    %p137 = pnand %p135, %p136
    %p138 = pneg %p137
    // Predicated region
    $region9: #{obj_ls_d_net_forward.20} parent=5 // pred_check
      _
    $region10: #{obj_ls_d_net_forward.20} parent=5 // pred_check_branch
      %140 = sbr.rel (%p137) target = $region12
    $region11: #{obj_ls_d_net_forward.20} parent=5 // pred_region
      %s141 = ssub.s32 %s9, 1
      // Predicated region
      $region13: #{obj_ls_d_net_forward.20} parent=11 // pred_check
        %p142 = pneg %p73
      $region14: #{obj_ls_d_net_forward.20} parent=11 // pred_check_branch
        %144 = sbr.rel (%p142) target = $region16
      $region15: #{obj_ls_d_net_forward.20} parent=11 // pred_region
        %p145 = scmp.lt.s32.totalorder %s19, 0
        %s146 = scalar_select %p145, %s19, 0
        %s147 = smul.addr %s146, 4
        %s148 = scalar_lea.vmem %s1, %s147
      $region16: #{obj_ls_d_net_forward.20} parent=11 // pred_fallthru
        _
      // Predicated region
      $region17: #{obj_ls_d_net_forward.20} parent=11 // pred_check
        %p149 = pneg %p99
      $region18: #{obj_ls_d_net_forward.20} parent=11 // pred_check_branch
        %151 = sbr.rel (%p149) target = $region20
      $region19: #{obj_ls_d_net_forward.20} parent=11 // pred_region
        %p152 = scmp.lt.s32.totalorder %s19, 0
        %s153 = scalar_select %p152, %s19, 0
        %s154 = scalar_lea.vmem %s2, %s153
      $region20: #{obj_ls_d_net_forward.20} parent=11 // pred_fallthru
        _
    $region12: #{obj_ls_d_net_forward.20} parent=5 // pred_fallthru
      _
    %p155 = scmp.lt.s32.totalorder %s9, 4
    // Predicated region
    $region21: #{obj_ls_d_net_forward.20} parent=5 // pred_check
      %p156 = pneg %p155
    $region22: #{obj_ls_d_net_forward.20} parent=5 // pred_check_branch
      %158 = sbr.rel (%p156) target = $region24
    $region23: #{obj_ls_d_net_forward.20} parent=5 // pred_region
      // Predicated region
      $region25: #{obj_ls_d_net_forward.20} parent=23 // pred_check
        %p159 = pneg %p41
      $region26: #{obj_ls_d_net_forward.20} parent=23 // pred_check_branch
        %161 = sbr.rel (%p159) target = $region28
      $region27: #{obj_ls_d_net_forward.20} parent=23 // pred_region
        %s162 = smul.u32 64, %s16
        %p163 = scmp.lt.s32.totalorder %s162, 255
        %s164 = scalar_select %p163, %s162, 255
        %s165 = smul.addr %s164, 4
        %s166 = scalar_lea.vmem %s0, %s165
        %s167 = smul.u32 64, %s16
      $region28: #{obj_ls_d_net_forward.20} parent=23 // pred_fallthru
        _
    $region24: #{obj_ls_d_net_forward.20} parent=5 // pred_fallthru
      _
    %p168 = scmp.le.s32.totalorder 1, %s9
    %p169 = scmp.lt.s32.totalorder %s9, 5
    %p170 = pnand %p168, %p169
    %p171 = pneg %p170
    // Predicated region
    $region29: #{obj_ls_d_net_forward.20} parent=5 // pred_check
      _
    $region30: #{obj_ls_d_net_forward.20} parent=5 // pred_check_branch
      %173 = sbr.rel (%p170) target = $region32
    $region31: #{obj_ls_d_net_forward.20} parent=5 // pred_region
      %s174 = ssub.s32 %s9, 1
      %s175 = smul.u32 64, %s18
      %p176 = scmp.lt.s32.totalorder %s175, 255
      %s177 = scalar_select %p176, %s175, 255
      %s178 = smul.addr %s177, 4
      %s179 = scalar_lea.vmem %s0, %s178
      %p180 = pneg %p47
      %p181 = pneg %p44
      %p182 = scmp.lt.s32.totalorder %s19, 0
      %s183 = scalar_select %p182, %s19, 0
      %s184 = smul.addr %s183, 4
      %s185 = scalar_lea.vmem %s1, %s184
      %p186 = pneg %p73
      %p187 = pneg %p70
      %p188 = scmp.lt.s32.totalorder %s19, 0
      %s189 = scalar_select %p188, %s19, 0
      %s190 = scalar_lea.vmem %s2, %s189
      %p191 = pneg %p99
      %p192 = pneg %p96
      %p193 = pneg %p127
      %p194 = pneg %p124
      %s195 = smul.u32 64, %s18
      %p196 = scmp.lt.s32.totalorder %s195, 255
      %s197 = scalar_select %p196, %s195, 255
      %p198 = scmp.lt.s32.totalorder %s19, 0
      %s199 = scalar_select %p198, %s19, 0
      %s200 = sadd.s32 %s199, %s197
      %s201 = smul.addr %s200, 8
      %s202 = scalar_lea.vmem %s3, %s201
      %s203 = smul.u32 64, %s18
      %p204 = scmp.lt.s32.totalorder %s203, 255
      %s205 = scalar_select %p204, %s203, 255
      %s206 = smul.addr %s205, 4
      %s207 = scalar_lea.vmem %s0, %s206
      %s208 = smul.u32 64, %s18
      %p209 = scmp.lt.s32.totalorder %s19, 0
      %s210 = scalar_select %p209, %s19, 0
      %s211 = smul.addr %s210, 4
      %s212 = scalar_lea.vmem %s1, %s211
      %p213 = scmp.lt.s32.totalorder %s19, 0
      %s214 = scalar_select %p213, %s19, 0
      %s215 = scalar_lea.vmem %s2, %s214
      %s216 = smul.u32 64, %s18
      %p217 = scmp.lt.s32.totalorder %s216, 255
      %s218 = scalar_select %p217, %s216, 255
      %p219 = scmp.lt.s32.totalorder %s19, 0
      %s220 = scalar_select %p219, %s19, 0
      %s221 = sadd.s32 %s220, %s218
      %s222 = smul.addr %s221, 8
      %s223 = scalar_lea.vmem %s3, %s222
      %s224 = smul.u32 64, %s18
      %v226 = vld [vmem:[%s207] sm:$0xf]
      %v227 = vld [vmem:[%s207 + $0x4] sm:$0xf]
      %v228 = vld [vmem:[%s207 + $0x8] sm:$0xf]
      %v229 = vld [vmem:[%s207 + $0xc] sm:$0xf]
      %v230 = vld [vmem:[%s207 + $0x10] sm:$0xf]
      %v231 = vld [vmem:[%s207 + $0x14] sm:$0xf]
      %v232 = vld [vmem:[%s207 + $0x18] sm:$0xf]
      %v233 = vld [vmem:[%s207 + $0x1c] sm:$0xf]
      %v234 = vld [vmem:[%s207 + $0x20] sm:$0xf]
      %v235 = vld [vmem:[%s207 + $0x24] sm:$0xf]
      %v236 = vld [vmem:[%s207 + $0x28] sm:$0xf]
      %v237 = vld [vmem:[%s207 + $0x2c] sm:$0xf]
      %v238 = vld [vmem:[%s207 + $0x30] sm:$0xf]
      %v239 = vld [vmem:[%s207 + $0x34] sm:$0xf]
      %v240 = vld [vmem:[%s207 + $0x38] sm:$0xf]
      %v241 = vld [vmem:[%s207 + $0x3c] sm:$0xf]
      %v242 = vld [vmem:[%s207 + $0x40] sm:$0xf]
      %v243 = vld [vmem:[%s207 + $0x44] sm:$0xf]
      %v244 = vld [vmem:[%s207 + $0x48] sm:$0xf]
      %v245 = vld [vmem:[%s207 + $0x4c] sm:$0xf]
      %v246 = vld [vmem:[%s207 + $0x50] sm:$0xf]
      %v247 = vld [vmem:[%s207 + $0x54] sm:$0xf]
      %v248 = vld [vmem:[%s207 + $0x58] sm:$0xf]
      %v249 = vld [vmem:[%s207 + $0x5c] sm:$0xf]
      %v250 = vld [vmem:[%s207 + $0x60] sm:$0xf]
      %v251 = vld [vmem:[%s207 + $0x64] sm:$0xf]
      %v252 = vld [vmem:[%s207 + $0x68] sm:$0xf]
      %v253 = vld [vmem:[%s207 + $0x6c] sm:$0xf]
      %v254 = vld [vmem:[%s207 + $0x70] sm:$0xf]
      %v255 = vld [vmem:[%s207 + $0x74] sm:$0xf]
      %v256 = vld [vmem:[%s207 + $0x78] sm:$0xf]
      %v257 = vld [vmem:[%s207 + $0x7c] sm:$0xf]
      %v258 = vld [vmem:[%s207 + $0x80] sm:$0xf]
      %v259 = vld [vmem:[%s207 + $0x84] sm:$0xf]
      %v260 = vld [vmem:[%s207 + $0x88] sm:$0xf]
      %v261 = vld [vmem:[%s207 + $0x8c] sm:$0xf]
      %v262 = vld [vmem:[%s207 + $0x90] sm:$0xf]
      %v263 = vld [vmem:[%s207 + $0x94] sm:$0xf]
      %v264 = vld [vmem:[%s207 + $0x98] sm:$0xf]
      %v265 = vld [vmem:[%s207 + $0x9c] sm:$0xf]
      %v266 = vld [vmem:[%s207 + $0xa0] sm:$0xf]
      %v267 = vld [vmem:[%s207 + $0xa4] sm:$0xf]
      %v268 = vld [vmem:[%s207 + $0xa8] sm:$0xf]
      %v269 = vld [vmem:[%s207 + $0xac] sm:$0xf]
      %v270 = vld [vmem:[%s207 + $0xb0] sm:$0xf]
      %v271 = vld [vmem:[%s207 + $0xb4] sm:$0xf]
      %v272 = vld [vmem:[%s207 + $0xb8] sm:$0xf]
      %v273 = vld [vmem:[%s207 + $0xbc] sm:$0xf]
      %v274 = vld [vmem:[%s207 + $0xc0] sm:$0xf]
      %v275 = vld [vmem:[%s207 + $0xc4] sm:$0xf]
      %v276 = vld [vmem:[%s207 + $0xc8] sm:$0xf]
      %v277 = vld [vmem:[%s207 + $0xcc] sm:$0xf]
      %v278 = vld [vmem:[%s207 + $0xd0] sm:$0xf]
      %v279 = vld [vmem:[%s207 + $0xd4] sm:$0xf]
      %v280 = vld [vmem:[%s207 + $0xd8] sm:$0xf]
      %v281 = vld [vmem:[%s207 + $0xdc] sm:$0xf]
      %v282 = vld [vmem:[%s207 + $0xe0] sm:$0xf]
      %v283 = vld [vmem:[%s207 + $0xe4] sm:$0xf]
      %v284 = vld [vmem:[%s207 + $0xe8] sm:$0xf]
      %v285 = vld [vmem:[%s207 + $0xec] sm:$0xf]
      %v286 = vld [vmem:[%s207 + $0xf0] sm:$0xf]
      %v287 = vld [vmem:[%s207 + $0xf4] sm:$0xf]
      %v288 = vld [vmem:[%s207 + $0xf8] sm:$0xf]
      %v289 = vld [vmem:[%s207 + $0xfc] sm:$0xf]
      %v290 = vld [vmem:[%s212] sm:$0xf]
      %v291 = vld [vmem:[%s212 + $0x4] sm:$0xf]
      %v292 = vld [vmem:[%s212 + $0x8] sm:$0xf]
      %v293 = vld [vmem:[%s212 + $0xc] sm:$0xf]
      %v294 = vld [vmem:[%s212 + $0x10] sm:$0xf]
      %v295 = vld [vmem:[%s212 + $0x14] sm:$0xf]
      %v296 = vld [vmem:[%s212 + $0x18] sm:$0xf]
      %v297 = vld [vmem:[%s212 + $0x1c] sm:$0xf]
      %v298 = vld [vmem:[%s212 + $0x20] sm:$0xf]
      %v299 = vld [vmem:[%s212 + $0x24] sm:$0xf]
      %v300 = vld [vmem:[%s212 + $0x28] sm:$0xf]
      %v301 = vld [vmem:[%s212 + $0x2c] sm:$0xf]
      %v302 = vld [vmem:[%s212 + $0x30] sm:$0xf]
      %v303 = vld [vmem:[%s212 + $0x34] sm:$0xf]
      %v304 = vld [vmem:[%s215] sm:$0x1]
      %v306 = vperm.slane %v304, 0
      %v372 = vunpack.c.l.b16 %v226
      %v373 = vunpack.c.l.b16 %v227
      %v374 = vunpack.c.l.b16 %v228
      %v375 = vunpack.c.l.b16 %v229
      %v376 = vunpack.c.l.b16 %v230
      %v377 = vunpack.c.l.b16 %v231
      %v378 = vunpack.c.l.b16 %v232
      %v379 = vunpack.c.l.b16 %v233
      %v380 = vunpack.c.l.b16 %v234
      %v381 = vunpack.c.l.b16 %v235
      %v382 = vunpack.c.l.b16 %v236
      %v383 = vunpack.c.l.b16 %v237
      %v384 = vunpack.c.l.b16 %v238
      %v385 = vunpack.c.l.b16 %v239
      %v386 = vunpack.c.l.b16 %v240
      %v387 = vunpack.c.l.b16 %v241
      %v388 = vunpack.c.l.b16 %v242
      %v389 = vunpack.c.l.b16 %v243
      %v390 = vunpack.c.l.b16 %v244
      %v391 = vunpack.c.l.b16 %v245
      %v392 = vunpack.c.l.b16 %v246
      %v393 = vunpack.c.l.b16 %v247
      %v394 = vunpack.c.l.b16 %v248
      %v395 = vunpack.c.l.b16 %v249
      %v396 = vunpack.c.l.b16 %v250
      %v397 = vunpack.c.l.b16 %v251
      %v398 = vunpack.c.l.b16 %v252
      %v399 = vunpack.c.l.b16 %v253
      %v400 = vunpack.c.l.b16 %v254
      %v401 = vunpack.c.l.b16 %v255
      %v402 = vunpack.c.l.b16 %v256
      %v403 = vunpack.c.l.b16 %v257
      %v404 = vunpack.c.l.b16 %v258
      %v405 = vunpack.c.l.b16 %v259
      %v406 = vunpack.c.l.b16 %v260
      %v407 = vunpack.c.l.b16 %v261
      %v408 = vunpack.c.l.b16 %v262
      %v409 = vunpack.c.l.b16 %v263
      %v410 = vunpack.c.l.b16 %v264
      %v411 = vunpack.c.l.b16 %v265
      %v412 = vunpack.c.l.b16 %v266
      %v413 = vunpack.c.l.b16 %v267
      %v414 = vunpack.c.l.b16 %v268
      %v415 = vunpack.c.l.b16 %v269
      %v416 = vunpack.c.l.b16 %v270
      %v417 = vunpack.c.l.b16 %v271
      %v418 = vunpack.c.l.b16 %v272
      %v419 = vunpack.c.l.b16 %v273
      %v420 = vunpack.c.l.b16 %v274
      %v421 = vunpack.c.l.b16 %v275
      %v422 = vunpack.c.l.b16 %v276
      %v423 = vunpack.c.l.b16 %v277
      %v424 = vunpack.c.l.b16 %v278
      %v425 = vunpack.c.l.b16 %v279
      %v426 = vunpack.c.l.b16 %v280
      %v427 = vunpack.c.l.b16 %v281
      %v428 = vunpack.c.l.b16 %v282
      %v429 = vunpack.c.l.b16 %v283
      %v430 = vunpack.c.l.b16 %v284
      %v431 = vunpack.c.l.b16 %v285
      %v432 = vunpack.c.l.b16 %v286
      %v433 = vunpack.c.l.b16 %v287
      %v434 = vunpack.c.l.b16 %v288
      %v435 = vunpack.c.l.b16 %v289
      %v436 = vpack.c.b16 %v373, %v372
      %v437 = vpack.c.b16 %v375, %v374
      %v438 = vpack.c.b16 %v377, %v376
      %v439 = vpack.c.b16 %v379, %v378
      %v440 = vpack.c.b16 %v381, %v380
      %v441 = vpack.c.b16 %v383, %v382
      %v442 = vpack.c.b16 %v385, %v384
      %v443 = vpack.c.b16 %v387, %v386
      %v444 = vpack.c.b16 %v389, %v388
      %v445 = vpack.c.b16 %v391, %v390
      %v446 = vpack.c.b16 %v393, %v392
      %v447 = vpack.c.b16 %v395, %v394
      %v448 = vpack.c.b16 %v397, %v396
      %v449 = vpack.c.b16 %v399, %v398
      %v450 = vpack.c.b16 %v401, %v400
      %v451 = vpack.c.b16 %v403, %v402
      %v452 = vpack.c.b16 %v405, %v404
      %v453 = vpack.c.b16 %v407, %v406
      %v454 = vpack.c.b16 %v409, %v408
      %v455 = vpack.c.b16 %v411, %v410
      %v456 = vpack.c.b16 %v413, %v412
      %v457 = vpack.c.b16 %v415, %v414
      %v458 = vpack.c.b16 %v417, %v416
      %v459 = vpack.c.b16 %v419, %v418
      %v460 = vpack.c.b16 %v421, %v420
      %v461 = vpack.c.b16 %v423, %v422
      %v462 = vpack.c.b16 %v425, %v424
      %v463 = vpack.c.b16 %v427, %v426
      %v464 = vpack.c.b16 %v429, %v428
      %v465 = vpack.c.b16 %v431, %v430
      %v466 = vpack.c.b16 %v433, %v432
      %v467 = vpack.c.b16 %v435, %v434
      %v482 = vunpack.c.l.b16 %v290
      %v483 = vunpack.c.l.b16 %v291
      %v484 = vunpack.c.l.b16 %v292
      %v485 = vunpack.c.l.b16 %v293
      %v486 = vunpack.c.l.b16 %v294
      %v487 = vunpack.c.l.b16 %v295
      %v488 = vunpack.c.l.b16 %v296
      %v489 = vunpack.c.l.b16 %v297
      %v490 = vunpack.c.l.b16 %v298
      %v491 = vunpack.c.l.b16 %v299
      %v492 = vunpack.c.l.b16 %v300
      %v493 = vunpack.c.l.b16 %v301
      %v494 = vunpack.c.l.b16 %v302
      %v495 = vunpack.c.l.b16 %v303
      %v496 = vpack.c.b16 %v483, %v482
      %v497 = vpack.c.b16 %v485, %v484
      %v498 = vpack.c.b16 %v487, %v486
      %v499 = vpack.c.b16 %v489, %v488
      %v500 = vpack.c.b16 %v491, %v490
      %v501 = vpack.c.b16 %v493, %v492
      %v502 = vpack.c.b16 %v495, %v494
      %vm510 = vcmask 916480
      %v512 = vsel %vm510, %v436, 0
      %v515 = vsel %vm510, %v437, 0
      %v518 = vsel %vm510, %v438, 0
      %v521 = vsel %vm510, %v439, 0
      %v524 = vsel %vm510, %v440, 0
      %v527 = vsel %vm510, %v441, 0
      %v530 = vsel %vm510, %v442, 0
      %v533 = vsel %vm510, %v443, 0
      %v536 = vsel %vm510, %v444, 0
      %v539 = vsel %vm510, %v445, 0
      %v542 = vsel %vm510, %v446, 0
      %v545 = vsel %vm510, %v447, 0
      %v548 = vsel %vm510, %v448, 0
      %v551 = vsel %vm510, %v449, 0
      %v554 = vsel %vm510, %v450, 0
      %v557 = vsel %vm510, %v451, 0
      %v560 = vsel %vm510, %v452, 0
      %v563 = vsel %vm510, %v453, 0
      %v566 = vsel %vm510, %v454, 0
      %v569 = vsel %vm510, %v455, 0
      %v572 = vsel %vm510, %v456, 0
      %v575 = vsel %vm510, %v457, 0
      %v578 = vsel %vm510, %v458, 0
      %v581 = vsel %vm510, %v459, 0
      %v584 = vsel %vm510, %v460, 0
      %v587 = vsel %vm510, %v461, 0
      %v590 = vsel %vm510, %v462, 0
      %v593 = vsel %vm510, %v463, 0
      %v596 = vsel %vm510, %v464, 0
      %v599 = vsel %vm510, %v465, 0
      %v602 = vsel %vm510, %v466, 0
      %v605 = vsel %vm510, %v467, 0
      %607 = vmatpush.bf16.msra.mxu0 0
      %608 = vmatpush.bf16.msra.mxu0 %v502
      %609 = vmatpush.bf16.msra.mxu0 %v501
      %610 = vmatpush.bf16.msra.mxu0 %v500
      %611 = vmatpush.bf16.msra.mxu0 %v499
      %612 = vmatpush.bf16.msra.mxu0 %v498
      %613 = vmatpush.bf16.msra.mxu0 %v497
      %614 = vmatpush.bf16.msra.mxu0 %v496
      %615 = vmatmul.bf16.gmra.mxu0 %v512
      %v616 = vpop.f32.mrf.mxu0
      %v617 = vadd.f32 %v306, %v616
      %v618 = vpop.f32.mrf.mxu0
      %v619 = vadd.f32 %v306, %v618
      %620 = vmatmul.bf16.gmra.mxu0 %v515
      %v621 = vpop.f32.mrf.mxu0
      %v622 = vadd.f32 %v306, %v621
      %v623 = vpop.f32.mrf.mxu0
      %v624 = vadd.f32 %v306, %v623
      %625 = vmatmul.bf16.gmra.mxu0 %v518
      %v626 = vpop.f32.mrf.mxu0
      %v627 = vadd.f32 %v306, %v626
      %v628 = vpop.f32.mrf.mxu0
      %v629 = vadd.f32 %v306, %v628
      %630 = vmatmul.bf16.gmra.mxu0 %v521
      %v631 = vpop.f32.mrf.mxu0
      %v632 = vadd.f32 %v306, %v631
      %v633 = vpop.f32.mrf.mxu0
      %v634 = vadd.f32 %v306, %v633
      %635 = vmatmul.bf16.gmra.mxu0 %v524
      %v636 = vpop.f32.mrf.mxu0
      %v637 = vadd.f32 %v306, %v636
      %v638 = vpop.f32.mrf.mxu0
      %v639 = vadd.f32 %v306, %v638
      %640 = vmatmul.bf16.gmra.mxu0 %v527
      %v641 = vpop.f32.mrf.mxu0
      %v642 = vadd.f32 %v306, %v641
      %v643 = vpop.f32.mrf.mxu0
      %v644 = vadd.f32 %v306, %v643
      %645 = vmatmul.bf16.gmra.mxu0 %v530
      %v646 = vpop.f32.mrf.mxu0
      %v647 = vadd.f32 %v306, %v646
      %v648 = vpop.f32.mrf.mxu0
      %v649 = vadd.f32 %v306, %v648
      %650 = vmatmul.bf16.gmra.mxu0 %v533
      %v651 = vpop.f32.mrf.mxu0
      %v652 = vadd.f32 %v306, %v651
      %v653 = vpop.f32.mrf.mxu0
      %v654 = vadd.f32 %v306, %v653
      %655 = vmatmul.bf16.gmra.mxu0 %v536
      %v656 = vpop.f32.mrf.mxu0
      %v657 = vadd.f32 %v306, %v656
      %v658 = vpop.f32.mrf.mxu0
      %v659 = vadd.f32 %v306, %v658
      %660 = vmatmul.bf16.gmra.mxu0 %v539
      %v661 = vpop.f32.mrf.mxu0
      %v662 = vadd.f32 %v306, %v661
      %v663 = vpop.f32.mrf.mxu0
      %v664 = vadd.f32 %v306, %v663
      %665 = vmatmul.bf16.gmra.mxu0 %v542
      %v666 = vpop.f32.mrf.mxu0
      %v667 = vadd.f32 %v306, %v666
      %v668 = vpop.f32.mrf.mxu0
      %v669 = vadd.f32 %v306, %v668
      %670 = vmatmul.bf16.gmra.mxu0 %v545
      %v671 = vpop.f32.mrf.mxu0
      %v672 = vadd.f32 %v306, %v671
      %v673 = vpop.f32.mrf.mxu0
      %v674 = vadd.f32 %v306, %v673
      %675 = vmatmul.bf16.gmra.mxu0 %v548
      %v676 = vpop.f32.mrf.mxu0
      %v677 = vadd.f32 %v306, %v676
      %v678 = vpop.f32.mrf.mxu0
      %v679 = vadd.f32 %v306, %v678
      %680 = vmatmul.bf16.gmra.mxu0 %v551
      %v681 = vpop.f32.mrf.mxu0
      %v682 = vadd.f32 %v306, %v681
      %v683 = vpop.f32.mrf.mxu0
      %v684 = vadd.f32 %v306, %v683
      %685 = vmatmul.bf16.gmra.mxu0 %v554
      %v686 = vpop.f32.mrf.mxu0
      %v687 = vadd.f32 %v306, %v686
      %v688 = vpop.f32.mrf.mxu0
      %v689 = vadd.f32 %v306, %v688
      %690 = vmatmul.bf16.gmra.mxu0 %v557
      %v691 = vpop.f32.mrf.mxu0
      %v692 = vadd.f32 %v306, %v691
      %v693 = vpop.f32.mrf.mxu0
      %v694 = vadd.f32 %v306, %v693
      %695 = vmatmul.bf16.gmra.mxu0 %v560
      %v696 = vpop.f32.mrf.mxu0
      %v697 = vadd.f32 %v306, %v696
      %v698 = vpop.f32.mrf.mxu0
      %v699 = vadd.f32 %v306, %v698
      %700 = vmatmul.bf16.gmra.mxu0 %v563
      %v701 = vpop.f32.mrf.mxu0
      %v702 = vadd.f32 %v306, %v701
      %v703 = vpop.f32.mrf.mxu0
      %v704 = vadd.f32 %v306, %v703
      %705 = vmatmul.bf16.gmra.mxu0 %v566
      %v706 = vpop.f32.mrf.mxu0
      %v707 = vadd.f32 %v306, %v706
      %v708 = vpop.f32.mrf.mxu0
      %v709 = vadd.f32 %v306, %v708
      %710 = vmatmul.bf16.gmra.mxu0 %v569
      %v711 = vpop.f32.mrf.mxu0
      %v712 = vadd.f32 %v306, %v711
      %v713 = vpop.f32.mrf.mxu0
      %v714 = vadd.f32 %v306, %v713
      %715 = vmatmul.bf16.gmra.mxu0 %v572
      %v716 = vpop.f32.mrf.mxu0
      %v717 = vadd.f32 %v306, %v716
      %v718 = vpop.f32.mrf.mxu0
      %v719 = vadd.f32 %v306, %v718
      %720 = vmatmul.bf16.gmra.mxu0 %v575
      %v721 = vpop.f32.mrf.mxu0
      %v722 = vadd.f32 %v306, %v721
      %v723 = vpop.f32.mrf.mxu0
      %v724 = vadd.f32 %v306, %v723
      %725 = vmatmul.bf16.gmra.mxu0 %v578
      %v726 = vpop.f32.mrf.mxu0
      %v727 = vadd.f32 %v306, %v726
      %v728 = vpop.f32.mrf.mxu0
      %v729 = vadd.f32 %v306, %v728
      %730 = vmatmul.bf16.gmra.mxu0 %v581
      %v731 = vpop.f32.mrf.mxu0
      %v732 = vadd.f32 %v306, %v731
      %v733 = vpop.f32.mrf.mxu0
      %v734 = vadd.f32 %v306, %v733
      %735 = vmatmul.bf16.gmra.mxu0 %v584
      %v736 = vpop.f32.mrf.mxu0
      %v737 = vadd.f32 %v306, %v736
      %v738 = vpop.f32.mrf.mxu0
      %v739 = vadd.f32 %v306, %v738
      %740 = vmatmul.bf16.gmra.mxu0 %v587
      %v741 = vpop.f32.mrf.mxu0
      %v742 = vadd.f32 %v306, %v741
      %v743 = vpop.f32.mrf.mxu0
      %v744 = vadd.f32 %v306, %v743
      %745 = vmatmul.bf16.gmra.mxu0 %v590
      %v746 = vpop.f32.mrf.mxu0
      %v747 = vadd.f32 %v306, %v746
      %v748 = vpop.f32.mrf.mxu0
      %v749 = vadd.f32 %v306, %v748
      %750 = vmatmul.bf16.gmra.mxu0 %v593
      %v751 = vpop.f32.mrf.mxu0
      %v752 = vadd.f32 %v306, %v751
      %v753 = vpop.f32.mrf.mxu0
      %v754 = vadd.f32 %v306, %v753
      %755 = vmatmul.bf16.gmra.mxu0 %v596
      %v756 = vpop.f32.mrf.mxu0
      %v757 = vadd.f32 %v306, %v756
      %v758 = vpop.f32.mrf.mxu0
      %v759 = vadd.f32 %v306, %v758
      %760 = vmatmul.bf16.gmra.mxu0 %v599
      %v761 = vpop.f32.mrf.mxu0
      %v762 = vadd.f32 %v306, %v761
      %v763 = vpop.f32.mrf.mxu0
      %v764 = vadd.f32 %v306, %v763
      %765 = vmatmul.bf16.gmra.mxu0 %v602
      %v766 = vpop.f32.mrf.mxu0
      %v767 = vadd.f32 %v306, %v766
      %v768 = vpop.f32.mrf.mxu0
      %v769 = vadd.f32 %v306, %v768
      %770 = vmatmul.bf16.gmra.mxu0 %v605
      %v771 = vpop.f32.mrf.mxu0
      %v772 = vadd.f32 %v306, %v771
      %v773 = vpop.f32.mrf.mxu0
      %v774 = vadd.f32 %v306, %v773
      %775 = vdwg.mxu0
      %vm776 = vcmp.ge.f32.partialorder %v617, 0.0
      %vm777 = vcmp.ge.f32.partialorder %v619, 0.0
      %vm778 = vcmp.ge.f32.partialorder %v622, 0.0
      %vm779 = vcmp.ge.f32.partialorder %v624, 0.0
      %vm780 = vcmp.ge.f32.partialorder %v627, 0.0
      %vm781 = vcmp.ge.f32.partialorder %v629, 0.0
      %vm782 = vcmp.ge.f32.partialorder %v632, 0.0
      %vm783 = vcmp.ge.f32.partialorder %v634, 0.0
      %vm784 = vcmp.ge.f32.partialorder %v637, 0.0
      %vm785 = vcmp.ge.f32.partialorder %v639, 0.0
      %vm786 = vcmp.ge.f32.partialorder %v642, 0.0
      %vm787 = vcmp.ge.f32.partialorder %v644, 0.0
      %vm788 = vcmp.ge.f32.partialorder %v647, 0.0
      %vm789 = vcmp.ge.f32.partialorder %v649, 0.0
      %vm790 = vcmp.ge.f32.partialorder %v652, 0.0
      %vm791 = vcmp.ge.f32.partialorder %v654, 0.0
      %vm792 = vcmp.ge.f32.partialorder %v657, 0.0
      %vm793 = vcmp.ge.f32.partialorder %v659, 0.0
      %vm794 = vcmp.ge.f32.partialorder %v662, 0.0
      %vm795 = vcmp.ge.f32.partialorder %v664, 0.0
      %vm796 = vcmp.ge.f32.partialorder %v667, 0.0
      %vm797 = vcmp.ge.f32.partialorder %v669, 0.0
      %vm798 = vcmp.ge.f32.partialorder %v672, 0.0
      %vm799 = vcmp.ge.f32.partialorder %v674, 0.0
      %vm800 = vcmp.ge.f32.partialorder %v677, 0.0
      %vm801 = vcmp.ge.f32.partialorder %v679, 0.0
      %vm802 = vcmp.ge.f32.partialorder %v682, 0.0
      %vm803 = vcmp.ge.f32.partialorder %v684, 0.0
      %vm804 = vcmp.ge.f32.partialorder %v687, 0.0
      %vm805 = vcmp.ge.f32.partialorder %v689, 0.0
      %vm806 = vcmp.ge.f32.partialorder %v692, 0.0
      %vm807 = vcmp.ge.f32.partialorder %v694, 0.0
      %vm808 = vcmp.ge.f32.partialorder %v697, 0.0
      %vm809 = vcmp.ge.f32.partialorder %v699, 0.0
      %vm810 = vcmp.ge.f32.partialorder %v702, 0.0
      %vm811 = vcmp.ge.f32.partialorder %v704, 0.0
      %vm812 = vcmp.ge.f32.partialorder %v707, 0.0
      %vm813 = vcmp.ge.f32.partialorder %v709, 0.0
      %vm814 = vcmp.ge.f32.partialorder %v712, 0.0
      %vm815 = vcmp.ge.f32.partialorder %v714, 0.0
      %vm816 = vcmp.ge.f32.partialorder %v717, 0.0
      %vm817 = vcmp.ge.f32.partialorder %v719, 0.0
      %vm818 = vcmp.ge.f32.partialorder %v722, 0.0
      %vm819 = vcmp.ge.f32.partialorder %v724, 0.0
      %vm820 = vcmp.ge.f32.partialorder %v727, 0.0
      %vm821 = vcmp.ge.f32.partialorder %v729, 0.0
      %vm822 = vcmp.ge.f32.partialorder %v732, 0.0
      %vm823 = vcmp.ge.f32.partialorder %v734, 0.0
      %vm824 = vcmp.ge.f32.partialorder %v737, 0.0
      %vm825 = vcmp.ge.f32.partialorder %v739, 0.0
      %vm826 = vcmp.ge.f32.partialorder %v742, 0.0
      %vm827 = vcmp.ge.f32.partialorder %v744, 0.0
      %vm828 = vcmp.ge.f32.partialorder %v747, 0.0
      %vm829 = vcmp.ge.f32.partialorder %v749, 0.0
      %vm830 = vcmp.ge.f32.partialorder %v752, 0.0
      %vm831 = vcmp.ge.f32.partialorder %v754, 0.0
      %vm832 = vcmp.ge.f32.partialorder %v757, 0.0
      %vm833 = vcmp.ge.f32.partialorder %v759, 0.0
      %vm834 = vcmp.ge.f32.partialorder %v762, 0.0
      %vm835 = vcmp.ge.f32.partialorder %v764, 0.0
      %vm836 = vcmp.ge.f32.partialorder %v767, 0.0
      %vm837 = vcmp.ge.f32.partialorder %v769, 0.0
      %vm838 = vcmp.ge.f32.partialorder %v772, 0.0
      %vm839 = vcmp.ge.f32.partialorder %v774, 0.0
      %v840 = vmul.f32 %v617, 0.2
      %v841 = vmul.f32 %v619, 0.2
      %v842 = vmul.f32 %v622, 0.2
      %v843 = vmul.f32 %v624, 0.2
      %v844 = vmul.f32 %v627, 0.2
      %v845 = vmul.f32 %v629, 0.2
      %v846 = vmul.f32 %v632, 0.2
      %v847 = vmul.f32 %v634, 0.2
      %v848 = vmul.f32 %v637, 0.2
      %v849 = vmul.f32 %v639, 0.2
      %v850 = vmul.f32 %v642, 0.2
      %v851 = vmul.f32 %v644, 0.2
      %v852 = vmul.f32 %v647, 0.2
      %v853 = vmul.f32 %v649, 0.2
      %v854 = vmul.f32 %v652, 0.2
      %v855 = vmul.f32 %v654, 0.2
      %v856 = vmul.f32 %v657, 0.2
      %v857 = vmul.f32 %v659, 0.2
      %v858 = vmul.f32 %v662, 0.2
      %v859 = vmul.f32 %v664, 0.2
      %v860 = vmul.f32 %v667, 0.2
      %v861 = vmul.f32 %v669, 0.2
      %v862 = vmul.f32 %v672, 0.2
      %v863 = vmul.f32 %v674, 0.2
      %v864 = vmul.f32 %v677, 0.2
      %v865 = vmul.f32 %v679, 0.2
      %v866 = vmul.f32 %v682, 0.2
      %v867 = vmul.f32 %v684, 0.2
      %v868 = vmul.f32 %v687, 0.2
      %v869 = vmul.f32 %v689, 0.2
      %v870 = vmul.f32 %v692, 0.2
      %v871 = vmul.f32 %v694, 0.2
      %v872 = vmul.f32 %v697, 0.2
      %v873 = vmul.f32 %v699, 0.2
      %v874 = vmul.f32 %v702, 0.2
      %v875 = vmul.f32 %v704, 0.2
      %v876 = vmul.f32 %v707, 0.2
      %v877 = vmul.f32 %v709, 0.2
      %v878 = vmul.f32 %v712, 0.2
      %v879 = vmul.f32 %v714, 0.2
      %v880 = vmul.f32 %v717, 0.2
      %v881 = vmul.f32 %v719, 0.2
      %v882 = vmul.f32 %v722, 0.2
      %v883 = vmul.f32 %v724, 0.2
      %v884 = vmul.f32 %v727, 0.2
      %v885 = vmul.f32 %v729, 0.2
      %v886 = vmul.f32 %v732, 0.2
      %v887 = vmul.f32 %v734, 0.2
      %v888 = vmul.f32 %v737, 0.2
      %v889 = vmul.f32 %v739, 0.2
      %v890 = vmul.f32 %v742, 0.2
      %v891 = vmul.f32 %v744, 0.2
      %v892 = vmul.f32 %v747, 0.2
      %v893 = vmul.f32 %v749, 0.2
      %v894 = vmul.f32 %v752, 0.2
      %v895 = vmul.f32 %v754, 0.2
      %v896 = vmul.f32 %v757, 0.2
      %v897 = vmul.f32 %v759, 0.2
      %v898 = vmul.f32 %v762, 0.2
      %v899 = vmul.f32 %v764, 0.2
      %v900 = vmul.f32 %v767, 0.2
      %v901 = vmul.f32 %v769, 0.2
      %v902 = vmul.f32 %v772, 0.2
      %v903 = vmul.f32 %v774, 0.2
      %v904 = vsel %vm776, %v617, %v840
      %v905 = vsel %vm777, %v619, %v841
      %v906 = vsel %vm778, %v622, %v842
      %v907 = vsel %vm779, %v624, %v843
      %v908 = vsel %vm780, %v627, %v844
      %v909 = vsel %vm781, %v629, %v845
      %v910 = vsel %vm782, %v632, %v846
      %v911 = vsel %vm783, %v634, %v847
      %v912 = vsel %vm784, %v637, %v848
      %v913 = vsel %vm785, %v639, %v849
      %v914 = vsel %vm786, %v642, %v850
      %v915 = vsel %vm787, %v644, %v851
      %v916 = vsel %vm788, %v647, %v852
      %v917 = vsel %vm789, %v649, %v853
      %v918 = vsel %vm790, %v652, %v854
      %v919 = vsel %vm791, %v654, %v855
      %v920 = vsel %vm792, %v657, %v856
      %v921 = vsel %vm793, %v659, %v857
      %v922 = vsel %vm794, %v662, %v858
      %v923 = vsel %vm795, %v664, %v859
      %v924 = vsel %vm796, %v667, %v860
      %v925 = vsel %vm797, %v669, %v861
      %v926 = vsel %vm798, %v672, %v862
      %v927 = vsel %vm799, %v674, %v863
      %v928 = vsel %vm800, %v677, %v864
      %v929 = vsel %vm801, %v679, %v865
      %v930 = vsel %vm802, %v682, %v866
      %v931 = vsel %vm803, %v684, %v867
      %v932 = vsel %vm804, %v687, %v868
      %v933 = vsel %vm805, %v689, %v869
      %v934 = vsel %vm806, %v692, %v870
      %v935 = vsel %vm807, %v694, %v871
      %v936 = vsel %vm808, %v697, %v872
      %v937 = vsel %vm809, %v699, %v873
      %v938 = vsel %vm810, %v702, %v874
      %v939 = vsel %vm811, %v704, %v875
      %v940 = vsel %vm812, %v707, %v876
      %v941 = vsel %vm813, %v709, %v877
      %v942 = vsel %vm814, %v712, %v878
      %v943 = vsel %vm815, %v714, %v879
      %v944 = vsel %vm816, %v717, %v880
      %v945 = vsel %vm817, %v719, %v881
      %v946 = vsel %vm818, %v722, %v882
      %v947 = vsel %vm819, %v724, %v883
      %v948 = vsel %vm820, %v727, %v884
      %v949 = vsel %vm821, %v729, %v885
      %v950 = vsel %vm822, %v732, %v886
      %v951 = vsel %vm823, %v734, %v887
      %v952 = vsel %vm824, %v737, %v888
      %v953 = vsel %vm825, %v739, %v889
      %v954 = vsel %vm826, %v742, %v890
      %v955 = vsel %vm827, %v744, %v891
      %v956 = vsel %vm828, %v747, %v892
      %v957 = vsel %vm829, %v749, %v893
      %v958 = vsel %vm830, %v752, %v894
      %v959 = vsel %vm831, %v754, %v895
      %v960 = vsel %vm832, %v757, %v896
      %v961 = vsel %vm833, %v759, %v897
      %v962 = vsel %vm834, %v762, %v898
      %v963 = vsel %vm835, %v764, %v899
      %v964 = vsel %vm836, %v767, %v900
      %v965 = vsel %vm837, %v769, %v901
      %v966 = vsel %vm838, %v772, %v902
      %v967 = vsel %vm839, %v774, %v903
      %968 = vst [vmem:[%s223] sm:$0xff] %v904
      %969 = vst [vmem:[%s223 + $0x8] sm:$0xff] %v905
      %970 = vst [vmem:[%s223 + $0x10] sm:$0xff] %v906
      %971 = vst [vmem:[%s223 + $0x18] sm:$0xff] %v907
      %972 = vst [vmem:[%s223 + $0x20] sm:$0xff] %v908
      %973 = vst [vmem:[%s223 + $0x28] sm:$0xff] %v909
      %974 = vst [vmem:[%s223 + $0x30] sm:$0xff] %v910
      %975 = vst [vmem:[%s223 + $0x38] sm:$0xff] %v911
      %976 = vst [vmem:[%s223 + $0x40] sm:$0xff] %v912
      %977 = vst [vmem:[%s223 + $0x48] sm:$0xff] %v913
      %978 = vst [vmem:[%s223 + $0x50] sm:$0xff] %v914
      %979 = vst [vmem:[%s223 + $0x58] sm:$0xff] %v915
      %980 = vst [vmem:[%s223 + $0x60] sm:$0xff] %v916
      %981 = vst [vmem:[%s223 + $0x68] sm:$0xff] %v917
      %982 = vst [vmem:[%s223 + $0x70] sm:$0xff] %v918
      %983 = vst [vmem:[%s223 + $0x78] sm:$0xff] %v919
      %984 = vst [vmem:[%s223 + $0x80] sm:$0xff] %v920
      %985 = vst [vmem:[%s223 + $0x88] sm:$0xff] %v921
      %986 = vst [vmem:[%s223 + $0x90] sm:$0xff] %v922
      %987 = vst [vmem:[%s223 + $0x98] sm:$0xff] %v923
      %988 = vst [vmem:[%s223 + $0xa0] sm:$0xff] %v924
      %989 = vst [vmem:[%s223 + $0xa8] sm:$0xff] %v925
      %990 = vst [vmem:[%s223 + $0xb0] sm:$0xff] %v926
      %991 = vst [vmem:[%s223 + $0xb8] sm:$0xff] %v927
      %992 = vst [vmem:[%s223 + $0xc0] sm:$0xff] %v928
      %993 = vst [vmem:[%s223 + $0xc8] sm:$0xff] %v929
      %994 = vst [vmem:[%s223 + $0xd0] sm:$0xff] %v930
      %995 = vst [vmem:[%s223 + $0xd8] sm:$0xff] %v931
      %996 = vst [vmem:[%s223 + $0xe0] sm:$0xff] %v932
      %997 = vst [vmem:[%s223 + $0xe8] sm:$0xff] %v933
      %998 = vst [vmem:[%s223 + $0xf0] sm:$0xff] %v934
      %999 = vst [vmem:[%s223 + $0xf8] sm:$0xff] %v935
      %1000 = vst [vmem:[%s223 + $0x100] sm:$0xff] %v936
      %1001 = vst [vmem:[%s223 + $0x108] sm:$0xff] %v937
      %1002 = vst [vmem:[%s223 + $0x110] sm:$0xff] %v938
      %1003 = vst [vmem:[%s223 + $0x118] sm:$0xff] %v939
      %1004 = vst [vmem:[%s223 + $0x120] sm:$0xff] %v940
      %1005 = vst [vmem:[%s223 + $0x128] sm:$0xff] %v941
      %1006 = vst [vmem:[%s223 + $0x130] sm:$0xff] %v942
      %1007 = vst [vmem:[%s223 + $0x138] sm:$0xff] %v943
      %1008 = vst [vmem:[%s223 + $0x140] sm:$0xff] %v944
      %1009 = vst [vmem:[%s223 + $0x148] sm:$0xff] %v945
      %1010 = vst [vmem:[%s223 + $0x150] sm:$0xff] %v946
      %1011 = vst [vmem:[%s223 + $0x158] sm:$0xff] %v947
      %1012 = vst [vmem:[%s223 + $0x160] sm:$0xff] %v948
      %1013 = vst [vmem:[%s223 + $0x168] sm:$0xff] %v949
      %1014 = vst [vmem:[%s223 + $0x170] sm:$0xff] %v950
      %1015 = vst [vmem:[%s223 + $0x178] sm:$0xff] %v951
      %1016 = vst [vmem:[%s223 + $0x180] sm:$0xff] %v952
      %1017 = vst [vmem:[%s223 + $0x188] sm:$0xff] %v953
      %1018 = vst [vmem:[%s223 + $0x190] sm:$0xff] %v954
      %1019 = vst [vmem:[%s223 + $0x198] sm:$0xff] %v955
      %1020 = vst [vmem:[%s223 + $0x1a0] sm:$0xff] %v956
      %1021 = vst [vmem:[%s223 + $0x1a8] sm:$0xff] %v957
      %1022 = vst [vmem:[%s223 + $0x1b0] sm:$0xff] %v958
      %1023 = vst [vmem:[%s223 + $0x1b8] sm:$0xff] %v959
      %1024 = vst [vmem:[%s223 + $0x1c0] sm:$0xff] %v960
      %1025 = vst [vmem:[%s223 + $0x1c8] sm:$0xff] %v961
      %1026 = vst [vmem:[%s223 + $0x1d0] sm:$0xff] %v962
      %1027 = vst [vmem:[%s223 + $0x1d8] sm:$0xff] %v963
      %1028 = vst [vmem:[%s223 + $0x1e0] sm:$0xff] %v964
      %1029 = vst [vmem:[%s223 + $0x1e8] sm:$0xff] %v965
      %1030 = vst [vmem:[%s223 + $0x1f0] sm:$0xff] %v966
      %1031 = vst [vmem:[%s223 + $0x1f8] sm:$0xff] %v967
      %s1032 = smul.u32 64, %s18
      %p1033 = scmp.lt.s32.totalorder %s1032, 255
      %s1034 = scalar_select %p1033, %s1032, 255
      %p1035 = scmp.lt.s32.totalorder %s19, 0
      %s1036 = scalar_select %p1035, %s19, 0
      %s1037 = sadd.s32 %s1036, %s1034
      %s1038 = smul.addr %s1037, 8
      %s1039 = scalar_lea.vmem %s3, %s1038
      // Predicated region
      $region33: #{obj_ls_d_net_forward.20} parent=31 // pred_check
        %p1040 = pneg %p124
      $region34: #{obj_ls_d_net_forward.20} parent=31 // pred_check_branch
        %1042 = sbr.rel (%p1040) target = $region36
      $region35: #{obj_ls_d_net_forward.20} parent=31 // pred_region
        %s1043 = smul.u32 64, %s18
      $region36: #{obj_ls_d_net_forward.20} parent=31 // pred_fallthru
        _
    $region32: #{obj_ls_d_net_forward.20} parent=5 // pred_fallthru
      _
    %p1044 = scmp.le.s32.totalorder 2, %s9
    // Predicated region
    $region37: #{obj_ls_d_net_forward.20} parent=5 // pred_check
      %p1045 = pneg %p1044
    $region38: #{obj_ls_d_net_forward.20} parent=5 // pred_check_branch
      %1047 = sbr.rel (%p1045) target = $region40
    $region39: #{obj_ls_d_net_forward.20} parent=5 // pred_region
      %s1048 = ssub.s32 %s9, 2
      // Predicated region
      $region41: #{obj_ls_d_net_forward.20} parent=39 // pred_check
        %p1049 = pneg %p130
      $region42: #{obj_ls_d_net_forward.20} parent=39 // pred_check_branch
        %1051 = sbr.rel (%p1049) target = $region44
      $region43: #{obj_ls_d_net_forward.20} parent=39 // pred_region
        %s1052 = smul.u32 64, %s20
        %p1053 = scmp.lt.s32.totalorder %s1052, 255
        %s1054 = scalar_select %p1053, %s1052, 255
        %p1055 = scmp.lt.s32.totalorder %s21, 0
        %s1056 = scalar_select %p1055, %s21, 0
        %s1057 = sadd.s32 %s1056, %s1054
        %s1058 = smul.addr %s1057, 8
        %s1059 = scalar_lea.vmem %s3, %s1058
      $region44: #{obj_ls_d_net_forward.20} parent=39 // pred_fallthru
        _
    $region40: #{obj_ls_d_net_forward.20} parent=5 // pred_fallthru
      _
  $region6: #{obj_ls_d_net_forward.20} parent=0 // loop_footer
    %s13 = sadd.s32 1, %s9
  $region7: #{obj_ls_d_net_forward.20} parent=0 // loop_footer_branch
    %8 = sbr.rel target = $region3
  $region8: #{obj_ls_d_net_forward.20} parent=0 // loop_exit
    _

// kernel: obj_ls_d_net_forward.22
$region0: #{obj_ls_d_net_forward.22}
  #allocation0 [shape = 'u32[]', space=smem, size = 0x4, offset = 0x4, fixed_abs, tag = 'smem constant byte address 0x4 - core index']
  #allocation1 [shape = 'u32[72,128]{1,0:T(1,128)}', space=vmem, size = 0x9000, scoped, tag = 'internal scratch']
  %s0 = inlined_call_operand.vmem [shape: f32[512,32], index: 0, kind: input, shape index: {}]
  %s1 = inlined_call_operand.vmem [shape: f32[1,32], index: 1, kind: input, shape index: {}]
  %s2 = inlined_call_operand.vmem [shape: f32[1,32], index: 2, kind: input, shape index: {}]
  %s3 = inlined_call_operand.vmem [shape: f32[512,32], index: 3, kind: output, shape index: {}]
  %s4 = sld [smem:[#allocation0]]
  $region22: #{obj_ls_d_net_forward.22} parent=0
    _
  %s6 = ssub.s32 1, %s4
  %s7 = scalar_select 0, %s6, %s4
  // Predicated region
  $region2: #{obj_ls_d_net_forward.22} parent=0 // pred_check
    _
  $region3: #{obj_ls_d_net_forward.22} parent=0 // pred_check_branch
    %9 = sbr.rel (0) target = $region5
  $region4: #{obj_ls_d_net_forward.22} parent=0 // pred_region
    _
  $region5: #{obj_ls_d_net_forward.22} parent=0 // pred_fallthru
    _
  // Predicated region
  $region6: #{obj_ls_d_net_forward.22} parent=0 // pred_check
    _
  $region7: #{obj_ls_d_net_forward.22} parent=0 // pred_check_branch
    %11 = sbr.rel (0) target = $region9
  $region8: #{obj_ls_d_net_forward.22} parent=0 // pred_region
    _
  $region9: #{obj_ls_d_net_forward.22} parent=0 // pred_fallthru
    _
  // Predicated region
  $region10: #{obj_ls_d_net_forward.22} parent=0 // pred_check
    _
  $region11: #{obj_ls_d_net_forward.22} parent=0 // pred_check_branch
    %13 = sbr.rel (0) target = $region13
  $region12: #{obj_ls_d_net_forward.22} parent=0 // pred_region
    _
  $region13: #{obj_ls_d_net_forward.22} parent=0 // pred_fallthru
    _
  %v14 = vld [vmem:[%s0] sm:$0xff]
  %v15 = vld [vmem:[%s0 + $0x8] sm:$0xff]
  %v16 = vld [vmem:[%s0 + $0x10] sm:$0xff]
  %v17 = vld [vmem:[%s0 + $0x18] sm:$0xff]
  %v18 = vld [vmem:[%s0 + $0x20] sm:$0xff]
  %v19 = vld [vmem:[%s0 + $0x28] sm:$0xff]
  %v20 = vld [vmem:[%s0 + $0x30] sm:$0xff]
  %v21 = vld [vmem:[%s0 + $0x38] sm:$0xff]
  %v22 = vld [vmem:[%s0 + $0x40] sm:$0xff]
  %v23 = vld [vmem:[%s0 + $0x48] sm:$0xff]
  %v24 = vld [vmem:[%s0 + $0x50] sm:$0xff]
  %v25 = vld [vmem:[%s0 + $0x58] sm:$0xff]
  %v26 = vld [vmem:[%s0 + $0x60] sm:$0xff]
  %v27 = vld [vmem:[%s0 + $0x68] sm:$0xff]
  %v28 = vld [vmem:[%s0 + $0x70] sm:$0xff]
  %v29 = vld [vmem:[%s0 + $0x78] sm:$0xff]
  %v30 = vld [vmem:[%s0 + $0x80] sm:$0xff]
  %v31 = vld [vmem:[%s0 + $0x88] sm:$0xff]
  %v32 = vld [vmem:[%s0 + $0x90] sm:$0xff]
  %v33 = vld [vmem:[%s0 + $0x98] sm:$0xff]
  %v34 = vld [vmem:[%s0 + $0xa0] sm:$0xff]
  %v35 = vld [vmem:[%s0 + $0xa8] sm:$0xff]
  %v36 = vld [vmem:[%s0 + $0xb0] sm:$0xff]
  %v37 = vld [vmem:[%s0 + $0xb8] sm:$0xff]
  %v38 = vld [vmem:[%s0 + $0xc0] sm:$0xff]
  %v39 = vld [vmem:[%s0 + $0xc8] sm:$0xff]
  %v40 = vld [vmem:[%s0 + $0xd0] sm:$0xff]
  %v41 = vld [vmem:[%s0 + $0xd8] sm:$0xff]
  %v42 = vld [vmem:[%s0 + $0xe0] sm:$0xff]
  %v43 = vld [vmem:[%s0 + $0xe8] sm:$0xff]
  %v44 = vld [vmem:[%s0 + $0xf0] sm:$0xff]
  %v45 = vld [vmem:[%s0 + $0xf8] sm:$0xff]
  %v46 = vld [vmem:[%s0 + $0x100] sm:$0xff]
  %v47 = vld [vmem:[%s0 + $0x108] sm:$0xff]
  %v48 = vld [vmem:[%s0 + $0x110] sm:$0xff]
  %v49 = vld [vmem:[%s0 + $0x118] sm:$0xff]
  %v50 = vld [vmem:[%s0 + $0x120] sm:$0xff]
  %v51 = vld [vmem:[%s0 + $0x128] sm:$0xff]
  %v52 = vld [vmem:[%s0 + $0x130] sm:$0xff]
  %v53 = vld [vmem:[%s0 + $0x138] sm:$0xff]
  %v54 = vld [vmem:[%s0 + $0x140] sm:$0xff]
  %v55 = vld [vmem:[%s0 + $0x148] sm:$0xff]
  %v56 = vld [vmem:[%s0 + $0x150] sm:$0xff]
  %v57 = vld [vmem:[%s0 + $0x158] sm:$0xff]
  %v58 = vld [vmem:[%s0 + $0x160] sm:$0xff]
  %v59 = vld [vmem:[%s0 + $0x168] sm:$0xff]
  %v60 = vld [vmem:[%s0 + $0x170] sm:$0xff]
  %v61 = vld [vmem:[%s0 + $0x178] sm:$0xff]
  %v62 = vld [vmem:[%s0 + $0x180] sm:$0xff]
  %v63 = vld [vmem:[%s0 + $0x188] sm:$0xff]
  %v64 = vld [vmem:[%s0 + $0x190] sm:$0xff]
  %v65 = vld [vmem:[%s0 + $0x198] sm:$0xff]
  %v66 = vld [vmem:[%s0 + $0x1a0] sm:$0xff]
  %v67 = vld [vmem:[%s0 + $0x1a8] sm:$0xff]
  %v68 = vld [vmem:[%s0 + $0x1b0] sm:$0xff]
  %v69 = vld [vmem:[%s0 + $0x1b8] sm:$0xff]
  %v70 = vld [vmem:[%s0 + $0x1c0] sm:$0xff]
  %v71 = vld [vmem:[%s0 + $0x1c8] sm:$0xff]
  %v72 = vld [vmem:[%s0 + $0x1d0] sm:$0xff]
  %v73 = vld [vmem:[%s0 + $0x1d8] sm:$0xff]
  %v74 = vld [vmem:[%s0 + $0x1e0] sm:$0xff]
  %v75 = vld [vmem:[%s0 + $0x1e8] sm:$0xff]
  %v76 = vld [vmem:[%s0 + $0x1f0] sm:$0xff]
  %v77 = vld [vmem:[%s0 + $0x1f8] sm:$0xff]
  %vm78 = vcmask 261120
  %v79 = vsel %vm78, %v14, 0.0
  %v80 = vsel %vm78, %v15, 0.0
  %v81 = vadd.f32 %v79, %v80
  %v82 = vsel %vm78, %v16, 0.0
  %v83 = vadd.f32 %v81, %v82
  %v84 = vsel %vm78, %v17, 0.0
  %v85 = vadd.f32 %v83, %v84
  %v86 = vsel %vm78, %v18, 0.0
  %v87 = vadd.f32 %v85, %v86
  %v88 = vsel %vm78, %v19, 0.0
  %v89 = vadd.f32 %v87, %v88
  %v90 = vsel %vm78, %v20, 0.0
  %v91 = vadd.f32 %v89, %v90
  %v92 = vsel %vm78, %v21, 0.0
  %v93 = vadd.f32 %v91, %v92
  %v94 = vsel %vm78, %v22, 0.0
  %v95 = vadd.f32 %v93, %v94
  %v96 = vsel %vm78, %v23, 0.0
  %v97 = vadd.f32 %v95, %v96
  %v98 = vsel %vm78, %v24, 0.0
  %v99 = vadd.f32 %v97, %v98
  %v100 = vsel %vm78, %v25, 0.0
  %v101 = vadd.f32 %v99, %v100
  %v102 = vsel %vm78, %v26, 0.0
  %v103 = vadd.f32 %v101, %v102
  %v104 = vsel %vm78, %v27, 0.0
  %v105 = vadd.f32 %v103, %v104
  %v106 = vsel %vm78, %v28, 0.0
  %v107 = vadd.f32 %v105, %v106
  %v108 = vsel %vm78, %v29, 0.0
  %v109 = vadd.f32 %v107, %v108
  %v110 = vsel %vm78, %v30, 0.0
  %v111 = vadd.f32 %v109, %v110
  %v112 = vsel %vm78, %v31, 0.0
  %v113 = vadd.f32 %v111, %v112
  %v114 = vsel %vm78, %v32, 0.0
  %v115 = vadd.f32 %v113, %v114
  %v116 = vsel %vm78, %v33, 0.0
  %v117 = vadd.f32 %v115, %v116
  %v118 = vsel %vm78, %v34, 0.0
  %v119 = vadd.f32 %v117, %v118
  %v120 = vsel %vm78, %v35, 0.0
  %v121 = vadd.f32 %v119, %v120
  %v122 = vsel %vm78, %v36, 0.0
  %v123 = vadd.f32 %v121, %v122
  %v124 = vsel %vm78, %v37, 0.0
  %v125 = vadd.f32 %v123, %v124
  %v126 = vsel %vm78, %v38, 0.0
  %v127 = vadd.f32 %v125, %v126
  %v128 = vsel %vm78, %v39, 0.0
  %v129 = vadd.f32 %v127, %v128
  %v130 = vsel %vm78, %v40, 0.0
  %v131 = vadd.f32 %v129, %v130
  %v132 = vsel %vm78, %v41, 0.0
  %v133 = vadd.f32 %v131, %v132
  %v134 = vsel %vm78, %v42, 0.0
  %v135 = vadd.f32 %v133, %v134
  %v136 = vsel %vm78, %v43, 0.0
  %v137 = vadd.f32 %v135, %v136
  %v138 = vsel %vm78, %v44, 0.0
  %v139 = vadd.f32 %v137, %v138
  %v140 = vsel %vm78, %v45, 0.0
  %v141 = vadd.f32 %v139, %v140
  %v142 = vsel %vm78, %v46, 0.0
  %v143 = vadd.f32 %v141, %v142
  %v144 = vsel %vm78, %v47, 0.0
  %v145 = vadd.f32 %v143, %v144
  %v146 = vsel %vm78, %v48, 0.0
  %v147 = vadd.f32 %v145, %v146
  %v148 = vsel %vm78, %v49, 0.0
  %v149 = vadd.f32 %v147, %v148
  %v150 = vsel %vm78, %v50, 0.0
  %v151 = vadd.f32 %v149, %v150
  %v152 = vsel %vm78, %v51, 0.0
  %v153 = vadd.f32 %v151, %v152
  %v154 = vsel %vm78, %v52, 0.0
  %v155 = vadd.f32 %v153, %v154
  %v156 = vsel %vm78, %v53, 0.0
  %v157 = vadd.f32 %v155, %v156
  %v158 = vsel %vm78, %v54, 0.0
  %v159 = vadd.f32 %v157, %v158
  %v160 = vsel %vm78, %v55, 0.0
  %v161 = vadd.f32 %v159, %v160
  %v162 = vsel %vm78, %v56, 0.0
  %v163 = vadd.f32 %v161, %v162
  %v164 = vsel %vm78, %v57, 0.0
  %v165 = vadd.f32 %v163, %v164
  %v166 = vsel %vm78, %v58, 0.0
  %v167 = vadd.f32 %v165, %v166
  %v168 = vsel %vm78, %v59, 0.0
  %v169 = vadd.f32 %v167, %v168
  %v170 = vsel %vm78, %v60, 0.0
  %v171 = vadd.f32 %v169, %v170
  %v172 = vsel %vm78, %v61, 0.0
  %v173 = vadd.f32 %v171, %v172
  %v174 = vsel %vm78, %v62, 0.0
  %v175 = vadd.f32 %v173, %v174
  %v176 = vsel %vm78, %v63, 0.0
  %v177 = vadd.f32 %v175, %v176
  %v178 = vsel %vm78, %v64, 0.0
  %v179 = vadd.f32 %v177, %v178
  %v180 = vsel %vm78, %v65, 0.0
  %v181 = vadd.f32 %v179, %v180
  %v182 = vsel %vm78, %v66, 0.0
  %v183 = vadd.f32 %v181, %v182
  %v184 = vsel %vm78, %v67, 0.0
  %v185 = vadd.f32 %v183, %v184
  %v186 = vsel %vm78, %v68, 0.0
  %v187 = vadd.f32 %v185, %v186
  %v188 = vsel %vm78, %v69, 0.0
  %v189 = vadd.f32 %v187, %v188
  %v190 = vsel %vm78, %v70, 0.0
  %v191 = vadd.f32 %v189, %v190
  %v192 = vsel %vm78, %v71, 0.0
  %v193 = vadd.f32 %v191, %v192
  %v194 = vsel %vm78, %v72, 0.0
  %v195 = vadd.f32 %v193, %v194
  %v196 = vsel %vm78, %v73, 0.0
  %v197 = vadd.f32 %v195, %v196
  %v198 = vsel %vm78, %v74, 0.0
  %v199 = vadd.f32 %v197, %v198
  %v200 = vsel %vm78, %v75, 0.0
  %v201 = vadd.f32 %v199, %v200
  %v202 = vsel %vm78, %v76, 0.0
  %v203 = vadd.f32 %v201, %v202
  %v204 = vsel %vm78, %v77, 0.0
  %v205 = vadd.f32 %v203, %v204
  %v206 = vrot.slane %v205, 4
  %v207 = vadd.f32 %v205, %v206
  %v208 = vrot.slane %v207, 2
  %v209 = vadd.f32 %v207, %v208
  %v210 = vrot.slane %v209, 1
  %v211 = vadd.f32 %v209, %v210
  %v212 = vrcp.pop 512.0
  %v213 = vmul.f32 512.0, %v212
  %v214 = vsub.f32 1.0, %v213
  %v215 = vmul.f32 %v212, %v214
  %v216 = vadd.f32 %v212, %v215
  %vm217 = vweird.f32 %v212
  %v218 = vsel %vm217, %v212, %v216
  %v219 = vmul.f32 %v211, %v218
  %v220 = vsub.f32 %v14, %v219
  %v221 = vsub.f32 %v15, %v219
  %v222 = vsub.f32 %v16, %v219
  %v223 = vsub.f32 %v17, %v219
  %v224 = vsub.f32 %v18, %v219
  %v225 = vsub.f32 %v19, %v219
  %v226 = vsub.f32 %v20, %v219
  %v227 = vsub.f32 %v21, %v219
  %v228 = vsub.f32 %v22, %v219
  %v229 = vsub.f32 %v23, %v219
  %v230 = vsub.f32 %v24, %v219
  %v231 = vsub.f32 %v25, %v219
  %v232 = vsub.f32 %v26, %v219
  %v233 = vsub.f32 %v27, %v219
  %v234 = vsub.f32 %v28, %v219
  %v235 = vsub.f32 %v29, %v219
  %v236 = vsub.f32 %v30, %v219
  %v237 = vsub.f32 %v31, %v219
  %v238 = vsub.f32 %v32, %v219
  %v239 = vsub.f32 %v33, %v219
  %v240 = vsub.f32 %v34, %v219
  %v241 = vsub.f32 %v35, %v219
  %v242 = vsub.f32 %v36, %v219
  %v243 = vsub.f32 %v37, %v219
  %v244 = vsub.f32 %v38, %v219
  %v245 = vsub.f32 %v39, %v219
  %v246 = vsub.f32 %v40, %v219
  %v247 = vsub.f32 %v41, %v219
  %v248 = vsub.f32 %v42, %v219
  %v249 = vsub.f32 %v43, %v219
  %v250 = vsub.f32 %v44, %v219
  %v251 = vsub.f32 %v45, %v219
  %v252 = vsub.f32 %v46, %v219
  %v253 = vsub.f32 %v47, %v219
  %v254 = vsub.f32 %v48, %v219
  %v255 = vsub.f32 %v49, %v219
  %v256 = vsub.f32 %v50, %v219
  %v257 = vsub.f32 %v51, %v219
  %v258 = vsub.f32 %v52, %v219
  %v259 = vsub.f32 %v53, %v219
  %v260 = vsub.f32 %v54, %v219
  %v261 = vsub.f32 %v55, %v219
  %v262 = vsub.f32 %v56, %v219
  %v263 = vsub.f32 %v57, %v219
  %v264 = vsub.f32 %v58, %v219
  %v265 = vsub.f32 %v59, %v219
  %v266 = vsub.f32 %v60, %v219
  %v267 = vsub.f32 %v61, %v219
  %v268 = vsub.f32 %v62, %v219
  %v269 = vsub.f32 %v63, %v219
  %v270 = vsub.f32 %v64, %v219
  %v271 = vsub.f32 %v65, %v219
  %v272 = vsub.f32 %v66, %v219
  %v273 = vsub.f32 %v67, %v219
  %v274 = vsub.f32 %v68, %v219
  %v275 = vsub.f32 %v69, %v219
  %v276 = vsub.f32 %v70, %v219
  %v277 = vsub.f32 %v71, %v219
  %v278 = vsub.f32 %v72, %v219
  %v279 = vsub.f32 %v73, %v219
  %v280 = vsub.f32 %v74, %v219
  %v281 = vsub.f32 %v75, %v219
  %v282 = vsub.f32 %v76, %v219
  %v283 = vsub.f32 %v77, %v219
  %v284 = vmul.f32 %v220, %v220
  %v285 = vmul.f32 %v221, %v221
  %v286 = vmul.f32 %v222, %v222
  %v287 = vmul.f32 %v223, %v223
  %v288 = vmul.f32 %v224, %v224
  %v289 = vmul.f32 %v225, %v225
  %v290 = vmul.f32 %v226, %v226
  %v291 = vmul.f32 %v227, %v227
  %v292 = vmul.f32 %v228, %v228
  %v293 = vmul.f32 %v229, %v229
  %v294 = vmul.f32 %v230, %v230
  %v295 = vmul.f32 %v231, %v231
  %v296 = vmul.f32 %v232, %v232
  %v297 = vmul.f32 %v233, %v233
  %v298 = vmul.f32 %v234, %v234
  %v299 = vmul.f32 %v235, %v235
  %v300 = vmul.f32 %v236, %v236
  %v301 = vmul.f32 %v237, %v237
  %v302 = vmul.f32 %v238, %v238
  %v303 = vmul.f32 %v239, %v239
  %v304 = vmul.f32 %v240, %v240
  %v305 = vmul.f32 %v241, %v241
  %v306 = vmul.f32 %v242, %v242
  %v307 = vmul.f32 %v243, %v243
  %v308 = vmul.f32 %v244, %v244
  %v309 = vmul.f32 %v245, %v245
  %v310 = vmul.f32 %v246, %v246
  %v311 = vmul.f32 %v247, %v247
  %v312 = vmul.f32 %v248, %v248
  %v313 = vmul.f32 %v249, %v249
  %v314 = vmul.f32 %v250, %v250
  %v315 = vmul.f32 %v251, %v251
  %v316 = vmul.f32 %v252, %v252
  %v317 = vmul.f32 %v253, %v253
  %v318 = vmul.f32 %v254, %v254
  %v319 = vmul.f32 %v255, %v255
  %v320 = vmul.f32 %v256, %v256
  %v321 = vmul.f32 %v257, %v257
  %v322 = vmul.f32 %v258, %v258
  %v323 = vmul.f32 %v259, %v259
  %v324 = vmul.f32 %v260, %v260
  %v325 = vmul.f32 %v261, %v261
  %v326 = vmul.f32 %v262, %v262
  %v327 = vmul.f32 %v263, %v263
  %v328 = vmul.f32 %v264, %v264
  %v329 = vmul.f32 %v265, %v265
  %v330 = vmul.f32 %v266, %v266
  %v331 = vmul.f32 %v267, %v267
  %v332 = vmul.f32 %v268, %v268
  %v333 = vmul.f32 %v269, %v269
  %v334 = vmul.f32 %v270, %v270
  %v335 = vmul.f32 %v271, %v271
  %v336 = vmul.f32 %v272, %v272
  %v337 = vmul.f32 %v273, %v273
  %v338 = vmul.f32 %v274, %v274
  %v339 = vmul.f32 %v275, %v275
  %v340 = vmul.f32 %v276, %v276
  %v341 = vmul.f32 %v277, %v277
  %v342 = vmul.f32 %v278, %v278
  %v343 = vmul.f32 %v279, %v279
  %v344 = vmul.f32 %v280, %v280
  %v345 = vmul.f32 %v281, %v281
  %v346 = vmul.f32 %v282, %v282
  %v347 = vmul.f32 %v283, %v283
  %v348 = vsel %vm78, %v284, 0.0
  %v349 = vsel %vm78, %v285, 0.0
  %v350 = vadd.f32 %v348, %v349
  %v351 = vsel %vm78, %v286, 0.0
  %v352 = vadd.f32 %v350, %v351
  %v353 = vsel %vm78, %v287, 0.0
  %v354 = vadd.f32 %v352, %v353
  %v355 = vsel %vm78, %v288, 0.0
  %v356 = vadd.f32 %v354, %v355
  %v357 = vsel %vm78, %v289, 0.0
  %v358 = vadd.f32 %v356, %v357
  %v359 = vsel %vm78, %v290, 0.0
  %v360 = vadd.f32 %v358, %v359
  %v361 = vsel %vm78, %v291, 0.0
  %v362 = vadd.f32 %v360, %v361
  %v363 = vsel %vm78, %v292, 0.0
  %v364 = vadd.f32 %v362, %v363
  %v365 = vsel %vm78, %v293, 0.0
  %v366 = vadd.f32 %v364, %v365
  %v367 = vsel %vm78, %v294, 0.0
  %v368 = vadd.f32 %v366, %v367
  %v369 = vsel %vm78, %v295, 0.0
  %v370 = vadd.f32 %v368, %v369
  %v371 = vsel %vm78, %v296, 0.0
  %v372 = vadd.f32 %v370, %v371
  %v373 = vsel %vm78, %v297, 0.0
  %v374 = vadd.f32 %v372, %v373
  %v375 = vsel %vm78, %v298, 0.0
  %v376 = vadd.f32 %v374, %v375
  %v377 = vsel %vm78, %v299, 0.0
  %v378 = vadd.f32 %v376, %v377
  %v379 = vsel %vm78, %v300, 0.0
  %v380 = vadd.f32 %v378, %v379
  %v381 = vsel %vm78, %v301, 0.0
  %v382 = vadd.f32 %v380, %v381
  %v383 = vsel %vm78, %v302, 0.0
  %v384 = vadd.f32 %v382, %v383
  %v385 = vsel %vm78, %v303, 0.0
  %v386 = vadd.f32 %v384, %v385
  %v387 = vsel %vm78, %v304, 0.0
  %v388 = vadd.f32 %v386, %v387
  %v389 = vsel %vm78, %v305, 0.0
  %v390 = vadd.f32 %v388, %v389
  %v391 = vsel %vm78, %v306, 0.0
  %v392 = vadd.f32 %v390, %v391
  %v393 = vsel %vm78, %v307, 0.0
  %v394 = vadd.f32 %v392, %v393
  %v395 = vsel %vm78, %v308, 0.0
  %v396 = vadd.f32 %v394, %v395
  %v397 = vsel %vm78, %v309, 0.0
  %v398 = vadd.f32 %v396, %v397
  %v399 = vsel %vm78, %v310, 0.0
  %v400 = vadd.f32 %v398, %v399
  %v401 = vsel %vm78, %v311, 0.0
  %v402 = vadd.f32 %v400, %v401
  %v403 = vsel %vm78, %v312, 0.0
  %v404 = vadd.f32 %v402, %v403
  %v405 = vsel %vm78, %v313, 0.0
  %v406 = vadd.f32 %v404, %v405
  %v407 = vsel %vm78, %v314, 0.0
  %v408 = vadd.f32 %v406, %v407
  %v409 = vsel %vm78, %v315, 0.0
  %v410 = vadd.f32 %v408, %v409
  %v411 = vsel %vm78, %v316, 0.0
  %v412 = vadd.f32 %v410, %v411
  %v413 = vsel %vm78, %v317, 0.0
  %v414 = vadd.f32 %v412, %v413
  %v415 = vsel %vm78, %v318, 0.0
  %v416 = vadd.f32 %v414, %v415
  %v417 = vsel %vm78, %v319, 0.0
  %v418 = vadd.f32 %v416, %v417
  %v419 = vsel %vm78, %v320, 0.0
  %v420 = vadd.f32 %v418, %v419
  %v421 = vsel %vm78, %v321, 0.0
  %v422 = vadd.f32 %v420, %v421
  %v423 = vsel %vm78, %v322, 0.0
  %v424 = vadd.f32 %v422, %v423
  %v425 = vsel %vm78, %v323, 0.0
  %v426 = vadd.f32 %v424, %v425
  %v427 = vsel %vm78, %v324, 0.0
  %v428 = vadd.f32 %v426, %v427
  %v429 = vsel %vm78, %v325, 0.0
  %v430 = vadd.f32 %v428, %v429
  %v431 = vsel %vm78, %v326, 0.0
  %v432 = vadd.f32 %v430, %v431
  %v433 = vsel %vm78, %v327, 0.0
  %v434 = vadd.f32 %v432, %v433
  %v435 = vsel %vm78, %v328, 0.0
  %v436 = vadd.f32 %v434, %v435
  %v437 = vsel %vm78, %v329, 0.0
  %v438 = vadd.f32 %v436, %v437
  %v439 = vsel %vm78, %v330, 0.0
  %v440 = vadd.f32 %v438, %v439
  %v441 = vsel %vm78, %v331, 0.0
  %v442 = vadd.f32 %v440, %v441
  %v443 = vsel %vm78, %v332, 0.0
  %v444 = vadd.f32 %v442, %v443
  %v445 = vsel %vm78, %v333, 0.0
  %v446 = vadd.f32 %v444, %v445
  %v447 = vsel %vm78, %v334, 0.0
  %v448 = vadd.f32 %v446, %v447
  %v449 = vsel %vm78, %v335, 0.0
  %v450 = vadd.f32 %v448, %v449
  %v451 = vsel %vm78, %v336, 0.0
  %v452 = vadd.f32 %v450, %v451
  %v453 = vsel %vm78, %v337, 0.0
  %v454 = vadd.f32 %v452, %v453
  %v455 = vsel %vm78, %v338, 0.0
  %v456 = vadd.f32 %v454, %v455
  %v457 = vsel %vm78, %v339, 0.0
  %v458 = vadd.f32 %v456, %v457
  %v459 = vsel %vm78, %v340, 0.0
  %v460 = vadd.f32 %v458, %v459
  %v461 = vsel %vm78, %v341, 0.0
  %v462 = vadd.f32 %v460, %v461
  %v463 = vsel %vm78, %v342, 0.0
  %v464 = vadd.f32 %v462, %v463
  %v465 = vsel %vm78, %v343, 0.0
  %v466 = vadd.f32 %v464, %v465
  %v467 = vsel %vm78, %v344, 0.0
  %v468 = vadd.f32 %v466, %v467
  %v469 = vsel %vm78, %v345, 0.0
  %v470 = vadd.f32 %v468, %v469
  %v471 = vsel %vm78, %v346, 0.0
  %v472 = vadd.f32 %v470, %v471
  %v473 = vsel %vm78, %v347, 0.0
  %v474 = vadd.f32 %v472, %v473
  %v475 = vrot.slane %v474, 4
  %v476 = vadd.f32 %v474, %v475
  %v477 = vrot.slane %v476, 2
  %v478 = vadd.f32 %v476, %v477
  %v479 = vrot.slane %v478, 1
  %v480 = vadd.f32 %v478, %v479
  %v481 = vmul.f32 %v480, %v218
  %v482 = vadd.f32 %v481, 1e-05
  %v483 = vrsqrt.pop %v482
  %v484 = vmul.f32 %v483, %v482
  %v485 = vmul.f32 %v484, %v483
  %v486 = vmul.f32 0.5, %v485
  %v487 = vsub.f32 1.5, %v486
  %v488 = vmul.f32 %v483, %v487
  %vm489 = vweird.f32 %v482
  %vm490 = vweird.f32 %v483
  %vm491 = vmor %vm489, %vm490
  %v492 = vsel %vm491, %v483, %v488
  %v493 = vmul.f32 %v220, %v492
  %v494 = vmul.f32 %v221, %v492
  %v495 = vmul.f32 %v222, %v492
  %v496 = vmul.f32 %v223, %v492
  %v497 = vmul.f32 %v224, %v492
  %v498 = vmul.f32 %v225, %v492
  %v499 = vmul.f32 %v226, %v492
  %v500 = vmul.f32 %v227, %v492
  %v501 = vmul.f32 %v228, %v492
  %v502 = vmul.f32 %v229, %v492
  %v503 = vmul.f32 %v230, %v492
  %v504 = vmul.f32 %v231, %v492
  %v505 = vmul.f32 %v232, %v492
  %v506 = vmul.f32 %v233, %v492
  %v507 = vmul.f32 %v234, %v492
  %v508 = vmul.f32 %v235, %v492
  %v509 = vmul.f32 %v236, %v492
  %v510 = vmul.f32 %v237, %v492
  %v511 = vmul.f32 %v238, %v492
  %v512 = vmul.f32 %v239, %v492
  %v513 = vmul.f32 %v240, %v492
  %v514 = vmul.f32 %v241, %v492
  %v515 = vmul.f32 %v242, %v492
  %v516 = vmul.f32 %v243, %v492
  %v517 = vmul.f32 %v244, %v492
  %v518 = vmul.f32 %v245, %v492
  %v519 = vmul.f32 %v246, %v492
  %v520 = vmul.f32 %v247, %v492
  %v521 = vmul.f32 %v248, %v492
  %v522 = vmul.f32 %v249, %v492
  %v523 = vmul.f32 %v250, %v492
  %v524 = vmul.f32 %v251, %v492
  %v525 = vmul.f32 %v252, %v492
  %v526 = vmul.f32 %v253, %v492
  %v527 = vmul.f32 %v254, %v492
  %v528 = vmul.f32 %v255, %v492
  %v529 = vmul.f32 %v256, %v492
  %v530 = vmul.f32 %v257, %v492
  %v531 = vmul.f32 %v258, %v492
  %v532 = vmul.f32 %v259, %v492
  %v533 = vmul.f32 %v260, %v492
  %v534 = vmul.f32 %v261, %v492
  %v535 = vmul.f32 %v262, %v492
  %v536 = vmul.f32 %v263, %v492
  %v537 = vmul.f32 %v264, %v492
  %v538 = vmul.f32 %v265, %v492
  %v539 = vmul.f32 %v266, %v492
  %v540 = vmul.f32 %v267, %v492
  %v541 = vmul.f32 %v268, %v492
  %v542 = vmul.f32 %v269, %v492
  %v543 = vmul.f32 %v270, %v492
  %v544 = vmul.f32 %v271, %v492
  %v545 = vmul.f32 %v272, %v492
  %v546 = vmul.f32 %v273, %v492
  %v547 = vmul.f32 %v274, %v492
  %v548 = vmul.f32 %v275, %v492
  %v549 = vmul.f32 %v276, %v492
  %v550 = vmul.f32 %v277, %v492
  %v551 = vmul.f32 %v278, %v492
  %v552 = vmul.f32 %v279, %v492
  %v553 = vmul.f32 %v280, %v492
  %v554 = vmul.f32 %v281, %v492
  %v555 = vmul.f32 %v282, %v492
  %v556 = vmul.f32 %v283, %v492
  %v557 = vld [vmem:[%s1] sm:$0x1]
  %v559 = vperm.slane %v557, 0
  %v561 = vmul.f32 %v493, %v559
  %v562 = vmul.f32 %v494, %v559
  %v563 = vmul.f32 %v495, %v559
  %v564 = vmul.f32 %v496, %v559
  %v565 = vmul.f32 %v497, %v559
  %v566 = vmul.f32 %v498, %v559
  %v567 = vmul.f32 %v499, %v559
  %v568 = vmul.f32 %v500, %v559
  %v569 = vmul.f32 %v501, %v559
  %v570 = vmul.f32 %v502, %v559
  %v571 = vmul.f32 %v503, %v559
  %v572 = vmul.f32 %v504, %v559
  %v573 = vmul.f32 %v505, %v559
  %v574 = vmul.f32 %v506, %v559
  %v575 = vmul.f32 %v507, %v559
  %v576 = vmul.f32 %v508, %v559
  %v577 = vmul.f32 %v509, %v559
  %v578 = vmul.f32 %v510, %v559
  %v579 = vmul.f32 %v511, %v559
  %v580 = vmul.f32 %v512, %v559
  %v581 = vmul.f32 %v513, %v559
  %v582 = vmul.f32 %v514, %v559
  %v583 = vmul.f32 %v515, %v559
  %v584 = vmul.f32 %v516, %v559
  %v585 = vmul.f32 %v517, %v559
  %v586 = vmul.f32 %v518, %v559
  %v587 = vmul.f32 %v519, %v559
  %v588 = vmul.f32 %v520, %v559
  %v589 = vmul.f32 %v521, %v559
  %v590 = vmul.f32 %v522, %v559
  %v591 = vmul.f32 %v523, %v559
  %v592 = vmul.f32 %v524, %v559
  %v593 = vmul.f32 %v525, %v559
  %v594 = vmul.f32 %v526, %v559
  %v595 = vmul.f32 %v527, %v559
  %v596 = vmul.f32 %v528, %v559
  %v597 = vmul.f32 %v529, %v559
  %v598 = vmul.f32 %v530, %v559
  %v599 = vmul.f32 %v531, %v559
  %v600 = vmul.f32 %v532, %v559
  %v601 = vmul.f32 %v533, %v559
  %v602 = vmul.f32 %v534, %v559
  %v603 = vmul.f32 %v535, %v559
  %v604 = vmul.f32 %v536, %v559
  %v605 = vmul.f32 %v537, %v559
  %v606 = vmul.f32 %v538, %v559
  %v607 = vmul.f32 %v539, %v559
  %v608 = vmul.f32 %v540, %v559
  %v609 = vmul.f32 %v541, %v559
  %v610 = vmul.f32 %v542, %v559
  %v611 = vmul.f32 %v543, %v559
  %v612 = vmul.f32 %v544, %v559
  %v613 = vmul.f32 %v545, %v559
  %v614 = vmul.f32 %v546, %v559
  %v615 = vmul.f32 %v547, %v559
  %v616 = vmul.f32 %v548, %v559
  %v617 = vmul.f32 %v549, %v559
  %v618 = vmul.f32 %v550, %v559
  %v619 = vmul.f32 %v551, %v559
  %v620 = vmul.f32 %v552, %v559
  %v621 = vmul.f32 %v553, %v559
  %v622 = vmul.f32 %v554, %v559
  %v623 = vmul.f32 %v555, %v559
  %v624 = vmul.f32 %v556, %v559
  %v625 = vld [vmem:[%s2] sm:$0x1]
  %v627 = vperm.slane %v625, 0
  %v629 = vadd.f32 %v561, %v627
  %v630 = vadd.f32 %v562, %v627
  %v631 = vadd.f32 %v563, %v627
  %v632 = vadd.f32 %v564, %v627
  %v633 = vadd.f32 %v565, %v627
  %v634 = vadd.f32 %v566, %v627
  %v635 = vadd.f32 %v567, %v627
  %v636 = vadd.f32 %v568, %v627
  %v637 = vadd.f32 %v569, %v627
  %v638 = vadd.f32 %v570, %v627
  %v639 = vadd.f32 %v571, %v627
  %v640 = vadd.f32 %v572, %v627
  %v641 = vadd.f32 %v573, %v627
  %v642 = vadd.f32 %v574, %v627
  %v643 = vadd.f32 %v575, %v627
  %v644 = vadd.f32 %v576, %v627
  %v645 = vadd.f32 %v577, %v627
  %v646 = vadd.f32 %v578, %v627
  %v647 = vadd.f32 %v579, %v627
  %v648 = vadd.f32 %v580, %v627
  %v649 = vadd.f32 %v581, %v627
  %v650 = vadd.f32 %v582, %v627
  %v651 = vadd.f32 %v583, %v627
  %v652 = vadd.f32 %v584, %v627
  %v653 = vadd.f32 %v585, %v627
  %v654 = vadd.f32 %v586, %v627
  %v655 = vadd.f32 %v587, %v627
  %v656 = vadd.f32 %v588, %v627
  %v657 = vadd.f32 %v589, %v627
  %v658 = vadd.f32 %v590, %v627
  %v659 = vadd.f32 %v591, %v627
  %v660 = vadd.f32 %v592, %v627
  %v661 = vadd.f32 %v593, %v627
  %v662 = vadd.f32 %v594, %v627
  %v663 = vadd.f32 %v595, %v627
  %v664 = vadd.f32 %v596, %v627
  %v665 = vadd.f32 %v597, %v627
  %v666 = vadd.f32 %v598, %v627
  %v667 = vadd.f32 %v599, %v627
  %v668 = vadd.f32 %v600, %v627
  %v669 = vadd.f32 %v601, %v627
  %v670 = vadd.f32 %v602, %v627
  %v671 = vadd.f32 %v603, %v627
  %v672 = vadd.f32 %v604, %v627
  %v673 = vadd.f32 %v605, %v627
  %v674 = vadd.f32 %v606, %v627
  %v675 = vadd.f32 %v607, %v627
  %v676 = vadd.f32 %v608, %v627
  %v677 = vadd.f32 %v609, %v627
  %v678 = vadd.f32 %v610, %v627
  %v679 = vadd.f32 %v611, %v627
  %v680 = vadd.f32 %v612, %v627
  %v681 = vadd.f32 %v613, %v627
  %v682 = vadd.f32 %v614, %v627
  %v683 = vadd.f32 %v615, %v627
  %v684 = vadd.f32 %v616, %v627
  %v685 = vadd.f32 %v617, %v627
  %v686 = vadd.f32 %v618, %v627
  %v687 = vadd.f32 %v619, %v627
  %v688 = vadd.f32 %v620, %v627
  %v689 = vadd.f32 %v621, %v627
  %v690 = vadd.f32 %v622, %v627
  %v691 = vadd.f32 %v623, %v627
  %v692 = vadd.f32 %v624, %v627
  %vm693 = vcmp.ge.f32.partialorder %v629, 0.0
  %vm694 = vcmp.ge.f32.partialorder %v630, 0.0
  %vm695 = vcmp.ge.f32.partialorder %v631, 0.0
  %vm696 = vcmp.ge.f32.partialorder %v632, 0.0
  %vm697 = vcmp.ge.f32.partialorder %v633, 0.0
  %vm698 = vcmp.ge.f32.partialorder %v634, 0.0
  %vm699 = vcmp.ge.f32.partialorder %v635, 0.0
  %vm700 = vcmp.ge.f32.partialorder %v636, 0.0
  %vm701 = vcmp.ge.f32.partialorder %v637, 0.0
  %vm702 = vcmp.ge.f32.partialorder %v638, 0.0
  %vm703 = vcmp.ge.f32.partialorder %v639, 0.0
  %vm704 = vcmp.ge.f32.partialorder %v640, 0.0
  %vm705 = vcmp.ge.f32.partialorder %v641, 0.0
  %vm706 = vcmp.ge.f32.partialorder %v642, 0.0
  %vm707 = vcmp.ge.f32.partialorder %v643, 0.0
  %vm708 = vcmp.ge.f32.partialorder %v644, 0.0
  %vm709 = vcmp.ge.f32.partialorder %v645, 0.0
  %vm710 = vcmp.ge.f32.partialorder %v646, 0.0
  %vm711 = vcmp.ge.f32.partialorder %v647, 0.0
  %vm712 = vcmp.ge.f32.partialorder %v648, 0.0
  %vm713 = vcmp.ge.f32.partialorder %v649, 0.0
  %vm714 = vcmp.ge.f32.partialorder %v650, 0.0
  %vm715 = vcmp.ge.f32.partialorder %v651, 0.0
  %vm716 = vcmp.ge.f32.partialorder %v652, 0.0
  %vm717 = vcmp.ge.f32.partialorder %v653, 0.0
  %vm718 = vcmp.ge.f32.partialorder %v654, 0.0
  %vm719 = vcmp.ge.f32.partialorder %v655, 0.0
  %vm720 = vcmp.ge.f32.partialorder %v656, 0.0
  %vm721 = vcmp.ge.f32.partialorder %v657, 0.0
  %vm722 = vcmp.ge.f32.partialorder %v658, 0.0
  %vm723 = vcmp.ge.f32.partialorder %v659, 0.0
  %vm724 = vcmp.ge.f32.partialorder %v660, 0.0
  %vm725 = vcmp.ge.f32.partialorder %v661, 0.0
  %vm726 = vcmp.ge.f32.partialorder %v662, 0.0
  %vm727 = vcmp.ge.f32.partialorder %v663, 0.0
  %vm728 = vcmp.ge.f32.partialorder %v664, 0.0
  %vm729 = vcmp.ge.f32.partialorder %v665, 0.0
  %vm730 = vcmp.ge.f32.partialorder %v666, 0.0
  %vm731 = vcmp.ge.f32.partialorder %v667, 0.0
  %vm732 = vcmp.ge.f32.partialorder %v668, 0.0
  %vm733 = vcmp.ge.f32.partialorder %v669, 0.0
  %vm734 = vcmp.ge.f32.partialorder %v670, 0.0
  %vm735 = vcmp.ge.f32.partialorder %v671, 0.0
  %vm736 = vcmp.ge.f32.partialorder %v672, 0.0
  %vm737 = vcmp.ge.f32.partialorder %v673, 0.0
  %vm738 = vcmp.ge.f32.partialorder %v674, 0.0
  %vm739 = vcmp.ge.f32.partialorder %v675, 0.0
  %vm740 = vcmp.ge.f32.partialorder %v676, 0.0
  %vm741 = vcmp.ge.f32.partialorder %v677, 0.0
  %vm742 = vcmp.ge.f32.partialorder %v678, 0.0
  %vm743 = vcmp.ge.f32.partialorder %v679, 0.0
  %vm744 = vcmp.ge.f32.partialorder %v680, 0.0
  %vm745 = vcmp.ge.f32.partialorder %v681, 0.0
  %vm746 = vcmp.ge.f32.partialorder %v682, 0.0
  %vm747 = vcmp.ge.f32.partialorder %v683, 0.0
  %vm748 = vcmp.ge.f32.partialorder %v684, 0.0
  %vm749 = vcmp.ge.f32.partialorder %v685, 0.0
  %vm750 = vcmp.ge.f32.partialorder %v686, 0.0
  %vm751 = vcmp.ge.f32.partialorder %v687, 0.0
  %vm752 = vcmp.ge.f32.partialorder %v688, 0.0
  %vm753 = vcmp.ge.f32.partialorder %v689, 0.0
  %vm754 = vcmp.ge.f32.partialorder %v690, 0.0
  %vm755 = vcmp.ge.f32.partialorder %v691, 0.0
  %vm756 = vcmp.ge.f32.partialorder %v692, 0.0
  %v757 = vmul.f32 %v629, 0.2
  %v758 = vmul.f32 %v630, 0.2
  %v759 = vmul.f32 %v631, 0.2
  %v760 = vmul.f32 %v632, 0.2
  %v761 = vmul.f32 %v633, 0.2
  %v762 = vmul.f32 %v634, 0.2
  %v763 = vmul.f32 %v635, 0.2
  %v764 = vmul.f32 %v636, 0.2
  %v765 = vmul.f32 %v637, 0.2
  %v766 = vmul.f32 %v638, 0.2
  %v767 = vmul.f32 %v639, 0.2
  %v768 = vmul.f32 %v640, 0.2
  %v769 = vmul.f32 %v641, 0.2
  %v770 = vmul.f32 %v642, 0.2
  %v771 = vmul.f32 %v643, 0.2
  %v772 = vmul.f32 %v644, 0.2
  %v773 = vmul.f32 %v645, 0.2
  %v774 = vmul.f32 %v646, 0.2
  %v775 = vmul.f32 %v647, 0.2
  %v776 = vmul.f32 %v648, 0.2
  %v777 = vmul.f32 %v649, 0.2
  %v778 = vmul.f32 %v650, 0.2
  %v779 = vmul.f32 %v651, 0.2
  %v780 = vmul.f32 %v652, 0.2
  %v781 = vmul.f32 %v653, 0.2
  %v782 = vmul.f32 %v654, 0.2
  %v783 = vmul.f32 %v655, 0.2
  %v784 = vmul.f32 %v656, 0.2
  %v785 = vmul.f32 %v657, 0.2
  %v786 = vmul.f32 %v658, 0.2
  %v787 = vmul.f32 %v659, 0.2
  %v788 = vmul.f32 %v660, 0.2
  %v789 = vmul.f32 %v661, 0.2
  %v790 = vmul.f32 %v662, 0.2
  %v791 = vmul.f32 %v663, 0.2
  %v792 = vmul.f32 %v664, 0.2
  %v793 = vmul.f32 %v665, 0.2
  %v794 = vmul.f32 %v666, 0.2
  %v795 = vmul.f32 %v667, 0.2
  %v796 = vmul.f32 %v668, 0.2
  %v797 = vmul.f32 %v669, 0.2
  %v798 = vmul.f32 %v670, 0.2
  %v799 = vmul.f32 %v671, 0.2
  %v800 = vmul.f32 %v672, 0.2
  %v801 = vmul.f32 %v673, 0.2
  %v802 = vmul.f32 %v674, 0.2
  %v803 = vmul.f32 %v675, 0.2
  %v804 = vmul.f32 %v676, 0.2
  %v805 = vmul.f32 %v677, 0.2
  %v806 = vmul.f32 %v678, 0.2
  %v807 = vmul.f32 %v679, 0.2
  %v808 = vmul.f32 %v680, 0.2
  %v809 = vmul.f32 %v681, 0.2
  %v810 = vmul.f32 %v682, 0.2
  %v811 = vmul.f32 %v683, 0.2
  %v812 = vmul.f32 %v684, 0.2
  %v813 = vmul.f32 %v685, 0.2
  %v814 = vmul.f32 %v686, 0.2
  %v815 = vmul.f32 %v687, 0.2
  %v816 = vmul.f32 %v688, 0.2
  %v817 = vmul.f32 %v689, 0.2
  %v818 = vmul.f32 %v690, 0.2
  %v819 = vmul.f32 %v691, 0.2
  %v820 = vmul.f32 %v692, 0.2
  %v821 = vsel %vm693, %v629, %v757
  %v822 = vsel %vm694, %v630, %v758
  %v823 = vsel %vm695, %v631, %v759
  %v824 = vsel %vm696, %v632, %v760
  %v825 = vsel %vm697, %v633, %v761
  %v826 = vsel %vm698, %v634, %v762
  %v827 = vsel %vm699, %v635, %v763
  %v828 = vsel %vm700, %v636, %v764
  %v829 = vsel %vm701, %v637, %v765
  %v830 = vsel %vm702, %v638, %v766
  %v831 = vsel %vm703, %v639, %v767
  %v832 = vsel %vm704, %v640, %v768
  %v833 = vsel %vm705, %v641, %v769
  %v834 = vsel %vm706, %v642, %v770
  %v835 = vsel %vm707, %v643, %v771
  %v836 = vsel %vm708, %v644, %v772
  %v837 = vsel %vm709, %v645, %v773
  %v838 = vsel %vm710, %v646, %v774
  %v839 = vsel %vm711, %v647, %v775
  %v840 = vsel %vm712, %v648, %v776
  %v841 = vsel %vm713, %v649, %v777
  %v842 = vsel %vm714, %v650, %v778
  %v843 = vsel %vm715, %v651, %v779
  %v844 = vsel %vm716, %v652, %v780
  %v845 = vsel %vm717, %v653, %v781
  %v846 = vsel %vm718, %v654, %v782
  %v847 = vsel %vm719, %v655, %v783
  %v848 = vsel %vm720, %v656, %v784
  %v849 = vsel %vm721, %v657, %v785
  %v850 = vsel %vm722, %v658, %v786
  %v851 = vsel %vm723, %v659, %v787
  %v852 = vsel %vm724, %v660, %v788
  %v853 = vsel %vm725, %v661, %v789
  %v854 = vsel %vm726, %v662, %v790
  %v855 = vsel %vm727, %v663, %v791
  %v856 = vsel %vm728, %v664, %v792
  %v857 = vsel %vm729, %v665, %v793
  %v858 = vsel %vm730, %v666, %v794
  %v859 = vsel %vm731, %v667, %v795
  %v860 = vsel %vm732, %v668, %v796
  %v861 = vsel %vm733, %v669, %v797
  %v862 = vsel %vm734, %v670, %v798
  %v863 = vsel %vm735, %v671, %v799
  %v864 = vsel %vm736, %v672, %v800
  %v865 = vsel %vm737, %v673, %v801
  %v866 = vsel %vm738, %v674, %v802
  %v867 = vsel %vm739, %v675, %v803
  %v868 = vsel %vm740, %v676, %v804
  %v869 = vsel %vm741, %v677, %v805
  %v870 = vsel %vm742, %v678, %v806
  %v871 = vsel %vm743, %v679, %v807
  %v872 = vsel %vm744, %v680, %v808
  %v873 = vsel %vm745, %v681, %v809
  %v874 = vsel %vm746, %v682, %v810
  %v875 = vsel %vm747, %v683, %v811
  %v876 = vsel %vm748, %v684, %v812
  %v877 = vsel %vm749, %v685, %v813
  %v878 = vsel %vm750, %v686, %v814
  %v879 = vsel %vm751, %v687, %v815
  %v880 = vsel %vm752, %v688, %v816
  %v881 = vsel %vm753, %v689, %v817
  %v882 = vsel %vm754, %v690, %v818
  %v883 = vsel %vm755, %v691, %v819
  %v884 = vsel %vm756, %v692, %v820
  %885 = vst.msk [vmem:[%s3] sm:$0xff] %vm78, %v821
  %886 = vst.msk [vmem:[%s3 + $0x8] sm:$0xff] %vm78, %v822
  %887 = vst.msk [vmem:[%s3 + $0x10] sm:$0xff] %vm78, %v823
  %888 = vst.msk [vmem:[%s3 + $0x18] sm:$0xff] %vm78, %v824
  %889 = vst.msk [vmem:[%s3 + $0x20] sm:$0xff] %vm78, %v825
  %890 = vst.msk [vmem:[%s3 + $0x28] sm:$0xff] %vm78, %v826
  %891 = vst.msk [vmem:[%s3 + $0x30] sm:$0xff] %vm78, %v827
  %892 = vst.msk [vmem:[%s3 + $0x38] sm:$0xff] %vm78, %v828
  %893 = vst.msk [vmem:[%s3 + $0x40] sm:$0xff] %vm78, %v829
  %894 = vst.msk [vmem:[%s3 + $0x48] sm:$0xff] %vm78, %v830
  %895 = vst.msk [vmem:[%s3 + $0x50] sm:$0xff] %vm78, %v831
  %896 = vst.msk [vmem:[%s3 + $0x58] sm:$0xff] %vm78, %v832
  %897 = vst.msk [vmem:[%s3 + $0x60] sm:$0xff] %vm78, %v833
  %898 = vst.msk [vmem:[%s3 + $0x68] sm:$0xff] %vm78, %v834
  %899 = vst.msk [vmem:[%s3 + $0x70] sm:$0xff] %vm78, %v835
  %900 = vst.msk [vmem:[%s3 + $0x78] sm:$0xff] %vm78, %v836
  %901 = vst.msk [vmem:[%s3 + $0x80] sm:$0xff] %vm78, %v837
  %902 = vst.msk [vmem:[%s3 + $0x88] sm:$0xff] %vm78, %v838
  %903 = vst.msk [vmem:[%s3 + $0x90] sm:$0xff] %vm78, %v839
  %904 = vst.msk [vmem:[%s3 + $0x98] sm:$0xff] %vm78, %v840
  %905 = vst.msk [vmem:[%s3 + $0xa0] sm:$0xff] %vm78, %v841
  %906 = vst.msk [vmem:[%s3 + $0xa8] sm:$0xff] %vm78, %v842
  %907 = vst.msk [vmem:[%s3 + $0xb0] sm:$0xff] %vm78, %v843
  %908 = vst.msk [vmem:[%s3 + $0xb8] sm:$0xff] %vm78, %v844
  %909 = vst.msk [vmem:[%s3 + $0xc0] sm:$0xff] %vm78, %v845
  %910 = vst.msk [vmem:[%s3 + $0xc8] sm:$0xff] %vm78, %v846
  %911 = vst.msk [vmem:[%s3 + $0xd0] sm:$0xff] %vm78, %v847
  %912 = vst.msk [vmem:[%s3 + $0xd8] sm:$0xff] %vm78, %v848
  %913 = vst.msk [vmem:[%s3 + $0xe0] sm:$0xff] %vm78, %v849
  %914 = vst.msk [vmem:[%s3 + $0xe8] sm:$0xff] %vm78, %v850
  %915 = vst.msk [vmem:[%s3 + $0xf0] sm:$0xff] %vm78, %v851
  %916 = vst.msk [vmem:[%s3 + $0xf8] sm:$0xff] %vm78, %v852
  %917 = vst.msk [vmem:[%s3 + $0x100] sm:$0xff] %vm78, %v853
  %918 = vst.msk [vmem:[%s3 + $0x108] sm:$0xff] %vm78, %v854
  %919 = vst.msk [vmem:[%s3 + $0x110] sm:$0xff] %vm78, %v855
  %920 = vst.msk [vmem:[%s3 + $0x118] sm:$0xff] %vm78, %v856
  %921 = vst.msk [vmem:[%s3 + $0x120] sm:$0xff] %vm78, %v857
  %922 = vst.msk [vmem:[%s3 + $0x128] sm:$0xff] %vm78, %v858
  %923 = vst.msk [vmem:[%s3 + $0x130] sm:$0xff] %vm78, %v859
  %924 = vst.msk [vmem:[%s3 + $0x138] sm:$0xff] %vm78, %v860
  %925 = vst.msk [vmem:[%s3 + $0x140] sm:$0xff] %vm78, %v861
  %926 = vst.msk [vmem:[%s3 + $0x148] sm:$0xff] %vm78, %v862
  %927 = vst.msk [vmem:[%s3 + $0x150] sm:$0xff] %vm78, %v863
  %928 = vst.msk [vmem:[%s3 + $0x158] sm:$0xff] %vm78, %v864
  %929 = vst.msk [vmem:[%s3 + $0x160] sm:$0xff] %vm78, %v865
  %930 = vst.msk [vmem:[%s3 + $0x168] sm:$0xff] %vm78, %v866
  %931 = vst.msk [vmem:[%s3 + $0x170] sm:$0xff] %vm78, %v867
  %932 = vst.msk [vmem:[%s3 + $0x178] sm:$0xff] %vm78, %v868
  %933 = vst.msk [vmem:[%s3 + $0x180] sm:$0xff] %vm78, %v869
  %934 = vst.msk [vmem:[%s3 + $0x188] sm:$0xff] %vm78, %v870
  %935 = vst.msk [vmem:[%s3 + $0x190] sm:$0xff] %vm78, %v871
  %936 = vst.msk [vmem:[%s3 + $0x198] sm:$0xff] %vm78, %v872
  %937 = vst.msk [vmem:[%s3 + $0x1a0] sm:$0xff] %vm78, %v873
  %938 = vst.msk [vmem:[%s3 + $0x1a8] sm:$0xff] %vm78, %v874
  %939 = vst.msk [vmem:[%s3 + $0x1b0] sm:$0xff] %vm78, %v875
  %940 = vst.msk [vmem:[%s3 + $0x1b8] sm:$0xff] %vm78, %v876
  %941 = vst.msk [vmem:[%s3 + $0x1c0] sm:$0xff] %vm78, %v877
  %942 = vst.msk [vmem:[%s3 + $0x1c8] sm:$0xff] %vm78, %v878
  %943 = vst.msk [vmem:[%s3 + $0x1d0] sm:$0xff] %vm78, %v879
  %944 = vst.msk [vmem:[%s3 + $0x1d8] sm:$0xff] %vm78, %v880
  %945 = vst.msk [vmem:[%s3 + $0x1e0] sm:$0xff] %vm78, %v881
  %946 = vst.msk [vmem:[%s3 + $0x1e8] sm:$0xff] %vm78, %v882
  %947 = vst.msk [vmem:[%s3 + $0x1f0] sm:$0xff] %vm78, %v883
  %948 = vst.msk [vmem:[%s3 + $0x1f8] sm:$0xff] %vm78, %v884
  // Predicated region
  $region14: #{obj_ls_d_net_forward.22} parent=0 // pred_check
    _
  $region15: #{obj_ls_d_net_forward.22} parent=0 // pred_check_branch
    %950 = sbr.rel (0) target = $region17
  $region16: #{obj_ls_d_net_forward.22} parent=0 // pred_region
    _
  $region17: #{obj_ls_d_net_forward.22} parent=0 // pred_fallthru
    _
  // Predicated region
  $region18: #{obj_ls_d_net_forward.22} parent=0 // pred_check
    _
  $region19: #{obj_ls_d_net_forward.22} parent=0 // pred_check_branch
    %952 = sbr.rel (0) target = $region21
  $region20: #{obj_ls_d_net_forward.22} parent=0 // pred_region
    _
  $region21: #{obj_ls_d_net_forward.22} parent=0 // pred_fallthru
    _

// kernel: obj_ls_d_net_forward.21
$region0: #{obj_ls_d_net_forward.21}
  #allocation0 [shape = 'u32[]', space=smem, size = 0x4, offset = 0x4, fixed_abs, tag = 'smem constant byte address 0x4 - core index']
  #allocation1 [shape = 'u32[72,128]{1,0:T(1,128)}', space=vmem, size = 0x9000, scoped, tag = 'internal scratch']
  %s0 = inlined_call_operand.vmem [shape: bf16[512,256], index: 0, kind: input, shape index: {}]
  %s1 = inlined_call_operand.vmem [shape: bf16[256,128], index: 1, kind: input, shape index: {}]
  %s2 = inlined_call_operand.vmem [shape: f32[1,128], index: 2, kind: input, shape index: {}]
  %s3 = inlined_call_operand.vmem [shape: f32[512,128], index: 3, kind: output, shape index: {}]
  %s4 = sld [smem:[#allocation0]]
  $region22: #{obj_ls_d_net_forward.21} parent=0
    _
  %s6 = ssub.s32 1, %s4
  %s7 = scalar_select 0, %s6, %s4
  // Predicated region
  $region2: #{obj_ls_d_net_forward.21} parent=0 // pred_check
    _
  $region3: #{obj_ls_d_net_forward.21} parent=0 // pred_check_branch
    %9 = sbr.rel (0) target = $region5
  $region4: #{obj_ls_d_net_forward.21} parent=0 // pred_region
    _
  $region5: #{obj_ls_d_net_forward.21} parent=0 // pred_fallthru
    _
  // Predicated region
  $region6: #{obj_ls_d_net_forward.21} parent=0 // pred_check
    _
  $region7: #{obj_ls_d_net_forward.21} parent=0 // pred_check_branch
    %11 = sbr.rel (0) target = $region9
  $region8: #{obj_ls_d_net_forward.21} parent=0 // pred_region
    _
  $region9: #{obj_ls_d_net_forward.21} parent=0 // pred_fallthru
    _
  // Predicated region
  $region10: #{obj_ls_d_net_forward.21} parent=0 // pred_check
    _
  $region11: #{obj_ls_d_net_forward.21} parent=0 // pred_check_branch
    %13 = sbr.rel (0) target = $region13
  $region12: #{obj_ls_d_net_forward.21} parent=0 // pred_region
    _
  $region13: #{obj_ls_d_net_forward.21} parent=0 // pred_fallthru
    _
  %v14 = vld [vmem:[%s0] sm:$0xff]
  %v15 = vld [vmem:[%s0 + $0x8] sm:$0xff]
  %v16 = vld [vmem:[%s0 + $0x10] sm:$0xff]
  %v17 = vld [vmem:[%s0 + $0x18] sm:$0xff]
  %v18 = vld [vmem:[%s0 + $0x20] sm:$0xff]
  %v19 = vld [vmem:[%s0 + $0x28] sm:$0xff]
  %v20 = vld [vmem:[%s0 + $0x30] sm:$0xff]
  %v21 = vld [vmem:[%s0 + $0x38] sm:$0xff]
  %v22 = vld [vmem:[%s0 + $0x40] sm:$0xff]
  %v23 = vld [vmem:[%s0 + $0x48] sm:$0xff]
  %v24 = vld [vmem:[%s0 + $0x50] sm:$0xff]
  %v25 = vld [vmem:[%s0 + $0x58] sm:$0xff]
  %v26 = vld [vmem:[%s0 + $0x60] sm:$0xff]
  %v27 = vld [vmem:[%s0 + $0x68] sm:$0xff]
  %v28 = vld [vmem:[%s0 + $0x70] sm:$0xff]
  %v29 = vld [vmem:[%s0 + $0x78] sm:$0xff]
  %v30 = vld [vmem:[%s0 + $0x80] sm:$0xff]
  %v31 = vld [vmem:[%s0 + $0x88] sm:$0xff]
  %v32 = vld [vmem:[%s0 + $0x90] sm:$0xff]
  %v33 = vld [vmem:[%s0 + $0x98] sm:$0xff]
  %v34 = vld [vmem:[%s0 + $0xa0] sm:$0xff]
  %v35 = vld [vmem:[%s0 + $0xa8] sm:$0xff]
  %v36 = vld [vmem:[%s0 + $0xb0] sm:$0xff]
  %v37 = vld [vmem:[%s0 + $0xb8] sm:$0xff]
  %v38 = vld [vmem:[%s0 + $0xc0] sm:$0xff]
  %v39 = vld [vmem:[%s0 + $0xc8] sm:$0xff]
  %v40 = vld [vmem:[%s0 + $0xd0] sm:$0xff]
  %v41 = vld [vmem:[%s0 + $0xd8] sm:$0xff]
  %v42 = vld [vmem:[%s0 + $0xe0] sm:$0xff]
  %v43 = vld [vmem:[%s0 + $0xe8] sm:$0xff]
  %v44 = vld [vmem:[%s0 + $0xf0] sm:$0xff]
  %v45 = vld [vmem:[%s0 + $0xf8] sm:$0xff]
  %v46 = vld [vmem:[%s0 + $0x100] sm:$0xff]
  %v47 = vld [vmem:[%s0 + $0x108] sm:$0xff]
  %v48 = vld [vmem:[%s0 + $0x110] sm:$0xff]
  %v49 = vld [vmem:[%s0 + $0x118] sm:$0xff]
  %v50 = vld [vmem:[%s0 + $0x120] sm:$0xff]
  %v51 = vld [vmem:[%s0 + $0x128] sm:$0xff]
  %v52 = vld [vmem:[%s0 + $0x130] sm:$0xff]
  %v53 = vld [vmem:[%s0 + $0x138] sm:$0xff]
  %v54 = vld [vmem:[%s0 + $0x140] sm:$0xff]
  %v55 = vld [vmem:[%s0 + $0x148] sm:$0xff]
  %v56 = vld [vmem:[%s0 + $0x150] sm:$0xff]
  %v57 = vld [vmem:[%s0 + $0x158] sm:$0xff]
  %v58 = vld [vmem:[%s0 + $0x160] sm:$0xff]
  %v59 = vld [vmem:[%s0 + $0x168] sm:$0xff]
  %v60 = vld [vmem:[%s0 + $0x170] sm:$0xff]
  %v61 = vld [vmem:[%s0 + $0x178] sm:$0xff]
  %v62 = vld [vmem:[%s0 + $0x180] sm:$0xff]
  %v63 = vld [vmem:[%s0 + $0x188] sm:$0xff]
  %v64 = vld [vmem:[%s0 + $0x190] sm:$0xff]
  %v65 = vld [vmem:[%s0 + $0x198] sm:$0xff]
  %v66 = vld [vmem:[%s0 + $0x1a0] sm:$0xff]
  %v67 = vld [vmem:[%s0 + $0x1a8] sm:$0xff]
  %v68 = vld [vmem:[%s0 + $0x1b0] sm:$0xff]
  %v69 = vld [vmem:[%s0 + $0x1b8] sm:$0xff]
  %v70 = vld [vmem:[%s0 + $0x1c0] sm:$0xff]
  %v71 = vld [vmem:[%s0 + $0x1c8] sm:$0xff]
  %v72 = vld [vmem:[%s0 + $0x1d0] sm:$0xff]
  %v73 = vld [vmem:[%s0 + $0x1d8] sm:$0xff]
  %v74 = vld [vmem:[%s0 + $0x1e0] sm:$0xff]
  %v75 = vld [vmem:[%s0 + $0x1e8] sm:$0xff]
  %v76 = vld [vmem:[%s0 + $0x1f0] sm:$0xff]
  %v77 = vld [vmem:[%s0 + $0x1f8] sm:$0xff]
  %v78 = vld [vmem:[%s1] sm:$0xf]
  %v79 = vld [vmem:[%s1 + $0x4] sm:$0xf]
  %v80 = vld [vmem:[%s1 + $0x8] sm:$0xf]
  %v81 = vld [vmem:[%s1 + $0xc] sm:$0xf]
  %v82 = vld [vmem:[%s1 + $0x10] sm:$0xf]
  %v83 = vld [vmem:[%s1 + $0x14] sm:$0xf]
  %v84 = vld [vmem:[%s1 + $0x18] sm:$0xf]
  %v85 = vld [vmem:[%s1 + $0x1c] sm:$0xf]
  %v86 = vld [vmem:[%s1 + $0x20] sm:$0xf]
  %v87 = vld [vmem:[%s1 + $0x24] sm:$0xf]
  %v88 = vld [vmem:[%s1 + $0x28] sm:$0xf]
  %v89 = vld [vmem:[%s1 + $0x2c] sm:$0xf]
  %v90 = vld [vmem:[%s1 + $0x30] sm:$0xf]
  %v91 = vld [vmem:[%s1 + $0x34] sm:$0xf]
  %v92 = vld [vmem:[%s1 + $0x38] sm:$0xf]
  %v93 = vld [vmem:[%s1 + $0x3c] sm:$0xf]
  %v94 = vld [vmem:[%s1 + $0x40] sm:$0xf]
  %v95 = vld [vmem:[%s1 + $0x44] sm:$0xf]
  %v96 = vld [vmem:[%s1 + $0x48] sm:$0xf]
  %v97 = vld [vmem:[%s1 + $0x4c] sm:$0xf]
  %v98 = vld [vmem:[%s1 + $0x50] sm:$0xf]
  %v99 = vld [vmem:[%s1 + $0x54] sm:$0xf]
  %v100 = vld [vmem:[%s1 + $0x58] sm:$0xf]
  %v101 = vld [vmem:[%s1 + $0x5c] sm:$0xf]
  %v102 = vld [vmem:[%s1 + $0x60] sm:$0xf]
  %v103 = vld [vmem:[%s1 + $0x64] sm:$0xf]
  %v104 = vld [vmem:[%s1 + $0x68] sm:$0xf]
  %v105 = vld [vmem:[%s1 + $0x6c] sm:$0xf]
  %v106 = vld [vmem:[%s1 + $0x70] sm:$0xf]
  %v107 = vld [vmem:[%s1 + $0x74] sm:$0xf]
  %v108 = vld [vmem:[%s1 + $0x78] sm:$0xf]
  %v109 = vld [vmem:[%s1 + $0x7c] sm:$0xf]
  %v110 = vld [vmem:[%s2] sm:$0x1]
  %v112 = vperm.slane %v110, 0
  %v178 = vunpack.c.l.b16 %v14
  %v179 = vunpack.c.h.b16 %v14
  %v180 = vunpack.c.l.b16 %v15
  %v181 = vunpack.c.h.b16 %v15
  %v182 = vunpack.c.l.b16 %v16
  %v183 = vunpack.c.h.b16 %v16
  %v184 = vunpack.c.l.b16 %v17
  %v185 = vunpack.c.h.b16 %v17
  %v186 = vunpack.c.l.b16 %v18
  %v187 = vunpack.c.h.b16 %v18
  %v188 = vunpack.c.l.b16 %v19
  %v189 = vunpack.c.h.b16 %v19
  %v190 = vunpack.c.l.b16 %v20
  %v191 = vunpack.c.h.b16 %v20
  %v192 = vunpack.c.l.b16 %v21
  %v193 = vunpack.c.h.b16 %v21
  %v194 = vunpack.c.l.b16 %v22
  %v195 = vunpack.c.h.b16 %v22
  %v196 = vunpack.c.l.b16 %v23
  %v197 = vunpack.c.h.b16 %v23
  %v198 = vunpack.c.l.b16 %v24
  %v199 = vunpack.c.h.b16 %v24
  %v200 = vunpack.c.l.b16 %v25
  %v201 = vunpack.c.h.b16 %v25
  %v202 = vunpack.c.l.b16 %v26
  %v203 = vunpack.c.h.b16 %v26
  %v204 = vunpack.c.l.b16 %v27
  %v205 = vunpack.c.h.b16 %v27
  %v206 = vunpack.c.l.b16 %v28
  %v207 = vunpack.c.h.b16 %v28
  %v208 = vunpack.c.l.b16 %v29
  %v209 = vunpack.c.h.b16 %v29
  %v210 = vunpack.c.l.b16 %v30
  %v211 = vunpack.c.h.b16 %v30
  %v212 = vunpack.c.l.b16 %v31
  %v213 = vunpack.c.h.b16 %v31
  %v214 = vunpack.c.l.b16 %v32
  %v215 = vunpack.c.h.b16 %v32
  %v216 = vunpack.c.l.b16 %v33
  %v217 = vunpack.c.h.b16 %v33
  %v218 = vunpack.c.l.b16 %v34
  %v219 = vunpack.c.h.b16 %v34
  %v220 = vunpack.c.l.b16 %v35
  %v221 = vunpack.c.h.b16 %v35
  %v222 = vunpack.c.l.b16 %v36
  %v223 = vunpack.c.h.b16 %v36
  %v224 = vunpack.c.l.b16 %v37
  %v225 = vunpack.c.h.b16 %v37
  %v226 = vunpack.c.l.b16 %v38
  %v227 = vunpack.c.h.b16 %v38
  %v228 = vunpack.c.l.b16 %v39
  %v229 = vunpack.c.h.b16 %v39
  %v230 = vunpack.c.l.b16 %v40
  %v231 = vunpack.c.h.b16 %v40
  %v232 = vunpack.c.l.b16 %v41
  %v233 = vunpack.c.h.b16 %v41
  %v234 = vunpack.c.l.b16 %v42
  %v235 = vunpack.c.h.b16 %v42
  %v236 = vunpack.c.l.b16 %v43
  %v237 = vunpack.c.h.b16 %v43
  %v238 = vunpack.c.l.b16 %v44
  %v239 = vunpack.c.h.b16 %v44
  %v240 = vunpack.c.l.b16 %v45
  %v241 = vunpack.c.h.b16 %v45
  %v242 = vunpack.c.l.b16 %v46
  %v243 = vunpack.c.h.b16 %v46
  %v244 = vunpack.c.l.b16 %v47
  %v245 = vunpack.c.h.b16 %v47
  %v246 = vunpack.c.l.b16 %v48
  %v247 = vunpack.c.h.b16 %v48
  %v248 = vunpack.c.l.b16 %v49
  %v249 = vunpack.c.h.b16 %v49
  %v250 = vunpack.c.l.b16 %v50
  %v251 = vunpack.c.h.b16 %v50
  %v252 = vunpack.c.l.b16 %v51
  %v253 = vunpack.c.h.b16 %v51
  %v254 = vunpack.c.l.b16 %v52
  %v255 = vunpack.c.h.b16 %v52
  %v256 = vunpack.c.l.b16 %v53
  %v257 = vunpack.c.h.b16 %v53
  %v258 = vunpack.c.l.b16 %v54
  %v259 = vunpack.c.h.b16 %v54
  %v260 = vunpack.c.l.b16 %v55
  %v261 = vunpack.c.h.b16 %v55
  %v262 = vunpack.c.l.b16 %v56
  %v263 = vunpack.c.h.b16 %v56
  %v264 = vunpack.c.l.b16 %v57
  %v265 = vunpack.c.h.b16 %v57
  %v266 = vunpack.c.l.b16 %v58
  %v267 = vunpack.c.h.b16 %v58
  %v268 = vunpack.c.l.b16 %v59
  %v269 = vunpack.c.h.b16 %v59
  %v270 = vunpack.c.l.b16 %v60
  %v271 = vunpack.c.h.b16 %v60
  %v272 = vunpack.c.l.b16 %v61
  %v273 = vunpack.c.h.b16 %v61
  %v274 = vunpack.c.l.b16 %v62
  %v275 = vunpack.c.h.b16 %v62
  %v276 = vunpack.c.l.b16 %v63
  %v277 = vunpack.c.h.b16 %v63
  %v278 = vunpack.c.l.b16 %v64
  %v279 = vunpack.c.h.b16 %v64
  %v280 = vunpack.c.l.b16 %v65
  %v281 = vunpack.c.h.b16 %v65
  %v282 = vunpack.c.l.b16 %v66
  %v283 = vunpack.c.h.b16 %v66
  %v284 = vunpack.c.l.b16 %v67
  %v285 = vunpack.c.h.b16 %v67
  %v286 = vunpack.c.l.b16 %v68
  %v287 = vunpack.c.h.b16 %v68
  %v288 = vunpack.c.l.b16 %v69
  %v289 = vunpack.c.h.b16 %v69
  %v290 = vunpack.c.l.b16 %v70
  %v291 = vunpack.c.h.b16 %v70
  %v292 = vunpack.c.l.b16 %v71
  %v293 = vunpack.c.h.b16 %v71
  %v294 = vunpack.c.l.b16 %v72
  %v295 = vunpack.c.h.b16 %v72
  %v296 = vunpack.c.l.b16 %v73
  %v297 = vunpack.c.h.b16 %v73
  %v298 = vunpack.c.l.b16 %v74
  %v299 = vunpack.c.h.b16 %v74
  %v300 = vunpack.c.l.b16 %v75
  %v301 = vunpack.c.h.b16 %v75
  %v302 = vunpack.c.l.b16 %v76
  %v303 = vunpack.c.h.b16 %v76
  %v304 = vunpack.c.l.b16 %v77
  %v305 = vunpack.c.h.b16 %v77
  %v306 = vpack.c.b16 %v180, %v178
  %v307 = vpack.c.b16 %v181, %v179
  %v308 = vpack.c.b16 %v184, %v182
  %v309 = vpack.c.b16 %v185, %v183
  %v310 = vpack.c.b16 %v188, %v186
  %v311 = vpack.c.b16 %v189, %v187
  %v312 = vpack.c.b16 %v192, %v190
  %v313 = vpack.c.b16 %v193, %v191
  %v314 = vpack.c.b16 %v196, %v194
  %v315 = vpack.c.b16 %v197, %v195
  %v316 = vpack.c.b16 %v200, %v198
  %v317 = vpack.c.b16 %v201, %v199
  %v318 = vpack.c.b16 %v204, %v202
  %v319 = vpack.c.b16 %v205, %v203
  %v320 = vpack.c.b16 %v208, %v206
  %v321 = vpack.c.b16 %v209, %v207
  %v322 = vpack.c.b16 %v212, %v210
  %v323 = vpack.c.b16 %v213, %v211
  %v324 = vpack.c.b16 %v216, %v214
  %v325 = vpack.c.b16 %v217, %v215
  %v326 = vpack.c.b16 %v220, %v218
  %v327 = vpack.c.b16 %v221, %v219
  %v328 = vpack.c.b16 %v224, %v222
  %v329 = vpack.c.b16 %v225, %v223
  %v330 = vpack.c.b16 %v228, %v226
  %v331 = vpack.c.b16 %v229, %v227
  %v332 = vpack.c.b16 %v232, %v230
  %v333 = vpack.c.b16 %v233, %v231
  %v334 = vpack.c.b16 %v236, %v234
  %v335 = vpack.c.b16 %v237, %v235
  %v336 = vpack.c.b16 %v240, %v238
  %v337 = vpack.c.b16 %v241, %v239
  %v338 = vpack.c.b16 %v244, %v242
  %v339 = vpack.c.b16 %v245, %v243
  %v340 = vpack.c.b16 %v248, %v246
  %v341 = vpack.c.b16 %v249, %v247
  %v342 = vpack.c.b16 %v252, %v250
  %v343 = vpack.c.b16 %v253, %v251
  %v344 = vpack.c.b16 %v256, %v254
  %v345 = vpack.c.b16 %v257, %v255
  %v346 = vpack.c.b16 %v260, %v258
  %v347 = vpack.c.b16 %v261, %v259
  %v348 = vpack.c.b16 %v264, %v262
  %v349 = vpack.c.b16 %v265, %v263
  %v350 = vpack.c.b16 %v268, %v266
  %v351 = vpack.c.b16 %v269, %v267
  %v352 = vpack.c.b16 %v272, %v270
  %v353 = vpack.c.b16 %v273, %v271
  %v354 = vpack.c.b16 %v276, %v274
  %v355 = vpack.c.b16 %v277, %v275
  %v356 = vpack.c.b16 %v280, %v278
  %v357 = vpack.c.b16 %v281, %v279
  %v358 = vpack.c.b16 %v284, %v282
  %v359 = vpack.c.b16 %v285, %v283
  %v360 = vpack.c.b16 %v288, %v286
  %v361 = vpack.c.b16 %v289, %v287
  %v362 = vpack.c.b16 %v292, %v290
  %v363 = vpack.c.b16 %v293, %v291
  %v364 = vpack.c.b16 %v296, %v294
  %v365 = vpack.c.b16 %v297, %v295
  %v366 = vpack.c.b16 %v300, %v298
  %v367 = vpack.c.b16 %v301, %v299
  %v368 = vpack.c.b16 %v304, %v302
  %v369 = vpack.c.b16 %v305, %v303
  %v466 = vunpack.c.l.b16 %v78
  %v467 = vunpack.c.l.b16 %v79
  %v468 = vunpack.c.l.b16 %v80
  %v469 = vunpack.c.l.b16 %v81
  %v470 = vunpack.c.l.b16 %v82
  %v471 = vunpack.c.l.b16 %v83
  %v472 = vunpack.c.l.b16 %v84
  %v473 = vunpack.c.l.b16 %v85
  %v474 = vunpack.c.l.b16 %v86
  %v475 = vunpack.c.l.b16 %v87
  %v476 = vunpack.c.l.b16 %v88
  %v477 = vunpack.c.l.b16 %v89
  %v478 = vunpack.c.l.b16 %v90
  %v479 = vunpack.c.l.b16 %v91
  %v480 = vunpack.c.l.b16 %v92
  %v481 = vunpack.c.l.b16 %v93
  %v482 = vunpack.c.l.b16 %v94
  %v483 = vunpack.c.l.b16 %v95
  %v484 = vunpack.c.l.b16 %v96
  %v485 = vunpack.c.l.b16 %v97
  %v486 = vunpack.c.l.b16 %v98
  %v487 = vunpack.c.l.b16 %v99
  %v488 = vunpack.c.l.b16 %v100
  %v489 = vunpack.c.l.b16 %v101
  %v490 = vunpack.c.l.b16 %v102
  %v491 = vunpack.c.l.b16 %v103
  %v492 = vunpack.c.l.b16 %v104
  %v493 = vunpack.c.l.b16 %v105
  %v494 = vunpack.c.l.b16 %v106
  %v495 = vunpack.c.l.b16 %v107
  %v496 = vunpack.c.l.b16 %v108
  %v497 = vunpack.c.l.b16 %v109
  %v498 = vpack.c.b16 %v467, %v466
  %v499 = vpack.c.b16 %v469, %v468
  %v500 = vpack.c.b16 %v471, %v470
  %v501 = vpack.c.b16 %v473, %v472
  %v502 = vpack.c.b16 %v475, %v474
  %v503 = vpack.c.b16 %v477, %v476
  %v504 = vpack.c.b16 %v479, %v478
  %v505 = vpack.c.b16 %v481, %v480
  %v506 = vpack.c.b16 %v483, %v482
  %v507 = vpack.c.b16 %v485, %v484
  %v508 = vpack.c.b16 %v487, %v486
  %v509 = vpack.c.b16 %v489, %v488
  %v510 = vpack.c.b16 %v491, %v490
  %v511 = vpack.c.b16 %v493, %v492
  %v512 = vpack.c.b16 %v495, %v494
  %v513 = vpack.c.b16 %v497, %v496
  %530 = vmatpush.bf16.msra.mxu0 %v505
  %531 = vmatpush.bf16.msra.mxu0 %v504
  %532 = vmatpush.bf16.msra.mxu0 %v503
  %533 = vmatpush.bf16.msra.mxu0 %v502
  %534 = vmatpush.bf16.msra.mxu0 %v501
  %535 = vmatpush.bf16.msra.mxu0 %v500
  %536 = vmatpush.bf16.msra.mxu0 %v499
  %537 = vmatpush.bf16.msra.mxu0 %v498
  %538 = vmatmul.bf16.gmra.mxu0 %v306
  %v539 = vpop.f32.mrf.mxu0
  %v540 = vadd.f32 %v112, %v539
  %v541 = vpop.f32.mrf.mxu0
  %v542 = vadd.f32 %v112, %v541
  %543 = vmatmul.bf16.gmra.mxu0 %v308
  %v544 = vpop.f32.mrf.mxu0
  %v545 = vadd.f32 %v112, %v544
  %v546 = vpop.f32.mrf.mxu0
  %v547 = vadd.f32 %v112, %v546
  %548 = vmatmul.bf16.gmra.mxu0 %v310
  %v549 = vpop.f32.mrf.mxu0
  %v550 = vadd.f32 %v112, %v549
  %v551 = vpop.f32.mrf.mxu0
  %v552 = vadd.f32 %v112, %v551
  %553 = vmatmul.bf16.gmra.mxu0 %v312
  %v554 = vpop.f32.mrf.mxu0
  %v555 = vadd.f32 %v112, %v554
  %v556 = vpop.f32.mrf.mxu0
  %v557 = vadd.f32 %v112, %v556
  %558 = vmatmul.bf16.gmra.mxu0 %v314
  %v559 = vpop.f32.mrf.mxu0
  %v560 = vadd.f32 %v112, %v559
  %v561 = vpop.f32.mrf.mxu0
  %v562 = vadd.f32 %v112, %v561
  %563 = vmatmul.bf16.gmra.mxu0 %v316
  %v564 = vpop.f32.mrf.mxu0
  %v565 = vadd.f32 %v112, %v564
  %v566 = vpop.f32.mrf.mxu0
  %v567 = vadd.f32 %v112, %v566
  %568 = vmatmul.bf16.gmra.mxu0 %v318
  %v569 = vpop.f32.mrf.mxu0
  %v570 = vadd.f32 %v112, %v569
  %v571 = vpop.f32.mrf.mxu0
  %v572 = vadd.f32 %v112, %v571
  %573 = vmatmul.bf16.gmra.mxu0 %v320
  %v574 = vpop.f32.mrf.mxu0
  %v575 = vadd.f32 %v112, %v574
  %v576 = vpop.f32.mrf.mxu0
  %v577 = vadd.f32 %v112, %v576
  %578 = vmatmul.bf16.gmra.mxu0 %v322
  %v579 = vpop.f32.mrf.mxu0
  %v580 = vadd.f32 %v112, %v579
  %v581 = vpop.f32.mrf.mxu0
  %v582 = vadd.f32 %v112, %v581
  %583 = vmatmul.bf16.gmra.mxu0 %v324
  %v584 = vpop.f32.mrf.mxu0
  %v585 = vadd.f32 %v112, %v584
  %v586 = vpop.f32.mrf.mxu0
  %v587 = vadd.f32 %v112, %v586
  %588 = vmatmul.bf16.gmra.mxu0 %v326
  %v589 = vpop.f32.mrf.mxu0
  %v590 = vadd.f32 %v112, %v589
  %v591 = vpop.f32.mrf.mxu0
  %v592 = vadd.f32 %v112, %v591
  %593 = vmatmul.bf16.gmra.mxu0 %v328
  %v594 = vpop.f32.mrf.mxu0
  %v595 = vadd.f32 %v112, %v594
  %v596 = vpop.f32.mrf.mxu0
  %v597 = vadd.f32 %v112, %v596
  %598 = vmatmul.bf16.gmra.mxu0 %v330
  %v599 = vpop.f32.mrf.mxu0
  %v600 = vadd.f32 %v112, %v599
  %v601 = vpop.f32.mrf.mxu0
  %v602 = vadd.f32 %v112, %v601
  %603 = vmatmul.bf16.gmra.mxu0 %v332
  %v604 = vpop.f32.mrf.mxu0
  %v605 = vadd.f32 %v112, %v604
  %v606 = vpop.f32.mrf.mxu0
  %v607 = vadd.f32 %v112, %v606
  %608 = vmatmul.bf16.gmra.mxu0 %v334
  %v609 = vpop.f32.mrf.mxu0
  %v610 = vadd.f32 %v112, %v609
  %v611 = vpop.f32.mrf.mxu0
  %v612 = vadd.f32 %v112, %v611
  %613 = vmatmul.bf16.gmra.mxu0 %v336
  %v614 = vpop.f32.mrf.mxu0
  %v615 = vadd.f32 %v112, %v614
  %v616 = vpop.f32.mrf.mxu0
  %v617 = vadd.f32 %v112, %v616
  %618 = vmatmul.bf16.gmra.mxu0 %v338
  %v619 = vpop.f32.mrf.mxu0
  %v620 = vadd.f32 %v112, %v619
  %v621 = vpop.f32.mrf.mxu0
  %v622 = vadd.f32 %v112, %v621
  %623 = vmatmul.bf16.gmra.mxu0 %v340
  %v624 = vpop.f32.mrf.mxu0
  %v625 = vadd.f32 %v112, %v624
  %v626 = vpop.f32.mrf.mxu0
  %v627 = vadd.f32 %v112, %v626
  %628 = vmatmul.bf16.gmra.mxu0 %v342
  %v629 = vpop.f32.mrf.mxu0
  %v630 = vadd.f32 %v112, %v629
  %v631 = vpop.f32.mrf.mxu0
  %v632 = vadd.f32 %v112, %v631
  %633 = vmatmul.bf16.gmra.mxu0 %v344
  %v634 = vpop.f32.mrf.mxu0
  %v635 = vadd.f32 %v112, %v634
  %v636 = vpop.f32.mrf.mxu0
  %v637 = vadd.f32 %v112, %v636
  %638 = vmatmul.bf16.gmra.mxu0 %v346
  %v639 = vpop.f32.mrf.mxu0
  %v640 = vadd.f32 %v112, %v639
  %v641 = vpop.f32.mrf.mxu0
  %v642 = vadd.f32 %v112, %v641
  %643 = vmatmul.bf16.gmra.mxu0 %v348
  %v644 = vpop.f32.mrf.mxu0
  %v645 = vadd.f32 %v112, %v644
  %v646 = vpop.f32.mrf.mxu0
  %v647 = vadd.f32 %v112, %v646
  %648 = vmatmul.bf16.gmra.mxu0 %v350
  %v649 = vpop.f32.mrf.mxu0
  %v650 = vadd.f32 %v112, %v649
  %v651 = vpop.f32.mrf.mxu0
  %v652 = vadd.f32 %v112, %v651
  %653 = vmatmul.bf16.gmra.mxu0 %v352
  %v654 = vpop.f32.mrf.mxu0
  %v655 = vadd.f32 %v112, %v654
  %v656 = vpop.f32.mrf.mxu0
  %v657 = vadd.f32 %v112, %v656
  %658 = vmatmul.bf16.gmra.mxu0 %v354
  %v659 = vpop.f32.mrf.mxu0
  %v660 = vadd.f32 %v112, %v659
  %v661 = vpop.f32.mrf.mxu0
  %v662 = vadd.f32 %v112, %v661
  %663 = vmatmul.bf16.gmra.mxu0 %v356
  %v664 = vpop.f32.mrf.mxu0
  %v665 = vadd.f32 %v112, %v664
  %v666 = vpop.f32.mrf.mxu0
  %v667 = vadd.f32 %v112, %v666
  %668 = vmatmul.bf16.gmra.mxu0 %v358
  %v669 = vpop.f32.mrf.mxu0
  %v670 = vadd.f32 %v112, %v669
  %v671 = vpop.f32.mrf.mxu0
  %v672 = vadd.f32 %v112, %v671
  %673 = vmatmul.bf16.gmra.mxu0 %v360
  %v674 = vpop.f32.mrf.mxu0
  %v675 = vadd.f32 %v112, %v674
  %v676 = vpop.f32.mrf.mxu0
  %v677 = vadd.f32 %v112, %v676
  %678 = vmatmul.bf16.gmra.mxu0 %v362
  %v679 = vpop.f32.mrf.mxu0
  %v680 = vadd.f32 %v112, %v679
  %v681 = vpop.f32.mrf.mxu0
  %v682 = vadd.f32 %v112, %v681
  %683 = vmatmul.bf16.gmra.mxu0 %v364
  %v684 = vpop.f32.mrf.mxu0
  %v685 = vadd.f32 %v112, %v684
  %v686 = vpop.f32.mrf.mxu0
  %v687 = vadd.f32 %v112, %v686
  %688 = vmatmul.bf16.gmra.mxu0 %v366
  %v689 = vpop.f32.mrf.mxu0
  %v690 = vadd.f32 %v112, %v689
  %v691 = vpop.f32.mrf.mxu0
  %v692 = vadd.f32 %v112, %v691
  %693 = vmatmul.bf16.gmra.mxu0 %v368
  %v694 = vpop.f32.mrf.mxu0
  %v695 = vadd.f32 %v112, %v694
  %v696 = vpop.f32.mrf.mxu0
  %v697 = vadd.f32 %v112, %v696
  %698 = vdwg.mxu0
  %699 = vmatpush.bf16.msra.mxu0 %v513
  %700 = vmatpush.bf16.msra.mxu0 %v512
  %701 = vmatpush.bf16.msra.mxu0 %v511
  %702 = vmatpush.bf16.msra.mxu0 %v510
  %703 = vmatpush.bf16.msra.mxu0 %v509
  %704 = vmatpush.bf16.msra.mxu0 %v508
  %705 = vmatpush.bf16.msra.mxu0 %v507
  %706 = vmatpush.bf16.msra.mxu0 %v506
  %707 = vmatmul.bf16.gmra.mxu0 %v307
  %v708 = vpop.f32.mrf.mxu0
  %v709 = vadd.f32 %v540, %v708
  %v710 = vpop.f32.mrf.mxu0
  %v711 = vadd.f32 %v542, %v710
  %712 = vmatmul.bf16.gmra.mxu0 %v309
  %v713 = vpop.f32.mrf.mxu0
  %v714 = vadd.f32 %v545, %v713
  %v715 = vpop.f32.mrf.mxu0
  %v716 = vadd.f32 %v547, %v715
  %717 = vmatmul.bf16.gmra.mxu0 %v311
  %v718 = vpop.f32.mrf.mxu0
  %v719 = vadd.f32 %v550, %v718
  %v720 = vpop.f32.mrf.mxu0
  %v721 = vadd.f32 %v552, %v720
  %722 = vmatmul.bf16.gmra.mxu0 %v313
  %v723 = vpop.f32.mrf.mxu0
  %v724 = vadd.f32 %v555, %v723
  %v725 = vpop.f32.mrf.mxu0
  %v726 = vadd.f32 %v557, %v725
  %727 = vmatmul.bf16.gmra.mxu0 %v315
  %v728 = vpop.f32.mrf.mxu0
  %v729 = vadd.f32 %v560, %v728
  %v730 = vpop.f32.mrf.mxu0
  %v731 = vadd.f32 %v562, %v730
  %732 = vmatmul.bf16.gmra.mxu0 %v317
  %v733 = vpop.f32.mrf.mxu0
  %v734 = vadd.f32 %v565, %v733
  %v735 = vpop.f32.mrf.mxu0
  %v736 = vadd.f32 %v567, %v735
  %737 = vmatmul.bf16.gmra.mxu0 %v319
  %v738 = vpop.f32.mrf.mxu0
  %v739 = vadd.f32 %v570, %v738
  %v740 = vpop.f32.mrf.mxu0
  %v741 = vadd.f32 %v572, %v740
  %742 = vmatmul.bf16.gmra.mxu0 %v321
  %v743 = vpop.f32.mrf.mxu0
  %v744 = vadd.f32 %v575, %v743
  %v745 = vpop.f32.mrf.mxu0
  %v746 = vadd.f32 %v577, %v745
  %747 = vmatmul.bf16.gmra.mxu0 %v323
  %v748 = vpop.f32.mrf.mxu0
  %v749 = vadd.f32 %v580, %v748
  %v750 = vpop.f32.mrf.mxu0
  %v751 = vadd.f32 %v582, %v750
  %752 = vmatmul.bf16.gmra.mxu0 %v325
  %v753 = vpop.f32.mrf.mxu0
  %v754 = vadd.f32 %v585, %v753
  %v755 = vpop.f32.mrf.mxu0
  %v756 = vadd.f32 %v587, %v755
  %757 = vmatmul.bf16.gmra.mxu0 %v327
  %v758 = vpop.f32.mrf.mxu0
  %v759 = vadd.f32 %v590, %v758
  %v760 = vpop.f32.mrf.mxu0
  %v761 = vadd.f32 %v592, %v760
  %762 = vmatmul.bf16.gmra.mxu0 %v329
  %v763 = vpop.f32.mrf.mxu0
  %v764 = vadd.f32 %v595, %v763
  %v765 = vpop.f32.mrf.mxu0
  %v766 = vadd.f32 %v597, %v765
  %767 = vmatmul.bf16.gmra.mxu0 %v331
  %v768 = vpop.f32.mrf.mxu0
  %v769 = vadd.f32 %v600, %v768
  %v770 = vpop.f32.mrf.mxu0
  %v771 = vadd.f32 %v602, %v770
  %772 = vmatmul.bf16.gmra.mxu0 %v333
  %v773 = vpop.f32.mrf.mxu0
  %v774 = vadd.f32 %v605, %v773
  %v775 = vpop.f32.mrf.mxu0
  %v776 = vadd.f32 %v607, %v775
  %777 = vmatmul.bf16.gmra.mxu0 %v335
  %v778 = vpop.f32.mrf.mxu0
  %v779 = vadd.f32 %v610, %v778
  %v780 = vpop.f32.mrf.mxu0
  %v781 = vadd.f32 %v612, %v780
  %782 = vmatmul.bf16.gmra.mxu0 %v337
  %v783 = vpop.f32.mrf.mxu0
  %v784 = vadd.f32 %v615, %v783
  %v785 = vpop.f32.mrf.mxu0
  %v786 = vadd.f32 %v617, %v785
  %787 = vmatmul.bf16.gmra.mxu0 %v339
  %v788 = vpop.f32.mrf.mxu0
  %v789 = vadd.f32 %v620, %v788
  %v790 = vpop.f32.mrf.mxu0
  %v791 = vadd.f32 %v622, %v790
  %792 = vmatmul.bf16.gmra.mxu0 %v341
  %v793 = vpop.f32.mrf.mxu0
  %v794 = vadd.f32 %v625, %v793
  %v795 = vpop.f32.mrf.mxu0
  %v796 = vadd.f32 %v627, %v795
  %797 = vmatmul.bf16.gmra.mxu0 %v343
  %v798 = vpop.f32.mrf.mxu0
  %v799 = vadd.f32 %v630, %v798
  %v800 = vpop.f32.mrf.mxu0
  %v801 = vadd.f32 %v632, %v800
  %802 = vmatmul.bf16.gmra.mxu0 %v345
  %v803 = vpop.f32.mrf.mxu0
  %v804 = vadd.f32 %v635, %v803
  %v805 = vpop.f32.mrf.mxu0
  %v806 = vadd.f32 %v637, %v805
  %807 = vmatmul.bf16.gmra.mxu0 %v347
  %v808 = vpop.f32.mrf.mxu0
  %v809 = vadd.f32 %v640, %v808
  %v810 = vpop.f32.mrf.mxu0
  %v811 = vadd.f32 %v642, %v810
  %812 = vmatmul.bf16.gmra.mxu0 %v349
  %v813 = vpop.f32.mrf.mxu0
  %v814 = vadd.f32 %v645, %v813
  %v815 = vpop.f32.mrf.mxu0
  %v816 = vadd.f32 %v647, %v815
  %817 = vmatmul.bf16.gmra.mxu0 %v351
  %v818 = vpop.f32.mrf.mxu0
  %v819 = vadd.f32 %v650, %v818
  %v820 = vpop.f32.mrf.mxu0
  %v821 = vadd.f32 %v652, %v820
  %822 = vmatmul.bf16.gmra.mxu0 %v353
  %v823 = vpop.f32.mrf.mxu0
  %v824 = vadd.f32 %v655, %v823
  %v825 = vpop.f32.mrf.mxu0
  %v826 = vadd.f32 %v657, %v825
  %827 = vmatmul.bf16.gmra.mxu0 %v355
  %v828 = vpop.f32.mrf.mxu0
  %v829 = vadd.f32 %v660, %v828
  %v830 = vpop.f32.mrf.mxu0
  %v831 = vadd.f32 %v662, %v830
  %832 = vmatmul.bf16.gmra.mxu0 %v357
  %v833 = vpop.f32.mrf.mxu0
  %v834 = vadd.f32 %v665, %v833
  %v835 = vpop.f32.mrf.mxu0
  %v836 = vadd.f32 %v667, %v835
  %837 = vmatmul.bf16.gmra.mxu0 %v359
  %v838 = vpop.f32.mrf.mxu0
  %v839 = vadd.f32 %v670, %v838
  %v840 = vpop.f32.mrf.mxu0
  %v841 = vadd.f32 %v672, %v840
  %842 = vmatmul.bf16.gmra.mxu0 %v361
  %v843 = vpop.f32.mrf.mxu0
  %v844 = vadd.f32 %v675, %v843
  %v845 = vpop.f32.mrf.mxu0
  %v846 = vadd.f32 %v677, %v845
  %847 = vmatmul.bf16.gmra.mxu0 %v363
  %v848 = vpop.f32.mrf.mxu0
  %v849 = vadd.f32 %v680, %v848
  %v850 = vpop.f32.mrf.mxu0
  %v851 = vadd.f32 %v682, %v850
  %852 = vmatmul.bf16.gmra.mxu0 %v365
  %v853 = vpop.f32.mrf.mxu0
  %v854 = vadd.f32 %v685, %v853
  %v855 = vpop.f32.mrf.mxu0
  %v856 = vadd.f32 %v687, %v855
  %857 = vmatmul.bf16.gmra.mxu0 %v367
  %v858 = vpop.f32.mrf.mxu0
  %v859 = vadd.f32 %v690, %v858
  %v860 = vpop.f32.mrf.mxu0
  %v861 = vadd.f32 %v692, %v860
  %862 = vmatmul.bf16.gmra.mxu0 %v369
  %v863 = vpop.f32.mrf.mxu0
  %v864 = vadd.f32 %v695, %v863
  %v865 = vpop.f32.mrf.mxu0
  %v866 = vadd.f32 %v697, %v865
  %867 = vdwg.mxu0
  %868 = vst [vmem:[%s3] sm:$0xff] %v709
  %869 = vst [vmem:[%s3 + $0x8] sm:$0xff] %v711
  %870 = vst [vmem:[%s3 + $0x10] sm:$0xff] %v714
  %871 = vst [vmem:[%s3 + $0x18] sm:$0xff] %v716
  %872 = vst [vmem:[%s3 + $0x20] sm:$0xff] %v719
  %873 = vst [vmem:[%s3 + $0x28] sm:$0xff] %v721
  %874 = vst [vmem:[%s3 + $0x30] sm:$0xff] %v724
  %875 = vst [vmem:[%s3 + $0x38] sm:$0xff] %v726
  %876 = vst [vmem:[%s3 + $0x40] sm:$0xff] %v729
  %877 = vst [vmem:[%s3 + $0x48] sm:$0xff] %v731
  %878 = vst [vmem:[%s3 + $0x50] sm:$0xff] %v734
  %879 = vst [vmem:[%s3 + $0x58] sm:$0xff] %v736
  %880 = vst [vmem:[%s3 + $0x60] sm:$0xff] %v739
  %881 = vst [vmem:[%s3 + $0x68] sm:$0xff] %v741
  %882 = vst [vmem:[%s3 + $0x70] sm:$0xff] %v744
  %883 = vst [vmem:[%s3 + $0x78] sm:$0xff] %v746
  %884 = vst [vmem:[%s3 + $0x80] sm:$0xff] %v749
  %885 = vst [vmem:[%s3 + $0x88] sm:$0xff] %v751
  %886 = vst [vmem:[%s3 + $0x90] sm:$0xff] %v754
  %887 = vst [vmem:[%s3 + $0x98] sm:$0xff] %v756
  %888 = vst [vmem:[%s3 + $0xa0] sm:$0xff] %v759
  %889 = vst [vmem:[%s3 + $0xa8] sm:$0xff] %v761
  %890 = vst [vmem:[%s3 + $0xb0] sm:$0xff] %v764
  %891 = vst [vmem:[%s3 + $0xb8] sm:$0xff] %v766
  %892 = vst [vmem:[%s3 + $0xc0] sm:$0xff] %v769
  %893 = vst [vmem:[%s3 + $0xc8] sm:$0xff] %v771
  %894 = vst [vmem:[%s3 + $0xd0] sm:$0xff] %v774
  %895 = vst [vmem:[%s3 + $0xd8] sm:$0xff] %v776
  %896 = vst [vmem:[%s3 + $0xe0] sm:$0xff] %v779
  %897 = vst [vmem:[%s3 + $0xe8] sm:$0xff] %v781
  %898 = vst [vmem:[%s3 + $0xf0] sm:$0xff] %v784
  %899 = vst [vmem:[%s3 + $0xf8] sm:$0xff] %v786
  %900 = vst [vmem:[%s3 + $0x100] sm:$0xff] %v789
  %901 = vst [vmem:[%s3 + $0x108] sm:$0xff] %v791
  %902 = vst [vmem:[%s3 + $0x110] sm:$0xff] %v794
  %903 = vst [vmem:[%s3 + $0x118] sm:$0xff] %v796
  %904 = vst [vmem:[%s3 + $0x120] sm:$0xff] %v799
  %905 = vst [vmem:[%s3 + $0x128] sm:$0xff] %v801
  %906 = vst [vmem:[%s3 + $0x130] sm:$0xff] %v804
  %907 = vst [vmem:[%s3 + $0x138] sm:$0xff] %v806
  %908 = vst [vmem:[%s3 + $0x140] sm:$0xff] %v809
  %909 = vst [vmem:[%s3 + $0x148] sm:$0xff] %v811
  %910 = vst [vmem:[%s3 + $0x150] sm:$0xff] %v814
  %911 = vst [vmem:[%s3 + $0x158] sm:$0xff] %v816
  %912 = vst [vmem:[%s3 + $0x160] sm:$0xff] %v819
  %913 = vst [vmem:[%s3 + $0x168] sm:$0xff] %v821
  %914 = vst [vmem:[%s3 + $0x170] sm:$0xff] %v824
  %915 = vst [vmem:[%s3 + $0x178] sm:$0xff] %v826
  %916 = vst [vmem:[%s3 + $0x180] sm:$0xff] %v829
  %917 = vst [vmem:[%s3 + $0x188] sm:$0xff] %v831
  %918 = vst [vmem:[%s3 + $0x190] sm:$0xff] %v834
  %919 = vst [vmem:[%s3 + $0x198] sm:$0xff] %v836
  %920 = vst [vmem:[%s3 + $0x1a0] sm:$0xff] %v839
  %921 = vst [vmem:[%s3 + $0x1a8] sm:$0xff] %v841
  %922 = vst [vmem:[%s3 + $0x1b0] sm:$0xff] %v844
  %923 = vst [vmem:[%s3 + $0x1b8] sm:$0xff] %v846
  %924 = vst [vmem:[%s3 + $0x1c0] sm:$0xff] %v849
  %925 = vst [vmem:[%s3 + $0x1c8] sm:$0xff] %v851
  %926 = vst [vmem:[%s3 + $0x1d0] sm:$0xff] %v854
  %927 = vst [vmem:[%s3 + $0x1d8] sm:$0xff] %v856
  %928 = vst [vmem:[%s3 + $0x1e0] sm:$0xff] %v859
  %929 = vst [vmem:[%s3 + $0x1e8] sm:$0xff] %v861
  %930 = vst [vmem:[%s3 + $0x1f0] sm:$0xff] %v864
  %931 = vst [vmem:[%s3 + $0x1f8] sm:$0xff] %v866
  // Predicated region
  $region14: #{obj_ls_d_net_forward.21} parent=0 // pred_check
    _
  $region15: #{obj_ls_d_net_forward.21} parent=0 // pred_check_branch
    %933 = sbr.rel (0) target = $region17
  $region16: #{obj_ls_d_net_forward.21} parent=0 // pred_region
    _
  $region17: #{obj_ls_d_net_forward.21} parent=0 // pred_fallthru
    _
  // Predicated region
  $region18: #{obj_ls_d_net_forward.21} parent=0 // pred_check
    _
  $region19: #{obj_ls_d_net_forward.21} parent=0 // pred_check_branch
    %935 = sbr.rel (0) target = $region21
  $region20: #{obj_ls_d_net_forward.21} parent=0 // pred_region
    _
  $region21: #{obj_ls_d_net_forward.21} parent=0 // pred_fallthru
    _

// kernel: obj_ls_d_net_forward.24
$region0: #{obj_ls_d_net_forward.24}
  #allocation0 [shape = 'u32[]', space=smem, size = 0x4, offset = 0x4, fixed_abs, tag = 'smem constant byte address 0x4 - core index']
  #allocation1 [shape = 'u32[72,128]{1,0:T(1,128)}', space=vmem, size = 0x9000, scoped, tag = 'internal scratch']
  %s0 = inlined_call_operand.vmem [shape: f32[128,64], index: 0, kind: input, shape index: {}]
  %s1 = inlined_call_operand.vmem [shape: f32[1,64], index: 1, kind: input, shape index: {}]
  %s2 = inlined_call_operand.vmem [shape: f32[1,64], index: 2, kind: input, shape index: {}]
  %s3 = inlined_call_operand.vmem [shape: f32[128,64], index: 3, kind: output, shape index: {}]
  %s4 = sld [smem:[#allocation0]]
  $region22: #{obj_ls_d_net_forward.24} parent=0
    _
  %s6 = ssub.s32 1, %s4
  %s7 = scalar_select 0, %s6, %s4
  // Predicated region
  $region2: #{obj_ls_d_net_forward.24} parent=0 // pred_check
    _
  $region3: #{obj_ls_d_net_forward.24} parent=0 // pred_check_branch
    %9 = sbr.rel (0) target = $region5
  $region4: #{obj_ls_d_net_forward.24} parent=0 // pred_region
    _
  $region5: #{obj_ls_d_net_forward.24} parent=0 // pred_fallthru
    _
  // Predicated region
  $region6: #{obj_ls_d_net_forward.24} parent=0 // pred_check
    _
  $region7: #{obj_ls_d_net_forward.24} parent=0 // pred_check_branch
    %11 = sbr.rel (0) target = $region9
  $region8: #{obj_ls_d_net_forward.24} parent=0 // pred_region
    _
  $region9: #{obj_ls_d_net_forward.24} parent=0 // pred_fallthru
    _
  // Predicated region
  $region10: #{obj_ls_d_net_forward.24} parent=0 // pred_check
    _
  $region11: #{obj_ls_d_net_forward.24} parent=0 // pred_check_branch
    %13 = sbr.rel (0) target = $region13
  $region12: #{obj_ls_d_net_forward.24} parent=0 // pred_region
    _
  $region13: #{obj_ls_d_net_forward.24} parent=0 // pred_fallthru
    _
  %v14 = vld [vmem:[%s0] sm:$0xff]
  %v15 = vld [vmem:[%s0 + $0x8] sm:$0xff]
  %v16 = vld [vmem:[%s0 + $0x10] sm:$0xff]
  %v17 = vld [vmem:[%s0 + $0x18] sm:$0xff]
  %v18 = vld [vmem:[%s0 + $0x20] sm:$0xff]
  %v19 = vld [vmem:[%s0 + $0x28] sm:$0xff]
  %v20 = vld [vmem:[%s0 + $0x30] sm:$0xff]
  %v21 = vld [vmem:[%s0 + $0x38] sm:$0xff]
  %v22 = vld [vmem:[%s0 + $0x40] sm:$0xff]
  %v23 = vld [vmem:[%s0 + $0x48] sm:$0xff]
  %v24 = vld [vmem:[%s0 + $0x50] sm:$0xff]
  %v25 = vld [vmem:[%s0 + $0x58] sm:$0xff]
  %v26 = vld [vmem:[%s0 + $0x60] sm:$0xff]
  %v27 = vld [vmem:[%s0 + $0x68] sm:$0xff]
  %v28 = vld [vmem:[%s0 + $0x70] sm:$0xff]
  %v29 = vld [vmem:[%s0 + $0x78] sm:$0xff]
  %vm30 = vcmask 523264
  %v31 = vsel %vm30, %v14, 0.0
  %v32 = vsel %vm30, %v15, 0.0
  %v33 = vadd.f32 %v31, %v32
  %v34 = vsel %vm30, %v16, 0.0
  %v35 = vadd.f32 %v33, %v34
  %v36 = vsel %vm30, %v17, 0.0
  %v37 = vadd.f32 %v35, %v36
  %v38 = vsel %vm30, %v18, 0.0
  %v39 = vadd.f32 %v37, %v38
  %v40 = vsel %vm30, %v19, 0.0
  %v41 = vadd.f32 %v39, %v40
  %v42 = vsel %vm30, %v20, 0.0
  %v43 = vadd.f32 %v41, %v42
  %v44 = vsel %vm30, %v21, 0.0
  %v45 = vadd.f32 %v43, %v44
  %v46 = vsel %vm30, %v22, 0.0
  %v47 = vadd.f32 %v45, %v46
  %v48 = vsel %vm30, %v23, 0.0
  %v49 = vadd.f32 %v47, %v48
  %v50 = vsel %vm30, %v24, 0.0
  %v51 = vadd.f32 %v49, %v50
  %v52 = vsel %vm30, %v25, 0.0
  %v53 = vadd.f32 %v51, %v52
  %v54 = vsel %vm30, %v26, 0.0
  %v55 = vadd.f32 %v53, %v54
  %v56 = vsel %vm30, %v27, 0.0
  %v57 = vadd.f32 %v55, %v56
  %v58 = vsel %vm30, %v28, 0.0
  %v59 = vadd.f32 %v57, %v58
  %v60 = vsel %vm30, %v29, 0.0
  %v61 = vadd.f32 %v59, %v60
  %v62 = vrot.slane %v61, 4
  %v63 = vadd.f32 %v61, %v62
  %v64 = vrot.slane %v63, 2
  %v65 = vadd.f32 %v63, %v64
  %v66 = vrot.slane %v65, 1
  %v67 = vadd.f32 %v65, %v66
  %v68 = vrcp.pop 128.0
  %v69 = vmul.f32 128.0, %v68
  %v70 = vsub.f32 1.0, %v69
  %v71 = vmul.f32 %v68, %v70
  %v72 = vadd.f32 %v68, %v71
  %vm73 = vweird.f32 %v68
  %v74 = vsel %vm73, %v68, %v72
  %v75 = vmul.f32 %v67, %v74
  %v76 = vsub.f32 %v14, %v75
  %v77 = vsub.f32 %v15, %v75
  %v78 = vsub.f32 %v16, %v75
  %v79 = vsub.f32 %v17, %v75
  %v80 = vsub.f32 %v18, %v75
  %v81 = vsub.f32 %v19, %v75
  %v82 = vsub.f32 %v20, %v75
  %v83 = vsub.f32 %v21, %v75
  %v84 = vsub.f32 %v22, %v75
  %v85 = vsub.f32 %v23, %v75
  %v86 = vsub.f32 %v24, %v75
  %v87 = vsub.f32 %v25, %v75
  %v88 = vsub.f32 %v26, %v75
  %v89 = vsub.f32 %v27, %v75
  %v90 = vsub.f32 %v28, %v75
  %v91 = vsub.f32 %v29, %v75
  %v92 = vmul.f32 %v76, %v76
  %v93 = vmul.f32 %v77, %v77
  %v94 = vmul.f32 %v78, %v78
  %v95 = vmul.f32 %v79, %v79
  %v96 = vmul.f32 %v80, %v80
  %v97 = vmul.f32 %v81, %v81
  %v98 = vmul.f32 %v82, %v82
  %v99 = vmul.f32 %v83, %v83
  %v100 = vmul.f32 %v84, %v84
  %v101 = vmul.f32 %v85, %v85
  %v102 = vmul.f32 %v86, %v86
  %v103 = vmul.f32 %v87, %v87
  %v104 = vmul.f32 %v88, %v88
  %v105 = vmul.f32 %v89, %v89
  %v106 = vmul.f32 %v90, %v90
  %v107 = vmul.f32 %v91, %v91
  %v108 = vsel %vm30, %v92, 0.0
  %v109 = vsel %vm30, %v93, 0.0
  %v110 = vadd.f32 %v108, %v109
  %v111 = vsel %vm30, %v94, 0.0
  %v112 = vadd.f32 %v110, %v111
  %v113 = vsel %vm30, %v95, 0.0
  %v114 = vadd.f32 %v112, %v113
  %v115 = vsel %vm30, %v96, 0.0
  %v116 = vadd.f32 %v114, %v115
  %v117 = vsel %vm30, %v97, 0.0
  %v118 = vadd.f32 %v116, %v117
  %v119 = vsel %vm30, %v98, 0.0
  %v120 = vadd.f32 %v118, %v119
  %v121 = vsel %vm30, %v99, 0.0
  %v122 = vadd.f32 %v120, %v121
  %v123 = vsel %vm30, %v100, 0.0
  %v124 = vadd.f32 %v122, %v123
  %v125 = vsel %vm30, %v101, 0.0
  %v126 = vadd.f32 %v124, %v125
  %v127 = vsel %vm30, %v102, 0.0
  %v128 = vadd.f32 %v126, %v127
  %v129 = vsel %vm30, %v103, 0.0
  %v130 = vadd.f32 %v128, %v129
  %v131 = vsel %vm30, %v104, 0.0
  %v132 = vadd.f32 %v130, %v131
  %v133 = vsel %vm30, %v105, 0.0
  %v134 = vadd.f32 %v132, %v133
  %v135 = vsel %vm30, %v106, 0.0
  %v136 = vadd.f32 %v134, %v135
  %v137 = vsel %vm30, %v107, 0.0
  %v138 = vadd.f32 %v136, %v137
  %v139 = vrot.slane %v138, 4
  %v140 = vadd.f32 %v138, %v139
  %v141 = vrot.slane %v140, 2
  %v142 = vadd.f32 %v140, %v141
  %v143 = vrot.slane %v142, 1
  %v144 = vadd.f32 %v142, %v143
  %v145 = vmul.f32 %v144, %v74
  %v146 = vadd.f32 %v145, 1e-05
  %v147 = vrsqrt.pop %v146
  %v148 = vmul.f32 %v147, %v146
  %v149 = vmul.f32 %v148, %v147
  %v150 = vmul.f32 0.5, %v149
  %v151 = vsub.f32 1.5, %v150
  %v152 = vmul.f32 %v147, %v151
  %vm153 = vweird.f32 %v146
  %vm154 = vweird.f32 %v147
  %vm155 = vmor %vm153, %vm154
  %v156 = vsel %vm155, %v147, %v152
  %v157 = vmul.f32 %v76, %v156
  %v158 = vmul.f32 %v77, %v156
  %v159 = vmul.f32 %v78, %v156
  %v160 = vmul.f32 %v79, %v156
  %v161 = vmul.f32 %v80, %v156
  %v162 = vmul.f32 %v81, %v156
  %v163 = vmul.f32 %v82, %v156
  %v164 = vmul.f32 %v83, %v156
  %v165 = vmul.f32 %v84, %v156
  %v166 = vmul.f32 %v85, %v156
  %v167 = vmul.f32 %v86, %v156
  %v168 = vmul.f32 %v87, %v156
  %v169 = vmul.f32 %v88, %v156
  %v170 = vmul.f32 %v89, %v156
  %v171 = vmul.f32 %v90, %v156
  %v172 = vmul.f32 %v91, %v156
  %v173 = vld [vmem:[%s1] sm:$0x1]
  %v175 = vperm.slane %v173, 0
  %v177 = vmul.f32 %v157, %v175
  %v178 = vmul.f32 %v158, %v175
  %v179 = vmul.f32 %v159, %v175
  %v180 = vmul.f32 %v160, %v175
  %v181 = vmul.f32 %v161, %v175
  %v182 = vmul.f32 %v162, %v175
  %v183 = vmul.f32 %v163, %v175
  %v184 = vmul.f32 %v164, %v175
  %v185 = vmul.f32 %v165, %v175
  %v186 = vmul.f32 %v166, %v175
  %v187 = vmul.f32 %v167, %v175
  %v188 = vmul.f32 %v168, %v175
  %v189 = vmul.f32 %v169, %v175
  %v190 = vmul.f32 %v170, %v175
  %v191 = vmul.f32 %v171, %v175
  %v192 = vmul.f32 %v172, %v175
  %v193 = vld [vmem:[%s2] sm:$0x1]
  %v195 = vperm.slane %v193, 0
  %v197 = vadd.f32 %v177, %v195
  %v198 = vadd.f32 %v178, %v195
  %v199 = vadd.f32 %v179, %v195
  %v200 = vadd.f32 %v180, %v195
  %v201 = vadd.f32 %v181, %v195
  %v202 = vadd.f32 %v182, %v195
  %v203 = vadd.f32 %v183, %v195
  %v204 = vadd.f32 %v184, %v195
  %v205 = vadd.f32 %v185, %v195
  %v206 = vadd.f32 %v186, %v195
  %v207 = vadd.f32 %v187, %v195
  %v208 = vadd.f32 %v188, %v195
  %v209 = vadd.f32 %v189, %v195
  %v210 = vadd.f32 %v190, %v195
  %v211 = vadd.f32 %v191, %v195
  %v212 = vadd.f32 %v192, %v195
  %vm213 = vcmp.ge.f32.partialorder %v197, 0.0
  %vm214 = vcmp.ge.f32.partialorder %v198, 0.0
  %vm215 = vcmp.ge.f32.partialorder %v199, 0.0
  %vm216 = vcmp.ge.f32.partialorder %v200, 0.0
  %vm217 = vcmp.ge.f32.partialorder %v201, 0.0
  %vm218 = vcmp.ge.f32.partialorder %v202, 0.0
  %vm219 = vcmp.ge.f32.partialorder %v203, 0.0
  %vm220 = vcmp.ge.f32.partialorder %v204, 0.0
  %vm221 = vcmp.ge.f32.partialorder %v205, 0.0
  %vm222 = vcmp.ge.f32.partialorder %v206, 0.0
  %vm223 = vcmp.ge.f32.partialorder %v207, 0.0
  %vm224 = vcmp.ge.f32.partialorder %v208, 0.0
  %vm225 = vcmp.ge.f32.partialorder %v209, 0.0
  %vm226 = vcmp.ge.f32.partialorder %v210, 0.0
  %vm227 = vcmp.ge.f32.partialorder %v211, 0.0
  %vm228 = vcmp.ge.f32.partialorder %v212, 0.0
  %v229 = vmul.f32 %v197, 0.2
  %v230 = vmul.f32 %v198, 0.2
  %v231 = vmul.f32 %v199, 0.2
  %v232 = vmul.f32 %v200, 0.2
  %v233 = vmul.f32 %v201, 0.2
  %v234 = vmul.f32 %v202, 0.2
  %v235 = vmul.f32 %v203, 0.2
  %v236 = vmul.f32 %v204, 0.2
  %v237 = vmul.f32 %v205, 0.2
  %v238 = vmul.f32 %v206, 0.2
  %v239 = vmul.f32 %v207, 0.2
  %v240 = vmul.f32 %v208, 0.2
  %v241 = vmul.f32 %v209, 0.2
  %v242 = vmul.f32 %v210, 0.2
  %v243 = vmul.f32 %v211, 0.2
  %v244 = vmul.f32 %v212, 0.2
  %v245 = vsel %vm213, %v197, %v229
  %v246 = vsel %vm214, %v198, %v230
  %v247 = vsel %vm215, %v199, %v231
  %v248 = vsel %vm216, %v200, %v232
  %v249 = vsel %vm217, %v201, %v233
  %v250 = vsel %vm218, %v202, %v234
  %v251 = vsel %vm219, %v203, %v235
  %v252 = vsel %vm220, %v204, %v236
  %v253 = vsel %vm221, %v205, %v237
  %v254 = vsel %vm222, %v206, %v238
  %v255 = vsel %vm223, %v207, %v239
  %v256 = vsel %vm224, %v208, %v240
  %v257 = vsel %vm225, %v209, %v241
  %v258 = vsel %vm226, %v210, %v242
  %v259 = vsel %vm227, %v211, %v243
  %v260 = vsel %vm228, %v212, %v244
  %261 = vst.msk [vmem:[%s3] sm:$0xff] %vm30, %v245
  %262 = vst.msk [vmem:[%s3 + $0x8] sm:$0xff] %vm30, %v246
  %263 = vst.msk [vmem:[%s3 + $0x10] sm:$0xff] %vm30, %v247
  %264 = vst.msk [vmem:[%s3 + $0x18] sm:$0xff] %vm30, %v248
  %265 = vst.msk [vmem:[%s3 + $0x20] sm:$0xff] %vm30, %v249
  %266 = vst.msk [vmem:[%s3 + $0x28] sm:$0xff] %vm30, %v250
  %267 = vst.msk [vmem:[%s3 + $0x30] sm:$0xff] %vm30, %v251
  %268 = vst.msk [vmem:[%s3 + $0x38] sm:$0xff] %vm30, %v252
  %269 = vst.msk [vmem:[%s3 + $0x40] sm:$0xff] %vm30, %v253
  %270 = vst.msk [vmem:[%s3 + $0x48] sm:$0xff] %vm30, %v254
  %271 = vst.msk [vmem:[%s3 + $0x50] sm:$0xff] %vm30, %v255
  %272 = vst.msk [vmem:[%s3 + $0x58] sm:$0xff] %vm30, %v256
  %273 = vst.msk [vmem:[%s3 + $0x60] sm:$0xff] %vm30, %v257
  %274 = vst.msk [vmem:[%s3 + $0x68] sm:$0xff] %vm30, %v258
  %275 = vst.msk [vmem:[%s3 + $0x70] sm:$0xff] %vm30, %v259
  %276 = vst.msk [vmem:[%s3 + $0x78] sm:$0xff] %vm30, %v260
  // Predicated region
  $region14: #{obj_ls_d_net_forward.24} parent=0 // pred_check
    _
  $region15: #{obj_ls_d_net_forward.24} parent=0 // pred_check_branch
    %278 = sbr.rel (0) target = $region17
  $region16: #{obj_ls_d_net_forward.24} parent=0 // pred_region
    _
  $region17: #{obj_ls_d_net_forward.24} parent=0 // pred_fallthru
    _
  // Predicated region
  $region18: #{obj_ls_d_net_forward.24} parent=0 // pred_check
    _
  $region19: #{obj_ls_d_net_forward.24} parent=0 // pred_check_branch
    %280 = sbr.rel (0) target = $region21
  $region20: #{obj_ls_d_net_forward.24} parent=0 // pred_region
    _
  $region21: #{obj_ls_d_net_forward.24} parent=0 // pred_fallthru
    _

// kernel: obj_ls_d_net_forward.23
$region0: #{obj_ls_d_net_forward.23}
  #allocation0 [shape = 'u32[]', space=smem, size = 0x4, offset = 0x4, fixed_abs, tag = 'smem constant byte address 0x4 - core index']
  #allocation1 [shape = 'u32[72,128]{1,0:T(1,128)}', space=vmem, size = 0x9000, scoped, tag = 'internal scratch']
  %s0 = inlined_call_operand.vmem [shape: bf16[128,512], index: 0, kind: input, shape index: {}]
  %s1 = inlined_call_operand.vmem [shape: bf16[512,128], index: 1, kind: input, shape index: {}]
  %s2 = inlined_call_operand.vmem [shape: f32[1,128], index: 2, kind: input, shape index: {}]
  %s3 = inlined_call_operand.vmem [shape: f32[128,128], index: 3, kind: output, shape index: {}]
  %s4 = sld [smem:[#allocation0]]
  $region22: #{obj_ls_d_net_forward.23} parent=0
    _
  %s6 = ssub.s32 1, %s4
  %s7 = scalar_select 0, %s6, %s4
  // Predicated region
  $region2: #{obj_ls_d_net_forward.23} parent=0 // pred_check
    _
  $region3: #{obj_ls_d_net_forward.23} parent=0 // pred_check_branch
    %9 = sbr.rel (0) target = $region5
  $region4: #{obj_ls_d_net_forward.23} parent=0 // pred_region
    _
  $region5: #{obj_ls_d_net_forward.23} parent=0 // pred_fallthru
    _
  // Predicated region
  $region6: #{obj_ls_d_net_forward.23} parent=0 // pred_check
    _
  $region7: #{obj_ls_d_net_forward.23} parent=0 // pred_check_branch
    %11 = sbr.rel (0) target = $region9
  $region8: #{obj_ls_d_net_forward.23} parent=0 // pred_region
    _
  $region9: #{obj_ls_d_net_forward.23} parent=0 // pred_fallthru
    _
  // Predicated region
  $region10: #{obj_ls_d_net_forward.23} parent=0 // pred_check
    _
  $region11: #{obj_ls_d_net_forward.23} parent=0 // pred_check_branch
    %13 = sbr.rel (0) target = $region13
  $region12: #{obj_ls_d_net_forward.23} parent=0 // pred_region
    _
  $region13: #{obj_ls_d_net_forward.23} parent=0 // pred_fallthru
    _
  %v14 = vld [vmem:[%s0] sm:$0xff]
  %v15 = vld [vmem:[%s0 + $0x8] sm:$0xff]
  %v16 = vld [vmem:[%s0 + $0x10] sm:$0xff]
  %v17 = vld [vmem:[%s0 + $0x18] sm:$0xff]
  %v18 = vld [vmem:[%s0 + $0x20] sm:$0xff]
  %v19 = vld [vmem:[%s0 + $0x28] sm:$0xff]
  %v20 = vld [vmem:[%s0 + $0x30] sm:$0xff]
  %v21 = vld [vmem:[%s0 + $0x38] sm:$0xff]
  %v22 = vld [vmem:[%s0 + $0x40] sm:$0xff]
  %v23 = vld [vmem:[%s0 + $0x48] sm:$0xff]
  %v24 = vld [vmem:[%s0 + $0x50] sm:$0xff]
  %v25 = vld [vmem:[%s0 + $0x58] sm:$0xff]
  %v26 = vld [vmem:[%s0 + $0x60] sm:$0xff]
  %v27 = vld [vmem:[%s0 + $0x68] sm:$0xff]
  %v28 = vld [vmem:[%s0 + $0x70] sm:$0xff]
  %v29 = vld [vmem:[%s0 + $0x78] sm:$0xff]
  %v30 = vld [vmem:[%s0 + $0x80] sm:$0xff]
  %v31 = vld [vmem:[%s0 + $0x88] sm:$0xff]
  %v32 = vld [vmem:[%s0 + $0x90] sm:$0xff]
  %v33 = vld [vmem:[%s0 + $0x98] sm:$0xff]
  %v34 = vld [vmem:[%s0 + $0xa0] sm:$0xff]
  %v35 = vld [vmem:[%s0 + $0xa8] sm:$0xff]
  %v36 = vld [vmem:[%s0 + $0xb0] sm:$0xff]
  %v37 = vld [vmem:[%s0 + $0xb8] sm:$0xff]
  %v38 = vld [vmem:[%s0 + $0xc0] sm:$0xff]
  %v39 = vld [vmem:[%s0 + $0xc8] sm:$0xff]
  %v40 = vld [vmem:[%s0 + $0xd0] sm:$0xff]
  %v41 = vld [vmem:[%s0 + $0xd8] sm:$0xff]
  %v42 = vld [vmem:[%s0 + $0xe0] sm:$0xff]
  %v43 = vld [vmem:[%s0 + $0xe8] sm:$0xff]
  %v44 = vld [vmem:[%s0 + $0xf0] sm:$0xff]
  %v45 = vld [vmem:[%s0 + $0xf8] sm:$0xff]
  %v46 = vld [vmem:[%s1] sm:$0xf]
  %v47 = vld [vmem:[%s1 + $0x4] sm:$0xf]
  %v48 = vld [vmem:[%s1 + $0x8] sm:$0xf]
  %v49 = vld [vmem:[%s1 + $0xc] sm:$0xf]
  %v50 = vld [vmem:[%s1 + $0x10] sm:$0xf]
  %v51 = vld [vmem:[%s1 + $0x14] sm:$0xf]
  %v52 = vld [vmem:[%s1 + $0x18] sm:$0xf]
  %v53 = vld [vmem:[%s1 + $0x1c] sm:$0xf]
  %v54 = vld [vmem:[%s1 + $0x20] sm:$0xf]
  %v55 = vld [vmem:[%s1 + $0x24] sm:$0xf]
  %v56 = vld [vmem:[%s1 + $0x28] sm:$0xf]
  %v57 = vld [vmem:[%s1 + $0x2c] sm:$0xf]
  %v58 = vld [vmem:[%s1 + $0x30] sm:$0xf]
  %v59 = vld [vmem:[%s1 + $0x34] sm:$0xf]
  %v60 = vld [vmem:[%s1 + $0x38] sm:$0xf]
  %v61 = vld [vmem:[%s1 + $0x3c] sm:$0xf]
  %v62 = vld [vmem:[%s1 + $0x40] sm:$0xf]
  %v63 = vld [vmem:[%s1 + $0x44] sm:$0xf]
  %v64 = vld [vmem:[%s1 + $0x48] sm:$0xf]
  %v65 = vld [vmem:[%s1 + $0x4c] sm:$0xf]
  %v66 = vld [vmem:[%s1 + $0x50] sm:$0xf]
  %v67 = vld [vmem:[%s1 + $0x54] sm:$0xf]
  %v68 = vld [vmem:[%s1 + $0x58] sm:$0xf]
  %v69 = vld [vmem:[%s1 + $0x5c] sm:$0xf]
  %v70 = vld [vmem:[%s1 + $0x60] sm:$0xf]
  %v71 = vld [vmem:[%s1 + $0x64] sm:$0xf]
  %v72 = vld [vmem:[%s1 + $0x68] sm:$0xf]
  %v73 = vld [vmem:[%s1 + $0x6c] sm:$0xf]
  %v74 = vld [vmem:[%s1 + $0x70] sm:$0xf]
  %v75 = vld [vmem:[%s1 + $0x74] sm:$0xf]
  %v76 = vld [vmem:[%s1 + $0x78] sm:$0xf]
  %v77 = vld [vmem:[%s1 + $0x7c] sm:$0xf]
  %v78 = vld [vmem:[%s1 + $0x80] sm:$0xf]
  %v79 = vld [vmem:[%s1 + $0x84] sm:$0xf]
  %v80 = vld [vmem:[%s1 + $0x88] sm:$0xf]
  %v81 = vld [vmem:[%s1 + $0x8c] sm:$0xf]
  %v82 = vld [vmem:[%s1 + $0x90] sm:$0xf]
  %v83 = vld [vmem:[%s1 + $0x94] sm:$0xf]
  %v84 = vld [vmem:[%s1 + $0x98] sm:$0xf]
  %v85 = vld [vmem:[%s1 + $0x9c] sm:$0xf]
  %v86 = vld [vmem:[%s1 + $0xa0] sm:$0xf]
  %v87 = vld [vmem:[%s1 + $0xa4] sm:$0xf]
  %v88 = vld [vmem:[%s1 + $0xa8] sm:$0xf]
  %v89 = vld [vmem:[%s1 + $0xac] sm:$0xf]
  %v90 = vld [vmem:[%s1 + $0xb0] sm:$0xf]
  %v91 = vld [vmem:[%s1 + $0xb4] sm:$0xf]
  %v92 = vld [vmem:[%s1 + $0xb8] sm:$0xf]
  %v93 = vld [vmem:[%s1 + $0xbc] sm:$0xf]
  %v94 = vld [vmem:[%s1 + $0xc0] sm:$0xf]
  %v95 = vld [vmem:[%s1 + $0xc4] sm:$0xf]
  %v96 = vld [vmem:[%s1 + $0xc8] sm:$0xf]
  %v97 = vld [vmem:[%s1 + $0xcc] sm:$0xf]
  %v98 = vld [vmem:[%s1 + $0xd0] sm:$0xf]
  %v99 = vld [vmem:[%s1 + $0xd4] sm:$0xf]
  %v100 = vld [vmem:[%s1 + $0xd8] sm:$0xf]
  %v101 = vld [vmem:[%s1 + $0xdc] sm:$0xf]
  %v102 = vld [vmem:[%s1 + $0xe0] sm:$0xf]
  %v103 = vld [vmem:[%s1 + $0xe4] sm:$0xf]
  %v104 = vld [vmem:[%s1 + $0xe8] sm:$0xf]
  %v105 = vld [vmem:[%s1 + $0xec] sm:$0xf]
  %v106 = vld [vmem:[%s1 + $0xf0] sm:$0xf]
  %v107 = vld [vmem:[%s1 + $0xf4] sm:$0xf]
  %v108 = vld [vmem:[%s1 + $0xf8] sm:$0xf]
  %v109 = vld [vmem:[%s1 + $0xfc] sm:$0xf]
  %v110 = vld [vmem:[%s2] sm:$0x1]
  %v112 = vperm.slane %v110, 0
  %v146 = vunpack.c.l.b16 %v14
  %v147 = vunpack.c.h.b16 %v14
  %v148 = vunpack.c.l.b16 %v15
  %v149 = vunpack.c.h.b16 %v15
  %v150 = vunpack.c.l.b16 %v16
  %v151 = vunpack.c.h.b16 %v16
  %v152 = vunpack.c.l.b16 %v17
  %v153 = vunpack.c.h.b16 %v17
  %v154 = vunpack.c.l.b16 %v18
  %v155 = vunpack.c.h.b16 %v18
  %v156 = vunpack.c.l.b16 %v19
  %v157 = vunpack.c.h.b16 %v19
  %v158 = vunpack.c.l.b16 %v20
  %v159 = vunpack.c.h.b16 %v20
  %v160 = vunpack.c.l.b16 %v21
  %v161 = vunpack.c.h.b16 %v21
  %v162 = vunpack.c.l.b16 %v22
  %v163 = vunpack.c.h.b16 %v22
  %v164 = vunpack.c.l.b16 %v23
  %v165 = vunpack.c.h.b16 %v23
  %v166 = vunpack.c.l.b16 %v24
  %v167 = vunpack.c.h.b16 %v24
  %v168 = vunpack.c.l.b16 %v25
  %v169 = vunpack.c.h.b16 %v25
  %v170 = vunpack.c.l.b16 %v26
  %v171 = vunpack.c.h.b16 %v26
  %v172 = vunpack.c.l.b16 %v27
  %v173 = vunpack.c.h.b16 %v27
  %v174 = vunpack.c.l.b16 %v28
  %v175 = vunpack.c.h.b16 %v28
  %v176 = vunpack.c.l.b16 %v29
  %v177 = vunpack.c.h.b16 %v29
  %v178 = vunpack.c.l.b16 %v30
  %v179 = vunpack.c.h.b16 %v30
  %v180 = vunpack.c.l.b16 %v31
  %v181 = vunpack.c.h.b16 %v31
  %v182 = vunpack.c.l.b16 %v32
  %v183 = vunpack.c.h.b16 %v32
  %v184 = vunpack.c.l.b16 %v33
  %v185 = vunpack.c.h.b16 %v33
  %v186 = vunpack.c.l.b16 %v34
  %v187 = vunpack.c.h.b16 %v34
  %v188 = vunpack.c.l.b16 %v35
  %v189 = vunpack.c.h.b16 %v35
  %v190 = vunpack.c.l.b16 %v36
  %v191 = vunpack.c.h.b16 %v36
  %v192 = vunpack.c.l.b16 %v37
  %v193 = vunpack.c.h.b16 %v37
  %v194 = vunpack.c.l.b16 %v38
  %v195 = vunpack.c.h.b16 %v38
  %v196 = vunpack.c.l.b16 %v39
  %v197 = vunpack.c.h.b16 %v39
  %v198 = vunpack.c.l.b16 %v40
  %v199 = vunpack.c.h.b16 %v40
  %v200 = vunpack.c.l.b16 %v41
  %v201 = vunpack.c.h.b16 %v41
  %v202 = vunpack.c.l.b16 %v42
  %v203 = vunpack.c.h.b16 %v42
  %v204 = vunpack.c.l.b16 %v43
  %v205 = vunpack.c.h.b16 %v43
  %v206 = vunpack.c.l.b16 %v44
  %v207 = vunpack.c.h.b16 %v44
  %v208 = vunpack.c.l.b16 %v45
  %v209 = vunpack.c.h.b16 %v45
  %v210 = vpack.c.b16 %v150, %v146
  %v211 = vpack.c.b16 %v151, %v147
  %v212 = vpack.c.b16 %v152, %v148
  %v213 = vpack.c.b16 %v153, %v149
  %v214 = vpack.c.b16 %v158, %v154
  %v215 = vpack.c.b16 %v159, %v155
  %v216 = vpack.c.b16 %v160, %v156
  %v217 = vpack.c.b16 %v161, %v157
  %v218 = vpack.c.b16 %v166, %v162
  %v219 = vpack.c.b16 %v167, %v163
  %v220 = vpack.c.b16 %v168, %v164
  %v221 = vpack.c.b16 %v169, %v165
  %v222 = vpack.c.b16 %v174, %v170
  %v223 = vpack.c.b16 %v175, %v171
  %v224 = vpack.c.b16 %v176, %v172
  %v225 = vpack.c.b16 %v177, %v173
  %v226 = vpack.c.b16 %v182, %v178
  %v227 = vpack.c.b16 %v183, %v179
  %v228 = vpack.c.b16 %v184, %v180
  %v229 = vpack.c.b16 %v185, %v181
  %v230 = vpack.c.b16 %v190, %v186
  %v231 = vpack.c.b16 %v191, %v187
  %v232 = vpack.c.b16 %v192, %v188
  %v233 = vpack.c.b16 %v193, %v189
  %v234 = vpack.c.b16 %v198, %v194
  %v235 = vpack.c.b16 %v199, %v195
  %v236 = vpack.c.b16 %v200, %v196
  %v237 = vpack.c.b16 %v201, %v197
  %v238 = vpack.c.b16 %v206, %v202
  %v239 = vpack.c.b16 %v207, %v203
  %v240 = vpack.c.b16 %v208, %v204
  %v241 = vpack.c.b16 %v209, %v205
  %v338 = vunpack.c.l.b16 %v46
  %v339 = vunpack.c.l.b16 %v47
  %v340 = vunpack.c.l.b16 %v48
  %v341 = vunpack.c.l.b16 %v49
  %v342 = vunpack.c.l.b16 %v50
  %v343 = vunpack.c.l.b16 %v51
  %v344 = vunpack.c.l.b16 %v52
  %v345 = vunpack.c.l.b16 %v53
  %v346 = vunpack.c.l.b16 %v54
  %v347 = vunpack.c.l.b16 %v55
  %v348 = vunpack.c.l.b16 %v56
  %v349 = vunpack.c.l.b16 %v57
  %v350 = vunpack.c.l.b16 %v58
  %v351 = vunpack.c.l.b16 %v59
  %v352 = vunpack.c.l.b16 %v60
  %v353 = vunpack.c.l.b16 %v61
  %v354 = vunpack.c.l.b16 %v62
  %v355 = vunpack.c.l.b16 %v63
  %v356 = vunpack.c.l.b16 %v64
  %v357 = vunpack.c.l.b16 %v65
  %v358 = vunpack.c.l.b16 %v66
  %v359 = vunpack.c.l.b16 %v67
  %v360 = vunpack.c.l.b16 %v68
  %v361 = vunpack.c.l.b16 %v69
  %v362 = vunpack.c.l.b16 %v70
  %v363 = vunpack.c.l.b16 %v71
  %v364 = vunpack.c.l.b16 %v72
  %v365 = vunpack.c.l.b16 %v73
  %v366 = vunpack.c.l.b16 %v74
  %v367 = vunpack.c.l.b16 %v75
  %v368 = vunpack.c.l.b16 %v76
  %v369 = vunpack.c.l.b16 %v77
  %v370 = vunpack.c.l.b16 %v78
  %v371 = vunpack.c.l.b16 %v79
  %v372 = vunpack.c.l.b16 %v80
  %v373 = vunpack.c.l.b16 %v81
  %v374 = vunpack.c.l.b16 %v82
  %v375 = vunpack.c.l.b16 %v83
  %v376 = vunpack.c.l.b16 %v84
  %v377 = vunpack.c.l.b16 %v85
  %v378 = vunpack.c.l.b16 %v86
  %v379 = vunpack.c.l.b16 %v87
  %v380 = vunpack.c.l.b16 %v88
  %v381 = vunpack.c.l.b16 %v89
  %v382 = vunpack.c.l.b16 %v90
  %v383 = vunpack.c.l.b16 %v91
  %v384 = vunpack.c.l.b16 %v92
  %v385 = vunpack.c.l.b16 %v93
  %v386 = vunpack.c.l.b16 %v94
  %v387 = vunpack.c.l.b16 %v95
  %v388 = vunpack.c.l.b16 %v96
  %v389 = vunpack.c.l.b16 %v97
  %v390 = vunpack.c.l.b16 %v98
  %v391 = vunpack.c.l.b16 %v99
  %v392 = vunpack.c.l.b16 %v100
  %v393 = vunpack.c.l.b16 %v101
  %v394 = vunpack.c.l.b16 %v102
  %v395 = vunpack.c.l.b16 %v103
  %v396 = vunpack.c.l.b16 %v104
  %v397 = vunpack.c.l.b16 %v105
  %v398 = vunpack.c.l.b16 %v106
  %v399 = vunpack.c.l.b16 %v107
  %v400 = vunpack.c.l.b16 %v108
  %v401 = vunpack.c.l.b16 %v109
  %v402 = vpack.c.b16 %v339, %v338
  %v403 = vpack.c.b16 %v341, %v340
  %v404 = vpack.c.b16 %v343, %v342
  %v405 = vpack.c.b16 %v345, %v344
  %v406 = vpack.c.b16 %v347, %v346
  %v407 = vpack.c.b16 %v349, %v348
  %v408 = vpack.c.b16 %v351, %v350
  %v409 = vpack.c.b16 %v353, %v352
  %v410 = vpack.c.b16 %v355, %v354
  %v411 = vpack.c.b16 %v357, %v356
  %v412 = vpack.c.b16 %v359, %v358
  %v413 = vpack.c.b16 %v361, %v360
  %v414 = vpack.c.b16 %v363, %v362
  %v415 = vpack.c.b16 %v365, %v364
  %v416 = vpack.c.b16 %v367, %v366
  %v417 = vpack.c.b16 %v369, %v368
  %v418 = vpack.c.b16 %v371, %v370
  %v419 = vpack.c.b16 %v373, %v372
  %v420 = vpack.c.b16 %v375, %v374
  %v421 = vpack.c.b16 %v377, %v376
  %v422 = vpack.c.b16 %v379, %v378
  %v423 = vpack.c.b16 %v381, %v380
  %v424 = vpack.c.b16 %v383, %v382
  %v425 = vpack.c.b16 %v385, %v384
  %v426 = vpack.c.b16 %v387, %v386
  %v427 = vpack.c.b16 %v389, %v388
  %v428 = vpack.c.b16 %v391, %v390
  %v429 = vpack.c.b16 %v393, %v392
  %v430 = vpack.c.b16 %v395, %v394
  %v431 = vpack.c.b16 %v397, %v396
  %v432 = vpack.c.b16 %v399, %v398
  %v433 = vpack.c.b16 %v401, %v400
  %466 = vmatpush.bf16.msra.mxu0 %v409
  %467 = vmatpush.bf16.msra.mxu0 %v408
  %468 = vmatpush.bf16.msra.mxu0 %v407
  %469 = vmatpush.bf16.msra.mxu0 %v406
  %470 = vmatpush.bf16.msra.mxu0 %v405
  %471 = vmatpush.bf16.msra.mxu0 %v404
  %472 = vmatpush.bf16.msra.mxu0 %v403
  %473 = vmatpush.bf16.msra.mxu0 %v402
  %474 = vmatmul.bf16.gmra.mxu0 %v210
  %v475 = vpop.f32.mrf.mxu0
  %v476 = vadd.f32 %v112, %v475
  %v477 = vpop.f32.mrf.mxu0
  %v478 = vadd.f32 %v112, %v477
  %479 = vmatmul.bf16.gmra.mxu0 %v214
  %v480 = vpop.f32.mrf.mxu0
  %v481 = vadd.f32 %v112, %v480
  %v482 = vpop.f32.mrf.mxu0
  %v483 = vadd.f32 %v112, %v482
  %484 = vmatmul.bf16.gmra.mxu0 %v218
  %v485 = vpop.f32.mrf.mxu0
  %v486 = vadd.f32 %v112, %v485
  %v487 = vpop.f32.mrf.mxu0
  %v488 = vadd.f32 %v112, %v487
  %489 = vmatmul.bf16.gmra.mxu0 %v222
  %v490 = vpop.f32.mrf.mxu0
  %v491 = vadd.f32 %v112, %v490
  %v492 = vpop.f32.mrf.mxu0
  %v493 = vadd.f32 %v112, %v492
  %494 = vmatmul.bf16.gmra.mxu0 %v226
  %v495 = vpop.f32.mrf.mxu0
  %v496 = vadd.f32 %v112, %v495
  %v497 = vpop.f32.mrf.mxu0
  %v498 = vadd.f32 %v112, %v497
  %499 = vmatmul.bf16.gmra.mxu0 %v230
  %v500 = vpop.f32.mrf.mxu0
  %v501 = vadd.f32 %v112, %v500
  %v502 = vpop.f32.mrf.mxu0
  %v503 = vadd.f32 %v112, %v502
  %504 = vmatmul.bf16.gmra.mxu0 %v234
  %v505 = vpop.f32.mrf.mxu0
  %v506 = vadd.f32 %v112, %v505
  %v507 = vpop.f32.mrf.mxu0
  %v508 = vadd.f32 %v112, %v507
  %509 = vmatmul.bf16.gmra.mxu0 %v238
  %v510 = vpop.f32.mrf.mxu0
  %v511 = vadd.f32 %v112, %v510
  %v512 = vpop.f32.mrf.mxu0
  %v513 = vadd.f32 %v112, %v512
  %514 = vdwg.mxu0
  %515 = vmatpush.bf16.msra.mxu0 %v417
  %516 = vmatpush.bf16.msra.mxu0 %v416
  %517 = vmatpush.bf16.msra.mxu0 %v415
  %518 = vmatpush.bf16.msra.mxu0 %v414
  %519 = vmatpush.bf16.msra.mxu0 %v413
  %520 = vmatpush.bf16.msra.mxu0 %v412
  %521 = vmatpush.bf16.msra.mxu0 %v411
  %522 = vmatpush.bf16.msra.mxu0 %v410
  %523 = vmatmul.bf16.gmra.mxu0 %v211
  %v524 = vpop.f32.mrf.mxu0
  %v525 = vadd.f32 %v476, %v524
  %v526 = vpop.f32.mrf.mxu0
  %v527 = vadd.f32 %v478, %v526
  %528 = vmatmul.bf16.gmra.mxu0 %v215
  %v529 = vpop.f32.mrf.mxu0
  %v530 = vadd.f32 %v481, %v529
  %v531 = vpop.f32.mrf.mxu0
  %v532 = vadd.f32 %v483, %v531
  %533 = vmatmul.bf16.gmra.mxu0 %v219
  %v534 = vpop.f32.mrf.mxu0
  %v535 = vadd.f32 %v486, %v534
  %v536 = vpop.f32.mrf.mxu0
  %v537 = vadd.f32 %v488, %v536
  %538 = vmatmul.bf16.gmra.mxu0 %v223
  %v539 = vpop.f32.mrf.mxu0
  %v540 = vadd.f32 %v491, %v539
  %v541 = vpop.f32.mrf.mxu0
  %v542 = vadd.f32 %v493, %v541
  %543 = vmatmul.bf16.gmra.mxu0 %v227
  %v544 = vpop.f32.mrf.mxu0
  %v545 = vadd.f32 %v496, %v544
  %v546 = vpop.f32.mrf.mxu0
  %v547 = vadd.f32 %v498, %v546
  %548 = vmatmul.bf16.gmra.mxu0 %v231
  %v549 = vpop.f32.mrf.mxu0
  %v550 = vadd.f32 %v501, %v549
  %v551 = vpop.f32.mrf.mxu0
  %v552 = vadd.f32 %v503, %v551
  %553 = vmatmul.bf16.gmra.mxu0 %v235
  %v554 = vpop.f32.mrf.mxu0
  %v555 = vadd.f32 %v506, %v554
  %v556 = vpop.f32.mrf.mxu0
  %v557 = vadd.f32 %v508, %v556
  %558 = vmatmul.bf16.gmra.mxu0 %v239
  %v559 = vpop.f32.mrf.mxu0
  %v560 = vadd.f32 %v511, %v559
  %v561 = vpop.f32.mrf.mxu0
  %v562 = vadd.f32 %v513, %v561
  %563 = vdwg.mxu0
  %564 = vmatpush.bf16.msra.mxu0 %v425
  %565 = vmatpush.bf16.msra.mxu0 %v424
  %566 = vmatpush.bf16.msra.mxu0 %v423
  %567 = vmatpush.bf16.msra.mxu0 %v422
  %568 = vmatpush.bf16.msra.mxu0 %v421
  %569 = vmatpush.bf16.msra.mxu0 %v420
  %570 = vmatpush.bf16.msra.mxu0 %v419
  %571 = vmatpush.bf16.msra.mxu0 %v418
  %572 = vmatmul.bf16.gmra.mxu0 %v212
  %v573 = vpop.f32.mrf.mxu0
  %v574 = vadd.f32 %v525, %v573
  %v575 = vpop.f32.mrf.mxu0
  %v576 = vadd.f32 %v527, %v575
  %577 = vmatmul.bf16.gmra.mxu0 %v216
  %v578 = vpop.f32.mrf.mxu0
  %v579 = vadd.f32 %v530, %v578
  %v580 = vpop.f32.mrf.mxu0
  %v581 = vadd.f32 %v532, %v580
  %582 = vmatmul.bf16.gmra.mxu0 %v220
  %v583 = vpop.f32.mrf.mxu0
  %v584 = vadd.f32 %v535, %v583
  %v585 = vpop.f32.mrf.mxu0
  %v586 = vadd.f32 %v537, %v585
  %587 = vmatmul.bf16.gmra.mxu0 %v224
  %v588 = vpop.f32.mrf.mxu0
  %v589 = vadd.f32 %v540, %v588
  %v590 = vpop.f32.mrf.mxu0
  %v591 = vadd.f32 %v542, %v590
  %592 = vmatmul.bf16.gmra.mxu0 %v228
  %v593 = vpop.f32.mrf.mxu0
  %v594 = vadd.f32 %v545, %v593
  %v595 = vpop.f32.mrf.mxu0
  %v596 = vadd.f32 %v547, %v595
  %597 = vmatmul.bf16.gmra.mxu0 %v232
  %v598 = vpop.f32.mrf.mxu0
  %v599 = vadd.f32 %v550, %v598
  %v600 = vpop.f32.mrf.mxu0
  %v601 = vadd.f32 %v552, %v600
  %602 = vmatmul.bf16.gmra.mxu0 %v236
  %v603 = vpop.f32.mrf.mxu0
  %v604 = vadd.f32 %v555, %v603
  %v605 = vpop.f32.mrf.mxu0
  %v606 = vadd.f32 %v557, %v605
  %607 = vmatmul.bf16.gmra.mxu0 %v240
  %v608 = vpop.f32.mrf.mxu0
  %v609 = vadd.f32 %v560, %v608
  %v610 = vpop.f32.mrf.mxu0
  %v611 = vadd.f32 %v562, %v610
  %612 = vdwg.mxu0
  %613 = vmatpush.bf16.msra.mxu0 %v433
  %614 = vmatpush.bf16.msra.mxu0 %v432
  %615 = vmatpush.bf16.msra.mxu0 %v431
  %616 = vmatpush.bf16.msra.mxu0 %v430
  %617 = vmatpush.bf16.msra.mxu0 %v429
  %618 = vmatpush.bf16.msra.mxu0 %v428
  %619 = vmatpush.bf16.msra.mxu0 %v427
  %620 = vmatpush.bf16.msra.mxu0 %v426
  %621 = vmatmul.bf16.gmra.mxu0 %v213
  %v622 = vpop.f32.mrf.mxu0
  %v623 = vadd.f32 %v574, %v622
  %v624 = vpop.f32.mrf.mxu0
  %v625 = vadd.f32 %v576, %v624
  %626 = vmatmul.bf16.gmra.mxu0 %v217
  %v627 = vpop.f32.mrf.mxu0
  %v628 = vadd.f32 %v579, %v627
  %v629 = vpop.f32.mrf.mxu0
  %v630 = vadd.f32 %v581, %v629
  %631 = vmatmul.bf16.gmra.mxu0 %v221
  %v632 = vpop.f32.mrf.mxu0
  %v633 = vadd.f32 %v584, %v632
  %v634 = vpop.f32.mrf.mxu0
  %v635 = vadd.f32 %v586, %v634
  %636 = vmatmul.bf16.gmra.mxu0 %v225
  %v637 = vpop.f32.mrf.mxu0
  %v638 = vadd.f32 %v589, %v637
  %v639 = vpop.f32.mrf.mxu0
  %v640 = vadd.f32 %v591, %v639
  %641 = vmatmul.bf16.gmra.mxu0 %v229
  %v642 = vpop.f32.mrf.mxu0
  %v643 = vadd.f32 %v594, %v642
  %v644 = vpop.f32.mrf.mxu0
  %v645 = vadd.f32 %v596, %v644
  %646 = vmatmul.bf16.gmra.mxu0 %v233
  %v647 = vpop.f32.mrf.mxu0
  %v648 = vadd.f32 %v599, %v647
  %v649 = vpop.f32.mrf.mxu0
  %v650 = vadd.f32 %v601, %v649
  %651 = vmatmul.bf16.gmra.mxu0 %v237
  %v652 = vpop.f32.mrf.mxu0
  %v653 = vadd.f32 %v604, %v652
  %v654 = vpop.f32.mrf.mxu0
  %v655 = vadd.f32 %v606, %v654
  %656 = vmatmul.bf16.gmra.mxu0 %v241
  %v657 = vpop.f32.mrf.mxu0
  %v658 = vadd.f32 %v609, %v657
  %v659 = vpop.f32.mrf.mxu0
  %v660 = vadd.f32 %v611, %v659
  %661 = vdwg.mxu0
  %662 = vst [vmem:[%s3] sm:$0xff] %v623
  %663 = vst [vmem:[%s3 + $0x8] sm:$0xff] %v625
  %664 = vst [vmem:[%s3 + $0x10] sm:$0xff] %v628
  %665 = vst [vmem:[%s3 + $0x18] sm:$0xff] %v630
  %666 = vst [vmem:[%s3 + $0x20] sm:$0xff] %v633
  %667 = vst [vmem:[%s3 + $0x28] sm:$0xff] %v635
  %668 = vst [vmem:[%s3 + $0x30] sm:$0xff] %v638
  %669 = vst [vmem:[%s3 + $0x38] sm:$0xff] %v640
  %670 = vst [vmem:[%s3 + $0x40] sm:$0xff] %v643
  %671 = vst [vmem:[%s3 + $0x48] sm:$0xff] %v645
  %672 = vst [vmem:[%s3 + $0x50] sm:$0xff] %v648
  %673 = vst [vmem:[%s3 + $0x58] sm:$0xff] %v650
  %674 = vst [vmem:[%s3 + $0x60] sm:$0xff] %v653
  %675 = vst [vmem:[%s3 + $0x68] sm:$0xff] %v655
  %676 = vst [vmem:[%s3 + $0x70] sm:$0xff] %v658
  %677 = vst [vmem:[%s3 + $0x78] sm:$0xff] %v660
  // Predicated region
  $region14: #{obj_ls_d_net_forward.23} parent=0 // pred_check
    _
  $region15: #{obj_ls_d_net_forward.23} parent=0 // pred_check_branch
    %679 = sbr.rel (0) target = $region17
  $region16: #{obj_ls_d_net_forward.23} parent=0 // pred_region
    _
  $region17: #{obj_ls_d_net_forward.23} parent=0 // pred_fallthru
    _
  // Predicated region
  $region18: #{obj_ls_d_net_forward.23} parent=0 // pred_check
    _
  $region19: #{obj_ls_d_net_forward.23} parent=0 // pred_check_branch
    %681 = sbr.rel (0) target = $region21
  $region20: #{obj_ls_d_net_forward.23} parent=0 // pred_region
    _
  $region21: #{obj_ls_d_net_forward.23} parent=0 // pred_fallthru
    _

// kernel: obj_ls_d_net_forward.26
$region0: #{obj_ls_d_net_forward.26}
  #allocation0 [shape = 'u32[]', space=smem, size = 0x4, offset = 0x4, fixed_abs, tag = 'smem constant byte address 0x4 - core index']
  #allocation1 [shape = 'u32[72,128]{1,0:T(1,128)}', space=vmem, size = 0x9000, scoped, tag = 'internal scratch']
  %s0 = inlined_call_operand.vmem [shape: f32[32,128], index: 0, kind: input, shape index: {}]
  %s1 = inlined_call_operand.vmem [shape: f32[1,128], index: 1, kind: input, shape index: {}]
  %s2 = inlined_call_operand.vmem [shape: f32[1,128], index: 2, kind: input, shape index: {}]
  %s3 = inlined_call_operand.vmem [shape: f32[32,128], index: 3, kind: output, shape index: {}]
  %s4 = sld [smem:[#allocation0]]
  $region22: #{obj_ls_d_net_forward.26} parent=0
    _
  %s6 = ssub.s32 1, %s4
  %s7 = scalar_select 0, %s6, %s4
  // Predicated region
  $region2: #{obj_ls_d_net_forward.26} parent=0 // pred_check
    _
  $region3: #{obj_ls_d_net_forward.26} parent=0 // pred_check_branch
    %9 = sbr.rel (0) target = $region5
  $region4: #{obj_ls_d_net_forward.26} parent=0 // pred_region
    _
  $region5: #{obj_ls_d_net_forward.26} parent=0 // pred_fallthru
    _
  // Predicated region
  $region6: #{obj_ls_d_net_forward.26} parent=0 // pred_check
    _
  $region7: #{obj_ls_d_net_forward.26} parent=0 // pred_check_branch
    %11 = sbr.rel (0) target = $region9
  $region8: #{obj_ls_d_net_forward.26} parent=0 // pred_region
    _
  $region9: #{obj_ls_d_net_forward.26} parent=0 // pred_fallthru
    _
  // Predicated region
  $region10: #{obj_ls_d_net_forward.26} parent=0 // pred_check
    _
  $region11: #{obj_ls_d_net_forward.26} parent=0 // pred_check_branch
    %13 = sbr.rel (0) target = $region13
  $region12: #{obj_ls_d_net_forward.26} parent=0 // pred_region
    _
  $region13: #{obj_ls_d_net_forward.26} parent=0 // pred_fallthru
    _
  %v14 = vld [vmem:[%s0] sm:$0xff]
  %v15 = vld [vmem:[%s0 + $0x8] sm:$0xff]
  %v16 = vld [vmem:[%s0 + $0x10] sm:$0xff]
  %v17 = vld [vmem:[%s0 + $0x18] sm:$0xff]
  %v18 = vadd.f32 %v14, %v15
  %v19 = vadd.f32 %v18, %v16
  %v20 = vadd.f32 %v19, %v17
  %v21 = vrot.slane %v20, 4
  %v22 = vadd.f32 %v20, %v21
  %v23 = vrot.slane %v22, 2
  %v24 = vadd.f32 %v22, %v23
  %v25 = vrot.slane %v24, 1
  %v26 = vadd.f32 %v24, %v25
  %v27 = vrcp.pop 32.0
  %v28 = vmul.f32 32.0, %v27
  %v29 = vsub.f32 1.0, %v28
  %v30 = vmul.f32 %v27, %v29
  %v31 = vadd.f32 %v27, %v30
  %vm32 = vweird.f32 %v27
  %v33 = vsel %vm32, %v27, %v31
  %v34 = vmul.f32 %v26, %v33
  %v35 = vsub.f32 %v14, %v34
  %v36 = vsub.f32 %v15, %v34
  %v37 = vsub.f32 %v16, %v34
  %v38 = vsub.f32 %v17, %v34
  %v39 = vmul.f32 %v35, %v35
  %v40 = vmul.f32 %v36, %v36
  %v41 = vmul.f32 %v37, %v37
  %v42 = vmul.f32 %v38, %v38
  %v43 = vadd.f32 %v39, %v40
  %v44 = vadd.f32 %v43, %v41
  %v45 = vadd.f32 %v44, %v42
  %v46 = vrot.slane %v45, 4
  %v47 = vadd.f32 %v45, %v46
  %v48 = vrot.slane %v47, 2
  %v49 = vadd.f32 %v47, %v48
  %v50 = vrot.slane %v49, 1
  %v51 = vadd.f32 %v49, %v50
  %v52 = vmul.f32 %v51, %v33
  %v53 = vadd.f32 %v52, 1e-05
  %v54 = vrsqrt.pop %v53
  %v55 = vmul.f32 %v54, %v53
  %v56 = vmul.f32 %v55, %v54
  %v57 = vmul.f32 0.5, %v56
  %v58 = vsub.f32 1.5, %v57
  %v59 = vmul.f32 %v54, %v58
  %vm60 = vweird.f32 %v53
  %vm61 = vweird.f32 %v54
  %vm62 = vmor %vm60, %vm61
  %v63 = vsel %vm62, %v54, %v59
  %v64 = vmul.f32 %v35, %v63
  %v65 = vmul.f32 %v36, %v63
  %v66 = vmul.f32 %v37, %v63
  %v67 = vmul.f32 %v38, %v63
  %v68 = vld [vmem:[%s1] sm:$0x1]
  %v70 = vperm.slane %v68, 0
  %v72 = vmul.f32 %v64, %v70
  %v73 = vmul.f32 %v65, %v70
  %v74 = vmul.f32 %v66, %v70
  %v75 = vmul.f32 %v67, %v70
  %v76 = vld [vmem:[%s2] sm:$0x1]
  %v78 = vperm.slane %v76, 0
  %v80 = vadd.f32 %v72, %v78
  %v81 = vadd.f32 %v73, %v78
  %v82 = vadd.f32 %v74, %v78
  %v83 = vadd.f32 %v75, %v78
  %vm84 = vcmp.ge.f32.partialorder %v80, 0.0
  %vm85 = vcmp.ge.f32.partialorder %v81, 0.0
  %vm86 = vcmp.ge.f32.partialorder %v82, 0.0
  %vm87 = vcmp.ge.f32.partialorder %v83, 0.0
  %v88 = vmul.f32 %v80, 0.2
  %v89 = vmul.f32 %v81, 0.2
  %v90 = vmul.f32 %v82, 0.2
  %v91 = vmul.f32 %v83, 0.2
  %v92 = vsel %vm84, %v80, %v88
  %v93 = vsel %vm85, %v81, %v89
  %v94 = vsel %vm86, %v82, %v90
  %v95 = vsel %vm87, %v83, %v91
  %96 = vst [vmem:[%s3] sm:$0xff] %v92
  %97 = vst [vmem:[%s3 + $0x8] sm:$0xff] %v93
  %98 = vst [vmem:[%s3 + $0x10] sm:$0xff] %v94
  %99 = vst [vmem:[%s3 + $0x18] sm:$0xff] %v95
  // Predicated region
  $region14: #{obj_ls_d_net_forward.26} parent=0 // pred_check
    _
  $region15: #{obj_ls_d_net_forward.26} parent=0 // pred_check_branch
    %101 = sbr.rel (0) target = $region17
  $region16: #{obj_ls_d_net_forward.26} parent=0 // pred_region
    _
  $region17: #{obj_ls_d_net_forward.26} parent=0 // pred_fallthru
    _
  // Predicated region
  $region18: #{obj_ls_d_net_forward.26} parent=0 // pred_check
    _
  $region19: #{obj_ls_d_net_forward.26} parent=0 // pred_check_branch
    %103 = sbr.rel (0) target = $region21
  $region20: #{obj_ls_d_net_forward.26} parent=0 // pred_region
    _
  $region21: #{obj_ls_d_net_forward.26} parent=0 // pred_fallthru
    _

// kernel: obj_ls_d_net_forward.25
$region0: #{obj_ls_d_net_forward.25}
  #allocation0 [shape = 'u32[]', space=smem, size = 0x4, offset = 0x4, fixed_abs, tag = 'smem constant byte address 0x4 - core index']
  #allocation1 [shape = 'u32[72,128]{1,0:T(1,128)}', space=vmem, size = 0x9000, scoped, tag = 'internal scratch']
  %s0 = inlined_call_operand.vmem [shape: bf16[32,1024], index: 0, kind: input, shape index: {}]
  %s1 = inlined_call_operand.vmem [shape: bf16[1024,128], index: 1, kind: input, shape index: {}]
  %s2 = inlined_call_operand.vmem [shape: f32[1,128], index: 2, kind: input, shape index: {}]
  %s3 = inlined_call_operand.vmem [shape: f32[32,128], index: 3, kind: output, shape index: {}]
  %s4 = sld [smem:[#allocation0]]
  $region22: #{obj_ls_d_net_forward.25} parent=0
    _
  %s6 = ssub.s32 1, %s4
  %s7 = scalar_select 0, %s6, %s4
  // Predicated region
  $region2: #{obj_ls_d_net_forward.25} parent=0 // pred_check
    _
  $region3: #{obj_ls_d_net_forward.25} parent=0 // pred_check_branch
    %9 = sbr.rel (0) target = $region5
  $region4: #{obj_ls_d_net_forward.25} parent=0 // pred_region
    _
  $region5: #{obj_ls_d_net_forward.25} parent=0 // pred_fallthru
    _
  // Predicated region
  $region6: #{obj_ls_d_net_forward.25} parent=0 // pred_check
    _
  $region7: #{obj_ls_d_net_forward.25} parent=0 // pred_check_branch
    %11 = sbr.rel (0) target = $region9
  $region8: #{obj_ls_d_net_forward.25} parent=0 // pred_region
    _
  $region9: #{obj_ls_d_net_forward.25} parent=0 // pred_fallthru
    _
  // Predicated region
  $region10: #{obj_ls_d_net_forward.25} parent=0 // pred_check
    _
  $region11: #{obj_ls_d_net_forward.25} parent=0 // pred_check_branch
    %13 = sbr.rel (0) target = $region13
  $region12: #{obj_ls_d_net_forward.25} parent=0 // pred_region
    _
  $region13: #{obj_ls_d_net_forward.25} parent=0 // pred_fallthru
    _
  %v14 = vld [vmem:[%s0] sm:$0xff]
  %v15 = vld [vmem:[%s0 + $0x8] sm:$0xff]
  %v16 = vld [vmem:[%s0 + $0x10] sm:$0xff]
  %v17 = vld [vmem:[%s0 + $0x18] sm:$0xff]
  %v18 = vld [vmem:[%s0 + $0x20] sm:$0xff]
  %v19 = vld [vmem:[%s0 + $0x28] sm:$0xff]
  %v20 = vld [vmem:[%s0 + $0x30] sm:$0xff]
  %v21 = vld [vmem:[%s0 + $0x38] sm:$0xff]
  %v22 = vld [vmem:[%s0 + $0x40] sm:$0xff]
  %v23 = vld [vmem:[%s0 + $0x48] sm:$0xff]
  %v24 = vld [vmem:[%s0 + $0x50] sm:$0xff]
  %v25 = vld [vmem:[%s0 + $0x58] sm:$0xff]
  %v26 = vld [vmem:[%s0 + $0x60] sm:$0xff]
  %v27 = vld [vmem:[%s0 + $0x68] sm:$0xff]
  %v28 = vld [vmem:[%s0 + $0x70] sm:$0xff]
  %v29 = vld [vmem:[%s0 + $0x78] sm:$0xff]
  %v30 = vld [vmem:[%s1] sm:$0xf]
  %v31 = vld [vmem:[%s1 + $0x4] sm:$0xf]
  %v32 = vld [vmem:[%s1 + $0x8] sm:$0xf]
  %v33 = vld [vmem:[%s1 + $0xc] sm:$0xf]
  %v34 = vld [vmem:[%s1 + $0x10] sm:$0xf]
  %v35 = vld [vmem:[%s1 + $0x14] sm:$0xf]
  %v36 = vld [vmem:[%s1 + $0x18] sm:$0xf]
  %v37 = vld [vmem:[%s1 + $0x1c] sm:$0xf]
  %v38 = vld [vmem:[%s1 + $0x20] sm:$0xf]
  %v39 = vld [vmem:[%s1 + $0x24] sm:$0xf]
  %v40 = vld [vmem:[%s1 + $0x28] sm:$0xf]
  %v41 = vld [vmem:[%s1 + $0x2c] sm:$0xf]
  %v42 = vld [vmem:[%s1 + $0x30] sm:$0xf]
  %v43 = vld [vmem:[%s1 + $0x34] sm:$0xf]
  %v44 = vld [vmem:[%s1 + $0x38] sm:$0xf]
  %v45 = vld [vmem:[%s1 + $0x3c] sm:$0xf]
  %v46 = vld [vmem:[%s1 + $0x40] sm:$0xf]
  %v47 = vld [vmem:[%s1 + $0x44] sm:$0xf]
  %v48 = vld [vmem:[%s1 + $0x48] sm:$0xf]
  %v49 = vld [vmem:[%s1 + $0x4c] sm:$0xf]
  %v50 = vld [vmem:[%s1 + $0x50] sm:$0xf]
  %v51 = vld [vmem:[%s1 + $0x54] sm:$0xf]
  %v52 = vld [vmem:[%s1 + $0x58] sm:$0xf]
  %v53 = vld [vmem:[%s1 + $0x5c] sm:$0xf]
  %v54 = vld [vmem:[%s1 + $0x60] sm:$0xf]
  %v55 = vld [vmem:[%s1 + $0x64] sm:$0xf]
  %v56 = vld [vmem:[%s1 + $0x68] sm:$0xf]
  %v57 = vld [vmem:[%s1 + $0x6c] sm:$0xf]
  %v58 = vld [vmem:[%s1 + $0x70] sm:$0xf]
  %v59 = vld [vmem:[%s1 + $0x74] sm:$0xf]
  %v60 = vld [vmem:[%s1 + $0x78] sm:$0xf]
  %v61 = vld [vmem:[%s1 + $0x7c] sm:$0xf]
  %v62 = vld [vmem:[%s1 + $0x80] sm:$0xf]
  %v63 = vld [vmem:[%s1 + $0x84] sm:$0xf]
  %v64 = vld [vmem:[%s1 + $0x88] sm:$0xf]
  %v65 = vld [vmem:[%s1 + $0x8c] sm:$0xf]
  %v66 = vld [vmem:[%s1 + $0x90] sm:$0xf]
  %v67 = vld [vmem:[%s1 + $0x94] sm:$0xf]
  %v68 = vld [vmem:[%s1 + $0x98] sm:$0xf]
  %v69 = vld [vmem:[%s1 + $0x9c] sm:$0xf]
  %v70 = vld [vmem:[%s1 + $0xa0] sm:$0xf]
  %v71 = vld [vmem:[%s1 + $0xa4] sm:$0xf]
  %v72 = vld [vmem:[%s1 + $0xa8] sm:$0xf]
  %v73 = vld [vmem:[%s1 + $0xac] sm:$0xf]
  %v74 = vld [vmem:[%s1 + $0xb0] sm:$0xf]
  %v75 = vld [vmem:[%s1 + $0xb4] sm:$0xf]
  %v76 = vld [vmem:[%s1 + $0xb8] sm:$0xf]
  %v77 = vld [vmem:[%s1 + $0xbc] sm:$0xf]
  %v78 = vld [vmem:[%s1 + $0xc0] sm:$0xf]
  %v79 = vld [vmem:[%s1 + $0xc4] sm:$0xf]
  %v80 = vld [vmem:[%s1 + $0xc8] sm:$0xf]
  %v81 = vld [vmem:[%s1 + $0xcc] sm:$0xf]
  %v82 = vld [vmem:[%s1 + $0xd0] sm:$0xf]
  %v83 = vld [vmem:[%s1 + $0xd4] sm:$0xf]
  %v84 = vld [vmem:[%s1 + $0xd8] sm:$0xf]
  %v85 = vld [vmem:[%s1 + $0xdc] sm:$0xf]
  %v86 = vld [vmem:[%s1 + $0xe0] sm:$0xf]
  %v87 = vld [vmem:[%s1 + $0xe4] sm:$0xf]
  %v88 = vld [vmem:[%s1 + $0xe8] sm:$0xf]
  %v89 = vld [vmem:[%s1 + $0xec] sm:$0xf]
  %v90 = vld [vmem:[%s1 + $0xf0] sm:$0xf]
  %v91 = vld [vmem:[%s1 + $0xf4] sm:$0xf]
  %v92 = vld [vmem:[%s1 + $0xf8] sm:$0xf]
  %v93 = vld [vmem:[%s1 + $0xfc] sm:$0xf]
  %v94 = vld [vmem:[%s1 + $0x100] sm:$0xf]
  %v95 = vld [vmem:[%s1 + $0x104] sm:$0xf]
  %v96 = vld [vmem:[%s1 + $0x108] sm:$0xf]
  %v97 = vld [vmem:[%s1 + $0x10c] sm:$0xf]
  %v98 = vld [vmem:[%s1 + $0x110] sm:$0xf]
  %v99 = vld [vmem:[%s1 + $0x114] sm:$0xf]
  %v100 = vld [vmem:[%s1 + $0x118] sm:$0xf]
  %v101 = vld [vmem:[%s1 + $0x11c] sm:$0xf]
  %v102 = vld [vmem:[%s1 + $0x120] sm:$0xf]
  %v103 = vld [vmem:[%s1 + $0x124] sm:$0xf]
  %v104 = vld [vmem:[%s1 + $0x128] sm:$0xf]
  %v105 = vld [vmem:[%s1 + $0x12c] sm:$0xf]
  %v106 = vld [vmem:[%s1 + $0x130] sm:$0xf]
  %v107 = vld [vmem:[%s1 + $0x134] sm:$0xf]
  %v108 = vld [vmem:[%s1 + $0x138] sm:$0xf]
  %v109 = vld [vmem:[%s1 + $0x13c] sm:$0xf]
  %v110 = vld [vmem:[%s1 + $0x140] sm:$0xf]
  %v111 = vld [vmem:[%s1 + $0x144] sm:$0xf]
  %v112 = vld [vmem:[%s1 + $0x148] sm:$0xf]
  %v113 = vld [vmem:[%s1 + $0x14c] sm:$0xf]
  %v114 = vld [vmem:[%s1 + $0x150] sm:$0xf]
  %v115 = vld [vmem:[%s1 + $0x154] sm:$0xf]
  %v116 = vld [vmem:[%s1 + $0x158] sm:$0xf]
  %v117 = vld [vmem:[%s1 + $0x15c] sm:$0xf]
  %v118 = vld [vmem:[%s1 + $0x160] sm:$0xf]
  %v119 = vld [vmem:[%s1 + $0x164] sm:$0xf]
  %v120 = vld [vmem:[%s1 + $0x168] sm:$0xf]
  %v121 = vld [vmem:[%s1 + $0x16c] sm:$0xf]
  %v122 = vld [vmem:[%s1 + $0x170] sm:$0xf]
  %v123 = vld [vmem:[%s1 + $0x174] sm:$0xf]
  %v124 = vld [vmem:[%s1 + $0x178] sm:$0xf]
  %v125 = vld [vmem:[%s1 + $0x17c] sm:$0xf]
  %v126 = vld [vmem:[%s1 + $0x180] sm:$0xf]
  %v127 = vld [vmem:[%s1 + $0x184] sm:$0xf]
  %v128 = vld [vmem:[%s1 + $0x188] sm:$0xf]
  %v129 = vld [vmem:[%s1 + $0x18c] sm:$0xf]
  %v130 = vld [vmem:[%s1 + $0x190] sm:$0xf]
  %v131 = vld [vmem:[%s1 + $0x194] sm:$0xf]
  %v132 = vld [vmem:[%s1 + $0x198] sm:$0xf]
  %v133 = vld [vmem:[%s1 + $0x19c] sm:$0xf]
  %v134 = vld [vmem:[%s1 + $0x1a0] sm:$0xf]
  %v135 = vld [vmem:[%s1 + $0x1a4] sm:$0xf]
  %v136 = vld [vmem:[%s1 + $0x1a8] sm:$0xf]
  %v137 = vld [vmem:[%s1 + $0x1ac] sm:$0xf]
  %v138 = vld [vmem:[%s1 + $0x1b0] sm:$0xf]
  %v139 = vld [vmem:[%s1 + $0x1b4] sm:$0xf]
  %v140 = vld [vmem:[%s1 + $0x1b8] sm:$0xf]
  %v141 = vld [vmem:[%s1 + $0x1bc] sm:$0xf]
  %v142 = vld [vmem:[%s1 + $0x1c0] sm:$0xf]
  %v143 = vld [vmem:[%s1 + $0x1c4] sm:$0xf]
  %v144 = vld [vmem:[%s1 + $0x1c8] sm:$0xf]
  %v145 = vld [vmem:[%s1 + $0x1cc] sm:$0xf]
  %v146 = vld [vmem:[%s1 + $0x1d0] sm:$0xf]
  %v147 = vld [vmem:[%s1 + $0x1d4] sm:$0xf]
  %v148 = vld [vmem:[%s1 + $0x1d8] sm:$0xf]
  %v149 = vld [vmem:[%s1 + $0x1dc] sm:$0xf]
  %v150 = vld [vmem:[%s1 + $0x1e0] sm:$0xf]
  %v151 = vld [vmem:[%s1 + $0x1e4] sm:$0xf]
  %v152 = vld [vmem:[%s1 + $0x1e8] sm:$0xf]
  %v153 = vld [vmem:[%s1 + $0x1ec] sm:$0xf]
  %v154 = vld [vmem:[%s1 + $0x1f0] sm:$0xf]
  %v155 = vld [vmem:[%s1 + $0x1f4] sm:$0xf]
  %v156 = vld [vmem:[%s1 + $0x1f8] sm:$0xf]
  %v157 = vld [vmem:[%s1 + $0x1fc] sm:$0xf]
  %v158 = vld [vmem:[%s2] sm:$0x1]
  %v160 = vperm.slane %v158, 0
  %v178 = vunpack.c.l.b16 %v14
  %v179 = vunpack.c.h.b16 %v14
  %v180 = vunpack.c.l.b16 %v15
  %v181 = vunpack.c.h.b16 %v15
  %v182 = vunpack.c.l.b16 %v16
  %v183 = vunpack.c.h.b16 %v16
  %v184 = vunpack.c.l.b16 %v17
  %v185 = vunpack.c.h.b16 %v17
  %v186 = vunpack.c.l.b16 %v18
  %v187 = vunpack.c.h.b16 %v18
  %v188 = vunpack.c.l.b16 %v19
  %v189 = vunpack.c.h.b16 %v19
  %v190 = vunpack.c.l.b16 %v20
  %v191 = vunpack.c.h.b16 %v20
  %v192 = vunpack.c.l.b16 %v21
  %v193 = vunpack.c.h.b16 %v21
  %v194 = vunpack.c.l.b16 %v22
  %v195 = vunpack.c.h.b16 %v22
  %v196 = vunpack.c.l.b16 %v23
  %v197 = vunpack.c.h.b16 %v23
  %v198 = vunpack.c.l.b16 %v24
  %v199 = vunpack.c.h.b16 %v24
  %v200 = vunpack.c.l.b16 %v25
  %v201 = vunpack.c.h.b16 %v25
  %v202 = vunpack.c.l.b16 %v26
  %v203 = vunpack.c.h.b16 %v26
  %v204 = vunpack.c.l.b16 %v27
  %v205 = vunpack.c.h.b16 %v27
  %v206 = vunpack.c.l.b16 %v28
  %v207 = vunpack.c.h.b16 %v28
  %v208 = vunpack.c.l.b16 %v29
  %v209 = vunpack.c.h.b16 %v29
  %v210 = vpack.c.b16 %v186, %v178
  %v211 = vpack.c.b16 %v187, %v179
  %v212 = vpack.c.b16 %v188, %v180
  %v213 = vpack.c.b16 %v189, %v181
  %v214 = vpack.c.b16 %v190, %v182
  %v215 = vpack.c.b16 %v191, %v183
  %v216 = vpack.c.b16 %v192, %v184
  %v217 = vpack.c.b16 %v193, %v185
  %v218 = vpack.c.b16 %v202, %v194
  %v219 = vpack.c.b16 %v203, %v195
  %v220 = vpack.c.b16 %v204, %v196
  %v221 = vpack.c.b16 %v205, %v197
  %v222 = vpack.c.b16 %v206, %v198
  %v223 = vpack.c.b16 %v207, %v199
  %v224 = vpack.c.b16 %v208, %v200
  %v225 = vpack.c.b16 %v209, %v201
  %v370 = vunpack.c.l.b16 %v30
  %v371 = vunpack.c.l.b16 %v31
  %v372 = vunpack.c.l.b16 %v32
  %v373 = vunpack.c.l.b16 %v33
  %v374 = vunpack.c.l.b16 %v34
  %v375 = vunpack.c.l.b16 %v35
  %v376 = vunpack.c.l.b16 %v36
  %v377 = vunpack.c.l.b16 %v37
  %v378 = vunpack.c.l.b16 %v38
  %v379 = vunpack.c.l.b16 %v39
  %v380 = vunpack.c.l.b16 %v40
  %v381 = vunpack.c.l.b16 %v41
  %v382 = vunpack.c.l.b16 %v42
  %v383 = vunpack.c.l.b16 %v43
  %v384 = vunpack.c.l.b16 %v44
  %v385 = vunpack.c.l.b16 %v45
  %v386 = vunpack.c.l.b16 %v46
  %v387 = vunpack.c.l.b16 %v47
  %v388 = vunpack.c.l.b16 %v48
  %v389 = vunpack.c.l.b16 %v49
  %v390 = vunpack.c.l.b16 %v50
  %v391 = vunpack.c.l.b16 %v51
  %v392 = vunpack.c.l.b16 %v52
  %v393 = vunpack.c.l.b16 %v53
  %v394 = vunpack.c.l.b16 %v54
  %v395 = vunpack.c.l.b16 %v55
  %v396 = vunpack.c.l.b16 %v56
  %v397 = vunpack.c.l.b16 %v57
  %v398 = vunpack.c.l.b16 %v58
  %v399 = vunpack.c.l.b16 %v59
  %v400 = vunpack.c.l.b16 %v60
  %v401 = vunpack.c.l.b16 %v61
  %v402 = vunpack.c.l.b16 %v62
  %v403 = vunpack.c.l.b16 %v63
  %v404 = vunpack.c.l.b16 %v64
  %v405 = vunpack.c.l.b16 %v65
  %v406 = vunpack.c.l.b16 %v66
  %v407 = vunpack.c.l.b16 %v67
  %v408 = vunpack.c.l.b16 %v68
  %v409 = vunpack.c.l.b16 %v69
  %v410 = vunpack.c.l.b16 %v70
  %v411 = vunpack.c.l.b16 %v71
  %v412 = vunpack.c.l.b16 %v72
  %v413 = vunpack.c.l.b16 %v73
  %v414 = vunpack.c.l.b16 %v74
  %v415 = vunpack.c.l.b16 %v75
  %v416 = vunpack.c.l.b16 %v76
  %v417 = vunpack.c.l.b16 %v77
  %v418 = vunpack.c.l.b16 %v78
  %v419 = vunpack.c.l.b16 %v79
  %v420 = vunpack.c.l.b16 %v80
  %v421 = vunpack.c.l.b16 %v81
  %v422 = vunpack.c.l.b16 %v82
  %v423 = vunpack.c.l.b16 %v83
  %v424 = vunpack.c.l.b16 %v84
  %v425 = vunpack.c.l.b16 %v85
  %v426 = vunpack.c.l.b16 %v86
  %v427 = vunpack.c.l.b16 %v87
  %v428 = vunpack.c.l.b16 %v88
  %v429 = vunpack.c.l.b16 %v89
  %v430 = vunpack.c.l.b16 %v90
  %v431 = vunpack.c.l.b16 %v91
  %v432 = vunpack.c.l.b16 %v92
  %v433 = vunpack.c.l.b16 %v93
  %v434 = vunpack.c.l.b16 %v94
  %v435 = vunpack.c.l.b16 %v95
  %v436 = vunpack.c.l.b16 %v96
  %v437 = vunpack.c.l.b16 %v97
  %v438 = vunpack.c.l.b16 %v98
  %v439 = vunpack.c.l.b16 %v99
  %v440 = vunpack.c.l.b16 %v100
  %v441 = vunpack.c.l.b16 %v101
  %v442 = vunpack.c.l.b16 %v102
  %v443 = vunpack.c.l.b16 %v103
  %v444 = vunpack.c.l.b16 %v104
  %v445 = vunpack.c.l.b16 %v105
  %v446 = vunpack.c.l.b16 %v106
  %v447 = vunpack.c.l.b16 %v107
  %v448 = vunpack.c.l.b16 %v108
  %v449 = vunpack.c.l.b16 %v109
  %v450 = vunpack.c.l.b16 %v110
  %v451 = vunpack.c.l.b16 %v111
  %v452 = vunpack.c.l.b16 %v112
  %v453 = vunpack.c.l.b16 %v113
  %v454 = vunpack.c.l.b16 %v114
  %v455 = vunpack.c.l.b16 %v115
  %v456 = vunpack.c.l.b16 %v116
  %v457 = vunpack.c.l.b16 %v117
  %v458 = vunpack.c.l.b16 %v118
  %v459 = vunpack.c.l.b16 %v119
  %v460 = vunpack.c.l.b16 %v120
  %v461 = vunpack.c.l.b16 %v121
  %v462 = vunpack.c.l.b16 %v122
  %v463 = vunpack.c.l.b16 %v123
  %v464 = vunpack.c.l.b16 %v124
  %v465 = vunpack.c.l.b16 %v125
  %v466 = vunpack.c.l.b16 %v126
  %v467 = vunpack.c.l.b16 %v127
  %v468 = vunpack.c.l.b16 %v128
  %v469 = vunpack.c.l.b16 %v129
  %v470 = vunpack.c.l.b16 %v130
  %v471 = vunpack.c.l.b16 %v131
  %v472 = vunpack.c.l.b16 %v132
  %v473 = vunpack.c.l.b16 %v133
  %v474 = vunpack.c.l.b16 %v134
  %v475 = vunpack.c.l.b16 %v135
  %v476 = vunpack.c.l.b16 %v136
  %v477 = vunpack.c.l.b16 %v137
  %v478 = vunpack.c.l.b16 %v138
  %v479 = vunpack.c.l.b16 %v139
  %v480 = vunpack.c.l.b16 %v140
  %v481 = vunpack.c.l.b16 %v141
  %v482 = vunpack.c.l.b16 %v142
  %v483 = vunpack.c.l.b16 %v143
  %v484 = vunpack.c.l.b16 %v144
  %v485 = vunpack.c.l.b16 %v145
  %v486 = vunpack.c.l.b16 %v146
  %v487 = vunpack.c.l.b16 %v147
  %v488 = vunpack.c.l.b16 %v148
  %v489 = vunpack.c.l.b16 %v149
  %v490 = vunpack.c.l.b16 %v150
  %v491 = vunpack.c.l.b16 %v151
  %v492 = vunpack.c.l.b16 %v152
  %v493 = vunpack.c.l.b16 %v153
  %v494 = vunpack.c.l.b16 %v154
  %v495 = vunpack.c.l.b16 %v155
  %v496 = vunpack.c.l.b16 %v156
  %v497 = vunpack.c.l.b16 %v157
  %v498 = vpack.c.b16 %v371, %v370
  %v499 = vpack.c.b16 %v373, %v372
  %v500 = vpack.c.b16 %v375, %v374
  %v501 = vpack.c.b16 %v377, %v376
  %v502 = vpack.c.b16 %v379, %v378
  %v503 = vpack.c.b16 %v381, %v380
  %v504 = vpack.c.b16 %v383, %v382
  %v505 = vpack.c.b16 %v385, %v384
  %v506 = vpack.c.b16 %v387, %v386
  %v507 = vpack.c.b16 %v389, %v388
  %v508 = vpack.c.b16 %v391, %v390
  %v509 = vpack.c.b16 %v393, %v392
  %v510 = vpack.c.b16 %v395, %v394
  %v511 = vpack.c.b16 %v397, %v396
  %v512 = vpack.c.b16 %v399, %v398
  %v513 = vpack.c.b16 %v401, %v400
  %v514 = vpack.c.b16 %v403, %v402
  %v515 = vpack.c.b16 %v405, %v404
  %v516 = vpack.c.b16 %v407, %v406
  %v517 = vpack.c.b16 %v409, %v408
  %v518 = vpack.c.b16 %v411, %v410
  %v519 = vpack.c.b16 %v413, %v412
  %v520 = vpack.c.b16 %v415, %v414
  %v521 = vpack.c.b16 %v417, %v416
  %v522 = vpack.c.b16 %v419, %v418
  %v523 = vpack.c.b16 %v421, %v420
  %v524 = vpack.c.b16 %v423, %v422
  %v525 = vpack.c.b16 %v425, %v424
  %v526 = vpack.c.b16 %v427, %v426
  %v527 = vpack.c.b16 %v429, %v428
  %v528 = vpack.c.b16 %v431, %v430
  %v529 = vpack.c.b16 %v433, %v432
  %v530 = vpack.c.b16 %v435, %v434
  %v531 = vpack.c.b16 %v437, %v436
  %v532 = vpack.c.b16 %v439, %v438
  %v533 = vpack.c.b16 %v441, %v440
  %v534 = vpack.c.b16 %v443, %v442
  %v535 = vpack.c.b16 %v445, %v444
  %v536 = vpack.c.b16 %v447, %v446
  %v537 = vpack.c.b16 %v449, %v448
  %v538 = vpack.c.b16 %v451, %v450
  %v539 = vpack.c.b16 %v453, %v452
  %v540 = vpack.c.b16 %v455, %v454
  %v541 = vpack.c.b16 %v457, %v456
  %v542 = vpack.c.b16 %v459, %v458
  %v543 = vpack.c.b16 %v461, %v460
  %v544 = vpack.c.b16 %v463, %v462
  %v545 = vpack.c.b16 %v465, %v464
  %v546 = vpack.c.b16 %v467, %v466
  %v547 = vpack.c.b16 %v469, %v468
  %v548 = vpack.c.b16 %v471, %v470
  %v549 = vpack.c.b16 %v473, %v472
  %v550 = vpack.c.b16 %v475, %v474
  %v551 = vpack.c.b16 %v477, %v476
  %v552 = vpack.c.b16 %v479, %v478
  %v553 = vpack.c.b16 %v481, %v480
  %v554 = vpack.c.b16 %v483, %v482
  %v555 = vpack.c.b16 %v485, %v484
  %v556 = vpack.c.b16 %v487, %v486
  %v557 = vpack.c.b16 %v489, %v488
  %v558 = vpack.c.b16 %v491, %v490
  %v559 = vpack.c.b16 %v493, %v492
  %v560 = vpack.c.b16 %v495, %v494
  %v561 = vpack.c.b16 %v497, %v496
  %626 = vmatpush.bf16.msra.mxu0 %v505
  %627 = vmatpush.bf16.msra.mxu0 %v504
  %628 = vmatpush.bf16.msra.mxu0 %v503
  %629 = vmatpush.bf16.msra.mxu0 %v502
  %630 = vmatpush.bf16.msra.mxu0 %v501
  %631 = vmatpush.bf16.msra.mxu0 %v500
  %632 = vmatpush.bf16.msra.mxu0 %v499
  %633 = vmatpush.bf16.msra.mxu0 %v498
  %634 = vmatmul.bf16.gmra.mxu0 %v210
  %v635 = vpop.f32.mrf.mxu0
  %v636 = vadd.f32 %v160, %v635
  %v637 = vpop.f32.mrf.mxu0
  %v638 = vadd.f32 %v160, %v637
  %639 = vmatmul.bf16.gmra.mxu0 %v218
  %v640 = vpop.f32.mrf.mxu0
  %v641 = vadd.f32 %v160, %v640
  %v642 = vpop.f32.mrf.mxu0
  %v643 = vadd.f32 %v160, %v642
  %644 = vdwg.mxu0
  %645 = vmatpush.bf16.msra.mxu0 %v513
  %646 = vmatpush.bf16.msra.mxu0 %v512
  %647 = vmatpush.bf16.msra.mxu0 %v511
  %648 = vmatpush.bf16.msra.mxu0 %v510
  %649 = vmatpush.bf16.msra.mxu0 %v509
  %650 = vmatpush.bf16.msra.mxu0 %v508
  %651 = vmatpush.bf16.msra.mxu0 %v507
  %652 = vmatpush.bf16.msra.mxu0 %v506
  %653 = vmatmul.bf16.gmra.mxu0 %v211
  %v654 = vpop.f32.mrf.mxu0
  %v655 = vadd.f32 %v636, %v654
  %v656 = vpop.f32.mrf.mxu0
  %v657 = vadd.f32 %v638, %v656
  %658 = vmatmul.bf16.gmra.mxu0 %v219
  %v659 = vpop.f32.mrf.mxu0
  %v660 = vadd.f32 %v641, %v659
  %v661 = vpop.f32.mrf.mxu0
  %v662 = vadd.f32 %v643, %v661
  %663 = vdwg.mxu0
  %664 = vmatpush.bf16.msra.mxu0 %v521
  %665 = vmatpush.bf16.msra.mxu0 %v520
  %666 = vmatpush.bf16.msra.mxu0 %v519
  %667 = vmatpush.bf16.msra.mxu0 %v518
  %668 = vmatpush.bf16.msra.mxu0 %v517
  %669 = vmatpush.bf16.msra.mxu0 %v516
  %670 = vmatpush.bf16.msra.mxu0 %v515
  %671 = vmatpush.bf16.msra.mxu0 %v514
  %672 = vmatmul.bf16.gmra.mxu0 %v212
  %v673 = vpop.f32.mrf.mxu0
  %v674 = vadd.f32 %v655, %v673
  %v675 = vpop.f32.mrf.mxu0
  %v676 = vadd.f32 %v657, %v675
  %677 = vmatmul.bf16.gmra.mxu0 %v220
  %v678 = vpop.f32.mrf.mxu0
  %v679 = vadd.f32 %v660, %v678
  %v680 = vpop.f32.mrf.mxu0
  %v681 = vadd.f32 %v662, %v680
  %682 = vdwg.mxu0
  %683 = vmatpush.bf16.msra.mxu0 %v529
  %684 = vmatpush.bf16.msra.mxu0 %v528
  %685 = vmatpush.bf16.msra.mxu0 %v527
  %686 = vmatpush.bf16.msra.mxu0 %v526
  %687 = vmatpush.bf16.msra.mxu0 %v525
  %688 = vmatpush.bf16.msra.mxu0 %v524
  %689 = vmatpush.bf16.msra.mxu0 %v523
  %690 = vmatpush.bf16.msra.mxu0 %v522
  %691 = vmatmul.bf16.gmra.mxu0 %v213
  %v692 = vpop.f32.mrf.mxu0
  %v693 = vadd.f32 %v674, %v692
  %v694 = vpop.f32.mrf.mxu0
  %v695 = vadd.f32 %v676, %v694
  %696 = vmatmul.bf16.gmra.mxu0 %v221
  %v697 = vpop.f32.mrf.mxu0
  %v698 = vadd.f32 %v679, %v697
  %v699 = vpop.f32.mrf.mxu0
  %v700 = vadd.f32 %v681, %v699
  %701 = vdwg.mxu0
  %702 = vmatpush.bf16.msra.mxu0 %v537
  %703 = vmatpush.bf16.msra.mxu0 %v536
  %704 = vmatpush.bf16.msra.mxu0 %v535
  %705 = vmatpush.bf16.msra.mxu0 %v534
  %706 = vmatpush.bf16.msra.mxu0 %v533
  %707 = vmatpush.bf16.msra.mxu0 %v532
  %708 = vmatpush.bf16.msra.mxu0 %v531
  %709 = vmatpush.bf16.msra.mxu0 %v530
  %710 = vmatmul.bf16.gmra.mxu0 %v214
  %v711 = vpop.f32.mrf.mxu0
  %v712 = vadd.f32 %v693, %v711
  %v713 = vpop.f32.mrf.mxu0
  %v714 = vadd.f32 %v695, %v713
  %715 = vmatmul.bf16.gmra.mxu0 %v222
  %v716 = vpop.f32.mrf.mxu0
  %v717 = vadd.f32 %v698, %v716
  %v718 = vpop.f32.mrf.mxu0
  %v719 = vadd.f32 %v700, %v718
  %720 = vdwg.mxu0
  %721 = vmatpush.bf16.msra.mxu0 %v545
  %722 = vmatpush.bf16.msra.mxu0 %v544
  %723 = vmatpush.bf16.msra.mxu0 %v543
  %724 = vmatpush.bf16.msra.mxu0 %v542
  %725 = vmatpush.bf16.msra.mxu0 %v541
  %726 = vmatpush.bf16.msra.mxu0 %v540
  %727 = vmatpush.bf16.msra.mxu0 %v539
  %728 = vmatpush.bf16.msra.mxu0 %v538
  %729 = vmatmul.bf16.gmra.mxu0 %v215
  %v730 = vpop.f32.mrf.mxu0
  %v731 = vadd.f32 %v712, %v730
  %v732 = vpop.f32.mrf.mxu0
  %v733 = vadd.f32 %v714, %v732
  %734 = vmatmul.bf16.gmra.mxu0 %v223
  %v735 = vpop.f32.mrf.mxu0
  %v736 = vadd.f32 %v717, %v735
  %v737 = vpop.f32.mrf.mxu0
  %v738 = vadd.f32 %v719, %v737
  %739 = vdwg.mxu0
  %740 = vmatpush.bf16.msra.mxu0 %v553
  %741 = vmatpush.bf16.msra.mxu0 %v552
  %742 = vmatpush.bf16.msra.mxu0 %v551
  %743 = vmatpush.bf16.msra.mxu0 %v550
  %744 = vmatpush.bf16.msra.mxu0 %v549
  %745 = vmatpush.bf16.msra.mxu0 %v548
  %746 = vmatpush.bf16.msra.mxu0 %v547
  %747 = vmatpush.bf16.msra.mxu0 %v546
  %748 = vmatmul.bf16.gmra.mxu0 %v216
  %v749 = vpop.f32.mrf.mxu0
  %v750 = vadd.f32 %v731, %v749
  %v751 = vpop.f32.mrf.mxu0
  %v752 = vadd.f32 %v733, %v751
  %753 = vmatmul.bf16.gmra.mxu0 %v224
  %v754 = vpop.f32.mrf.mxu0
  %v755 = vadd.f32 %v736, %v754
  %v756 = vpop.f32.mrf.mxu0
  %v757 = vadd.f32 %v738, %v756
  %758 = vdwg.mxu0
  %759 = vmatpush.bf16.msra.mxu0 %v561
  %760 = vmatpush.bf16.msra.mxu0 %v560
  %761 = vmatpush.bf16.msra.mxu0 %v559
  %762 = vmatpush.bf16.msra.mxu0 %v558
  %763 = vmatpush.bf16.msra.mxu0 %v557
  %764 = vmatpush.bf16.msra.mxu0 %v556
  %765 = vmatpush.bf16.msra.mxu0 %v555
  %766 = vmatpush.bf16.msra.mxu0 %v554
  %767 = vmatmul.bf16.gmra.mxu0 %v217
  %v768 = vpop.f32.mrf.mxu0
  %v769 = vadd.f32 %v750, %v768
  %v770 = vpop.f32.mrf.mxu0
  %v771 = vadd.f32 %v752, %v770
  %772 = vmatmul.bf16.gmra.mxu0 %v225
  %v773 = vpop.f32.mrf.mxu0
  %v774 = vadd.f32 %v755, %v773
  %v775 = vpop.f32.mrf.mxu0
  %v776 = vadd.f32 %v757, %v775
  %777 = vdwg.mxu0
  %778 = vst [vmem:[%s3] sm:$0xff] %v769
  %779 = vst [vmem:[%s3 + $0x8] sm:$0xff] %v771
  %780 = vst [vmem:[%s3 + $0x10] sm:$0xff] %v774
  %781 = vst [vmem:[%s3 + $0x18] sm:$0xff] %v776
  // Predicated region
  $region14: #{obj_ls_d_net_forward.25} parent=0 // pred_check
    _
  $region15: #{obj_ls_d_net_forward.25} parent=0 // pred_check_branch
    %783 = sbr.rel (0) target = $region17
  $region16: #{obj_ls_d_net_forward.25} parent=0 // pred_region
    _
  $region17: #{obj_ls_d_net_forward.25} parent=0 // pred_fallthru
    _
  // Predicated region
  $region18: #{obj_ls_d_net_forward.25} parent=0 // pred_check
    _
  $region19: #{obj_ls_d_net_forward.25} parent=0 // pred_check_branch
    %785 = sbr.rel (0) target = $region21
  $region20: #{obj_ls_d_net_forward.25} parent=0 // pred_region
    _
  $region21: #{obj_ls_d_net_forward.25} parent=0 // pred_fallthru
    _

// kernel: obj_ls_d_net_forward.27
$region0: #{obj_ls_d_net_forward.27}
  #allocation0 [shape = 'u32[]', space=smem, size = 0x4, offset = 0x4, fixed_abs, tag = 'smem constant byte address 0x4 - core index']
  #allocation1 [shape = 'u32[72,128]{1,0:T(1,128)}', space=vmem, size = 0x9000, scoped, tag = 'internal scratch']
  %s0 = inlined_call_operand.vmem [shape: bf16[54,2048], index: 0, kind: input, shape index: {}]
  %s1 = inlined_call_operand.vmem [shape: bf16[2048,128], index: 1, kind: input, shape index: {}]
  %s2 = inlined_call_operand.vmem [shape: f32[1,128], index: 2, kind: input, shape index: {}]
  %s3 = inlined_call_operand.vmem [shape: f32[54,128], index: 3, kind: output, shape index: {}]
  %s4 = sld [smem:[#allocation0]]
  $region22: #{obj_ls_d_net_forward.27} parent=0
    _
  %s6 = ssub.s32 1, %s4
  %s7 = scalar_select 0, %s6, %s4
  // Predicated region
  $region2: #{obj_ls_d_net_forward.27} parent=0 // pred_check
    _
  $region3: #{obj_ls_d_net_forward.27} parent=0 // pred_check_branch
    %9 = sbr.rel (0) target = $region5
  $region4: #{obj_ls_d_net_forward.27} parent=0 // pred_region
    _
  $region5: #{obj_ls_d_net_forward.27} parent=0 // pred_fallthru
    _
  // Predicated region
  $region6: #{obj_ls_d_net_forward.27} parent=0 // pred_check
    _
  $region7: #{obj_ls_d_net_forward.27} parent=0 // pred_check_branch
    %11 = sbr.rel (0) target = $region9
  $region8: #{obj_ls_d_net_forward.27} parent=0 // pred_region
    _
  $region9: #{obj_ls_d_net_forward.27} parent=0 // pred_fallthru
    _
  // Predicated region
  $region10: #{obj_ls_d_net_forward.27} parent=0 // pred_check
    _
  $region11: #{obj_ls_d_net_forward.27} parent=0 // pred_check_branch
    %13 = sbr.rel (0) target = $region13
  $region12: #{obj_ls_d_net_forward.27} parent=0 // pred_region
    _
  $region13: #{obj_ls_d_net_forward.27} parent=0 // pred_fallthru
    _
  %v14 = vld [vmem:[%s0] sm:$0xff]
  %v15 = vld [vmem:[%s0 + $0x8] sm:$0xff]
  %v16 = vld [vmem:[%s0 + $0x10] sm:$0xff]
  %v17 = vld [vmem:[%s0 + $0x18] sm:$0xff]
  %v18 = vld [vmem:[%s0 + $0x20] sm:$0xff]
  %v19 = vld [vmem:[%s0 + $0x28] sm:$0xff]
  %v20 = vld [vmem:[%s0 + $0x30] sm:$0xff]
  %v21 = vld [vmem:[%s0 + $0x38] sm:$0xff]
  %v22 = vld [vmem:[%s0 + $0x40] sm:$0xff]
  %v23 = vld [vmem:[%s0 + $0x48] sm:$0xff]
  %v24 = vld [vmem:[%s0 + $0x50] sm:$0xff]
  %v25 = vld [vmem:[%s0 + $0x58] sm:$0xff]
  %v26 = vld [vmem:[%s0 + $0x60] sm:$0xff]
  %v27 = vld [vmem:[%s0 + $0x68] sm:$0xff]
  %v28 = vld [vmem:[%s0 + $0x70] sm:$0xff]
  %v29 = vld [vmem:[%s0 + $0x78] sm:$0xff]
  %v30 = vld [vmem:[%s0 + $0x80] sm:$0xff]
  %v31 = vld [vmem:[%s0 + $0x88] sm:$0xff]
  %v32 = vld [vmem:[%s0 + $0x90] sm:$0xff]
  %v33 = vld [vmem:[%s0 + $0x98] sm:$0xff]
  %v34 = vld [vmem:[%s0 + $0xa0] sm:$0xff]
  %v35 = vld [vmem:[%s0 + $0xa8] sm:$0xff]
  %v36 = vld [vmem:[%s0 + $0xb0] sm:$0xff]
  %v37 = vld [vmem:[%s0 + $0xb8] sm:$0xff]
  %v38 = vld [vmem:[%s0 + $0xc0] sm:$0xff]
  %v39 = vld [vmem:[%s0 + $0xc8] sm:$0xff]
  %v40 = vld [vmem:[%s0 + $0xd0] sm:$0xff]
  %v41 = vld [vmem:[%s0 + $0xd8] sm:$0xff]
  %v42 = vld [vmem:[%s0 + $0xe0] sm:$0xff]
  %v43 = vld [vmem:[%s0 + $0xe8] sm:$0xff]
  %v44 = vld [vmem:[%s0 + $0xf0] sm:$0xff]
  %v45 = vld [vmem:[%s0 + $0xf8] sm:$0xff]
  %v46 = vld [vmem:[%s0 + $0x100] sm:$0xff]
  %v47 = vld [vmem:[%s0 + $0x108] sm:$0xff]
  %v48 = vld [vmem:[%s0 + $0x110] sm:$0xff]
  %v49 = vld [vmem:[%s0 + $0x118] sm:$0xff]
  %v50 = vld [vmem:[%s0 + $0x120] sm:$0xff]
  %v51 = vld [vmem:[%s0 + $0x128] sm:$0xff]
  %v52 = vld [vmem:[%s0 + $0x130] sm:$0xff]
  %v53 = vld [vmem:[%s0 + $0x138] sm:$0xff]
  %v54 = vld [vmem:[%s0 + $0x140] sm:$0xff]
  %v55 = vld [vmem:[%s0 + $0x148] sm:$0xff]
  %v56 = vld [vmem:[%s0 + $0x150] sm:$0xff]
  %v57 = vld [vmem:[%s0 + $0x158] sm:$0xff]
  %v58 = vld [vmem:[%s0 + $0x160] sm:$0xff]
  %v59 = vld [vmem:[%s0 + $0x168] sm:$0xff]
  %v60 = vld [vmem:[%s0 + $0x170] sm:$0xff]
  %v61 = vld [vmem:[%s0 + $0x178] sm:$0xff]
  %v62 = vld [vmem:[%s0 + $0x180] sm:$0x77]
  %v63 = vld [vmem:[%s0 + $0x188] sm:$0x77]
  %v64 = vld [vmem:[%s0 + $0x190] sm:$0x77]
  %v65 = vld [vmem:[%s0 + $0x198] sm:$0x77]
  %v66 = vld [vmem:[%s0 + $0x1a0] sm:$0x77]
  %v67 = vld [vmem:[%s0 + $0x1a8] sm:$0x77]
  %v68 = vld [vmem:[%s0 + $0x1b0] sm:$0x77]
  %v69 = vld [vmem:[%s0 + $0x1b8] sm:$0x77]
  %v70 = vld [vmem:[%s1] sm:$0xf]
  %v71 = vld [vmem:[%s1 + $0x4] sm:$0xf]
  %v72 = vld [vmem:[%s1 + $0x8] sm:$0xf]
  %v73 = vld [vmem:[%s1 + $0xc] sm:$0xf]
  %v74 = vld [vmem:[%s1 + $0x10] sm:$0xf]
  %v75 = vld [vmem:[%s1 + $0x14] sm:$0xf]
  %v76 = vld [vmem:[%s1 + $0x18] sm:$0xf]
  %v77 = vld [vmem:[%s1 + $0x1c] sm:$0xf]
  %v78 = vld [vmem:[%s1 + $0x20] sm:$0xf]
  %v79 = vld [vmem:[%s1 + $0x24] sm:$0xf]
  %v80 = vld [vmem:[%s1 + $0x28] sm:$0xf]
  %v81 = vld [vmem:[%s1 + $0x2c] sm:$0xf]
  %v82 = vld [vmem:[%s1 + $0x30] sm:$0xf]
  %v83 = vld [vmem:[%s1 + $0x34] sm:$0xf]
  %v84 = vld [vmem:[%s1 + $0x38] sm:$0xf]
  %v85 = vld [vmem:[%s1 + $0x3c] sm:$0xf]
  %v86 = vld [vmem:[%s1 + $0x40] sm:$0xf]
  %v87 = vld [vmem:[%s1 + $0x44] sm:$0xf]
  %v88 = vld [vmem:[%s1 + $0x48] sm:$0xf]
  %v89 = vld [vmem:[%s1 + $0x4c] sm:$0xf]
  %v90 = vld [vmem:[%s1 + $0x50] sm:$0xf]
  %v91 = vld [vmem:[%s1 + $0x54] sm:$0xf]
  %v92 = vld [vmem:[%s1 + $0x58] sm:$0xf]
  %v93 = vld [vmem:[%s1 + $0x5c] sm:$0xf]
  %v94 = vld [vmem:[%s1 + $0x60] sm:$0xf]
  %v95 = vld [vmem:[%s1 + $0x64] sm:$0xf]
  %v96 = vld [vmem:[%s1 + $0x68] sm:$0xf]
  %v97 = vld [vmem:[%s1 + $0x6c] sm:$0xf]
  %v98 = vld [vmem:[%s1 + $0x70] sm:$0xf]
  %v99 = vld [vmem:[%s1 + $0x74] sm:$0xf]
  %v100 = vld [vmem:[%s1 + $0x78] sm:$0xf]
  %v101 = vld [vmem:[%s1 + $0x7c] sm:$0xf]
  %v102 = vld [vmem:[%s1 + $0x80] sm:$0xf]
  %v103 = vld [vmem:[%s1 + $0x84] sm:$0xf]
  %v104 = vld [vmem:[%s1 + $0x88] sm:$0xf]
  %v105 = vld [vmem:[%s1 + $0x8c] sm:$0xf]
  %v106 = vld [vmem:[%s1 + $0x90] sm:$0xf]
  %v107 = vld [vmem:[%s1 + $0x94] sm:$0xf]
  %v108 = vld [vmem:[%s1 + $0x98] sm:$0xf]
  %v109 = vld [vmem:[%s1 + $0x9c] sm:$0xf]
  %v110 = vld [vmem:[%s1 + $0xa0] sm:$0xf]
  %v111 = vld [vmem:[%s1 + $0xa4] sm:$0xf]
  %v112 = vld [vmem:[%s1 + $0xa8] sm:$0xf]
  %v113 = vld [vmem:[%s1 + $0xac] sm:$0xf]
  %v114 = vld [vmem:[%s1 + $0xb0] sm:$0xf]
  %v115 = vld [vmem:[%s1 + $0xb4] sm:$0xf]
  %v116 = vld [vmem:[%s1 + $0xb8] sm:$0xf]
  %v117 = vld [vmem:[%s1 + $0xbc] sm:$0xf]
  %v118 = vld [vmem:[%s1 + $0xc0] sm:$0xf]
  %v119 = vld [vmem:[%s1 + $0xc4] sm:$0xf]
  %v120 = vld [vmem:[%s1 + $0xc8] sm:$0xf]
  %v121 = vld [vmem:[%s1 + $0xcc] sm:$0xf]
  %v122 = vld [vmem:[%s1 + $0xd0] sm:$0xf]
  %v123 = vld [vmem:[%s1 + $0xd4] sm:$0xf]
  %v124 = vld [vmem:[%s1 + $0xd8] sm:$0xf]
  %v125 = vld [vmem:[%s1 + $0xdc] sm:$0xf]
  %v126 = vld [vmem:[%s1 + $0xe0] sm:$0xf]
  %v127 = vld [vmem:[%s1 + $0xe4] sm:$0xf]
  %v128 = vld [vmem:[%s1 + $0xe8] sm:$0xf]
  %v129 = vld [vmem:[%s1 + $0xec] sm:$0xf]
  %v130 = vld [vmem:[%s1 + $0xf0] sm:$0xf]
  %v131 = vld [vmem:[%s1 + $0xf4] sm:$0xf]
  %v132 = vld [vmem:[%s1 + $0xf8] sm:$0xf]
  %v133 = vld [vmem:[%s1 + $0xfc] sm:$0xf]
  %v134 = vld [vmem:[%s1 + $0x100] sm:$0xf]
  %v135 = vld [vmem:[%s1 + $0x104] sm:$0xf]
  %v136 = vld [vmem:[%s1 + $0x108] sm:$0xf]
  %v137 = vld [vmem:[%s1 + $0x10c] sm:$0xf]
  %v138 = vld [vmem:[%s1 + $0x110] sm:$0xf]
  %v139 = vld [vmem:[%s1 + $0x114] sm:$0xf]
  %v140 = vld [vmem:[%s1 + $0x118] sm:$0xf]
  %v141 = vld [vmem:[%s1 + $0x11c] sm:$0xf]
  %v142 = vld [vmem:[%s1 + $0x120] sm:$0xf]
  %v143 = vld [vmem:[%s1 + $0x124] sm:$0xf]
  %v144 = vld [vmem:[%s1 + $0x128] sm:$0xf]
  %v145 = vld [vmem:[%s1 + $0x12c] sm:$0xf]
  %v146 = vld [vmem:[%s1 + $0x130] sm:$0xf]
  %v147 = vld [vmem:[%s1 + $0x134] sm:$0xf]
  %v148 = vld [vmem:[%s1 + $0x138] sm:$0xf]
  %v149 = vld [vmem:[%s1 + $0x13c] sm:$0xf]
  %v150 = vld [vmem:[%s1 + $0x140] sm:$0xf]
  %v151 = vld [vmem:[%s1 + $0x144] sm:$0xf]
  %v152 = vld [vmem:[%s1 + $0x148] sm:$0xf]
  %v153 = vld [vmem:[%s1 + $0x14c] sm:$0xf]
  %v154 = vld [vmem:[%s1 + $0x150] sm:$0xf]
  %v155 = vld [vmem:[%s1 + $0x154] sm:$0xf]
  %v156 = vld [vmem:[%s1 + $0x158] sm:$0xf]
  %v157 = vld [vmem:[%s1 + $0x15c] sm:$0xf]
  %v158 = vld [vmem:[%s1 + $0x160] sm:$0xf]
  %v159 = vld [vmem:[%s1 + $0x164] sm:$0xf]
  %v160 = vld [vmem:[%s1 + $0x168] sm:$0xf]
  %v161 = vld [vmem:[%s1 + $0x16c] sm:$0xf]
  %v162 = vld [vmem:[%s1 + $0x170] sm:$0xf]
  %v163 = vld [vmem:[%s1 + $0x174] sm:$0xf]
  %v164 = vld [vmem:[%s1 + $0x178] sm:$0xf]
  %v165 = vld [vmem:[%s1 + $0x17c] sm:$0xf]
  %v166 = vld [vmem:[%s1 + $0x180] sm:$0xf]
  %v167 = vld [vmem:[%s1 + $0x184] sm:$0xf]
  %v168 = vld [vmem:[%s1 + $0x188] sm:$0xf]
  %v169 = vld [vmem:[%s1 + $0x18c] sm:$0xf]
  %v170 = vld [vmem:[%s1 + $0x190] sm:$0xf]
  %v171 = vld [vmem:[%s1 + $0x194] sm:$0xf]
  %v172 = vld [vmem:[%s1 + $0x198] sm:$0xf]
  %v173 = vld [vmem:[%s1 + $0x19c] sm:$0xf]
  %v174 = vld [vmem:[%s1 + $0x1a0] sm:$0xf]
  %v175 = vld [vmem:[%s1 + $0x1a4] sm:$0xf]
  %v176 = vld [vmem:[%s1 + $0x1a8] sm:$0xf]
  %v177 = vld [vmem:[%s1 + $0x1ac] sm:$0xf]
  %v178 = vld [vmem:[%s1 + $0x1b0] sm:$0xf]
  %v179 = vld [vmem:[%s1 + $0x1b4] sm:$0xf]
  %v180 = vld [vmem:[%s1 + $0x1b8] sm:$0xf]
  %v181 = vld [vmem:[%s1 + $0x1bc] sm:$0xf]
  %v182 = vld [vmem:[%s1 + $0x1c0] sm:$0xf]
  %v183 = vld [vmem:[%s1 + $0x1c4] sm:$0xf]
  %v184 = vld [vmem:[%s1 + $0x1c8] sm:$0xf]
  %v185 = vld [vmem:[%s1 + $0x1cc] sm:$0xf]
  %v186 = vld [vmem:[%s1 + $0x1d0] sm:$0xf]
  %v187 = vld [vmem:[%s1 + $0x1d4] sm:$0xf]
  %v188 = vld [vmem:[%s1 + $0x1d8] sm:$0xf]
  %v189 = vld [vmem:[%s1 + $0x1dc] sm:$0xf]
  %v190 = vld [vmem:[%s1 + $0x1e0] sm:$0xf]
  %v191 = vld [vmem:[%s1 + $0x1e4] sm:$0xf]
  %v192 = vld [vmem:[%s1 + $0x1e8] sm:$0xf]
  %v193 = vld [vmem:[%s1 + $0x1ec] sm:$0xf]
  %v194 = vld [vmem:[%s1 + $0x1f0] sm:$0xf]
  %v195 = vld [vmem:[%s1 + $0x1f4] sm:$0xf]
  %v196 = vld [vmem:[%s1 + $0x1f8] sm:$0xf]
  %v197 = vld [vmem:[%s1 + $0x1fc] sm:$0xf]
  %v198 = vld [vmem:[%s1 + $0x200] sm:$0xf]
  %v199 = vld [vmem:[%s1 + $0x204] sm:$0xf]
  %v200 = vld [vmem:[%s1 + $0x208] sm:$0xf]
  %v201 = vld [vmem:[%s1 + $0x20c] sm:$0xf]
  %v202 = vld [vmem:[%s1 + $0x210] sm:$0xf]
  %v203 = vld [vmem:[%s1 + $0x214] sm:$0xf]
  %v204 = vld [vmem:[%s1 + $0x218] sm:$0xf]
  %v205 = vld [vmem:[%s1 + $0x21c] sm:$0xf]
  %v206 = vld [vmem:[%s1 + $0x220] sm:$0xf]
  %v207 = vld [vmem:[%s1 + $0x224] sm:$0xf]
  %v208 = vld [vmem:[%s1 + $0x228] sm:$0xf]
  %v209 = vld [vmem:[%s1 + $0x22c] sm:$0xf]
  %v210 = vld [vmem:[%s1 + $0x230] sm:$0xf]
  %v211 = vld [vmem:[%s1 + $0x234] sm:$0xf]
  %v212 = vld [vmem:[%s1 + $0x238] sm:$0xf]
  %v213 = vld [vmem:[%s1 + $0x23c] sm:$0xf]
  %v214 = vld [vmem:[%s1 + $0x240] sm:$0xf]
  %v215 = vld [vmem:[%s1 + $0x244] sm:$0xf]
  %v216 = vld [vmem:[%s1 + $0x248] sm:$0xf]
  %v217 = vld [vmem:[%s1 + $0x24c] sm:$0xf]
  %v218 = vld [vmem:[%s1 + $0x250] sm:$0xf]
  %v219 = vld [vmem:[%s1 + $0x254] sm:$0xf]
  %v220 = vld [vmem:[%s1 + $0x258] sm:$0xf]
  %v221 = vld [vmem:[%s1 + $0x25c] sm:$0xf]
  %v222 = vld [vmem:[%s1 + $0x260] sm:$0xf]
  %v223 = vld [vmem:[%s1 + $0x264] sm:$0xf]
  %v224 = vld [vmem:[%s1 + $0x268] sm:$0xf]
  %v225 = vld [vmem:[%s1 + $0x26c] sm:$0xf]
  %v226 = vld [vmem:[%s1 + $0x270] sm:$0xf]
  %v227 = vld [vmem:[%s1 + $0x274] sm:$0xf]
  %v228 = vld [vmem:[%s1 + $0x278] sm:$0xf]
  %v229 = vld [vmem:[%s1 + $0x27c] sm:$0xf]
  %v230 = vld [vmem:[%s1 + $0x280] sm:$0xf]
  %v231 = vld [vmem:[%s1 + $0x284] sm:$0xf]
  %v232 = vld [vmem:[%s1 + $0x288] sm:$0xf]
  %v233 = vld [vmem:[%s1 + $0x28c] sm:$0xf]
  %v234 = vld [vmem:[%s1 + $0x290] sm:$0xf]
  %v235 = vld [vmem:[%s1 + $0x294] sm:$0xf]
  %v236 = vld [vmem:[%s1 + $0x298] sm:$0xf]
  %v237 = vld [vmem:[%s1 + $0x29c] sm:$0xf]
  %v238 = vld [vmem:[%s1 + $0x2a0] sm:$0xf]
  %v239 = vld [vmem:[%s1 + $0x2a4] sm:$0xf]
  %v240 = vld [vmem:[%s1 + $0x2a8] sm:$0xf]
  %v241 = vld [vmem:[%s1 + $0x2ac] sm:$0xf]
  %v242 = vld [vmem:[%s1 + $0x2b0] sm:$0xf]
  %v243 = vld [vmem:[%s1 + $0x2b4] sm:$0xf]
  %v244 = vld [vmem:[%s1 + $0x2b8] sm:$0xf]
  %v245 = vld [vmem:[%s1 + $0x2bc] sm:$0xf]
  %v246 = vld [vmem:[%s1 + $0x2c0] sm:$0xf]
  %v247 = vld [vmem:[%s1 + $0x2c4] sm:$0xf]
  %v248 = vld [vmem:[%s1 + $0x2c8] sm:$0xf]
  %v249 = vld [vmem:[%s1 + $0x2cc] sm:$0xf]
  %v250 = vld [vmem:[%s1 + $0x2d0] sm:$0xf]
  %v251 = vld [vmem:[%s1 + $0x2d4] sm:$0xf]
  %v252 = vld [vmem:[%s1 + $0x2d8] sm:$0xf]
  %v253 = vld [vmem:[%s1 + $0x2dc] sm:$0xf]
  %v254 = vld [vmem:[%s1 + $0x2e0] sm:$0xf]
  %v255 = vld [vmem:[%s1 + $0x2e4] sm:$0xf]
  %v256 = vld [vmem:[%s1 + $0x2e8] sm:$0xf]
  %v257 = vld [vmem:[%s1 + $0x2ec] sm:$0xf]
  %v258 = vld [vmem:[%s1 + $0x2f0] sm:$0xf]
  %v259 = vld [vmem:[%s1 + $0x2f4] sm:$0xf]
  %v260 = vld [vmem:[%s1 + $0x2f8] sm:$0xf]
  %v261 = vld [vmem:[%s1 + $0x2fc] sm:$0xf]
  %v262 = vld [vmem:[%s1 + $0x300] sm:$0xf]
  %v263 = vld [vmem:[%s1 + $0x304] sm:$0xf]
  %v264 = vld [vmem:[%s1 + $0x308] sm:$0xf]
  %v265 = vld [vmem:[%s1 + $0x30c] sm:$0xf]
  %v266 = vld [vmem:[%s1 + $0x310] sm:$0xf]
  %v267 = vld [vmem:[%s1 + $0x314] sm:$0xf]
  %v268 = vld [vmem:[%s1 + $0x318] sm:$0xf]
  %v269 = vld [vmem:[%s1 + $0x31c] sm:$0xf]
  %v270 = vld [vmem:[%s1 + $0x320] sm:$0xf]
  %v271 = vld [vmem:[%s1 + $0x324] sm:$0xf]
  %v272 = vld [vmem:[%s1 + $0x328] sm:$0xf]
  %v273 = vld [vmem:[%s1 + $0x32c] sm:$0xf]
  %v274 = vld [vmem:[%s1 + $0x330] sm:$0xf]
  %v275 = vld [vmem:[%s1 + $0x334] sm:$0xf]
  %v276 = vld [vmem:[%s1 + $0x338] sm:$0xf]
  %v277 = vld [vmem:[%s1 + $0x33c] sm:$0xf]
  %v278 = vld [vmem:[%s1 + $0x340] sm:$0xf]
  %v279 = vld [vmem:[%s1 + $0x344] sm:$0xf]
  %v280 = vld [vmem:[%s1 + $0x348] sm:$0xf]
  %v281 = vld [vmem:[%s1 + $0x34c] sm:$0xf]
  %v282 = vld [vmem:[%s1 + $0x350] sm:$0xf]
  %v283 = vld [vmem:[%s1 + $0x354] sm:$0xf]
  %v284 = vld [vmem:[%s1 + $0x358] sm:$0xf]
  %v285 = vld [vmem:[%s1 + $0x35c] sm:$0xf]
  %v286 = vld [vmem:[%s1 + $0x360] sm:$0xf]
  %v287 = vld [vmem:[%s1 + $0x364] sm:$0xf]
  %v288 = vld [vmem:[%s1 + $0x368] sm:$0xf]
  %v289 = vld [vmem:[%s1 + $0x36c] sm:$0xf]
  %v290 = vld [vmem:[%s1 + $0x370] sm:$0xf]
  %v291 = vld [vmem:[%s1 + $0x374] sm:$0xf]
  %v292 = vld [vmem:[%s1 + $0x378] sm:$0xf]
  %v293 = vld [vmem:[%s1 + $0x37c] sm:$0xf]
  %v294 = vld [vmem:[%s1 + $0x380] sm:$0xf]
  %v295 = vld [vmem:[%s1 + $0x384] sm:$0xf]
  %v296 = vld [vmem:[%s1 + $0x388] sm:$0xf]
  %v297 = vld [vmem:[%s1 + $0x38c] sm:$0xf]
  %v298 = vld [vmem:[%s1 + $0x390] sm:$0xf]
  %v299 = vld [vmem:[%s1 + $0x394] sm:$0xf]
  %v300 = vld [vmem:[%s1 + $0x398] sm:$0xf]
  %v301 = vld [vmem:[%s1 + $0x39c] sm:$0xf]
  %v302 = vld [vmem:[%s1 + $0x3a0] sm:$0xf]
  %v303 = vld [vmem:[%s1 + $0x3a4] sm:$0xf]
  %v304 = vld [vmem:[%s1 + $0x3a8] sm:$0xf]
  %v305 = vld [vmem:[%s1 + $0x3ac] sm:$0xf]
  %v306 = vld [vmem:[%s1 + $0x3b0] sm:$0xf]
  %v307 = vld [vmem:[%s1 + $0x3b4] sm:$0xf]
  %v308 = vld [vmem:[%s1 + $0x3b8] sm:$0xf]
  %v309 = vld [vmem:[%s1 + $0x3bc] sm:$0xf]
  %v310 = vld [vmem:[%s1 + $0x3c0] sm:$0xf]
  %v311 = vld [vmem:[%s1 + $0x3c4] sm:$0xf]
  %v312 = vld [vmem:[%s1 + $0x3c8] sm:$0xf]
  %v313 = vld [vmem:[%s1 + $0x3cc] sm:$0xf]
  %v314 = vld [vmem:[%s1 + $0x3d0] sm:$0xf]
  %v315 = vld [vmem:[%s1 + $0x3d4] sm:$0xf]
  %v316 = vld [vmem:[%s1 + $0x3d8] sm:$0xf]
  %v317 = vld [vmem:[%s1 + $0x3dc] sm:$0xf]
  %v318 = vld [vmem:[%s1 + $0x3e0] sm:$0xf]
  %v319 = vld [vmem:[%s1 + $0x3e4] sm:$0xf]
  %v320 = vld [vmem:[%s1 + $0x3e8] sm:$0xf]
  %v321 = vld [vmem:[%s1 + $0x3ec] sm:$0xf]
  %v322 = vld [vmem:[%s1 + $0x3f0] sm:$0xf]
  %v323 = vld [vmem:[%s1 + $0x3f4] sm:$0xf]
  %v324 = vld [vmem:[%s1 + $0x3f8] sm:$0xf]
  %v325 = vld [vmem:[%s1 + $0x3fc] sm:$0xf]
  %v326 = vld [vmem:[%s2] sm:$0x1]
  %v328 = vperm.slane %v326, 0
  %v386 = vunpack.c.l.b16 %v14
  %v387 = vunpack.c.h.b16 %v14
  %v388 = vunpack.c.l.b16 %v15
  %v389 = vunpack.c.h.b16 %v15
  %v390 = vunpack.c.l.b16 %v16
  %v391 = vunpack.c.h.b16 %v16
  %v392 = vunpack.c.l.b16 %v17
  %v393 = vunpack.c.h.b16 %v17
  %v394 = vunpack.c.l.b16 %v18
  %v395 = vunpack.c.h.b16 %v18
  %v396 = vunpack.c.l.b16 %v19
  %v397 = vunpack.c.h.b16 %v19
  %v398 = vunpack.c.l.b16 %v20
  %v399 = vunpack.c.h.b16 %v20
  %v400 = vunpack.c.l.b16 %v21
  %v401 = vunpack.c.h.b16 %v21
  %v402 = vunpack.c.l.b16 %v22
  %v403 = vunpack.c.h.b16 %v22
  %v404 = vunpack.c.l.b16 %v23
  %v405 = vunpack.c.h.b16 %v23
  %v406 = vunpack.c.l.b16 %v24
  %v407 = vunpack.c.h.b16 %v24
  %v408 = vunpack.c.l.b16 %v25
  %v409 = vunpack.c.h.b16 %v25
  %v410 = vunpack.c.l.b16 %v26
  %v411 = vunpack.c.h.b16 %v26
  %v412 = vunpack.c.l.b16 %v27
  %v413 = vunpack.c.h.b16 %v27
  %v414 = vunpack.c.l.b16 %v28
  %v415 = vunpack.c.h.b16 %v28
  %v416 = vunpack.c.l.b16 %v29
  %v417 = vunpack.c.h.b16 %v29
  %v418 = vunpack.c.l.b16 %v30
  %v419 = vunpack.c.h.b16 %v30
  %v420 = vunpack.c.l.b16 %v31
  %v421 = vunpack.c.h.b16 %v31
  %v422 = vunpack.c.l.b16 %v32
  %v423 = vunpack.c.h.b16 %v32
  %v424 = vunpack.c.l.b16 %v33
  %v425 = vunpack.c.h.b16 %v33
  %v426 = vunpack.c.l.b16 %v34
  %v427 = vunpack.c.h.b16 %v34
  %v428 = vunpack.c.l.b16 %v35
  %v429 = vunpack.c.h.b16 %v35
  %v430 = vunpack.c.l.b16 %v36
  %v431 = vunpack.c.h.b16 %v36
  %v432 = vunpack.c.l.b16 %v37
  %v433 = vunpack.c.h.b16 %v37
  %v434 = vunpack.c.l.b16 %v38
  %v435 = vunpack.c.h.b16 %v38
  %v436 = vunpack.c.l.b16 %v39
  %v437 = vunpack.c.h.b16 %v39
  %v438 = vunpack.c.l.b16 %v40
  %v439 = vunpack.c.h.b16 %v40
  %v440 = vunpack.c.l.b16 %v41
  %v441 = vunpack.c.h.b16 %v41
  %v442 = vunpack.c.l.b16 %v42
  %v443 = vunpack.c.h.b16 %v42
  %v444 = vunpack.c.l.b16 %v43
  %v445 = vunpack.c.h.b16 %v43
  %v446 = vunpack.c.l.b16 %v44
  %v447 = vunpack.c.h.b16 %v44
  %v448 = vunpack.c.l.b16 %v45
  %v449 = vunpack.c.h.b16 %v45
  %v450 = vunpack.c.l.b16 %v46
  %v451 = vunpack.c.h.b16 %v46
  %v452 = vunpack.c.l.b16 %v47
  %v453 = vunpack.c.h.b16 %v47
  %v454 = vunpack.c.l.b16 %v48
  %v455 = vunpack.c.h.b16 %v48
  %v456 = vunpack.c.l.b16 %v49
  %v457 = vunpack.c.h.b16 %v49
  %v458 = vunpack.c.l.b16 %v50
  %v459 = vunpack.c.h.b16 %v50
  %v460 = vunpack.c.l.b16 %v51
  %v461 = vunpack.c.h.b16 %v51
  %v462 = vunpack.c.l.b16 %v52
  %v463 = vunpack.c.h.b16 %v52
  %v464 = vunpack.c.l.b16 %v53
  %v465 = vunpack.c.h.b16 %v53
  %v466 = vunpack.c.l.b16 %v54
  %v467 = vunpack.c.h.b16 %v54
  %v468 = vunpack.c.l.b16 %v55
  %v469 = vunpack.c.h.b16 %v55
  %v470 = vunpack.c.l.b16 %v56
  %v471 = vunpack.c.h.b16 %v56
  %v472 = vunpack.c.l.b16 %v57
  %v473 = vunpack.c.h.b16 %v57
  %v474 = vunpack.c.l.b16 %v58
  %v475 = vunpack.c.h.b16 %v58
  %v476 = vunpack.c.l.b16 %v59
  %v477 = vunpack.c.h.b16 %v59
  %v478 = vunpack.c.l.b16 %v60
  %v479 = vunpack.c.h.b16 %v60
  %v480 = vunpack.c.l.b16 %v61
  %v481 = vunpack.c.h.b16 %v61
  %v482 = vunpack.c.l.b16 %v62
  %v483 = vunpack.c.h.b16 %v62
  %v484 = vunpack.c.l.b16 %v63
  %v485 = vunpack.c.h.b16 %v63
  %v486 = vunpack.c.l.b16 %v64
  %v487 = vunpack.c.h.b16 %v64
  %v488 = vunpack.c.l.b16 %v65
  %v489 = vunpack.c.h.b16 %v65
  %v490 = vunpack.c.l.b16 %v66
  %v491 = vunpack.c.h.b16 %v66
  %v492 = vunpack.c.l.b16 %v67
  %v493 = vunpack.c.h.b16 %v67
  %v494 = vunpack.c.l.b16 %v68
  %v495 = vunpack.c.h.b16 %v68
  %v496 = vunpack.c.l.b16 %v69
  %v497 = vunpack.c.h.b16 %v69
  %v498 = vpack.c.b16 %v402, %v386
  %v499 = vpack.c.b16 %v403, %v387
  %v500 = vpack.c.b16 %v404, %v388
  %v501 = vpack.c.b16 %v405, %v389
  %v502 = vpack.c.b16 %v406, %v390
  %v503 = vpack.c.b16 %v407, %v391
  %v504 = vpack.c.b16 %v408, %v392
  %v505 = vpack.c.b16 %v409, %v393
  %v506 = vpack.c.b16 %v410, %v394
  %v507 = vpack.c.b16 %v411, %v395
  %v508 = vpack.c.b16 %v412, %v396
  %v509 = vpack.c.b16 %v413, %v397
  %v510 = vpack.c.b16 %v414, %v398
  %v511 = vpack.c.b16 %v415, %v399
  %v512 = vpack.c.b16 %v416, %v400
  %v513 = vpack.c.b16 %v417, %v401
  %v514 = vpack.c.b16 %v434, %v418
  %v515 = vpack.c.b16 %v435, %v419
  %v516 = vpack.c.b16 %v436, %v420
  %v517 = vpack.c.b16 %v437, %v421
  %v518 = vpack.c.b16 %v438, %v422
  %v519 = vpack.c.b16 %v439, %v423
  %v520 = vpack.c.b16 %v440, %v424
  %v521 = vpack.c.b16 %v441, %v425
  %v522 = vpack.c.b16 %v442, %v426
  %v523 = vpack.c.b16 %v443, %v427
  %v524 = vpack.c.b16 %v444, %v428
  %v525 = vpack.c.b16 %v445, %v429
  %v526 = vpack.c.b16 %v446, %v430
  %v527 = vpack.c.b16 %v447, %v431
  %v528 = vpack.c.b16 %v448, %v432
  %v529 = vpack.c.b16 %v449, %v433
  %v530 = vpack.c.b16 %v466, %v450
  %v531 = vpack.c.b16 %v467, %v451
  %v532 = vpack.c.b16 %v468, %v452
  %v533 = vpack.c.b16 %v469, %v453
  %v534 = vpack.c.b16 %v470, %v454
  %v535 = vpack.c.b16 %v471, %v455
  %v536 = vpack.c.b16 %v472, %v456
  %v537 = vpack.c.b16 %v473, %v457
  %v538 = vpack.c.b16 %v474, %v458
  %v539 = vpack.c.b16 %v475, %v459
  %v540 = vpack.c.b16 %v476, %v460
  %v541 = vpack.c.b16 %v477, %v461
  %v542 = vpack.c.b16 %v478, %v462
  %v543 = vpack.c.b16 %v479, %v463
  %v544 = vpack.c.b16 %v480, %v464
  %v545 = vpack.c.b16 %v481, %v465
  %v546 = vpack.c.b16 %v482, %v482
  %v547 = vpack.c.b16 %v483, %v483
  %v548 = vpack.c.b16 %v484, %v484
  %v549 = vpack.c.b16 %v485, %v485
  %v550 = vpack.c.b16 %v486, %v486
  %v551 = vpack.c.b16 %v487, %v487
  %v552 = vpack.c.b16 %v488, %v488
  %v553 = vpack.c.b16 %v489, %v489
  %v554 = vpack.c.b16 %v490, %v490
  %v555 = vpack.c.b16 %v491, %v491
  %v556 = vpack.c.b16 %v492, %v492
  %v557 = vpack.c.b16 %v493, %v493
  %v558 = vpack.c.b16 %v494, %v494
  %v559 = vpack.c.b16 %v495, %v495
  %v560 = vpack.c.b16 %v496, %v496
  %v561 = vpack.c.b16 %v497, %v497
  %v882 = vunpack.c.l.b16 %v70
  %v883 = vunpack.c.l.b16 %v71
  %v884 = vunpack.c.l.b16 %v72
  %v885 = vunpack.c.l.b16 %v73
  %v886 = vunpack.c.l.b16 %v74
  %v887 = vunpack.c.l.b16 %v75
  %v888 = vunpack.c.l.b16 %v76
  %v889 = vunpack.c.l.b16 %v77
  %v890 = vunpack.c.l.b16 %v78
  %v891 = vunpack.c.l.b16 %v79
  %v892 = vunpack.c.l.b16 %v80
  %v893 = vunpack.c.l.b16 %v81
  %v894 = vunpack.c.l.b16 %v82
  %v895 = vunpack.c.l.b16 %v83
  %v896 = vunpack.c.l.b16 %v84
  %v897 = vunpack.c.l.b16 %v85
  %v898 = vunpack.c.l.b16 %v86
  %v899 = vunpack.c.l.b16 %v87
  %v900 = vunpack.c.l.b16 %v88
  %v901 = vunpack.c.l.b16 %v89
  %v902 = vunpack.c.l.b16 %v90
  %v903 = vunpack.c.l.b16 %v91
  %v904 = vunpack.c.l.b16 %v92
  %v905 = vunpack.c.l.b16 %v93
  %v906 = vunpack.c.l.b16 %v94
  %v907 = vunpack.c.l.b16 %v95
  %v908 = vunpack.c.l.b16 %v96
  %v909 = vunpack.c.l.b16 %v97
  %v910 = vunpack.c.l.b16 %v98
  %v911 = vunpack.c.l.b16 %v99
  %v912 = vunpack.c.l.b16 %v100
  %v913 = vunpack.c.l.b16 %v101
  %v914 = vunpack.c.l.b16 %v102
  %v915 = vunpack.c.l.b16 %v103
  %v916 = vunpack.c.l.b16 %v104
  %v917 = vunpack.c.l.b16 %v105
  %v918 = vunpack.c.l.b16 %v106
  %v919 = vunpack.c.l.b16 %v107
  %v920 = vunpack.c.l.b16 %v108
  %v921 = vunpack.c.l.b16 %v109
  %v922 = vunpack.c.l.b16 %v110
  %v923 = vunpack.c.l.b16 %v111
  %v924 = vunpack.c.l.b16 %v112
  %v925 = vunpack.c.l.b16 %v113
  %v926 = vunpack.c.l.b16 %v114
  %v927 = vunpack.c.l.b16 %v115
  %v928 = vunpack.c.l.b16 %v116
  %v929 = vunpack.c.l.b16 %v117
  %v930 = vunpack.c.l.b16 %v118
  %v931 = vunpack.c.l.b16 %v119
  %v932 = vunpack.c.l.b16 %v120
  %v933 = vunpack.c.l.b16 %v121
  %v934 = vunpack.c.l.b16 %v122
  %v935 = vunpack.c.l.b16 %v123
  %v936 = vunpack.c.l.b16 %v124
  %v937 = vunpack.c.l.b16 %v125
  %v938 = vunpack.c.l.b16 %v126
  %v939 = vunpack.c.l.b16 %v127
  %v940 = vunpack.c.l.b16 %v128
  %v941 = vunpack.c.l.b16 %v129
  %v942 = vunpack.c.l.b16 %v130
  %v943 = vunpack.c.l.b16 %v131
  %v944 = vunpack.c.l.b16 %v132
  %v945 = vunpack.c.l.b16 %v133
  %v946 = vunpack.c.l.b16 %v134
  %v947 = vunpack.c.l.b16 %v135
  %v948 = vunpack.c.l.b16 %v136
  %v949 = vunpack.c.l.b16 %v137
  %v950 = vunpack.c.l.b16 %v138
  %v951 = vunpack.c.l.b16 %v139
  %v952 = vunpack.c.l.b16 %v140
  %v953 = vunpack.c.l.b16 %v141
  %v954 = vunpack.c.l.b16 %v142
  %v955 = vunpack.c.l.b16 %v143
  %v956 = vunpack.c.l.b16 %v144
  %v957 = vunpack.c.l.b16 %v145
  %v958 = vunpack.c.l.b16 %v146
  %v959 = vunpack.c.l.b16 %v147
  %v960 = vunpack.c.l.b16 %v148
  %v961 = vunpack.c.l.b16 %v149
  %v962 = vunpack.c.l.b16 %v150
  %v963 = vunpack.c.l.b16 %v151
  %v964 = vunpack.c.l.b16 %v152
  %v965 = vunpack.c.l.b16 %v153
  %v966 = vunpack.c.l.b16 %v154
  %v967 = vunpack.c.l.b16 %v155
  %v968 = vunpack.c.l.b16 %v156
  %v969 = vunpack.c.l.b16 %v157
  %v970 = vunpack.c.l.b16 %v158
  %v971 = vunpack.c.l.b16 %v159
  %v972 = vunpack.c.l.b16 %v160
  %v973 = vunpack.c.l.b16 %v161
  %v974 = vunpack.c.l.b16 %v162
  %v975 = vunpack.c.l.b16 %v163
  %v976 = vunpack.c.l.b16 %v164
  %v977 = vunpack.c.l.b16 %v165
  %v978 = vunpack.c.l.b16 %v166
  %v979 = vunpack.c.l.b16 %v167
  %v980 = vunpack.c.l.b16 %v168
  %v981 = vunpack.c.l.b16 %v169
  %v982 = vunpack.c.l.b16 %v170
  %v983 = vunpack.c.l.b16 %v171
  %v984 = vunpack.c.l.b16 %v172
  %v985 = vunpack.c.l.b16 %v173
  %v986 = vunpack.c.l.b16 %v174
  %v987 = vunpack.c.l.b16 %v175
  %v988 = vunpack.c.l.b16 %v176
  %v989 = vunpack.c.l.b16 %v177
  %v990 = vunpack.c.l.b16 %v178
  %v991 = vunpack.c.l.b16 %v179
  %v992 = vunpack.c.l.b16 %v180
  %v993 = vunpack.c.l.b16 %v181
  %v994 = vunpack.c.l.b16 %v182
  %v995 = vunpack.c.l.b16 %v183
  %v996 = vunpack.c.l.b16 %v184
  %v997 = vunpack.c.l.b16 %v185
  %v998 = vunpack.c.l.b16 %v186
  %v999 = vunpack.c.l.b16 %v187
  %v1000 = vunpack.c.l.b16 %v188
  %v1001 = vunpack.c.l.b16 %v189
  %v1002 = vunpack.c.l.b16 %v190
  %v1003 = vunpack.c.l.b16 %v191
  %v1004 = vunpack.c.l.b16 %v192
  %v1005 = vunpack.c.l.b16 %v193
  %v1006 = vunpack.c.l.b16 %v194
  %v1007 = vunpack.c.l.b16 %v195
  %v1008 = vunpack.c.l.b16 %v196
  %v1009 = vunpack.c.l.b16 %v197
  %v1010 = vunpack.c.l.b16 %v198
  %v1011 = vunpack.c.l.b16 %v199
  %v1012 = vunpack.c.l.b16 %v200
  %v1013 = vunpack.c.l.b16 %v201
  %v1014 = vunpack.c.l.b16 %v202
  %v1015 = vunpack.c.l.b16 %v203
  %v1016 = vunpack.c.l.b16 %v204
  %v1017 = vunpack.c.l.b16 %v205
  %v1018 = vunpack.c.l.b16 %v206
  %v1019 = vunpack.c.l.b16 %v207
  %v1020 = vunpack.c.l.b16 %v208
  %v1021 = vunpack.c.l.b16 %v209
  %v1022 = vunpack.c.l.b16 %v210
  %v1023 = vunpack.c.l.b16 %v211
  %v1024 = vunpack.c.l.b16 %v212
  %v1025 = vunpack.c.l.b16 %v213
  %v1026 = vunpack.c.l.b16 %v214
  %v1027 = vunpack.c.l.b16 %v215
  %v1028 = vunpack.c.l.b16 %v216
  %v1029 = vunpack.c.l.b16 %v217
  %v1030 = vunpack.c.l.b16 %v218
  %v1031 = vunpack.c.l.b16 %v219
  %v1032 = vunpack.c.l.b16 %v220
  %v1033 = vunpack.c.l.b16 %v221
  %v1034 = vunpack.c.l.b16 %v222
  %v1035 = vunpack.c.l.b16 %v223
  %v1036 = vunpack.c.l.b16 %v224
  %v1037 = vunpack.c.l.b16 %v225
  %v1038 = vunpack.c.l.b16 %v226
  %v1039 = vunpack.c.l.b16 %v227
  %v1040 = vunpack.c.l.b16 %v228
  %v1041 = vunpack.c.l.b16 %v229
  %v1042 = vunpack.c.l.b16 %v230
  %v1043 = vunpack.c.l.b16 %v231
  %v1044 = vunpack.c.l.b16 %v232
  %v1045 = vunpack.c.l.b16 %v233
  %v1046 = vunpack.c.l.b16 %v234
  %v1047 = vunpack.c.l.b16 %v235
  %v1048 = vunpack.c.l.b16 %v236
  %v1049 = vunpack.c.l.b16 %v237
  %v1050 = vunpack.c.l.b16 %v238
  %v1051 = vunpack.c.l.b16 %v239
  %v1052 = vunpack.c.l.b16 %v240
  %v1053 = vunpack.c.l.b16 %v241
  %v1054 = vunpack.c.l.b16 %v242
  %v1055 = vunpack.c.l.b16 %v243
  %v1056 = vunpack.c.l.b16 %v244
  %v1057 = vunpack.c.l.b16 %v245
  %v1058 = vunpack.c.l.b16 %v246
  %v1059 = vunpack.c.l.b16 %v247
  %v1060 = vunpack.c.l.b16 %v248
  %v1061 = vunpack.c.l.b16 %v249
  %v1062 = vunpack.c.l.b16 %v250
  %v1063 = vunpack.c.l.b16 %v251
  %v1064 = vunpack.c.l.b16 %v252
  %v1065 = vunpack.c.l.b16 %v253
  %v1066 = vunpack.c.l.b16 %v254
  %v1067 = vunpack.c.l.b16 %v255
  %v1068 = vunpack.c.l.b16 %v256
  %v1069 = vunpack.c.l.b16 %v257
  %v1070 = vunpack.c.l.b16 %v258
  %v1071 = vunpack.c.l.b16 %v259
  %v1072 = vunpack.c.l.b16 %v260
  %v1073 = vunpack.c.l.b16 %v261
  %v1074 = vunpack.c.l.b16 %v262
  %v1075 = vunpack.c.l.b16 %v263
  %v1076 = vunpack.c.l.b16 %v264
  %v1077 = vunpack.c.l.b16 %v265
  %v1078 = vunpack.c.l.b16 %v266
  %v1079 = vunpack.c.l.b16 %v267
  %v1080 = vunpack.c.l.b16 %v268
  %v1081 = vunpack.c.l.b16 %v269
  %v1082 = vunpack.c.l.b16 %v270
  %v1083 = vunpack.c.l.b16 %v271
  %v1084 = vunpack.c.l.b16 %v272
  %v1085 = vunpack.c.l.b16 %v273
  %v1086 = vunpack.c.l.b16 %v274
  %v1087 = vunpack.c.l.b16 %v275
  %v1088 = vunpack.c.l.b16 %v276
  %v1089 = vunpack.c.l.b16 %v277
  %v1090 = vunpack.c.l.b16 %v278
  %v1091 = vunpack.c.l.b16 %v279
  %v1092 = vunpack.c.l.b16 %v280
  %v1093 = vunpack.c.l.b16 %v281
  %v1094 = vunpack.c.l.b16 %v282
  %v1095 = vunpack.c.l.b16 %v283
  %v1096 = vunpack.c.l.b16 %v284
  %v1097 = vunpack.c.l.b16 %v285
  %v1098 = vunpack.c.l.b16 %v286
  %v1099 = vunpack.c.l.b16 %v287
  %v1100 = vunpack.c.l.b16 %v288
  %v1101 = vunpack.c.l.b16 %v289
  %v1102 = vunpack.c.l.b16 %v290
  %v1103 = vunpack.c.l.b16 %v291
  %v1104 = vunpack.c.l.b16 %v292
  %v1105 = vunpack.c.l.b16 %v293
  %v1106 = vunpack.c.l.b16 %v294
  %v1107 = vunpack.c.l.b16 %v295
  %v1108 = vunpack.c.l.b16 %v296
  %v1109 = vunpack.c.l.b16 %v297
  %v1110 = vunpack.c.l.b16 %v298
  %v1111 = vunpack.c.l.b16 %v299
  %v1112 = vunpack.c.l.b16 %v300
  %v1113 = vunpack.c.l.b16 %v301
  %v1114 = vunpack.c.l.b16 %v302
  %v1115 = vunpack.c.l.b16 %v303
  %v1116 = vunpack.c.l.b16 %v304
  %v1117 = vunpack.c.l.b16 %v305
  %v1118 = vunpack.c.l.b16 %v306
  %v1119 = vunpack.c.l.b16 %v307
  %v1120 = vunpack.c.l.b16 %v308
  %v1121 = vunpack.c.l.b16 %v309
  %v1122 = vunpack.c.l.b16 %v310
  %v1123 = vunpack.c.l.b16 %v311
  %v1124 = vunpack.c.l.b16 %v312
  %v1125 = vunpack.c.l.b16 %v313
  %v1126 = vunpack.c.l.b16 %v314
  %v1127 = vunpack.c.l.b16 %v315
  %v1128 = vunpack.c.l.b16 %v316
  %v1129 = vunpack.c.l.b16 %v317
  %v1130 = vunpack.c.l.b16 %v318
  %v1131 = vunpack.c.l.b16 %v319
  %v1132 = vunpack.c.l.b16 %v320
  %v1133 = vunpack.c.l.b16 %v321
  %v1134 = vunpack.c.l.b16 %v322
  %v1135 = vunpack.c.l.b16 %v323
  %v1136 = vunpack.c.l.b16 %v324
  %v1137 = vunpack.c.l.b16 %v325
  %v1138 = vpack.c.b16 %v883, %v882
  %v1139 = vpack.c.b16 %v885, %v884
  %v1140 = vpack.c.b16 %v887, %v886
  %v1141 = vpack.c.b16 %v889, %v888
  %v1142 = vpack.c.b16 %v891, %v890
  %v1143 = vpack.c.b16 %v893, %v892
  %v1144 = vpack.c.b16 %v895, %v894
  %v1145 = vpack.c.b16 %v897, %v896
  %v1146 = vpack.c.b16 %v899, %v898
  %v1147 = vpack.c.b16 %v901, %v900
  %v1148 = vpack.c.b16 %v903, %v902
  %v1149 = vpack.c.b16 %v905, %v904
  %v1150 = vpack.c.b16 %v907, %v906
  %v1151 = vpack.c.b16 %v909, %v908
  %v1152 = vpack.c.b16 %v911, %v910
  %v1153 = vpack.c.b16 %v913, %v912
  %v1154 = vpack.c.b16 %v915, %v914
  %v1155 = vpack.c.b16 %v917, %v916
  %v1156 = vpack.c.b16 %v919, %v918
  %v1157 = vpack.c.b16 %v921, %v920
  %v1158 = vpack.c.b16 %v923, %v922
  %v1159 = vpack.c.b16 %v925, %v924
  %v1160 = vpack.c.b16 %v927, %v926
  %v1161 = vpack.c.b16 %v929, %v928
  %v1162 = vpack.c.b16 %v931, %v930
  %v1163 = vpack.c.b16 %v933, %v932
  %v1164 = vpack.c.b16 %v935, %v934
  %v1165 = vpack.c.b16 %v937, %v936
  %v1166 = vpack.c.b16 %v939, %v938
  %v1167 = vpack.c.b16 %v941, %v940
  %v1168 = vpack.c.b16 %v943, %v942
  %v1169 = vpack.c.b16 %v945, %v944
  %v1170 = vpack.c.b16 %v947, %v946
  %v1171 = vpack.c.b16 %v949, %v948
  %v1172 = vpack.c.b16 %v951, %v950
  %v1173 = vpack.c.b16 %v953, %v952
  %v1174 = vpack.c.b16 %v955, %v954
  %v1175 = vpack.c.b16 %v957, %v956
  %v1176 = vpack.c.b16 %v959, %v958
  %v1177 = vpack.c.b16 %v961, %v960
  %v1178 = vpack.c.b16 %v963, %v962
  %v1179 = vpack.c.b16 %v965, %v964
  %v1180 = vpack.c.b16 %v967, %v966
  %v1181 = vpack.c.b16 %v969, %v968
  %v1182 = vpack.c.b16 %v971, %v970
  %v1183 = vpack.c.b16 %v973, %v972
  %v1184 = vpack.c.b16 %v975, %v974
  %v1185 = vpack.c.b16 %v977, %v976
  %v1186 = vpack.c.b16 %v979, %v978
  %v1187 = vpack.c.b16 %v981, %v980
  %v1188 = vpack.c.b16 %v983, %v982
  %v1189 = vpack.c.b16 %v985, %v984
  %v1190 = vpack.c.b16 %v987, %v986
  %v1191 = vpack.c.b16 %v989, %v988
  %v1192 = vpack.c.b16 %v991, %v990
  %v1193 = vpack.c.b16 %v993, %v992
  %v1194 = vpack.c.b16 %v995, %v994
  %v1195 = vpack.c.b16 %v997, %v996
  %v1196 = vpack.c.b16 %v999, %v998
  %v1197 = vpack.c.b16 %v1001, %v1000
  %v1198 = vpack.c.b16 %v1003, %v1002
  %v1199 = vpack.c.b16 %v1005, %v1004
  %v1200 = vpack.c.b16 %v1007, %v1006
  %v1201 = vpack.c.b16 %v1009, %v1008
  %v1202 = vpack.c.b16 %v1011, %v1010
  %v1203 = vpack.c.b16 %v1013, %v1012
  %v1204 = vpack.c.b16 %v1015, %v1014
  %v1205 = vpack.c.b16 %v1017, %v1016
  %v1206 = vpack.c.b16 %v1019, %v1018
  %v1207 = vpack.c.b16 %v1021, %v1020
  %v1208 = vpack.c.b16 %v1023, %v1022
  %v1209 = vpack.c.b16 %v1025, %v1024
  %v1210 = vpack.c.b16 %v1027, %v1026
  %v1211 = vpack.c.b16 %v1029, %v1028
  %v1212 = vpack.c.b16 %v1031, %v1030
  %v1213 = vpack.c.b16 %v1033, %v1032
  %v1214 = vpack.c.b16 %v1035, %v1034
  %v1215 = vpack.c.b16 %v1037, %v1036
  %v1216 = vpack.c.b16 %v1039, %v1038
  %v1217 = vpack.c.b16 %v1041, %v1040
  %v1218 = vpack.c.b16 %v1043, %v1042
  %v1219 = vpack.c.b16 %v1045, %v1044
  %v1220 = vpack.c.b16 %v1047, %v1046
  %v1221 = vpack.c.b16 %v1049, %v1048
  %v1222 = vpack.c.b16 %v1051, %v1050
  %v1223 = vpack.c.b16 %v1053, %v1052
  %v1224 = vpack.c.b16 %v1055, %v1054
  %v1225 = vpack.c.b16 %v1057, %v1056
  %v1226 = vpack.c.b16 %v1059, %v1058
  %v1227 = vpack.c.b16 %v1061, %v1060
  %v1228 = vpack.c.b16 %v1063, %v1062
  %v1229 = vpack.c.b16 %v1065, %v1064
  %v1230 = vpack.c.b16 %v1067, %v1066
  %v1231 = vpack.c.b16 %v1069, %v1068
  %v1232 = vpack.c.b16 %v1071, %v1070
  %v1233 = vpack.c.b16 %v1073, %v1072
  %v1234 = vpack.c.b16 %v1075, %v1074
  %v1235 = vpack.c.b16 %v1077, %v1076
  %v1236 = vpack.c.b16 %v1079, %v1078
  %v1237 = vpack.c.b16 %v1081, %v1080
  %v1238 = vpack.c.b16 %v1083, %v1082
  %v1239 = vpack.c.b16 %v1085, %v1084
  %v1240 = vpack.c.b16 %v1087, %v1086
  %v1241 = vpack.c.b16 %v1089, %v1088
  %v1242 = vpack.c.b16 %v1091, %v1090
  %v1243 = vpack.c.b16 %v1093, %v1092
  %v1244 = vpack.c.b16 %v1095, %v1094
  %v1245 = vpack.c.b16 %v1097, %v1096
  %v1246 = vpack.c.b16 %v1099, %v1098
  %v1247 = vpack.c.b16 %v1101, %v1100
  %v1248 = vpack.c.b16 %v1103, %v1102
  %v1249 = vpack.c.b16 %v1105, %v1104
  %v1250 = vpack.c.b16 %v1107, %v1106
  %v1251 = vpack.c.b16 %v1109, %v1108
  %v1252 = vpack.c.b16 %v1111, %v1110
  %v1253 = vpack.c.b16 %v1113, %v1112
  %v1254 = vpack.c.b16 %v1115, %v1114
  %v1255 = vpack.c.b16 %v1117, %v1116
  %v1256 = vpack.c.b16 %v1119, %v1118
  %v1257 = vpack.c.b16 %v1121, %v1120
  %v1258 = vpack.c.b16 %v1123, %v1122
  %v1259 = vpack.c.b16 %v1125, %v1124
  %v1260 = vpack.c.b16 %v1127, %v1126
  %v1261 = vpack.c.b16 %v1129, %v1128
  %v1262 = vpack.c.b16 %v1131, %v1130
  %v1263 = vpack.c.b16 %v1133, %v1132
  %v1264 = vpack.c.b16 %v1135, %v1134
  %v1265 = vpack.c.b16 %v1137, %v1136
  %1394 = vmatpush.bf16.msra.mxu0 %v1145
  %1395 = vmatpush.bf16.msra.mxu0 %v1144
  %1396 = vmatpush.bf16.msra.mxu0 %v1143
  %1397 = vmatpush.bf16.msra.mxu0 %v1142
  %1398 = vmatpush.bf16.msra.mxu0 %v1141
  %1399 = vmatpush.bf16.msra.mxu0 %v1140
  %1400 = vmatpush.bf16.msra.mxu0 %v1139
  %1401 = vmatpush.bf16.msra.mxu0 %v1138
  %1402 = vmatmul.bf16.gmra.mxu0 %v498
  %v1403 = vpop.f32.mrf.mxu0
  %v1404 = vadd.f32 %v328, %v1403
  %v1405 = vpop.f32.mrf.mxu0
  %v1406 = vadd.f32 %v328, %v1405
  %1407 = vmatmul.bf16.gmra.mxu0 %v514
  %v1408 = vpop.f32.mrf.mxu0
  %v1409 = vadd.f32 %v328, %v1408
  %v1410 = vpop.f32.mrf.mxu0
  %v1411 = vadd.f32 %v328, %v1410
  %1412 = vmatmul.bf16.gmra.mxu0 %v530
  %v1413 = vpop.f32.mrf.mxu0
  %v1414 = vadd.f32 %v328, %v1413
  %v1415 = vpop.f32.mrf.mxu0
  %v1416 = vadd.f32 %v328, %v1415
  %1417 = vmatmul.bf16.gmra.mxu0 %v546
  %v1418 = vpop.f32.mrf.mxu0
  %v1419 = vadd.f32 %v328, %v1418
  %v1420 = vpop.f32.mrf.mxu0
  %1421 = vdwg.mxu0
  %1422 = vmatpush.bf16.msra.mxu0 %v1153
  %1423 = vmatpush.bf16.msra.mxu0 %v1152
  %1424 = vmatpush.bf16.msra.mxu0 %v1151
  %1425 = vmatpush.bf16.msra.mxu0 %v1150
  %1426 = vmatpush.bf16.msra.mxu0 %v1149
  %1427 = vmatpush.bf16.msra.mxu0 %v1148
  %1428 = vmatpush.bf16.msra.mxu0 %v1147
  %1429 = vmatpush.bf16.msra.mxu0 %v1146
  %1430 = vmatmul.bf16.gmra.mxu0 %v499
  %v1431 = vpop.f32.mrf.mxu0
  %v1432 = vadd.f32 %v1404, %v1431
  %v1433 = vpop.f32.mrf.mxu0
  %v1434 = vadd.f32 %v1406, %v1433
  %1435 = vmatmul.bf16.gmra.mxu0 %v515
  %v1436 = vpop.f32.mrf.mxu0
  %v1437 = vadd.f32 %v1409, %v1436
  %v1438 = vpop.f32.mrf.mxu0
  %v1439 = vadd.f32 %v1411, %v1438
  %1440 = vmatmul.bf16.gmra.mxu0 %v531
  %v1441 = vpop.f32.mrf.mxu0
  %v1442 = vadd.f32 %v1414, %v1441
  %v1443 = vpop.f32.mrf.mxu0
  %v1444 = vadd.f32 %v1416, %v1443
  %1445 = vmatmul.bf16.gmra.mxu0 %v547
  %v1446 = vpop.f32.mrf.mxu0
  %v1447 = vadd.f32 %v1419, %v1446
  %v1448 = vpop.f32.mrf.mxu0
  %1449 = vdwg.mxu0
  %1450 = vmatpush.bf16.msra.mxu0 %v1161
  %1451 = vmatpush.bf16.msra.mxu0 %v1160
  %1452 = vmatpush.bf16.msra.mxu0 %v1159
  %1453 = vmatpush.bf16.msra.mxu0 %v1158
  %1454 = vmatpush.bf16.msra.mxu0 %v1157
  %1455 = vmatpush.bf16.msra.mxu0 %v1156
  %1456 = vmatpush.bf16.msra.mxu0 %v1155
  %1457 = vmatpush.bf16.msra.mxu0 %v1154
  %1458 = vmatmul.bf16.gmra.mxu0 %v500
  %v1459 = vpop.f32.mrf.mxu0
  %v1460 = vadd.f32 %v1432, %v1459
  %v1461 = vpop.f32.mrf.mxu0
  %v1462 = vadd.f32 %v1434, %v1461
  %1463 = vmatmul.bf16.gmra.mxu0 %v516
  %v1464 = vpop.f32.mrf.mxu0
  %v1465 = vadd.f32 %v1437, %v1464
  %v1466 = vpop.f32.mrf.mxu0
  %v1467 = vadd.f32 %v1439, %v1466
  %1468 = vmatmul.bf16.gmra.mxu0 %v532
  %v1469 = vpop.f32.mrf.mxu0
  %v1470 = vadd.f32 %v1442, %v1469
  %v1471 = vpop.f32.mrf.mxu0
  %v1472 = vadd.f32 %v1444, %v1471
  %1473 = vmatmul.bf16.gmra.mxu0 %v548
  %v1474 = vpop.f32.mrf.mxu0
  %v1475 = vadd.f32 %v1447, %v1474
  %v1476 = vpop.f32.mrf.mxu0
  %1477 = vdwg.mxu0
  %1478 = vmatpush.bf16.msra.mxu0 %v1169
  %1479 = vmatpush.bf16.msra.mxu0 %v1168
  %1480 = vmatpush.bf16.msra.mxu0 %v1167
  %1481 = vmatpush.bf16.msra.mxu0 %v1166
  %1482 = vmatpush.bf16.msra.mxu0 %v1165
  %1483 = vmatpush.bf16.msra.mxu0 %v1164
  %1484 = vmatpush.bf16.msra.mxu0 %v1163
  %1485 = vmatpush.bf16.msra.mxu0 %v1162
  %1486 = vmatmul.bf16.gmra.mxu0 %v501
  %v1487 = vpop.f32.mrf.mxu0
  %v1488 = vadd.f32 %v1460, %v1487
  %v1489 = vpop.f32.mrf.mxu0
  %v1490 = vadd.f32 %v1462, %v1489
  %1491 = vmatmul.bf16.gmra.mxu0 %v517
  %v1492 = vpop.f32.mrf.mxu0
  %v1493 = vadd.f32 %v1465, %v1492
  %v1494 = vpop.f32.mrf.mxu0
  %v1495 = vadd.f32 %v1467, %v1494
  %1496 = vmatmul.bf16.gmra.mxu0 %v533
  %v1497 = vpop.f32.mrf.mxu0
  %v1498 = vadd.f32 %v1470, %v1497
  %v1499 = vpop.f32.mrf.mxu0
  %v1500 = vadd.f32 %v1472, %v1499
  %1501 = vmatmul.bf16.gmra.mxu0 %v549
  %v1502 = vpop.f32.mrf.mxu0
  %v1503 = vadd.f32 %v1475, %v1502
  %v1504 = vpop.f32.mrf.mxu0
  %1505 = vdwg.mxu0
  %1506 = vmatpush.bf16.msra.mxu0 %v1177
  %1507 = vmatpush.bf16.msra.mxu0 %v1176
  %1508 = vmatpush.bf16.msra.mxu0 %v1175
  %1509 = vmatpush.bf16.msra.mxu0 %v1174
  %1510 = vmatpush.bf16.msra.mxu0 %v1173
  %1511 = vmatpush.bf16.msra.mxu0 %v1172
  %1512 = vmatpush.bf16.msra.mxu0 %v1171
  %1513 = vmatpush.bf16.msra.mxu0 %v1170
  %1514 = vmatmul.bf16.gmra.mxu0 %v502
  %v1515 = vpop.f32.mrf.mxu0
  %v1516 = vadd.f32 %v1488, %v1515
  %v1517 = vpop.f32.mrf.mxu0
  %v1518 = vadd.f32 %v1490, %v1517
  %1519 = vmatmul.bf16.gmra.mxu0 %v518
  %v1520 = vpop.f32.mrf.mxu0
  %v1521 = vadd.f32 %v1493, %v1520
  %v1522 = vpop.f32.mrf.mxu0
  %v1523 = vadd.f32 %v1495, %v1522
  %1524 = vmatmul.bf16.gmra.mxu0 %v534
  %v1525 = vpop.f32.mrf.mxu0
  %v1526 = vadd.f32 %v1498, %v1525
  %v1527 = vpop.f32.mrf.mxu0
  %v1528 = vadd.f32 %v1500, %v1527
  %1529 = vmatmul.bf16.gmra.mxu0 %v550
  %v1530 = vpop.f32.mrf.mxu0
  %v1531 = vadd.f32 %v1503, %v1530
  %v1532 = vpop.f32.mrf.mxu0
  %1533 = vdwg.mxu0
  %1534 = vmatpush.bf16.msra.mxu0 %v1185
  %1535 = vmatpush.bf16.msra.mxu0 %v1184
  %1536 = vmatpush.bf16.msra.mxu0 %v1183
  %1537 = vmatpush.bf16.msra.mxu0 %v1182
  %1538 = vmatpush.bf16.msra.mxu0 %v1181
  %1539 = vmatpush.bf16.msra.mxu0 %v1180
  %1540 = vmatpush.bf16.msra.mxu0 %v1179
  %1541 = vmatpush.bf16.msra.mxu0 %v1178
  %1542 = vmatmul.bf16.gmra.mxu0 %v503
  %v1543 = vpop.f32.mrf.mxu0
  %v1544 = vadd.f32 %v1516, %v1543
  %v1545 = vpop.f32.mrf.mxu0
  %v1546 = vadd.f32 %v1518, %v1545
  %1547 = vmatmul.bf16.gmra.mxu0 %v519
  %v1548 = vpop.f32.mrf.mxu0
  %v1549 = vadd.f32 %v1521, %v1548
  %v1550 = vpop.f32.mrf.mxu0
  %v1551 = vadd.f32 %v1523, %v1550
  %1552 = vmatmul.bf16.gmra.mxu0 %v535
  %v1553 = vpop.f32.mrf.mxu0
  %v1554 = vadd.f32 %v1526, %v1553
  %v1555 = vpop.f32.mrf.mxu0
  %v1556 = vadd.f32 %v1528, %v1555
  %1557 = vmatmul.bf16.gmra.mxu0 %v551
  %v1558 = vpop.f32.mrf.mxu0
  %v1559 = vadd.f32 %v1531, %v1558
  %v1560 = vpop.f32.mrf.mxu0
  %1561 = vdwg.mxu0
  %1562 = vmatpush.bf16.msra.mxu0 %v1193
  %1563 = vmatpush.bf16.msra.mxu0 %v1192
  %1564 = vmatpush.bf16.msra.mxu0 %v1191
  %1565 = vmatpush.bf16.msra.mxu0 %v1190
  %1566 = vmatpush.bf16.msra.mxu0 %v1189
  %1567 = vmatpush.bf16.msra.mxu0 %v1188
  %1568 = vmatpush.bf16.msra.mxu0 %v1187
  %1569 = vmatpush.bf16.msra.mxu0 %v1186
  %1570 = vmatmul.bf16.gmra.mxu0 %v504
  %v1571 = vpop.f32.mrf.mxu0
  %v1572 = vadd.f32 %v1544, %v1571
  %v1573 = vpop.f32.mrf.mxu0
  %v1574 = vadd.f32 %v1546, %v1573
  %1575 = vmatmul.bf16.gmra.mxu0 %v520
  %v1576 = vpop.f32.mrf.mxu0
  %v1577 = vadd.f32 %v1549, %v1576
  %v1578 = vpop.f32.mrf.mxu0
  %v1579 = vadd.f32 %v1551, %v1578
  %1580 = vmatmul.bf16.gmra.mxu0 %v536
  %v1581 = vpop.f32.mrf.mxu0
  %v1582 = vadd.f32 %v1554, %v1581
  %v1583 = vpop.f32.mrf.mxu0
  %v1584 = vadd.f32 %v1556, %v1583
  %1585 = vmatmul.bf16.gmra.mxu0 %v552
  %v1586 = vpop.f32.mrf.mxu0
  %v1587 = vadd.f32 %v1559, %v1586
  %v1588 = vpop.f32.mrf.mxu0
  %1589 = vdwg.mxu0
  %1590 = vmatpush.bf16.msra.mxu0 %v1201
  %1591 = vmatpush.bf16.msra.mxu0 %v1200
  %1592 = vmatpush.bf16.msra.mxu0 %v1199
  %1593 = vmatpush.bf16.msra.mxu0 %v1198
  %1594 = vmatpush.bf16.msra.mxu0 %v1197
  %1595 = vmatpush.bf16.msra.mxu0 %v1196
  %1596 = vmatpush.bf16.msra.mxu0 %v1195
  %1597 = vmatpush.bf16.msra.mxu0 %v1194
  %1598 = vmatmul.bf16.gmra.mxu0 %v505
  %v1599 = vpop.f32.mrf.mxu0
  %v1600 = vadd.f32 %v1572, %v1599
  %v1601 = vpop.f32.mrf.mxu0
  %v1602 = vadd.f32 %v1574, %v1601
  %1603 = vmatmul.bf16.gmra.mxu0 %v521
  %v1604 = vpop.f32.mrf.mxu0
  %v1605 = vadd.f32 %v1577, %v1604
  %v1606 = vpop.f32.mrf.mxu0
  %v1607 = vadd.f32 %v1579, %v1606
  %1608 = vmatmul.bf16.gmra.mxu0 %v537
  %v1609 = vpop.f32.mrf.mxu0
  %v1610 = vadd.f32 %v1582, %v1609
  %v1611 = vpop.f32.mrf.mxu0
  %v1612 = vadd.f32 %v1584, %v1611
  %1613 = vmatmul.bf16.gmra.mxu0 %v553
  %v1614 = vpop.f32.mrf.mxu0
  %v1615 = vadd.f32 %v1587, %v1614
  %v1616 = vpop.f32.mrf.mxu0
  %1617 = vdwg.mxu0
  %1618 = vmatpush.bf16.msra.mxu0 %v1209
  %1619 = vmatpush.bf16.msra.mxu0 %v1208
  %1620 = vmatpush.bf16.msra.mxu0 %v1207
  %1621 = vmatpush.bf16.msra.mxu0 %v1206
  %1622 = vmatpush.bf16.msra.mxu0 %v1205
  %1623 = vmatpush.bf16.msra.mxu0 %v1204
  %1624 = vmatpush.bf16.msra.mxu0 %v1203
  %1625 = vmatpush.bf16.msra.mxu0 %v1202
  %1626 = vmatmul.bf16.gmra.mxu0 %v506
  %v1627 = vpop.f32.mrf.mxu0
  %v1628 = vadd.f32 %v1600, %v1627
  %v1629 = vpop.f32.mrf.mxu0
  %v1630 = vadd.f32 %v1602, %v1629
  %1631 = vmatmul.bf16.gmra.mxu0 %v522
  %v1632 = vpop.f32.mrf.mxu0
  %v1633 = vadd.f32 %v1605, %v1632
  %v1634 = vpop.f32.mrf.mxu0
  %v1635 = vadd.f32 %v1607, %v1634
  %1636 = vmatmul.bf16.gmra.mxu0 %v538
  %v1637 = vpop.f32.mrf.mxu0
  %v1638 = vadd.f32 %v1610, %v1637
  %v1639 = vpop.f32.mrf.mxu0
  %v1640 = vadd.f32 %v1612, %v1639
  %1641 = vmatmul.bf16.gmra.mxu0 %v554
  %v1642 = vpop.f32.mrf.mxu0
  %v1643 = vadd.f32 %v1615, %v1642
  %v1644 = vpop.f32.mrf.mxu0
  %1645 = vdwg.mxu0
  %1646 = vmatpush.bf16.msra.mxu0 %v1217
  %1647 = vmatpush.bf16.msra.mxu0 %v1216
  %1648 = vmatpush.bf16.msra.mxu0 %v1215
  %1649 = vmatpush.bf16.msra.mxu0 %v1214
  %1650 = vmatpush.bf16.msra.mxu0 %v1213
  %1651 = vmatpush.bf16.msra.mxu0 %v1212
  %1652 = vmatpush.bf16.msra.mxu0 %v1211
  %1653 = vmatpush.bf16.msra.mxu0 %v1210
  %1654 = vmatmul.bf16.gmra.mxu0 %v507
  %v1655 = vpop.f32.mrf.mxu0
  %v1656 = vadd.f32 %v1628, %v1655
  %v1657 = vpop.f32.mrf.mxu0
  %v1658 = vadd.f32 %v1630, %v1657
  %1659 = vmatmul.bf16.gmra.mxu0 %v523
  %v1660 = vpop.f32.mrf.mxu0
  %v1661 = vadd.f32 %v1633, %v1660
  %v1662 = vpop.f32.mrf.mxu0
  %v1663 = vadd.f32 %v1635, %v1662
  %1664 = vmatmul.bf16.gmra.mxu0 %v539
  %v1665 = vpop.f32.mrf.mxu0
  %v1666 = vadd.f32 %v1638, %v1665
  %v1667 = vpop.f32.mrf.mxu0
  %v1668 = vadd.f32 %v1640, %v1667
  %1669 = vmatmul.bf16.gmra.mxu0 %v555
  %v1670 = vpop.f32.mrf.mxu0
  %v1671 = vadd.f32 %v1643, %v1670
  %v1672 = vpop.f32.mrf.mxu0
  %1673 = vdwg.mxu0
  %1674 = vmatpush.bf16.msra.mxu0 %v1225
  %1675 = vmatpush.bf16.msra.mxu0 %v1224
  %1676 = vmatpush.bf16.msra.mxu0 %v1223
  %1677 = vmatpush.bf16.msra.mxu0 %v1222
  %1678 = vmatpush.bf16.msra.mxu0 %v1221
  %1679 = vmatpush.bf16.msra.mxu0 %v1220
  %1680 = vmatpush.bf16.msra.mxu0 %v1219
  %1681 = vmatpush.bf16.msra.mxu0 %v1218
  %1682 = vmatmul.bf16.gmra.mxu0 %v508
  %v1683 = vpop.f32.mrf.mxu0
  %v1684 = vadd.f32 %v1656, %v1683
  %v1685 = vpop.f32.mrf.mxu0
  %v1686 = vadd.f32 %v1658, %v1685
  %1687 = vmatmul.bf16.gmra.mxu0 %v524
  %v1688 = vpop.f32.mrf.mxu0
  %v1689 = vadd.f32 %v1661, %v1688
  %v1690 = vpop.f32.mrf.mxu0
  %v1691 = vadd.f32 %v1663, %v1690
  %1692 = vmatmul.bf16.gmra.mxu0 %v540
  %v1693 = vpop.f32.mrf.mxu0
  %v1694 = vadd.f32 %v1666, %v1693
  %v1695 = vpop.f32.mrf.mxu0
  %v1696 = vadd.f32 %v1668, %v1695
  %1697 = vmatmul.bf16.gmra.mxu0 %v556
  %v1698 = vpop.f32.mrf.mxu0
  %v1699 = vadd.f32 %v1671, %v1698
  %v1700 = vpop.f32.mrf.mxu0
  %1701 = vdwg.mxu0
  %1702 = vmatpush.bf16.msra.mxu0 %v1233
  %1703 = vmatpush.bf16.msra.mxu0 %v1232
  %1704 = vmatpush.bf16.msra.mxu0 %v1231
  %1705 = vmatpush.bf16.msra.mxu0 %v1230
  %1706 = vmatpush.bf16.msra.mxu0 %v1229
  %1707 = vmatpush.bf16.msra.mxu0 %v1228
  %1708 = vmatpush.bf16.msra.mxu0 %v1227
  %1709 = vmatpush.bf16.msra.mxu0 %v1226
  %1710 = vmatmul.bf16.gmra.mxu0 %v509
  %v1711 = vpop.f32.mrf.mxu0
  %v1712 = vadd.f32 %v1684, %v1711
  %v1713 = vpop.f32.mrf.mxu0
  %v1714 = vadd.f32 %v1686, %v1713
  %1715 = vmatmul.bf16.gmra.mxu0 %v525
  %v1716 = vpop.f32.mrf.mxu0
  %v1717 = vadd.f32 %v1689, %v1716
  %v1718 = vpop.f32.mrf.mxu0
  %v1719 = vadd.f32 %v1691, %v1718
  %1720 = vmatmul.bf16.gmra.mxu0 %v541
  %v1721 = vpop.f32.mrf.mxu0
  %v1722 = vadd.f32 %v1694, %v1721
  %v1723 = vpop.f32.mrf.mxu0
  %v1724 = vadd.f32 %v1696, %v1723
  %1725 = vmatmul.bf16.gmra.mxu0 %v557
  %v1726 = vpop.f32.mrf.mxu0
  %v1727 = vadd.f32 %v1699, %v1726
  %v1728 = vpop.f32.mrf.mxu0
  %1729 = vdwg.mxu0
  %1730 = vmatpush.bf16.msra.mxu0 %v1241
  %1731 = vmatpush.bf16.msra.mxu0 %v1240
  %1732 = vmatpush.bf16.msra.mxu0 %v1239
  %1733 = vmatpush.bf16.msra.mxu0 %v1238
  %1734 = vmatpush.bf16.msra.mxu0 %v1237
  %1735 = vmatpush.bf16.msra.mxu0 %v1236
  %1736 = vmatpush.bf16.msra.mxu0 %v1235
  %1737 = vmatpush.bf16.msra.mxu0 %v1234
  %1738 = vmatmul.bf16.gmra.mxu0 %v510
  %v1739 = vpop.f32.mrf.mxu0
  %v1740 = vadd.f32 %v1712, %v1739
  %v1741 = vpop.f32.mrf.mxu0
  %v1742 = vadd.f32 %v1714, %v1741
  %1743 = vmatmul.bf16.gmra.mxu0 %v526
  %v1744 = vpop.f32.mrf.mxu0
  %v1745 = vadd.f32 %v1717, %v1744
  %v1746 = vpop.f32.mrf.mxu0
  %v1747 = vadd.f32 %v1719, %v1746
  %1748 = vmatmul.bf16.gmra.mxu0 %v542
  %v1749 = vpop.f32.mrf.mxu0
  %v1750 = vadd.f32 %v1722, %v1749
  %v1751 = vpop.f32.mrf.mxu0
  %v1752 = vadd.f32 %v1724, %v1751
  %1753 = vmatmul.bf16.gmra.mxu0 %v558
  %v1754 = vpop.f32.mrf.mxu0
  %v1755 = vadd.f32 %v1727, %v1754
  %v1756 = vpop.f32.mrf.mxu0
  %1757 = vdwg.mxu0
  %1758 = vmatpush.bf16.msra.mxu0 %v1249
  %1759 = vmatpush.bf16.msra.mxu0 %v1248
  %1760 = vmatpush.bf16.msra.mxu0 %v1247
  %1761 = vmatpush.bf16.msra.mxu0 %v1246
  %1762 = vmatpush.bf16.msra.mxu0 %v1245
  %1763 = vmatpush.bf16.msra.mxu0 %v1244
  %1764 = vmatpush.bf16.msra.mxu0 %v1243
  %1765 = vmatpush.bf16.msra.mxu0 %v1242
  %1766 = vmatmul.bf16.gmra.mxu0 %v511
  %v1767 = vpop.f32.mrf.mxu0
  %v1768 = vadd.f32 %v1740, %v1767
  %v1769 = vpop.f32.mrf.mxu0
  %v1770 = vadd.f32 %v1742, %v1769
  %1771 = vmatmul.bf16.gmra.mxu0 %v527
  %v1772 = vpop.f32.mrf.mxu0
  %v1773 = vadd.f32 %v1745, %v1772
  %v1774 = vpop.f32.mrf.mxu0
  %v1775 = vadd.f32 %v1747, %v1774
  %1776 = vmatmul.bf16.gmra.mxu0 %v543
  %v1777 = vpop.f32.mrf.mxu0
  %v1778 = vadd.f32 %v1750, %v1777
  %v1779 = vpop.f32.mrf.mxu0
  %v1780 = vadd.f32 %v1752, %v1779
  %1781 = vmatmul.bf16.gmra.mxu0 %v559
  %v1782 = vpop.f32.mrf.mxu0
  %v1783 = vadd.f32 %v1755, %v1782
  %v1784 = vpop.f32.mrf.mxu0
  %1785 = vdwg.mxu0
  %1786 = vmatpush.bf16.msra.mxu0 %v1257
  %1787 = vmatpush.bf16.msra.mxu0 %v1256
  %1788 = vmatpush.bf16.msra.mxu0 %v1255
  %1789 = vmatpush.bf16.msra.mxu0 %v1254
  %1790 = vmatpush.bf16.msra.mxu0 %v1253
  %1791 = vmatpush.bf16.msra.mxu0 %v1252
  %1792 = vmatpush.bf16.msra.mxu0 %v1251
  %1793 = vmatpush.bf16.msra.mxu0 %v1250
  %1794 = vmatmul.bf16.gmra.mxu0 %v512
  %v1795 = vpop.f32.mrf.mxu0
  %v1796 = vadd.f32 %v1768, %v1795
  %v1797 = vpop.f32.mrf.mxu0
  %v1798 = vadd.f32 %v1770, %v1797
  %1799 = vmatmul.bf16.gmra.mxu0 %v528
  %v1800 = vpop.f32.mrf.mxu0
  %v1801 = vadd.f32 %v1773, %v1800
  %v1802 = vpop.f32.mrf.mxu0
  %v1803 = vadd.f32 %v1775, %v1802
  %1804 = vmatmul.bf16.gmra.mxu0 %v544
  %v1805 = vpop.f32.mrf.mxu0
  %v1806 = vadd.f32 %v1778, %v1805
  %v1807 = vpop.f32.mrf.mxu0
  %v1808 = vadd.f32 %v1780, %v1807
  %1809 = vmatmul.bf16.gmra.mxu0 %v560
  %v1810 = vpop.f32.mrf.mxu0
  %v1811 = vadd.f32 %v1783, %v1810
  %v1812 = vpop.f32.mrf.mxu0
  %1813 = vdwg.mxu0
  %1814 = vmatpush.bf16.msra.mxu0 %v1265
  %1815 = vmatpush.bf16.msra.mxu0 %v1264
  %1816 = vmatpush.bf16.msra.mxu0 %v1263
  %1817 = vmatpush.bf16.msra.mxu0 %v1262
  %1818 = vmatpush.bf16.msra.mxu0 %v1261
  %1819 = vmatpush.bf16.msra.mxu0 %v1260
  %1820 = vmatpush.bf16.msra.mxu0 %v1259
  %1821 = vmatpush.bf16.msra.mxu0 %v1258
  %1822 = vmatmul.bf16.gmra.mxu0 %v513
  %v1823 = vpop.f32.mrf.mxu0
  %v1824 = vadd.f32 %v1796, %v1823
  %v1825 = vpop.f32.mrf.mxu0
  %v1826 = vadd.f32 %v1798, %v1825
  %1827 = vmatmul.bf16.gmra.mxu0 %v529
  %v1828 = vpop.f32.mrf.mxu0
  %v1829 = vadd.f32 %v1801, %v1828
  %v1830 = vpop.f32.mrf.mxu0
  %v1831 = vadd.f32 %v1803, %v1830
  %1832 = vmatmul.bf16.gmra.mxu0 %v545
  %v1833 = vpop.f32.mrf.mxu0
  %v1834 = vadd.f32 %v1806, %v1833
  %v1835 = vpop.f32.mrf.mxu0
  %v1836 = vadd.f32 %v1808, %v1835
  %1837 = vmatmul.bf16.gmra.mxu0 %v561
  %v1838 = vpop.f32.mrf.mxu0
  %v1839 = vadd.f32 %v1811, %v1838
  %v1840 = vpop.f32.mrf.mxu0
  %1841 = vdwg.mxu0
  %vm1842 = vcmp.ge.f32.partialorder %v1824, 0.0
  %vm1843 = vcmp.ge.f32.partialorder %v1826, 0.0
  %vm1844 = vcmp.ge.f32.partialorder %v1829, 0.0
  %vm1845 = vcmp.ge.f32.partialorder %v1831, 0.0
  %vm1846 = vcmp.ge.f32.partialorder %v1834, 0.0
  %vm1847 = vcmp.ge.f32.partialorder %v1836, 0.0
  %vm1848 = vcmp.ge.f32.partialorder %v1839, 0.0
  %v1849 = vmul.f32 %v1824, 0.2
  %v1850 = vmul.f32 %v1826, 0.2
  %v1851 = vmul.f32 %v1829, 0.2
  %v1852 = vmul.f32 %v1831, 0.2
  %v1853 = vmul.f32 %v1834, 0.2
  %v1854 = vmul.f32 %v1836, 0.2
  %v1855 = vmul.f32 %v1839, 0.2
  %v1856 = vsel %vm1842, %v1824, %v1849
  %v1857 = vsel %vm1843, %v1826, %v1850
  %v1858 = vsel %vm1844, %v1829, %v1851
  %v1859 = vsel %vm1845, %v1831, %v1852
  %v1860 = vsel %vm1846, %v1834, %v1853
  %v1861 = vsel %vm1847, %v1836, %v1854
  %v1862 = vsel %vm1848, %v1839, %v1855
  %1863 = vst [vmem:[%s3] sm:$0xff] %v1856
  %1864 = vst [vmem:[%s3 + $0x8] sm:$0xff] %v1857
  %1865 = vst [vmem:[%s3 + $0x10] sm:$0xff] %v1858
  %1866 = vst [vmem:[%s3 + $0x18] sm:$0xff] %v1859
  %1867 = vst [vmem:[%s3 + $0x20] sm:$0xff] %v1860
  %1868 = vst [vmem:[%s3 + $0x28] sm:$0xff] %v1861
  %1869 = vst [vmem:[%s3 + $0x30] sm:$0x3f] %v1862
  // Predicated region
  $region14: #{obj_ls_d_net_forward.27} parent=0 // pred_check
    _
  $region15: #{obj_ls_d_net_forward.27} parent=0 // pred_check_branch
    %1871 = sbr.rel (0) target = $region17
  $region16: #{obj_ls_d_net_forward.27} parent=0 // pred_region
    _
  $region17: #{obj_ls_d_net_forward.27} parent=0 // pred_fallthru
    _
  // Predicated region
  $region18: #{obj_ls_d_net_forward.27} parent=0 // pred_check
    _
  $region19: #{obj_ls_d_net_forward.27} parent=0 // pred_check_branch
    %1873 = sbr.rel (0) target = $region21
  $region20: #{obj_ls_d_net_forward.27} parent=0 // pred_region
    _
  $region21: #{obj_ls_d_net_forward.27} parent=0 // pred_fallthru
    _

</llo_original>
